<compile_context>
chip_gen: v7x
topology: tpu7x:2x2x1
jax: 0.10.0
libtpu: 0.0.40
codegen_flags: <defaults>
</compile_context>

<pallas_src>
import functools

import jax
import jax.numpy as jnp
from jax.experimental import pallas as pl
from jax.experimental.pallas import tpu as pltpu


def _round_up(x, m):
    return ((x + m - 1) // m) * m


# ---------------------------------------------------------------------------
# 3x3 conv + bias + ReLU, NHWC, one image per grid step.
# 9 shifted accumulate-dots on the padded activation (no im2col).
# ---------------------------------------------------------------------------
def _conv3x3_relu_kernel(x_ref, w_ref, b_ref, o_ref, *, H, W):
    # x_ref: (1, H+2, W+2, Cin)   spatially padded activation (bf16)
    # w_ref: (3, 3, Cin, Cout)    taps (bf16)
    # b_ref: (1, Cout)            bias (f32)
    # o_ref: (1, H, W, Cout)      output (bf16)
    x = x_ref[0]
    cin = x.shape[-1]
    cout = o_ref.shape[-1]

    acc = None
    for kh in range(3):
        for kw in range(3):
            xs = x[kh:kh + H, kw:kw + W, :].reshape(H * W, cin)
            d = jnp.dot(xs, w_ref[kh, kw, :, :],
                        preferred_element_type=jnp.float32)
            acc = d if acc is None else acc + d

    out = jnp.maximum(acc + b_ref[...], 0.0)
    o_ref[...] = out.reshape(1, H, W, cout).astype(o_ref.dtype)


def conv3x3_relu_nhwc(x, w, b):
    """3x3 conv, stride 1, pad 1, bias, ReLU.  x: (B,H,W,Cin) -> (B,H,W,Cout)."""
    B, H, W, cin = x.shape
    cout = w.shape[-1]
    xp = jnp.pad(x, ((0, 0), (1, 1), (1, 1), (0, 0)))
    # TODO(synk): for large images, add spatial row-tiling with halo rows so the
    # per-step VMEM footprint stays bounded; one image per step is enough here.
    return pl.pallas_call(
        functools.partial(_conv3x3_relu_kernel, H=H, W=W),
        out_shape=jax.ShapeDtypeStruct((B, H, W, cout), jnp.bfloat16),
        grid=(B,),
        in_specs=[
            pl.BlockSpec((1, H + 2, W + 2, cin), lambda i: (i, 0, 0, 0)),
            pl.BlockSpec((3, 3, cin, cout), lambda i: (0, 0, 0, 0)),
            pl.BlockSpec((1, cout), lambda i: (0, 0)),
        ],
        out_specs=pl.BlockSpec((1, H, W, cout), lambda i: (i, 0, 0, 0)),
        compiler_params=pltpu.CompilerParams(
            dimension_semantics=("parallel",)),
    )(xp, w, b)


def maxpool2x2_nhwc(x):
    # NOTE: assumes even H and W (true for the VGG trunk on 16x16 inputs).
    B, H, W, C = x.shape
    return x.reshape(B, H // 2, 2, W // 2, 2, C).max(axis=(2, 4))


# ---------------------------------------------------------------------------
# VGG16 features up to relu3_3 (torchvision vgg16.features[:16]) — NHWC,
# channels lane-padded to 128-multiples end-to-end.
# ---------------------------------------------------------------------------
_VGG_CFG = [
    ("conv", 3, 64), ("conv", 64, 64), ("pool",),
    ("conv", 64, 128), ("conv", 128, 128), ("pool",),
    ("conv", 128, 256), ("conv", 256, 256), ("conv", 256, 256),
]
_VGG_CIN_PAD = 128      # network input is lane-padded to 128 channels


def make_vgg_params(seed=42):
    # TODO(synk): deterministic He-init stand-in for pretrained VGG16 weights.
    params = []
    key = jax.random.PRNGKey(seed)
    ch_in_pad = _VGG_CIN_PAD
    for layer in _VGG_CFG:
        if layer[0] != "conv":
            continue
        _, cin, cout = layer
        cout_pad = _round_up(cout, 128)
        key, wk = jax.random.split(key)
        scale = jnp.sqrt(2.0 / (cin * 9))
        w_real = jax.random.normal(wk, (3, 3, cin, cout), jnp.float32) * scale
        w_pad = jnp.zeros((3, 3, ch_in_pad, cout_pad), jnp.float32)
        w_pad = w_pad.at[:, :, :cin, :cout].set(w_real)
        b_pad = jnp.zeros((1, cout_pad), jnp.float32)
        params.append((w_pad.astype(jnp.bfloat16), b_pad))
        ch_in_pad = cout_pad
    return params


def vgg_relu3_3_nhwc(x, params):
    pi = 0
    for layer in _VGG_CFG:
        if layer[0] == "conv":
            w, b = params[pi]
            x = conv3x3_relu_nhwc(x, w, b)
            pi += 1
        else:
            x = maxpool2x2_nhwc(x)
    return x


# ---------------------------------------------------------------------------
# Partial-sum reduction kernels (parallel grid, lane-dense (1,1,cols) outputs).
# ---------------------------------------------------------------------------
def _sq_diff_partial_kernel(a_ref, b_ref, o_ref):
    d = a_ref[0].astype(jnp.float32) - b_ref[0].astype(jnp.float32)
    s = jnp.sum(d * d, axis=0, keepdims=True)          # (1, cols)
    o_ref[...] = s.reshape(1, 1, s.shape[-1])


def _weighted_abs_diff_partial_kernel(a_ref, b_ref, w_ref, o_ref):
    d = jnp.abs(a_ref[0].astype(jnp.float32) - b_ref[0].astype(jnp.float32))
    s = jnp.sum(w_ref[0].astype(jnp.float32) * d, axis=0, keepdims=True)
    o_ref[...] = s.reshape(1, 1, s.shape[-1])


def _partial_reduce(kernel, arrays, cols=512, block_rows=512):
    """Sum-style reduction: per-block column partials in Pallas, final tiny sum
    in the wrapper.  Grid axis is fully parallel (megacore friendly)."""
    flats = [jnp.ravel(a) for a in arrays]
    n = flats[0].size
    rows = -(-n // cols)
    br = min(block_rows, rows)
    nb = -(-rows // br)
    rows_p = nb * br
    padded = [jnp.pad(f, (0, rows_p * cols - n)).reshape(nb, br, cols)
              for f in flats]
    parts = pl.pallas_call(
        kernel,
        out_shape=jax.ShapeDtypeStruct((nb, 1, cols), jnp.float32),
        grid=(nb,),
        in_specs=[pl.BlockSpec((1, br, cols), lambda i: (i, 0, 0))
                  for _ in padded],
        out_specs=pl.BlockSpec((1, 1, cols), lambda i: (i, 0, 0)),
        compiler_params=pltpu.CompilerParams(
            dimension_semantics=("parallel",)),
    )(*padded)
    return jnp.sum(parts)


# ---------------------------------------------------------------------------
# SSIM (window 11, sigma 1.5, zero pad 5, size_average=True) fused with the
# plain L1 |pred-target| sum.  Planes are packed along the lane axis.
# ---------------------------------------------------------------------------
_WIN = 11
_SIGMA = 1.5
_C1 = 0.01 ** 2
_C2 = 0.03 ** 2


def _gaussian_1d():
    xs = jnp.arange(_WIN, dtype=jnp.float32) - _WIN // 2
    g = jnp.exp(-(xs ** 2) / (2.0 * _SIGMA ** 2))
    return g / jnp.sum(g)


def _band_matrix(size):
    """(size,size) banded Gaussian matrix == zero-padded 1-D Gaussian conv."""
    g = _gaussian_1d()
    idx = jnp.arange(size)
    d = idx[None, :] - idx[:, None]                    # col - row
    band = g[jnp.clip(d + _WIN // 2, 0, _WIN - 1)]
    return jnp.where(jnp.abs(d) <= _WIN // 2, band, 0.0).astype(jnp.float32)


def _ssim_l1_kernel(x1_ref, x2_ref, ah_ref, awb_ref, m_ref, ssim_ref, l1_ref):
    # x*_ref: (1, H, P*W) f32 packed planes; ah: (H,H); awb: (P*W,P*W) blockdiag
    # m_ref : (1, 1, P*W) plane-validity lane mask
    x1 = x1_ref[0]
    x2 = x2_ref[0]
    ah = ah_ref[...]
    awb = awb_ref[...]
    mask = m_ref[0]                                    # (1, P*W)

    def blur(v):
        t = jnp.dot(ah, v, preferred_element_type=jnp.float32)
        return jnp.dot(t, awb, preferred_element_type=jnp.float32)

    # TODO(synk): for very large H/W switch the band-matrix dots to 11
    # shifted-add passes to avoid O(H^2) VMEM / wasted MXU flops.
    mu1 = blur(x1)
    mu2 = blur(x2)
    s11 = blur(x1 * x1)
    s22 = blur(x2 * x2)
    s12 = blur(x1 * x2)

    mu1_sq = mu1 * mu1
    mu2_sq = mu2 * mu2
    mu12 = mu1 * mu2
    sigma1_sq = s11 - mu1_sq
    sigma2_sq = s22 - mu2_sq
    sigma12 = s12 - mu12

    num = (2.0 * mu12 + _C1) * (2.0 * sigma12 + _C2)
    den = (mu1_sq + mu2_sq + _C1) * (sigma1_sq + sigma2_sq + _C2)
    ssim_map = num / den                               # (H, P*W)

    pw = ssim_map.shape[-1]
    ssim_cols = jnp.sum(ssim_map, axis=0, keepdims=True) * mask
    l1_cols = jnp.sum(jnp.abs(x1 - x2), axis=0, keepdims=True)  # padded planes = 0

    ssim_ref[...] = ssim_cols.reshape(1, 1, pw)
    l1_ref[...] = l1_cols.reshape(1, 1, pw)


def ssim_and_l1_sums(img1, img2):
    """Returns (sum of SSIM map over all N*C*H*W pixels, sum of |img1-img2|)."""
    N, C, H, W = img1.shape
    NC = N * C
    P = max(1, 128 // W)                 # planes packed along the lane axis
    nb = -(-NC // P)
    NCp = nb * P

    def pack(img):
        p = img.reshape(NC, H, W).astype(jnp.float32)
        p = jnp.pad(p, ((0, NCp - NC), (0, 0), (0, 0)))
        return p.reshape(nb, P, H, W).transpose(0, 2, 1, 3).reshape(nb, H, P * W)

    x1 = pack(img1)
    x2 = pack(img2)
    ah = _band_matrix(H)                                        # vertical blur
    awb = jnp.kron(jnp.eye(P, dtype=jnp.float32),
                   _band_matrix(W).T)                           # horizontal blur
    plane_mask = (jnp.arange(NCp) < NC).astype(jnp.float32).reshape(nb, P)
    lane_mask = jnp.repeat(plane_mask, W, axis=1).reshape(nb, 1, P * W)

    ssim_parts, l1_parts = pl.pallas_call(
        _ssim_l1_kernel,
        out_shape=(jax.ShapeDtypeStruct((nb, 1, P * W), jnp.float32),
                   jax.ShapeDtypeStruct((nb, 1, P * W), jnp.float32)),
        grid=(nb,),
        in_specs=[
            pl.BlockSpec((1, H, P * W), lambda i: (i, 0, 0)),
            pl.BlockSpec((1, H, P * W), lambda i: (i, 0, 0)),
            pl.BlockSpec((H, H), lambda i: (0, 0)),
            pl.BlockSpec((P * W, P * W), lambda i: (0, 0)),
            pl.BlockSpec((1, 1, P * W), lambda i: (i, 0, 0)),
        ],
        out_specs=(pl.BlockSpec((1, 1, P * W), lambda i: (i, 0, 0)),
                   pl.BlockSpec((1, 1, P * W), lambda i: (i, 0, 0))),
        compiler_params=pltpu.CompilerParams(
            dimension_semantics=("parallel",)),
    )(x1, x2, ah, awb, lane_mask)
    return jnp.sum(ssim_parts), jnp.sum(l1_parts)


# ---------------------------------------------------------------------------
# L1PerceptualSSIMLoss forward
# ---------------------------------------------------------------------------
def l1_perceptual_ssim_loss(pred, target, vgg_params, weight=None,
                            l1_weight=1.0, perc_weight=0.1, ssim_weight=0.3):
    assert pred.shape[1] == 3, "module expects (N, 3, H, W) inputs"

    # --- SSIM + (fused) plain-L1 sums: pred/target read from HBM once ---
    ssim_sum, l1_abs_sum = ssim_and_l1_sums(pred, target)
    ssim_mean = ssim_sum / pred.size

    # --- L1 (reduction='mean') ---
    if weight is None:
        l1 = l1_weight * (l1_abs_sum / pred.size)
    else:
        # TODO(synk): basicsr weighted-mean normalization may differ; this is
        # mean(weight * |pred - target|) over all elements.
        l1 = l1_weight * (_partial_reduce(_weighted_abs_diff_partial_kernel,
                                          [pred, target, weight]) / pred.size)

    # --- Perceptual (VGG16 relu3_3, MSE, reduction='mean') ---
    # pred & target batched through VGG in ONE pass, NHWC, bf16,
    # channels lane-padded to 128 end-to-end.
    x = jnp.concatenate([pred, target], axis=0)
    x = jnp.transpose(x, (0, 2, 3, 1)).astype(jnp.bfloat16)
    x = jnp.pad(x, ((0, 0), (0, 0), (0, 0), (0, _VGG_CIN_PAD - x.shape[-1])))
    feats = vgg_relu3_3_nhwc(x, vgg_params)            # (2N, H/4, W/4, 256)
    f_pred, f_tgt = jnp.split(feats, 2, axis=0)
    perc = perc_weight * (_partial_reduce(_sq_diff_partial_kernel,
                                          [f_pred, f_tgt]) / f_pred.size)

    # --- total ---
    return l1 + perc + ssim_weight * (1.0 - ssim_mean)


if __name__ == "__main__":
    key = jax.random.PRNGKey(0)
    k1, k2 = jax.random.split(key)
    N, C, H, W = 2, 3, 16, 16            # module requires (N, 3, H, W)
    pred = jax.random.uniform(k1, (N, C, H, W), jnp.float32)
    target = jax.random.uniform(k2, (N, C, H, W), jnp.float32)

    vgg_params = make_vgg_params(seed=42)

    loss_fn = jax.jit(lambda p, t: l1_perceptual_ssim_loss(p, t, vgg_params))
    loss = loss_fn(pred, target)
    jax.block_until_ready(loss)
    assert loss.shape == () and bool(jnp.isfinite(loss))
    print("KERNEL_OK")
</pallas_src>

<mosaic_0001>
module attributes {stable_mosaic.version = 11 : i64} {
  func.func @_conv3x3_relu_kernel(%arg0: i32, %arg1: memref<1x18x18x128xbf16, #tpu.memory_space<vmem>>, %arg2: memref<3x3x128x128xbf16, #tpu.memory_space<vmem>>, %arg3: memref<1x128xf32, #tpu.memory_space<vmem>>, %arg4: memref<1x16x16x128xbf16, #tpu.memory_space<vmem>>) attributes {dimension_semantics = [#tpu.dimension_semantics<parallel>], iteration_bounds = array<i64: 4>, scalar_prefetch = 0 : i64, scratch_operands = 0 : i64, tpu.core_type = #tpu.core_type<tc>, window_params = [{transform_indices = @transform_0, window_bounds = array<i64: 1, 18, 18, 128>}, {pipeline_mode = #tpu.pipeline_mode<synchronous>, transform_indices = @transform_1, window_bounds = array<i64: 3, 3, 128, 128>}, {pipeline_mode = #tpu.pipeline_mode<synchronous>, transform_indices = @transform_2, window_bounds = array<i64: 1, 128>}, {transform_indices = @transform_3, window_bounds = array<i64: 1, 16, 16, 128>}]} {
    %c0 = arith.constant 0 : index
    %c0_0 = arith.constant 0 : index
    %c0_1 = arith.constant 0 : index
    %c0_2 = arith.constant 0 : index
    %0 = vector.load %arg1[%c0, %c0_0, %c0_1, %c0_2] : memref<1x18x18x128xbf16, #tpu.memory_space<vmem>>, vector<1x18x18x128xbf16>
    %1 = vector.shape_cast %0 : vector<1x18x18x128xbf16> to vector<18x18x128xbf16>
    %2 = vector.extract_strided_slice %1 {offsets = [0, 0, 0], sizes = [16, 16, 128], strides = [1, 1, 1]} : vector<18x18x128xbf16> to vector<16x16x128xbf16>
    %3 = vector.shape_cast %2 : vector<16x16x128xbf16> to vector<256x128xbf16>
    %c0_3 = arith.constant 0 : index
    %c0_4 = arith.constant 0 : index
    %c0_5 = arith.constant 0 : index
    %c0_6 = arith.constant 0 : index
    %4 = vector.load %arg2[%c0_3, %c0_4, %c0_5, %c0_6] : memref<3x3x128x128xbf16, #tpu.memory_space<vmem>>, vector<1x1x128x128xbf16>
    %5 = vector.shape_cast %4 : vector<1x1x128x128xbf16> to vector<128x128xbf16>
    %cst = arith.constant dense<0.000000e+00> : vector<256x128xf32>
    %6 = tpu.matmul %3, %5, %cst {dimension_numbers = #tpu.dot_dimension_numbers<[1], [0], [0], [1], [0, 0, 1, 1], [], []>} : vector<256x128xbf16>, vector<128x128xbf16>, vector<256x128xf32> -> vector<256x128xf32>
    %7 = vector.extract_strided_slice %1 {offsets = [0, 1, 0], sizes = [16, 16, 128], strides = [1, 1, 1]} : vector<18x18x128xbf16> to vector<16x16x128xbf16>
    %8 = vector.shape_cast %7 : vector<16x16x128xbf16> to vector<256x128xbf16>
    %c0_7 = arith.constant 0 : index
    %c1 = arith.constant 1 : index
    %c0_8 = arith.constant 0 : index
    %c0_9 = arith.constant 0 : index
    %9 = vector.load %arg2[%c0_7, %c1, %c0_8, %c0_9] : memref<3x3x128x128xbf16, #tpu.memory_space<vmem>>, vector<1x1x128x128xbf16>
    %10 = vector.shape_cast %9 : vector<1x1x128x128xbf16> to vector<128x128xbf16>
    %cst_10 = arith.constant dense<0.000000e+00> : vector<256x128xf32>
    %11 = tpu.matmul %8, %10, %cst_10 {dimension_numbers = #tpu.dot_dimension_numbers<[1], [0], [0], [1], [0, 0, 1, 1], [], []>} : vector<256x128xbf16>, vector<128x128xbf16>, vector<256x128xf32> -> vector<256x128xf32>
    %12 = arith.addf %6, %11 : vector<256x128xf32>
    %13 = vector.extract_strided_slice %1 {offsets = [0, 2, 0], sizes = [16, 16, 128], strides = [1, 1, 1]} : vector<18x18x128xbf16> to vector<16x16x128xbf16>
    %14 = vector.shape_cast %13 : vector<16x16x128xbf16> to vector<256x128xbf16>
    %c0_11 = arith.constant 0 : index
    %c2 = arith.constant 2 : index
    %c0_12 = arith.constant 0 : index
    %c0_13 = arith.constant 0 : index
    %15 = vector.load %arg2[%c0_11, %c2, %c0_12, %c0_13] : memref<3x3x128x128xbf16, #tpu.memory_space<vmem>>, vector<1x1x128x128xbf16>
    %16 = vector.shape_cast %15 : vector<1x1x128x128xbf16> to vector<128x128xbf16>
    %cst_14 = arith.constant dense<0.000000e+00> : vector<256x128xf32>
    %17 = tpu.matmul %14, %16, %cst_14 {dimension_numbers = #tpu.dot_dimension_numbers<[1], [0], [0], [1], [0, 0, 1, 1], [], []>} : vector<256x128xbf16>, vector<128x128xbf16>, vector<256x128xf32> -> vector<256x128xf32>
    %18 = arith.addf %12, %17 : vector<256x128xf32>
    %19 = vector.extract_strided_slice %1 {offsets = [1, 0, 0], sizes = [16, 16, 128], strides = [1, 1, 1]} : vector<18x18x128xbf16> to vector<16x16x128xbf16>
    %20 = vector.shape_cast %19 : vector<16x16x128xbf16> to vector<256x128xbf16>
    %c1_15 = arith.constant 1 : index
    %c0_16 = arith.constant 0 : index
    %c0_17 = arith.constant 0 : index
    %c0_18 = arith.constant 0 : index
    %21 = vector.load %arg2[%c1_15, %c0_16, %c0_17, %c0_18] : memref<3x3x128x128xbf16, #tpu.memory_space<vmem>>, vector<1x1x128x128xbf16>
    %22 = vector.shape_cast %21 : vector<1x1x128x128xbf16> to vector<128x128xbf16>
    %cst_19 = arith.constant dense<0.000000e+00> : vector<256x128xf32>
    %23 = tpu.matmul %20, %22, %cst_19 {dimension_numbers = #tpu.dot_dimension_numbers<[1], [0], [0], [1], [0, 0, 1, 1], [], []>} : vector<256x128xbf16>, vector<128x128xbf16>, vector<256x128xf32> -> vector<256x128xf32>
    %24 = arith.addf %18, %23 : vector<256x128xf32>
    %25 = vector.extract_strided_slice %1 {offsets = [1, 1, 0], sizes = [16, 16, 128], strides = [1, 1, 1]} : vector<18x18x128xbf16> to vector<16x16x128xbf16>
    %26 = vector.shape_cast %25 : vector<16x16x128xbf16> to vector<256x128xbf16>
    %c1_20 = arith.constant 1 : index
    %c1_21 = arith.constant 1 : index
    %c0_22 = arith.constant 0 : index
    %c0_23 = arith.constant 0 : index
    %27 = vector.load %arg2[%c1_20, %c1_21, %c0_22, %c0_23] : memref<3x3x128x128xbf16, #tpu.memory_space<vmem>>, vector<1x1x128x128xbf16>
    %28 = vector.shape_cast %27 : vector<1x1x128x128xbf16> to vector<128x128xbf16>
    %cst_24 = arith.constant dense<0.000000e+00> : vector<256x128xf32>
    %29 = tpu.matmul %26, %28, %cst_24 {dimension_numbers = #tpu.dot_dimension_numbers<[1], [0], [0], [1], [0, 0, 1, 1], [], []>} : vector<256x128xbf16>, vector<128x128xbf16>, vector<256x128xf32> -> vector<256x128xf32>
    %30 = arith.addf %24, %29 : vector<256x128xf32>
    %31 = vector.extract_strided_slice %1 {offsets = [1, 2, 0], sizes = [16, 16, 128], strides = [1, 1, 1]} : vector<18x18x128xbf16> to vector<16x16x128xbf16>
    %32 = vector.shape_cast %31 : vector<16x16x128xbf16> to vector<256x128xbf16>
    %c1_25 = arith.constant 1 : index
    %c2_26 = arith.constant 2 : index
    %c0_27 = arith.constant 0 : index
    %c0_28 = arith.constant 0 : index
    %33 = vector.load %arg2[%c1_25, %c2_26, %c0_27, %c0_28] : memref<3x3x128x128xbf16, #tpu.memory_space<vmem>>, vector<1x1x128x128xbf16>
    %34 = vector.shape_cast %33 : vector<1x1x128x128xbf16> to vector<128x128xbf16>
    %cst_29 = arith.constant dense<0.000000e+00> : vector<256x128xf32>
    %35 = tpu.matmul %32, %34, %cst_29 {dimension_numbers = #tpu.dot_dimension_numbers<[1], [0], [0], [1], [0, 0, 1, 1], [], []>} : vector<256x128xbf16>, vector<128x128xbf16>, vector<256x128xf32> -> vector<256x128xf32>
    %36 = arith.addf %30, %35 : vector<256x128xf32>
    %37 = vector.extract_strided_slice %1 {offsets = [2, 0, 0], sizes = [16, 16, 128], strides = [1, 1, 1]} : vector<18x18x128xbf16> to vector<16x16x128xbf16>
    %38 = vector.shape_cast %37 : vector<16x16x128xbf16> to vector<256x128xbf16>
    %c2_30 = arith.constant 2 : index
    %c0_31 = arith.constant 0 : index
    %c0_32 = arith.constant 0 : index
    %c0_33 = arith.constant 0 : index
    %39 = vector.load %arg2[%c2_30, %c0_31, %c0_32, %c0_33] : memref<3x3x128x128xbf16, #tpu.memory_space<vmem>>, vector<1x1x128x128xbf16>
    %40 = vector.shape_cast %39 : vector<1x1x128x128xbf16> to vector<128x128xbf16>
    %cst_34 = arith.constant dense<0.000000e+00> : vector<256x128xf32>
    %41 = tpu.matmul %38, %40, %cst_34 {dimension_numbers = #tpu.dot_dimension_numbers<[1], [0], [0], [1], [0, 0, 1, 1], [], []>} : vector<256x128xbf16>, vector<128x128xbf16>, vector<256x128xf32> -> vector<256x128xf32>
    %42 = arith.addf %36, %41 : vector<256x128xf32>
    %43 = vector.extract_strided_slice %1 {offsets = [2, 1, 0], sizes = [16, 16, 128], strides = [1, 1, 1]} : vector<18x18x128xbf16> to vector<16x16x128xbf16>
    %44 = vector.shape_cast %43 : vector<16x16x128xbf16> to vector<256x128xbf16>
    %c2_35 = arith.constant 2 : index
    %c1_36 = arith.constant 1 : index
    %c0_37 = arith.constant 0 : index
    %c0_38 = arith.constant 0 : index
    %45 = vector.load %arg2[%c2_35, %c1_36, %c0_37, %c0_38] : memref<3x3x128x128xbf16, #tpu.memory_space<vmem>>, vector<1x1x128x128xbf16>
    %46 = vector.shape_cast %45 : vector<1x1x128x128xbf16> to vector<128x128xbf16>
    %cst_39 = arith.constant dense<0.000000e+00> : vector<256x128xf32>
    %47 = tpu.matmul %44, %46, %cst_39 {dimension_numbers = #tpu.dot_dimension_numbers<[1], [0], [0], [1], [0, 0, 1, 1], [], []>} : vector<256x128xbf16>, vector<128x128xbf16>, vector<256x128xf32> -> vector<256x128xf32>
    %48 = arith.addf %42, %47 : vector<256x128xf32>
    %49 = vector.extract_strided_slice %1 {offsets = [2, 2, 0], sizes = [16, 16, 128], strides = [1, 1, 1]} : vector<18x18x128xbf16> to vector<16x16x128xbf16>
    %50 = vector.shape_cast %49 : vector<16x16x128xbf16> to vector<256x128xbf16>
    %c2_40 = arith.constant 2 : index
    %c2_41 = arith.constant 2 : index
    %c0_42 = arith.constant 0 : index
    %c0_43 = arith.constant 0 : index
    %51 = vector.load %arg2[%c2_40, %c2_41, %c0_42, %c0_43] : memref<3x3x128x128xbf16, #tpu.memory_space<vmem>>, vector<1x1x128x128xbf16>
    %52 = vector.shape_cast %51 : vector<1x1x128x128xbf16> to vector<128x128xbf16>
    %cst_44 = arith.constant dense<0.000000e+00> : vector<256x128xf32>
    %53 = tpu.matmul %50, %52, %cst_44 {dimension_numbers = #tpu.dot_dimension_numbers<[1], [0], [0], [1], [0, 0, 1, 1], [], []>} : vector<256x128xbf16>, vector<128x128xbf16>, vector<256x128xf32> -> vector<256x128xf32>
    %54 = arith.addf %48, %53 : vector<256x128xf32>
    %c0_45 = arith.constant 0 : index
    %c0_46 = arith.constant 0 : index
    %55 = vector.load %arg3[%c0_45, %c0_46] : memref<1x128xf32, #tpu.memory_space<vmem>>, vector<1x128xf32>
    %56 = vector.broadcast %55 : vector<1x128xf32> to vector<256x128xf32>
    %57 = arith.addf %54, %56 : vector<256x128xf32>
    %cst_47 = arith.constant 0.000000e+00 : f32
    %58 = vector.broadcast %cst_47 : f32 to vector<256x128xf32>
    %59 = arith.maximumf %57, %58 : vector<256x128xf32>
    %60 = vector.shape_cast %59 : vector<256x128xf32> to vector<1x16x16x128xf32>
    %61 = arith.truncf %60 : vector<1x16x16x128xf32> to vector<1x16x16x128xbf16>
    %c0_48 = arith.constant 0 : index
    %c0_49 = arith.constant 0 : index
    %c0_50 = arith.constant 0 : index
    %c0_51 = arith.constant 0 : index
    %62 = vector.load %arg4[%c0_48, %c0_49, %c0_50, %c0_51] : memref<1x16x16x128xbf16, #tpu.memory_space<vmem>>, vector<1x16x16x128xbf16>
    tpu.vector_store %arg4[%c0_48, %c0_49, %c0_50, %c0_51], %61 {strides = array<i32>} : memref<1x16x16x128xbf16, #tpu.memory_space<vmem>>, vector<1x16x16x128xbf16>,
    return
  }
  func.func @transform_0(%arg0: i32) -> (i32, i32, i32, i32) {
    %c0_i32 = arith.constant 0 : i32
    %c0_i32_0 = arith.constant 0 : i32
    %c0_i32_1 = arith.constant 0 : i32
    %c0_i32_2 = arith.constant 0 : i32
    return %arg0, %c0_i32, %c0_i32_0, %c0_i32_1 : i32, i32, i32, i32
  }
  func.func @transform_1(%arg0: i32) -> (i32, i32, i32, i32) {
    %c0_i32 = arith.constant 0 : i32
    %c0_i32_0 = arith.constant 0 : i32
    %c0_i32_1 = arith.constant 0 : i32
    %c0_i32_2 = arith.constant 0 : i32
    %c0_i32_3 = arith.constant 0 : i32
    return %c0_i32, %c0_i32_0, %c0_i32_1, %c0_i32_2 : i32, i32, i32, i32
  }
  func.func @transform_2(%arg0: i32) -> (i32, i32) {
    %c0_i32 = arith.constant 0 : i32
    %c0_i32_0 = arith.constant 0 : i32
    %c0_i32_1 = arith.constant 0 : i32
    return %c0_i32, %c0_i32_0 : i32, i32
  }
  func.func @transform_3(%arg0: i32) -> (i32, i32, i32, i32) {
    %c0_i32 = arith.constant 0 : i32
    %c0_i32_0 = arith.constant 0 : i32
    %c0_i32_1 = arith.constant 0 : i32
    %c0_i32_2 = arith.constant 0 : i32
    return %arg0, %c0_i32, %c0_i32_0, %c0_i32_1 : i32, i32, i32, i32
  }
}

module attributes {stable_mosaic.version = 11 : i64} {
  func.func @_conv3x3_relu_kernel(%arg0: i32, %arg1: memref<1x10x10x128xbf16, #tpu.memory_space<vmem>>, %arg2: memref<3x3x128x128xbf16, #tpu.memory_space<vmem>>, %arg3: memref<1x128xf32, #tpu.memory_space<vmem>>, %arg4: memref<1x8x8x128xbf16, #tpu.memory_space<vmem>>) attributes {dimension_semantics = [#tpu.dimension_semantics<parallel>], iteration_bounds = array<i64: 4>, scalar_prefetch = 0 : i64, scratch_operands = 0 : i64, tpu.core_type = #tpu.core_type<tc>, window_params = [{transform_indices = @transform_0, window_bounds = array<i64: 1, 10, 10, 128>}, {pipeline_mode = #tpu.pipeline_mode<synchronous>, transform_indices = @transform_1, window_bounds = array<i64: 3, 3, 128, 128>}, {pipeline_mode = #tpu.pipeline_mode<synchronous>, transform_indices = @transform_2, window_bounds = array<i64: 1, 128>}, {transform_indices = @transform_3, window_bounds = array<i64: 1, 8, 8, 128>}]} {
    %c0 = arith.constant 0 : index
    %c0_0 = arith.constant 0 : index
    %c0_1 = arith.constant 0 : index
    %c0_2 = arith.constant 0 : index
    %0 = vector.load %arg1[%c0, %c0_0, %c0_1, %c0_2] : memref<1x10x10x128xbf16, #tpu.memory_space<vmem>>, vector<1x10x10x128xbf16>
    %1 = vector.shape_cast %0 : vector<1x10x10x128xbf16> to vector<10x10x128xbf16>
    %2 = vector.extract_strided_slice %1 {offsets = [0, 0, 0], sizes = [8, 8, 128], strides = [1, 1, 1]} : vector<10x10x128xbf16> to vector<8x8x128xbf16>
    %3 = vector.shape_cast %2 : vector<8x8x128xbf16> to vector<64x128xbf16>
    %c0_3 = arith.constant 0 : index
    %c0_4 = arith.constant 0 : index
    %c0_5 = arith.constant 0 : index
    %c0_6 = arith.constant 0 : index
    %4 = vector.load %arg2[%c0_3, %c0_4, %c0_5, %c0_6] : memref<3x3x128x128xbf16, #tpu.memory_space<vmem>>, vector<1x1x128x128xbf16>
    %5 = vector.shape_cast %4 : vector<1x1x128x128xbf16> to vector<128x128xbf16>
    %cst = arith.constant dense<0.000000e+00> : vector<64x128xf32>
    %6 = tpu.matmul %3, %5, %cst {dimension_numbers = #tpu.dot_dimension_numbers<[1], [0], [0], [1], [0, 0, 1, 1], [], []>} : vector<64x128xbf16>, vector<128x128xbf16>, vector<64x128xf32> -> vector<64x128xf32>
    %7 = vector.extract_strided_slice %1 {offsets = [0, 1, 0], sizes = [8, 8, 128], strides = [1, 1, 1]} : vector<10x10x128xbf16> to vector<8x8x128xbf16>
    %8 = vector.shape_cast %7 : vector<8x8x128xbf16> to vector<64x128xbf16>
    %c0_7 = arith.constant 0 : index
    %c1 = arith.constant 1 : index
    %c0_8 = arith.constant 0 : index
    %c0_9 = arith.constant 0 : index
    %9 = vector.load %arg2[%c0_7, %c1, %c0_8, %c0_9] : memref<3x3x128x128xbf16, #tpu.memory_space<vmem>>, vector<1x1x128x128xbf16>
    %10 = vector.shape_cast %9 : vector<1x1x128x128xbf16> to vector<128x128xbf16>
    %cst_10 = arith.constant dense<0.000000e+00> : vector<64x128xf32>
    %11 = tpu.matmul %8, %10, %cst_10 {dimension_numbers = #tpu.dot_dimension_numbers<[1], [0], [0], [1], [0, 0, 1, 1], [], []>} : vector<64x128xbf16>, vector<128x128xbf16>, vector<64x128xf32> -> vector<64x128xf32>
    %12 = arith.addf %6, %11 : vector<64x128xf32>
    %13 = vector.extract_strided_slice %1 {offsets = [0, 2, 0], sizes = [8, 8, 128], strides = [1, 1, 1]} : vector<10x10x128xbf16> to vector<8x8x128xbf16>
    %14 = vector.shape_cast %13 : vector<8x8x128xbf16> to vector<64x128xbf16>
    %c0_11 = arith.constant 0 : index
    %c2 = arith.constant 2 : index
    %c0_12 = arith.constant 0 : index
    %c0_13 = arith.constant 0 : index
    %15 = vector.load %arg2[%c0_11, %c2, %c0_12, %c0_13] : memref<3x3x128x128xbf16, #tpu.memory_space<vmem>>, vector<1x1x128x128xbf16>
    %16 = vector.shape_cast %15 : vector<1x1x128x128xbf16> to vector<128x128xbf16>
    %cst_14 = arith.constant dense<0.000000e+00> : vector<64x128xf32>
    %17 = tpu.matmul %14, %16, %cst_14 {dimension_numbers = #tpu.dot_dimension_numbers<[1], [0], [0], [1], [0, 0, 1, 1], [], []>} : vector<64x128xbf16>, vector<128x128xbf16>, vector<64x128xf32> -> vector<64x128xf32>
    %18 = arith.addf %12, %17 : vector<64x128xf32>
    %19 = vector.extract_strided_slice %1 {offsets = [1, 0, 0], sizes = [8, 8, 128], strides = [1, 1, 1]} : vector<10x10x128xbf16> to vector<8x8x128xbf16>
    %20 = vector.shape_cast %19 : vector<8x8x128xbf16> to vector<64x128xbf16>
    %c1_15 = arith.constant 1 : index
    %c0_16 = arith.constant 0 : index
    %c0_17 = arith.constant 0 : index
    %c0_18 = arith.constant 0 : index
    %21 = vector.load %arg2[%c1_15, %c0_16, %c0_17, %c0_18] : memref<3x3x128x128xbf16, #tpu.memory_space<vmem>>, vector<1x1x128x128xbf16>
    %22 = vector.shape_cast %21 : vector<1x1x128x128xbf16> to vector<128x128xbf16>
    %cst_19 = arith.constant dense<0.000000e+00> : vector<64x128xf32>
    %23 = tpu.matmul %20, %22, %cst_19 {dimension_numbers = #tpu.dot_dimension_numbers<[1], [0], [0], [1], [0, 0, 1, 1], [], []>} : vector<64x128xbf16>, vector<128x128xbf16>, vector<64x128xf32> -> vector<64x128xf32>
    %24 = arith.addf %18, %23 : vector<64x128xf32>
    %25 = vector.extract_strided_slice %1 {offsets = [1, 1, 0], sizes = [8, 8, 128], strides = [1, 1, 1]} : vector<10x10x128xbf16> to vector<8x8x128xbf16>
    %26 = vector.shape_cast %25 : vector<8x8x128xbf16> to vector<64x128xbf16>
    %c1_20 = arith.constant 1 : index
    %c1_21 = arith.constant 1 : index
    %c0_22 = arith.constant 0 : index
    %c0_23 = arith.constant 0 : index
    %27 = vector.load %arg2[%c1_20, %c1_21, %c0_22, %c0_23] : memref<3x3x128x128xbf16, #tpu.memory_space<vmem>>, vector<1x1x128x128xbf16>
    %28 = vector.shape_cast %27 : vector<1x1x128x128xbf16> to vector<128x128xbf16>
    %cst_24 = arith.constant dense<0.000000e+00> : vector<64x128xf32>
    %29 = tpu.matmul %26, %28, %cst_24 {dimension_numbers = #tpu.dot_dimension_numbers<[1], [0], [0], [1], [0, 0, 1, 1], [], []>} : vector<64x128xbf16>, vector<128x128xbf16>, vector<64x128xf32> -> vector<64x128xf32>
    %30 = arith.addf %24, %29 : vector<64x128xf32>
    %31 = vector.extract_strided_slice %1 {offsets = [1, 2, 0], sizes = [8, 8, 128], strides = [1, 1, 1]} : vector<10x10x128xbf16> to vector<8x8x128xbf16>
    %32 = vector.shape_cast %31 : vector<8x8x128xbf16> to vector<64x128xbf16>
    %c1_25 = arith.constant 1 : index
    %c2_26 = arith.constant 2 : index
    %c0_27 = arith.constant 0 : index
    %c0_28 = arith.constant 0 : index
    %33 = vector.load %arg2[%c1_25, %c2_26, %c0_27, %c0_28] : memref<3x3x128x128xbf16, #tpu.memory_space<vmem>>, vector<1x1x128x128xbf16>
    %34 = vector.shape_cast %33 : vector<1x1x128x128xbf16> to vector<128x128xbf16>
    %cst_29 = arith.constant dense<0.000000e+00> : vector<64x128xf32>
    %35 = tpu.matmul %32, %34, %cst_29 {dimension_numbers = #tpu.dot_dimension_numbers<[1], [0], [0], [1], [0, 0, 1, 1], [], []>} : vector<64x128xbf16>, vector<128x128xbf16>, vector<64x128xf32> -> vector<64x128xf32>
    %36 = arith.addf %30, %35 : vector<64x128xf32>
    %37 = vector.extract_strided_slice %1 {offsets = [2, 0, 0], sizes = [8, 8, 128], strides = [1, 1, 1]} : vector<10x10x128xbf16> to vector<8x8x128xbf16>
    %38 = vector.shape_cast %37 : vector<8x8x128xbf16> to vector<64x128xbf16>
    %c2_30 = arith.constant 2 : index
    %c0_31 = arith.constant 0 : index
    %c0_32 = arith.constant 0 : index
    %c0_33 = arith.constant 0 : index
    %39 = vector.load %arg2[%c2_30, %c0_31, %c0_32, %c0_33] : memref<3x3x128x128xbf16, #tpu.memory_space<vmem>>, vector<1x1x128x128xbf16>
    %40 = vector.shape_cast %39 : vector<1x1x128x128xbf16> to vector<128x128xbf16>
    %cst_34 = arith.constant dense<0.000000e+00> : vector<64x128xf32>
    %41 = tpu.matmul %38, %40, %cst_34 {dimension_numbers = #tpu.dot_dimension_numbers<[1], [0], [0], [1], [0, 0, 1, 1], [], []>} : vector<64x128xbf16>, vector<128x128xbf16>, vector<64x128xf32> -> vector<64x128xf32>
    %42 = arith.addf %36, %41 : vector<64x128xf32>
    %43 = vector.extract_strided_slice %1 {offsets = [2, 1, 0], sizes = [8, 8, 128], strides = [1, 1, 1]} : vector<10x10x128xbf16> to vector<8x8x128xbf16>
    %44 = vector.shape_cast %43 : vector<8x8x128xbf16> to vector<64x128xbf16>
    %c2_35 = arith.constant 2 : index
    %c1_36 = arith.constant 1 : index
    %c0_37 = arith.constant 0 : index
    %c0_38 = arith.constant 0 : index
    %45 = vector.load %arg2[%c2_35, %c1_36, %c0_37, %c0_38] : memref<3x3x128x128xbf16, #tpu.memory_space<vmem>>, vector<1x1x128x128xbf16>
    %46 = vector.shape_cast %45 : vector<1x1x128x128xbf16> to vector<128x128xbf16>
    %cst_39 = arith.constant dense<0.000000e+00> : vector<64x128xf32>
    %47 = tpu.matmul %44, %46, %cst_39 {dimension_numbers = #tpu.dot_dimension_numbers<[1], [0], [0], [1], [0, 0, 1, 1], [], []>} : vector<64x128xbf16>, vector<128x128xbf16>, vector<64x128xf32> -> vector<64x128xf32>
    %48 = arith.addf %42, %47 : vector<64x128xf32>
    %49 = vector.extract_strided_slice %1 {offsets = [2, 2, 0], sizes = [8, 8, 128], strides = [1, 1, 1]} : vector<10x10x128xbf16> to vector<8x8x128xbf16>
    %50 = vector.shape_cast %49 : vector<8x8x128xbf16> to vector<64x128xbf16>
    %c2_40 = arith.constant 2 : index
    %c2_41 = arith.constant 2 : index
    %c0_42 = arith.constant 0 : index
    %c0_43 = arith.constant 0 : index
    %51 = vector.load %arg2[%c2_40, %c2_41, %c0_42, %c0_43] : memref<3x3x128x128xbf16, #tpu.memory_space<vmem>>, vector<1x1x128x128xbf16>
    %52 = vector.shape_cast %51 : vector<1x1x128x128xbf16> to vector<128x128xbf16>
    %cst_44 = arith.constant dense<0.000000e+00> : vector<64x128xf32>
    %53 = tpu.matmul %50, %52, %cst_44 {dimension_numbers = #tpu.dot_dimension_numbers<[1], [0], [0], [1], [0, 0, 1, 1], [], []>} : vector<64x128xbf16>, vector<128x128xbf16>, vector<64x128xf32> -> vector<64x128xf32>
    %54 = arith.addf %48, %53 : vector<64x128xf32>
    %c0_45 = arith.constant 0 : index
    %c0_46 = arith.constant 0 : index
    %55 = vector.load %arg3[%c0_45, %c0_46] : memref<1x128xf32, #tpu.memory_space<vmem>>, vector<1x128xf32>
    %56 = vector.broadcast %55 : vector<1x128xf32> to vector<64x128xf32>
    %57 = arith.addf %54, %56 : vector<64x128xf32>
    %cst_47 = arith.constant 0.000000e+00 : f32
    %58 = vector.broadcast %cst_47 : f32 to vector<64x128xf32>
    %59 = arith.maximumf %57, %58 : vector<64x128xf32>
    %60 = vector.shape_cast %59 : vector<64x128xf32> to vector<1x8x8x128xf32>
    %61 = arith.truncf %60 : vector<1x8x8x128xf32> to vector<1x8x8x128xbf16>
    %c0_48 = arith.constant 0 : index
    %c0_49 = arith.constant 0 : index
    %c0_50 = arith.constant 0 : index
    %c0_51 = arith.constant 0 : index
    %62 = vector.load %arg4[%c0_48, %c0_49, %c0_50, %c0_51] : memref<1x8x8x128xbf16, #tpu.memory_space<vmem>>, vector<1x8x8x128xbf16>
    tpu.vector_store %arg4[%c0_48, %c0_49, %c0_50, %c0_51], %61 {strides = array<i32>} : memref<1x8x8x128xbf16, #tpu.memory_space<vmem>>, vector<1x8x8x128xbf16>,
    return
  }
  func.func @transform_0(%arg0: i32) -> (i32, i32, i32, i32) {
    %c0_i32 = arith.constant 0 : i32
    %c0_i32_0 = arith.constant 0 : i32
    %c0_i32_1 = arith.constant 0 : i32
    %c0_i32_2 = arith.constant 0 : i32
    return %arg0, %c0_i32, %c0_i32_0, %c0_i32_1 : i32, i32, i32, i32
  }
  func.func @transform_1(%arg0: i32) -> (i32, i32, i32, i32) {
    %c0_i32 = arith.constant 0 : i32
    %c0_i32_0 = arith.constant 0 : i32
    %c0_i32_1 = arith.constant 0 : i32
    %c0_i32_2 = arith.constant 0 : i32
    %c0_i32_3 = arith.constant 0 : i32
    return %c0_i32, %c0_i32_0, %c0_i32_1, %c0_i32_2 : i32, i32, i32, i32
  }
  func.func @transform_2(%arg0: i32) -> (i32, i32) {
    %c0_i32 = arith.constant 0 : i32
    %c0_i32_0 = arith.constant 0 : i32
    %c0_i32_1 = arith.constant 0 : i32
    return %c0_i32, %c0_i32_0 : i32, i32
  }
  func.func @transform_3(%arg0: i32) -> (i32, i32, i32, i32) {
    %c0_i32 = arith.constant 0 : i32
    %c0_i32_0 = arith.constant 0 : i32
    %c0_i32_1 = arith.constant 0 : i32
    %c0_i32_2 = arith.constant 0 : i32
    return %arg0, %c0_i32, %c0_i32_0, %c0_i32_1 : i32, i32, i32, i32
  }
}

module attributes {stable_mosaic.version = 11 : i64} {
  func.func @_conv3x3_relu_kernel(%arg0: i32, %arg1: memref<1x6x6x128xbf16, #tpu.memory_space<vmem>>, %arg2: memref<3x3x128x256xbf16, #tpu.memory_space<vmem>>, %arg3: memref<1x256xf32, #tpu.memory_space<vmem>>, %arg4: memref<1x4x4x256xbf16, #tpu.memory_space<vmem>>) attributes {dimension_semantics = [#tpu.dimension_semantics<parallel>], iteration_bounds = array<i64: 4>, scalar_prefetch = 0 : i64, scratch_operands = 0 : i64, tpu.core_type = #tpu.core_type<tc>, window_params = [{transform_indices = @transform_0, window_bounds = array<i64: 1, 6, 6, 128>}, {pipeline_mode = #tpu.pipeline_mode<synchronous>, transform_indices = @transform_1, window_bounds = array<i64: 3, 3, 128, 256>}, {pipeline_mode = #tpu.pipeline_mode<synchronous>, transform_indices = @transform_2, window_bounds = array<i64: 1, 256>}, {transform_indices = @transform_3, window_bounds = array<i64: 1, 4, 4, 256>}]} {
    %c0 = arith.constant 0 : index
    %c0_0 = arith.constant 0 : index
    %c0_1 = arith.constant 0 : index
    %c0_2 = arith.constant 0 : index
    %0 = vector.load %arg1[%c0, %c0_0, %c0_1, %c0_2] : memref<1x6x6x128xbf16, #tpu.memory_space<vmem>>, vector<1x6x6x128xbf16>
    %1 = vector.shape_cast %0 : vector<1x6x6x128xbf16> to vector<6x6x128xbf16>
    %2 = vector.extract_strided_slice %1 {offsets = [0, 0, 0], sizes = [4, 4, 128], strides = [1, 1, 1]} : vector<6x6x128xbf16> to vector<4x4x128xbf16>
    %3 = vector.shape_cast %2 : vector<4x4x128xbf16> to vector<16x128xbf16>
    %c0_3 = arith.constant 0 : index
    %c0_4 = arith.constant 0 : index
    %c0_5 = arith.constant 0 : index
    %c0_6 = arith.constant 0 : index
    %4 = vector.load %arg2[%c0_3, %c0_4, %c0_5, %c0_6] : memref<3x3x128x256xbf16, #tpu.memory_space<vmem>>, vector<1x1x128x256xbf16>
    %5 = vector.shape_cast %4 : vector<1x1x128x256xbf16> to vector<128x256xbf16>
    %cst = arith.constant dense<0.000000e+00> : vector<16x256xf32>
    %6 = tpu.matmul %3, %5, %cst {dimension_numbers = #tpu.dot_dimension_numbers<[1], [0], [0], [1], [0, 0, 1, 1], [], []>} : vector<16x128xbf16>, vector<128x256xbf16>, vector<16x256xf32> -> vector<16x256xf32>
    %7 = vector.extract_strided_slice %1 {offsets = [0, 1, 0], sizes = [4, 4, 128], strides = [1, 1, 1]} : vector<6x6x128xbf16> to vector<4x4x128xbf16>
    %8 = vector.shape_cast %7 : vector<4x4x128xbf16> to vector<16x128xbf16>
    %c0_7 = arith.constant 0 : index
    %c1 = arith.constant 1 : index
    %c0_8 = arith.constant 0 : index
    %c0_9 = arith.constant 0 : index
    %9 = vector.load %arg2[%c0_7, %c1, %c0_8, %c0_9] : memref<3x3x128x256xbf16, #tpu.memory_space<vmem>>, vector<1x1x128x256xbf16>
    %10 = vector.shape_cast %9 : vector<1x1x128x256xbf16> to vector<128x256xbf16>
    %cst_10 = arith.constant dense<0.000000e+00> : vector<16x256xf32>
    %11 = tpu.matmul %8, %10, %cst_10 {dimension_numbers = #tpu.dot_dimension_numbers<[1], [0], [0], [1], [0, 0, 1, 1], [], []>} : vector<16x128xbf16>, vector<128x256xbf16>, vector<16x256xf32> -> vector<16x256xf32>
    %12 = arith.addf %6, %11 : vector<16x256xf32>
    %13 = vector.extract_strided_slice %1 {offsets = [0, 2, 0], sizes = [4, 4, 128], strides = [1, 1, 1]} : vector<6x6x128xbf16> to vector<4x4x128xbf16>
    %14 = vector.shape_cast %13 : vector<4x4x128xbf16> to vector<16x128xbf16>
    %c0_11 = arith.constant 0 : index
    %c2 = arith.constant 2 : index
    %c0_12 = arith.constant 0 : index
    %c0_13 = arith.constant 0 : index
    %15 = vector.load %arg2[%c0_11, %c2, %c0_12, %c0_13] : memref<3x3x128x256xbf16, #tpu.memory_space<vmem>>, vector<1x1x128x256xbf16>
    %16 = vector.shape_cast %15 : vector<1x1x128x256xbf16> to vector<128x256xbf16>
    %cst_14 = arith.constant dense<0.000000e+00> : vector<16x256xf32>
    %17 = tpu.matmul %14, %16, %cst_14 {dimension_numbers = #tpu.dot_dimension_numbers<[1], [0], [0], [1], [0, 0, 1, 1], [], []>} : vector<16x128xbf16>, vector<128x256xbf16>, vector<16x256xf32> -> vector<16x256xf32>
    %18 = arith.addf %12, %17 : vector<16x256xf32>
    %19 = vector.extract_strided_slice %1 {offsets = [1, 0, 0], sizes = [4, 4, 128], strides = [1, 1, 1]} : vector<6x6x128xbf16> to vector<4x4x128xbf16>
    %20 = vector.shape_cast %19 : vector<4x4x128xbf16> to vector<16x128xbf16>
    %c1_15 = arith.constant 1 : index
    %c0_16 = arith.constant 0 : index
    %c0_17 = arith.constant 0 : index
    %c0_18 = arith.constant 0 : index
    %21 = vector.load %arg2[%c1_15, %c0_16, %c0_17, %c0_18] : memref<3x3x128x256xbf16, #tpu.memory_space<vmem>>, vector<1x1x128x256xbf16>
    %22 = vector.shape_cast %21 : vector<1x1x128x256xbf16> to vector<128x256xbf16>
    %cst_19 = arith.constant dense<0.000000e+00> : vector<16x256xf32>
    %23 = tpu.matmul %20, %22, %cst_19 {dimension_numbers = #tpu.dot_dimension_numbers<[1], [0], [0], [1], [0, 0, 1, 1], [], []>} : vector<16x128xbf16>, vector<128x256xbf16>, vector<16x256xf32> -> vector<16x256xf32>
    %24 = arith.addf %18, %23 : vector<16x256xf32>
    %25 = vector.extract_strided_slice %1 {offsets = [1, 1, 0], sizes = [4, 4, 128], strides = [1, 1, 1]} : vector<6x6x128xbf16> to vector<4x4x128xbf16>
    %26 = vector.shape_cast %25 : vector<4x4x128xbf16> to vector<16x128xbf16>
    %c1_20 = arith.constant 1 : index
    %c1_21 = arith.constant 1 : index
    %c0_22 = arith.constant 0 : index
    %c0_23 = arith.constant 0 : index
    %27 = vector.load %arg2[%c1_20, %c1_21, %c0_22, %c0_23] : memref<3x3x128x256xbf16, #tpu.memory_space<vmem>>, vector<1x1x128x256xbf16>
    %28 = vector.shape_cast %27 : vector<1x1x128x256xbf16> to vector<128x256xbf16>
    %cst_24 = arith.constant dense<0.000000e+00> : vector<16x256xf32>
    %29 = tpu.matmul %26, %28, %cst_24 {dimension_numbers = #tpu.dot_dimension_numbers<[1], [0], [0], [1], [0, 0, 1, 1], [], []>} : vector<16x128xbf16>, vector<128x256xbf16>, vector<16x256xf32> -> vector<16x256xf32>
    %30 = arith.addf %24, %29 : vector<16x256xf32>
    %31 = vector.extract_strided_slice %1 {offsets = [1, 2, 0], sizes = [4, 4, 128], strides = [1, 1, 1]} : vector<6x6x128xbf16> to vector<4x4x128xbf16>
    %32 = vector.shape_cast %31 : vector<4x4x128xbf16> to vector<16x128xbf16>
    %c1_25 = arith.constant 1 : index
    %c2_26 = arith.constant 2 : index
    %c0_27 = arith.constant 0 : index
    %c0_28 = arith.constant 0 : index
    %33 = vector.load %arg2[%c1_25, %c2_26, %c0_27, %c0_28] : memref<3x3x128x256xbf16, #tpu.memory_space<vmem>>, vector<1x1x128x256xbf16>
    %34 = vector.shape_cast %33 : vector<1x1x128x256xbf16> to vector<128x256xbf16>
    %cst_29 = arith.constant dense<0.000000e+00> : vector<16x256xf32>
    %35 = tpu.matmul %32, %34, %cst_29 {dimension_numbers = #tpu.dot_dimension_numbers<[1], [0], [0], [1], [0, 0, 1, 1], [], []>} : vector<16x128xbf16>, vector<128x256xbf16>, vector<16x256xf32> -> vector<16x256xf32>
    %36 = arith.addf %30, %35 : vector<16x256xf32>
    %37 = vector.extract_strided_slice %1 {offsets = [2, 0, 0], sizes = [4, 4, 128], strides = [1, 1, 1]} : vector<6x6x128xbf16> to vector<4x4x128xbf16>
    %38 = vector.shape_cast %37 : vector<4x4x128xbf16> to vector<16x128xbf16>
    %c2_30 = arith.constant 2 : index
    %c0_31 = arith.constant 0 : index
    %c0_32 = arith.constant 0 : index
    %c0_33 = arith.constant 0 : index
    %39 = vector.load %arg2[%c2_30, %c0_31, %c0_32, %c0_33] : memref<3x3x128x256xbf16, #tpu.memory_space<vmem>>, vector<1x1x128x256xbf16>
    %40 = vector.shape_cast %39 : vector<1x1x128x256xbf16> to vector<128x256xbf16>
    %cst_34 = arith.constant dense<0.000000e+00> : vector<16x256xf32>
    %41 = tpu.matmul %38, %40, %cst_34 {dimension_numbers = #tpu.dot_dimension_numbers<[1], [0], [0], [1], [0, 0, 1, 1], [], []>} : vector<16x128xbf16>, vector<128x256xbf16>, vector<16x256xf32> -> vector<16x256xf32>
    %42 = arith.addf %36, %41 : vector<16x256xf32>
    %43 = vector.extract_strided_slice %1 {offsets = [2, 1, 0], sizes = [4, 4, 128], strides = [1, 1, 1]} : vector<6x6x128xbf16> to vector<4x4x128xbf16>
    %44 = vector.shape_cast %43 : vector<4x4x128xbf16> to vector<16x128xbf16>
    %c2_35 = arith.constant 2 : index
    %c1_36 = arith.constant 1 : index
    %c0_37 = arith.constant 0 : index
    %c0_38 = arith.constant 0 : index
    %45 = vector.load %arg2[%c2_35, %c1_36, %c0_37, %c0_38] : memref<3x3x128x256xbf16, #tpu.memory_space<vmem>>, vector<1x1x128x256xbf16>
    %46 = vector.shape_cast %45 : vector<1x1x128x256xbf16> to vector<128x256xbf16>
    %cst_39 = arith.constant dense<0.000000e+00> : vector<16x256xf32>
    %47 = tpu.matmul %44, %46, %cst_39 {dimension_numbers = #tpu.dot_dimension_numbers<[1], [0], [0], [1], [0, 0, 1, 1], [], []>} : vector<16x128xbf16>, vector<128x256xbf16>, vector<16x256xf32> -> vector<16x256xf32>
    %48 = arith.addf %42, %47 : vector<16x256xf32>
    %49 = vector.extract_strided_slice %1 {offsets = [2, 2, 0], sizes = [4, 4, 128], strides = [1, 1, 1]} : vector<6x6x128xbf16> to vector<4x4x128xbf16>
    %50 = vector.shape_cast %49 : vector<4x4x128xbf16> to vector<16x128xbf16>
    %c2_40 = arith.constant 2 : index
    %c2_41 = arith.constant 2 : index
    %c0_42 = arith.constant 0 : index
    %c0_43 = arith.constant 0 : index
    %51 = vector.load %arg2[%c2_40, %c2_41, %c0_42, %c0_43] : memref<3x3x128x256xbf16, #tpu.memory_space<vmem>>, vector<1x1x128x256xbf16>
    %52 = vector.shape_cast %51 : vector<1x1x128x256xbf16> to vector<128x256xbf16>
    %cst_44 = arith.constant dense<0.000000e+00> : vector<16x256xf32>
    %53 = tpu.matmul %50, %52, %cst_44 {dimension_numbers = #tpu.dot_dimension_numbers<[1], [0], [0], [1], [0, 0, 1, 1], [], []>} : vector<16x128xbf16>, vector<128x256xbf16>, vector<16x256xf32> -> vector<16x256xf32>
    %54 = arith.addf %48, %53 : vector<16x256xf32>
    %c0_45 = arith.constant 0 : index
    %c0_46 = arith.constant 0 : index
    %55 = vector.load %arg3[%c0_45, %c0_46] : memref<1x256xf32, #tpu.memory_space<vmem>>, vector<1x256xf32>
    %56 = vector.broadcast %55 : vector<1x256xf32> to vector<16x256xf32>
    %57 = arith.addf %54, %56 : vector<16x256xf32>
    %cst_47 = arith.constant 0.000000e+00 : f32
    %58 = vector.broadcast %cst_47 : f32 to vector<16x256xf32>
    %59 = arith.maximumf %57, %58 : vector<16x256xf32>
    %60 = vector.shape_cast %59 : vector<16x256xf32> to vector<1x4x4x256xf32>
    %61 = arith.truncf %60 : vector<1x4x4x256xf32> to vector<1x4x4x256xbf16>
    %c0_48 = arith.constant 0 : index
    %c0_49 = arith.constant 0 : index
    %c0_50 = arith.constant 0 : index
    %c0_51 = arith.constant 0 : index
    %62 = vector.load %arg4[%c0_48, %c0_49, %c0_50, %c0_51] : memref<1x4x4x256xbf16, #tpu.memory_space<vmem>>, vector<1x4x4x256xbf16>
    tpu.vector_store %arg4[%c0_48, %c0_49, %c0_50, %c0_51], %61 {strides = array<i32>} : memref<1x4x4x256xbf16, #tpu.memory_space<vmem>>, vector<1x4x4x256xbf16>,
    return
  }
  func.func @transform_0(%arg0: i32) -> (i32, i32, i32, i32) {
    %c0_i32 = arith.constant 0 : i32
    %c0_i32_0 = arith.constant 0 : i32
    %c0_i32_1 = arith.constant 0 : i32
    %c0_i32_2 = arith.constant 0 : i32
    return %arg0, %c0_i32, %c0_i32_0, %c0_i32_1 : i32, i32, i32, i32
  }
  func.func @transform_1(%arg0: i32) -> (i32, i32, i32, i32) {
    %c0_i32 = arith.constant 0 : i32
    %c0_i32_0 = arith.constant 0 : i32
    %c0_i32_1 = arith.constant 0 : i32
    %c0_i32_2 = arith.constant 0 : i32
    %c0_i32_3 = arith.constant 0 : i32
    return %c0_i32, %c0_i32_0, %c0_i32_1, %c0_i32_2 : i32, i32, i32, i32
  }
  func.func @transform_2(%arg0: i32) -> (i32, i32) {
    %c0_i32 = arith.constant 0 : i32
    %c0_i32_0 = arith.constant 0 : i32
    %c0_i32_1 = arith.constant 0 : i32
    return %c0_i32, %c0_i32_0 : i32, i32
  }
  func.func @transform_3(%arg0: i32) -> (i32, i32, i32, i32) {
    %c0_i32 = arith.constant 0 : i32
    %c0_i32_0 = arith.constant 0 : i32
    %c0_i32_1 = arith.constant 0 : i32
    %c0_i32_2 = arith.constant 0 : i32
    return %arg0, %c0_i32, %c0_i32_0, %c0_i32_1 : i32, i32, i32, i32
  }
}

module attributes {stable_mosaic.version = 11 : i64} {
  func.func @_conv3x3_relu_kernel(%arg0: i32, %arg1: memref<1x6x6x256xbf16, #tpu.memory_space<vmem>>, %arg2: memref<3x3x256x256xbf16, #tpu.memory_space<vmem>>, %arg3: memref<1x256xf32, #tpu.memory_space<vmem>>, %arg4: memref<1x4x4x256xbf16, #tpu.memory_space<vmem>>) attributes {dimension_semantics = [#tpu.dimension_semantics<parallel>], iteration_bounds = array<i64: 4>, scalar_prefetch = 0 : i64, scratch_operands = 0 : i64, tpu.core_type = #tpu.core_type<tc>, window_params = [{transform_indices = @transform_0, window_bounds = array<i64: 1, 6, 6, 256>}, {pipeline_mode = #tpu.pipeline_mode<synchronous>, transform_indices = @transform_1, window_bounds = array<i64: 3, 3, 256, 256>}, {pipeline_mode = #tpu.pipeline_mode<synchronous>, transform_indices = @transform_2, window_bounds = array<i64: 1, 256>}, {transform_indices = @transform_3, window_bounds = array<i64: 1, 4, 4, 256>}]} {
    %c0 = arith.constant 0 : index
    %c0_0 = arith.constant 0 : index
    %c0_1 = arith.constant 0 : index
    %c0_2 = arith.constant 0 : index
    %0 = vector.load %arg1[%c0, %c0_0, %c0_1, %c0_2] : memref<1x6x6x256xbf16, #tpu.memory_space<vmem>>, vector<1x6x6x256xbf16>
    %1 = vector.shape_cast %0 : vector<1x6x6x256xbf16> to vector<6x6x256xbf16>
    %2 = vector.extract_strided_slice %1 {offsets = [0, 0, 0], sizes = [4, 4, 256], strides = [1, 1, 1]} : vector<6x6x256xbf16> to vector<4x4x256xbf16>
    %3 = vector.shape_cast %2 : vector<4x4x256xbf16> to vector<16x256xbf16>
    %c0_3 = arith.constant 0 : index
    %c0_4 = arith.constant 0 : index
    %c0_5 = arith.constant 0 : index
    %c0_6 = arith.constant 0 : index
    %4 = vector.load %arg2[%c0_3, %c0_4, %c0_5, %c0_6] : memref<3x3x256x256xbf16, #tpu.memory_space<vmem>>, vector<1x1x256x256xbf16>
    %5 = vector.shape_cast %4 : vector<1x1x256x256xbf16> to vector<256x256xbf16>
    %cst = arith.constant dense<0.000000e+00> : vector<16x256xf32>
    %6 = tpu.matmul %3, %5, %cst {dimension_numbers = #tpu.dot_dimension_numbers<[1], [0], [0], [1], [0, 0, 1, 1], [], []>} : vector<16x256xbf16>, vector<256x256xbf16>, vector<16x256xf32> -> vector<16x256xf32>
    %7 = vector.extract_strided_slice %1 {offsets = [0, 1, 0], sizes = [4, 4, 256], strides = [1, 1, 1]} : vector<6x6x256xbf16> to vector<4x4x256xbf16>
    %8 = vector.shape_cast %7 : vector<4x4x256xbf16> to vector<16x256xbf16>
    %c0_7 = arith.constant 0 : index
    %c1 = arith.constant 1 : index
    %c0_8 = arith.constant 0 : index
    %c0_9 = arith.constant 0 : index
    %9 = vector.load %arg2[%c0_7, %c1, %c0_8, %c0_9] : memref<3x3x256x256xbf16, #tpu.memory_space<vmem>>, vector<1x1x256x256xbf16>
    %10 = vector.shape_cast %9 : vector<1x1x256x256xbf16> to vector<256x256xbf16>
    %cst_10 = arith.constant dense<0.000000e+00> : vector<16x256xf32>
    %11 = tpu.matmul %8, %10, %cst_10 {dimension_numbers = #tpu.dot_dimension_numbers<[1], [0], [0], [1], [0, 0, 1, 1], [], []>} : vector<16x256xbf16>, vector<256x256xbf16>, vector<16x256xf32> -> vector<16x256xf32>
    %12 = arith.addf %6, %11 : vector<16x256xf32>
    %13 = vector.extract_strided_slice %1 {offsets = [0, 2, 0], sizes = [4, 4, 256], strides = [1, 1, 1]} : vector<6x6x256xbf16> to vector<4x4x256xbf16>
    %14 = vector.shape_cast %13 : vector<4x4x256xbf16> to vector<16x256xbf16>
    %c0_11 = arith.constant 0 : index
    %c2 = arith.constant 2 : index
    %c0_12 = arith.constant 0 : index
    %c0_13 = arith.constant 0 : index
    %15 = vector.load %arg2[%c0_11, %c2, %c0_12, %c0_13] : memref<3x3x256x256xbf16, #tpu.memory_space<vmem>>, vector<1x1x256x256xbf16>
    %16 = vector.shape_cast %15 : vector<1x1x256x256xbf16> to vector<256x256xbf16>
    %cst_14 = arith.constant dense<0.000000e+00> : vector<16x256xf32>
    %17 = tpu.matmul %14, %16, %cst_14 {dimension_numbers = #tpu.dot_dimension_numbers<[1], [0], [0], [1], [0, 0, 1, 1], [], []>} : vector<16x256xbf16>, vector<256x256xbf16>, vector<16x256xf32> -> vector<16x256xf32>
    %18 = arith.addf %12, %17 : vector<16x256xf32>
    %19 = vector.extract_strided_slice %1 {offsets = [1, 0, 0], sizes = [4, 4, 256], strides = [1, 1, 1]} : vector<6x6x256xbf16> to vector<4x4x256xbf16>
    %20 = vector.shape_cast %19 : vector<4x4x256xbf16> to vector<16x256xbf16>
    %c1_15 = arith.constant 1 : index
    %c0_16 = arith.constant 0 : index
    %c0_17 = arith.constant 0 : index
    %c0_18 = arith.constant 0 : index
    %21 = vector.load %arg2[%c1_15, %c0_16, %c0_17, %c0_18] : memref<3x3x256x256xbf16, #tpu.memory_space<vmem>>, vector<1x1x256x256xbf16>
    %22 = vector.shape_cast %21 : vector<1x1x256x256xbf16> to vector<256x256xbf16>
    %cst_19 = arith.constant dense<0.000000e+00> : vector<16x256xf32>
    %23 = tpu.matmul %20, %22, %cst_19 {dimension_numbers = #tpu.dot_dimension_numbers<[1], [0], [0], [1], [0, 0, 1, 1], [], []>} : vector<16x256xbf16>, vector<256x256xbf16>, vector<16x256xf32> -> vector<16x256xf32>
    %24 = arith.addf %18, %23 : vector<16x256xf32>
    %25 = vector.extract_strided_slice %1 {offsets = [1, 1, 0], sizes = [4, 4, 256], strides = [1, 1, 1]} : vector<6x6x256xbf16> to vector<4x4x256xbf16>
    %26 = vector.shape_cast %25 : vector<4x4x256xbf16> to vector<16x256xbf16>
    %c1_20 = arith.constant 1 : index
    %c1_21 = arith.constant 1 : index
    %c0_22 = arith.constant 0 : index
    %c0_23 = arith.constant 0 : index
    %27 = vector.load %arg2[%c1_20, %c1_21, %c0_22, %c0_23] : memref<3x3x256x256xbf16, #tpu.memory_space<vmem>>, vector<1x1x256x256xbf16>
    %28 = vector.shape_cast %27 : vector<1x1x256x256xbf16> to vector<256x256xbf16>
    %cst_24 = arith.constant dense<0.000000e+00> : vector<16x256xf32>
    %29 = tpu.matmul %26, %28, %cst_24 {dimension_numbers = #tpu.dot_dimension_numbers<[1], [0], [0], [1], [0, 0, 1, 1], [], []>} : vector<16x256xbf16>, vector<256x256xbf16>, vector<16x256xf32> -> vector<16x256xf32>
    %30 = arith.addf %24, %29 : vector<16x256xf32>
    %31 = vector.extract_strided_slice %1 {offsets = [1, 2, 0], sizes = [4, 4, 256], strides = [1, 1, 1]} : vector<6x6x256xbf16> to vector<4x4x256xbf16>
    %32 = vector.shape_cast %31 : vector<4x4x256xbf16> to vector<16x256xbf16>
    %c1_25 = arith.constant 1 : index
    %c2_26 = arith.constant 2 : index
    %c0_27 = arith.constant 0 : index
    %c0_28 = arith.constant 0 : index
    %33 = vector.load %arg2[%c1_25, %c2_26, %c0_27, %c0_28] : memref<3x3x256x256xbf16, #tpu.memory_space<vmem>>, vector<1x1x256x256xbf16>
    %34 = vector.shape_cast %33 : vector<1x1x256x256xbf16> to vector<256x256xbf16>
    %cst_29 = arith.constant dense<0.000000e+00> : vector<16x256xf32>
    %35 = tpu.matmul %32, %34, %cst_29 {dimension_numbers = #tpu.dot_dimension_numbers<[1], [0], [0], [1], [0, 0, 1, 1], [], []>} : vector<16x256xbf16>, vector<256x256xbf16>, vector<16x256xf32> -> vector<16x256xf32>
    %36 = arith.addf %30, %35 : vector<16x256xf32>
    %37 = vector.extract_strided_slice %1 {offsets = [2, 0, 0], sizes = [4, 4, 256], strides = [1, 1, 1]} : vector<6x6x256xbf16> to vector<4x4x256xbf16>
    %38 = vector.shape_cast %37 : vector<4x4x256xbf16> to vector<16x256xbf16>
    %c2_30 = arith.constant 2 : index
    %c0_31 = arith.constant 0 : index
    %c0_32 = arith.constant 0 : index
    %c0_33 = arith.constant 0 : index
    %39 = vector.load %arg2[%c2_30, %c0_31, %c0_32, %c0_33] : memref<3x3x256x256xbf16, #tpu.memory_space<vmem>>, vector<1x1x256x256xbf16>
    %40 = vector.shape_cast %39 : vector<1x1x256x256xbf16> to vector<256x256xbf16>
    %cst_34 = arith.constant dense<0.000000e+00> : vector<16x256xf32>
    %41 = tpu.matmul %38, %40, %cst_34 {dimension_numbers = #tpu.dot_dimension_numbers<[1], [0], [0], [1], [0, 0, 1, 1], [], []>} : vector<16x256xbf16>, vector<256x256xbf16>, vector<16x256xf32> -> vector<16x256xf32>
    %42 = arith.addf %36, %41 : vector<16x256xf32>
    %43 = vector.extract_strided_slice %1 {offsets = [2, 1, 0], sizes = [4, 4, 256], strides = [1, 1, 1]} : vector<6x6x256xbf16> to vector<4x4x256xbf16>
    %44 = vector.shape_cast %43 : vector<4x4x256xbf16> to vector<16x256xbf16>
    %c2_35 = arith.constant 2 : index
    %c1_36 = arith.constant 1 : index
    %c0_37 = arith.constant 0 : index
    %c0_38 = arith.constant 0 : index
    %45 = vector.load %arg2[%c2_35, %c1_36, %c0_37, %c0_38] : memref<3x3x256x256xbf16, #tpu.memory_space<vmem>>, vector<1x1x256x256xbf16>
    %46 = vector.shape_cast %45 : vector<1x1x256x256xbf16> to vector<256x256xbf16>
    %cst_39 = arith.constant dense<0.000000e+00> : vector<16x256xf32>
    %47 = tpu.matmul %44, %46, %cst_39 {dimension_numbers = #tpu.dot_dimension_numbers<[1], [0], [0], [1], [0, 0, 1, 1], [], []>} : vector<16x256xbf16>, vector<256x256xbf16>, vector<16x256xf32> -> vector<16x256xf32>
    %48 = arith.addf %42, %47 : vector<16x256xf32>
    %49 = vector.extract_strided_slice %1 {offsets = [2, 2, 0], sizes = [4, 4, 256], strides = [1, 1, 1]} : vector<6x6x256xbf16> to vector<4x4x256xbf16>
    %50 = vector.shape_cast %49 : vector<4x4x256xbf16> to vector<16x256xbf16>
    %c2_40 = arith.constant 2 : index
    %c2_41 = arith.constant 2 : index
    %c0_42 = arith.constant 0 : index
    %c0_43 = arith.constant 0 : index
    %51 = vector.load %arg2[%c2_40, %c2_41, %c0_42, %c0_43] : memref<3x3x256x256xbf16, #tpu.memory_space<vmem>>, vector<1x1x256x256xbf16>
    %52 = vector.shape_cast %51 : vector<1x1x256x256xbf16> to vector<256x256xbf16>
    %cst_44 = arith.constant dense<0.000000e+00> : vector<16x256xf32>
    %53 = tpu.matmul %50, %52, %cst_44 {dimension_numbers = #tpu.dot_dimension_numbers<[1], [0], [0], [1], [0, 0, 1, 1], [], []>} : vector<16x256xbf16>, vector<256x256xbf16>, vector<16x256xf32> -> vector<16x256xf32>
    %54 = arith.addf %48, %53 : vector<16x256xf32>
    %c0_45 = arith.constant 0 : index
    %c0_46 = arith.constant 0 : index
    %55 = vector.load %arg3[%c0_45, %c0_46] : memref<1x256xf32, #tpu.memory_space<vmem>>, vector<1x256xf32>
    %56 = vector.broadcast %55 : vector<1x256xf32> to vector<16x256xf32>
    %57 = arith.addf %54, %56 : vector<16x256xf32>
    %cst_47 = arith.constant 0.000000e+00 : f32
    %58 = vector.broadcast %cst_47 : f32 to vector<16x256xf32>
    %59 = arith.maximumf %57, %58 : vector<16x256xf32>
    %60 = vector.shape_cast %59 : vector<16x256xf32> to vector<1x4x4x256xf32>
    %61 = arith.truncf %60 : vector<1x4x4x256xf32> to vector<1x4x4x256xbf16>
    %c0_48 = arith.constant 0 : index
    %c0_49 = arith.constant 0 : index
    %c0_50 = arith.constant 0 : index
    %c0_51 = arith.constant 0 : index
    %62 = vector.load %arg4[%c0_48, %c0_49, %c0_50, %c0_51] : memref<1x4x4x256xbf16, #tpu.memory_space<vmem>>, vector<1x4x4x256xbf16>
    tpu.vector_store %arg4[%c0_48, %c0_49, %c0_50, %c0_51], %61 {strides = array<i32>} : memref<1x4x4x256xbf16, #tpu.memory_space<vmem>>, vector<1x4x4x256xbf16>,
    return
  }
  func.func @transform_0(%arg0: i32) -> (i32, i32, i32, i32) {
    %c0_i32 = arith.constant 0 : i32
    %c0_i32_0 = arith.constant 0 : i32
    %c0_i32_1 = arith.constant 0 : i32
    %c0_i32_2 = arith.constant 0 : i32
    return %arg0, %c0_i32, %c0_i32_0, %c0_i32_1 : i32, i32, i32, i32
  }
  func.func @transform_1(%arg0: i32) -> (i32, i32, i32, i32) {
    %c0_i32 = arith.constant 0 : i32
    %c0_i32_0 = arith.constant 0 : i32
    %c0_i32_1 = arith.constant 0 : i32
    %c0_i32_2 = arith.constant 0 : i32
    %c0_i32_3 = arith.constant 0 : i32
    return %c0_i32, %c0_i32_0, %c0_i32_1, %c0_i32_2 : i32, i32, i32, i32
  }
  func.func @transform_2(%arg0: i32) -> (i32, i32) {
    %c0_i32 = arith.constant 0 : i32
    %c0_i32_0 = arith.constant 0 : i32
    %c0_i32_1 = arith.constant 0 : i32
    return %c0_i32, %c0_i32_0 : i32, i32
  }
  func.func @transform_3(%arg0: i32) -> (i32, i32, i32, i32) {
    %c0_i32 = arith.constant 0 : i32
    %c0_i32_0 = arith.constant 0 : i32
    %c0_i32_1 = arith.constant 0 : i32
    %c0_i32_2 = arith.constant 0 : i32
    return %arg0, %c0_i32, %c0_i32_0, %c0_i32_1 : i32, i32, i32, i32
  }
}

module attributes {stable_mosaic.version = 11 : i64} {
  func.func @_sq_diff_partial_kernel(%arg0: i32, %arg1: memref<1x16x512xbf16, #tpu.memory_space<vmem>>, %arg2: memref<1x16x512xbf16, #tpu.memory_space<vmem>>, %arg3: memref<1x1x512xf32, #tpu.memory_space<vmem>>) attributes {dimension_semantics = [#tpu.dimension_semantics<parallel>], iteration_bounds = array<i64: 1>, scalar_prefetch = 0 : i64, scratch_operands = 0 : i64, tpu.core_type = #tpu.core_type<tc>, window_params = [{transform_indices = @transform_0, window_bounds = array<i64: 1, 16, 512>}, {transform_indices = @transform_1, window_bounds = array<i64: 1, 16, 512>}, {transform_indices = @transform_2, window_bounds = array<i64: 1, 1, 512>}]} {
    %c0 = arith.constant 0 : index
    %c0_0 = arith.constant 0 : index
    %c0_1 = arith.constant 0 : index
    %0 = vector.load %arg1[%c0, %c0_0, %c0_1] : memref<1x16x512xbf16, #tpu.memory_space<vmem>>, vector<1x16x512xbf16>
    %1 = vector.shape_cast %0 : vector<1x16x512xbf16> to vector<16x512xbf16>
    %2 = arith.extf %1 : vector<16x512xbf16> to vector<16x512xf32>
    %c0_2 = arith.constant 0 : index
    %c0_3 = arith.constant 0 : index
    %c0_4 = arith.constant 0 : index
    %3 = vector.load %arg2[%c0_2, %c0_3, %c0_4] : memref<1x16x512xbf16, #tpu.memory_space<vmem>>, vector<1x16x512xbf16>
    %4 = vector.shape_cast %3 : vector<1x16x512xbf16> to vector<16x512xbf16>
    %5 = arith.extf %4 : vector<16x512xbf16> to vector<16x512xf32>
    %6 = arith.subf %2, %5 : vector<16x512xf32>
    %7 = arith.mulf %6, %6 : vector<16x512xf32>
    %cst = arith.constant dense<0.000000e+00> : vector<512xf32>
    %8 = vector.multi_reduction <add>, %7, %cst [0] : vector<16x512xf32> to vector<512xf32>
    %9 = vector.shape_cast %8 : vector<512xf32> to vector<1x512xf32>
    %10 = vector.shape_cast %9 : vector<1x512xf32> to vector<1x1x512xf32>
    %c0_5 = arith.constant 0 : index
    %c0_6 = arith.constant 0 : index
    %c0_7 = arith.constant 0 : index
    %11 = vector.load %arg3[%c0_5, %c0_6, %c0_7] : memref<1x1x512xf32, #tpu.memory_space<vmem>>, vector<1x1x512xf32>
    tpu.vector_store %arg3[%c0_5, %c0_6, %c0_7], %10 {strides = array<i32>} : memref<1x1x512xf32, #tpu.memory_space<vmem>>, vector<1x1x512xf32>,
    return
  }
  func.func @transform_0(%arg0: i32) -> (i32, i32, i32) {
    %c0_i32 = arith.constant 0 : i32
    %c0_i32_0 = arith.constant 0 : i32
    %c0_i32_1 = arith.constant 0 : i32
    return %arg0, %c0_i32, %c0_i32_0 : i32, i32, i32
  }
  func.func @transform_1(%arg0: i32) -> (i32, i32, i32) {
    %c0_i32 = arith.constant 0 : i32
    %c0_i32_0 = arith.constant 0 : i32
    %c0_i32_1 = arith.constant 0 : i32
    return %arg0, %c0_i32, %c0_i32_0 : i32, i32, i32
  }
  func.func @transform_2(%arg0: i32) -> (i32, i32, i32) {
    %c0_i32 = arith.constant 0 : i32
    %c0_i32_0 = arith.constant 0 : i32
    %c0_i32_1 = arith.constant 0 : i32
    return %arg0, %c0_i32, %c0_i32_0 : i32, i32, i32
  }
}

module attributes {stable_mosaic.version = 11 : i64} {
  func.func @_ssim_l1_kernel(%arg0: i32, %arg1: memref<1x16x128xf32, #tpu.memory_space<vmem>>, %arg2: memref<1x16x128xf32, #tpu.memory_space<vmem>>, %arg3: memref<16x16xf32, #tpu.memory_space<vmem>>, %arg4: memref<128x128xf32, #tpu.memory_space<vmem>>, %arg5: memref<1x1x128xf32, #tpu.memory_space<vmem>>, %arg6: memref<1x1x128xf32, #tpu.memory_space<vmem>>, %arg7: memref<1x1x128xf32, #tpu.memory_space<vmem>>) attributes {dimension_semantics = [#tpu.dimension_semantics<parallel>], iteration_bounds = array<i64: 1>, scalar_prefetch = 0 : i64, scratch_operands = 0 : i64, tpu.core_type = #tpu.core_type<tc>, window_params = [{transform_indices = @transform_0, window_bounds = array<i64: 1, 16, 128>}, {transform_indices = @transform_1, window_bounds = array<i64: 1, 16, 128>}, {pipeline_mode = #tpu.pipeline_mode<synchronous>, transform_indices = @transform_2, window_bounds = array<i64: 16, 16>}, {pipeline_mode = #tpu.pipeline_mode<synchronous>, transform_indices = @transform_3, window_bounds = array<i64: 128, 128>}, {transform_indices = @transform_4, window_bounds = array<i64: 1, 1, 128>}, {transform_indices = @transform_5, window_bounds = array<i64: 1, 1, 128>}, {transform_indices = @transform_6, window_bounds = array<i64: 1, 1, 128>}]} {
    %c0 = arith.constant 0 : index
    %c0_0 = arith.constant 0 : index
    %c0_1 = arith.constant 0 : index
    %0 = vector.load %arg1[%c0, %c0_0, %c0_1] : memref<1x16x128xf32, #tpu.memory_space<vmem>>, vector<1x16x128xf32>
    %1 = vector.shape_cast %0 : vector<1x16x128xf32> to vector<16x128xf32>
    %c0_2 = arith.constant 0 : index
    %c0_3 = arith.constant 0 : index
    %c0_4 = arith.constant 0 : index
    %2 = vector.load %arg2[%c0_2, %c0_3, %c0_4] : memref<1x16x128xf32, #tpu.memory_space<vmem>>, vector<1x16x128xf32>
    %3 = vector.shape_cast %2 : vector<1x16x128xf32> to vector<16x128xf32>
    %c0_5 = arith.constant 0 : index
    %c0_6 = arith.constant 0 : index
    %4 = vector.load %arg3[%c0_5, %c0_6] : memref<16x16xf32, #tpu.memory_space<vmem>>, vector<16x16xf32>
    %c0_7 = arith.constant 0 : index
    %c0_8 = arith.constant 0 : index
    %5 = vector.load %arg4[%c0_7, %c0_8] : memref<128x128xf32, #tpu.memory_space<vmem>>, vector<128x128xf32>
    %c0_9 = arith.constant 0 : index
    %c0_10 = arith.constant 0 : index
    %c0_11 = arith.constant 0 : index
    %6 = vector.load %arg5[%c0_9, %c0_10, %c0_11] : memref<1x1x128xf32, #tpu.memory_space<vmem>>, vector<1x1x128xf32>
    %7 = vector.shape_cast %6 : vector<1x1x128xf32> to vector<1x128xf32>
    %cst = arith.constant dense<0.000000e+00> : vector<16x128xf32>
    %8 = tpu.matmul %4, %1, %cst {dimension_numbers = #tpu.dot_dimension_numbers<[1], [0], [0], [1], [0, 0, 1, 1], [], []>} : vector<16x16xf32>, vector<16x128xf32>, vector<16x128xf32> -> vector<16x128xf32>
    %cst_12 = arith.constant dense<0.000000e+00> : vector<16x128xf32>
    %9 = tpu.matmul %8, %5, %cst_12 {dimension_numbers = #tpu.dot_dimension_numbers<[1], [0], [0], [1], [0, 0, 1, 1], [], []>} : vector<16x128xf32>, vector<128x128xf32>, vector<16x128xf32> -> vector<16x128xf32>
    %cst_13 = arith.constant dense<0.000000e+00> : vector<16x128xf32>
    %10 = tpu.matmul %4, %3, %cst_13 {dimension_numbers = #tpu.dot_dimension_numbers<[1], [0], [0], [1], [0, 0, 1, 1], [], []>} : vector<16x16xf32>, vector<16x128xf32>, vector<16x128xf32> -> vector<16x128xf32>
    %cst_14 = arith.constant dense<0.000000e+00> : vector<16x128xf32>
    %11 = tpu.matmul %10, %5, %cst_14 {dimension_numbers = #tpu.dot_dimension_numbers<[1], [0], [0], [1], [0, 0, 1, 1], [], []>} : vector<16x128xf32>, vector<128x128xf32>, vector<16x128xf32> -> vector<16x128xf32>
    %12 = arith.mulf %1, %1 : vector<16x128xf32>
    %cst_15 = arith.constant dense<0.000000e+00> : vector<16x128xf32>
    %13 = tpu.matmul %4, %12, %cst_15 {dimension_numbers = #tpu.dot_dimension_numbers<[1], [0], [0], [1], [0, 0, 1, 1], [], []>} : vector<16x16xf32>, vector<16x128xf32>, vector<16x128xf32> -> vector<16x128xf32>
    %cst_16 = arith.constant dense<0.000000e+00> : vector<16x128xf32>
    %14 = tpu.matmul %13, %5, %cst_16 {dimension_numbers = #tpu.dot_dimension_numbers<[1], [0], [0], [1], [0, 0, 1, 1], [], []>} : vector<16x128xf32>, vector<128x128xf32>, vector<16x128xf32> -> vector<16x128xf32>
    %15 = arith.mulf %3, %3 : vector<16x128xf32>
    %cst_17 = arith.constant dense<0.000000e+00> : vector<16x128xf32>
    %16 = tpu.matmul %4, %15, %cst_17 {dimension_numbers = #tpu.dot_dimension_numbers<[1], [0], [0], [1], [0, 0, 1, 1], [], []>} : vector<16x16xf32>, vector<16x128xf32>, vector<16x128xf32> -> vector<16x128xf32>
    %cst_18 = arith.constant dense<0.000000e+00> : vector<16x128xf32>
    %17 = tpu.matmul %16, %5, %cst_18 {dimension_numbers = #tpu.dot_dimension_numbers<[1], [0], [0], [1], [0, 0, 1, 1], [], []>} : vector<16x128xf32>, vector<128x128xf32>, vector<16x128xf32> -> vector<16x128xf32>
    %18 = arith.mulf %1, %3 : vector<16x128xf32>
    %cst_19 = arith.constant dense<0.000000e+00> : vector<16x128xf32>
    %19 = tpu.matmul %4, %18, %cst_19 {dimension_numbers = #tpu.dot_dimension_numbers<[1], [0], [0], [1], [0, 0, 1, 1], [], []>} : vector<16x16xf32>, vector<16x128xf32>, vector<16x128xf32> -> vector<16x128xf32>
    %cst_20 = arith.constant dense<0.000000e+00> : vector<16x128xf32>
    %20 = tpu.matmul %19, %5, %cst_20 {dimension_numbers = #tpu.dot_dimension_numbers<[1], [0], [0], [1], [0, 0, 1, 1], [], []>} : vector<16x128xf32>, vector<128x128xf32>, vector<16x128xf32> -> vector<16x128xf32>
    %21 = arith.mulf %9, %9 : vector<16x128xf32>
    %22 = arith.mulf %11, %11 : vector<16x128xf32>
    %23 = arith.mulf %9, %11 : vector<16x128xf32>
    %24 = arith.subf %14, %21 : vector<16x128xf32>
    %25 = arith.subf %17, %22 : vector<16x128xf32>
    %26 = arith.subf %20, %23 : vector<16x128xf32>
    %cst_21 = arith.constant 2.000000e+00 : f32
    %27 = vector.broadcast %cst_21 : f32 to vector<16x128xf32>
    %28 = arith.mulf %27, %23 : vector<16x128xf32>
    %cst_22 = arith.constant 9.99999974E-5 : f32
    %29 = vector.broadcast %cst_22 : f32 to vector<16x128xf32>
    %30 = arith.addf %28, %29 : vector<16x128xf32>
    %cst_23 = arith.constant 2.000000e+00 : f32
    %31 = vector.broadcast %cst_23 : f32 to vector<16x128xf32>
    %32 = arith.mulf %31, %26 : vector<16x128xf32>
    %cst_24 = arith.constant 8.99999984E-4 : f32
    %33 = vector.broadcast %cst_24 : f32 to vector<16x128xf32>
    %34 = arith.addf %32, %33 : vector<16x128xf32>
    %35 = arith.mulf %30, %34 : vector<16x128xf32>
    %36 = arith.addf %21, %22 : vector<16x128xf32>
    %cst_25 = arith.constant 9.99999974E-5 : f32
    %37 = vector.broadcast %cst_25 : f32 to vector<16x128xf32>
    %38 = arith.addf %36, %37 : vector<16x128xf32>
    %39 = arith.addf %24, %25 : vector<16x128xf32>
    %cst_26 = arith.constant 8.99999984E-4 : f32
    %40 = vector.broadcast %cst_26 : f32 to vector<16x128xf32>
    %41 = arith.addf %39, %40 : vector<16x128xf32>
    %42 = arith.mulf %38, %41 : vector<16x128xf32>
    %43 = arith.divf %35, %42 : vector<16x128xf32>
    %cst_27 = arith.constant dense<0.000000e+00> : vector<128xf32>
    %44 = vector.multi_reduction <add>, %43, %cst_27 [0] : vector<16x128xf32> to vector<128xf32>
    %45 = vector.shape_cast %44 : vector<128xf32> to vector<1x128xf32>
    %46 = arith.mulf %45, %7 : vector<1x128xf32>
    %47 = arith.subf %1, %3 : vector<16x128xf32>
    %48 = math.absf %47 : vector<16x128xf32>
    %cst_28 = arith.constant dense<0.000000e+00> : vector<128xf32>
    %49 = vector.multi_reduction <add>, %48, %cst_28 [0] : vector<16x128xf32> to vector<128xf32>
    %50 = vector.shape_cast %49 : vector<128xf32> to vector<1x128xf32>
    %51 = vector.shape_cast %46 : vector<1x128xf32> to vector<1x1x128xf32>
    %c0_29 = arith.constant 0 : index
    %c0_30 = arith.constant 0 : index
    %c0_31 = arith.constant 0 : index
    %52 = vector.load %arg6[%c0_29, %c0_30, %c0_31] : memref<1x1x128xf32, #tpu.memory_space<vmem>>, vector<1x1x128xf32>
    tpu.vector_store %arg6[%c0_29, %c0_30, %c0_31], %51 {strides = array<i32>} : memref<1x1x128xf32, #tpu.memory_space<vmem>>, vector<1x1x128xf32>,
    %53 = vector.shape_cast %50 : vector<1x128xf32> to vector<1x1x128xf32>
    %c0_32 = arith.constant 0 : index
    %c0_33 = arith.constant 0 : index
    %c0_34 = arith.constant 0 : index
    %54 = vector.load %arg7[%c0_32, %c0_33, %c0_34] : memref<1x1x128xf32, #tpu.memory_space<vmem>>, vector<1x1x128xf32>
    tpu.vector_store %arg7[%c0_32, %c0_33, %c0_34], %53 {strides = array<i32>} : memref<1x1x128xf32, #tpu.memory_space<vmem>>, vector<1x1x128xf32>,
    return
  }
  func.func @transform_0(%arg0: i32) -> (i32, i32, i32) {
    %c0_i32 = arith.constant 0 : i32
    %c0_i32_0 = arith.constant 0 : i32
    %c0_i32_1 = arith.constant 0 : i32
    return %arg0, %c0_i32, %c0_i32_0 : i32, i32, i32
  }
  func.func @transform_1(%arg0: i32) -> (i32, i32, i32) {
    %c0_i32 = arith.constant 0 : i32
    %c0_i32_0 = arith.constant 0 : i32
    %c0_i32_1 = arith.constant 0 : i32
    return %arg0, %c0_i32, %c0_i32_0 : i32, i32, i32
  }
  func.func @transform_2(%arg0: i32) -> (i32, i32) {
    %c0_i32 = arith.constant 0 : i32
    %c0_i32_0 = arith.constant 0 : i32
    %c0_i32_1 = arith.constant 0 : i32
    return %c0_i32, %c0_i32_0 : i32, i32
  }
  func.func @transform_3(%arg0: i32) -> (i32, i32) {
    %c0_i32 = arith.constant 0 : i32
    %c0_i32_0 = arith.constant 0 : i32
    %c0_i32_1 = arith.constant 0 : i32
    return %c0_i32, %c0_i32_0 : i32, i32
  }
  func.func @transform_4(%arg0: i32) -> (i32, i32, i32) {
    %c0_i32 = arith.constant 0 : i32
    %c0_i32_0 = arith.constant 0 : i32
    %c0_i32_1 = arith.constant 0 : i32
    return %arg0, %c0_i32, %c0_i32_0 : i32, i32, i32
  }
  func.func @transform_5(%arg0: i32) -> (i32, i32, i32) {
    %c0_i32 = arith.constant 0 : i32
    %c0_i32_0 = arith.constant 0 : i32
    %c0_i32_1 = arith.constant 0 : i32
    return %arg0, %c0_i32, %c0_i32_0 : i32, i32, i32
  }
  func.func @transform_6(%arg0: i32) -> (i32, i32, i32) {
    %c0_i32 = arith.constant 0 : i32
    %c0_i32_0 = arith.constant 0 : i32
    %c0_i32_1 = arith.constant 0 : i32
    return %arg0, %c0_i32, %c0_i32_0 : i32, i32, i32
  }
}

</mosaic_0001>

<llo_original>
// kernel: _lambda_.12
$region0: #{_lambda_.12}
  #allocation0 [shape = 'u32[]', space=smem, size = 0x4, offset = 0x4, fixed_abs, tag = 'smem constant byte address 0x4 - core index']
  #allocation1 [shape = 'u32[144,128]{1,0:T(1,128)}', space=vmem, size = 0x12000, scoped, tag = 'internal scratch']
  %s0 = inlined_call_operand.vmem [shape: bf16[4,10,10,128], index: 0, kind: input, shape index: {}]
  %s1 = inlined_call_operand.vmem [shape: bf16[3,3,128,128], index: 1, kind: input, shape index: {}]
  %s2 = inlined_call_operand.vmem [shape: f32[1,128], index: 2, kind: input, shape index: {}]
  %s3 = inlined_call_operand.vmem [shape: bf16[4,8,8,128], index: 3, kind: output, shape index: {}]
  %s4 = sld [smem:[#allocation0]]
  $region45: #{_lambda_.12} parent=0
    _
  %s6 = ssub.s32 1, %s4
  %s7 = scalar_select 0, %s6, %s4
  loop: start=0, step=1, limit=6
  $region2: #{_lambda_.12} parent=0 // loop_pre_header
    _
  $region3: #{_lambda_.12} parent=0 // loop_header
    %s9 = sphi 0, %s13
    %p10 = scmp.ge.s32.totalorder %s9, 6
    %s19 = sphi 0, %s21
    %s22 = sphi 0, %s19
    %s23 = sphi 0, %s22
    %s39 = sphi 0, %s23
    %s43 = sphi 0, %s43
    %s45 = sphi 0, %s43
    %s46 = sphi 0, %s45
    %s60 = sphi 0, %s46
    %s64 = sphi 0, %s64
    %s66 = sphi 0, %s64
    %s67 = sphi 0, %s66
    %s81 = sphi 0, %s67
    %s87 = sphi 0, %s89
    %s90 = sphi 0, %s87
    %s91 = sphi 0, %s90
    %s107 = sphi 0, %s91
  $region4: #{_lambda_.12} parent=0 // loop_header_branch
    %12 = sbr.rel (%p10) target = $region8
  $region5: #{_lambda_.12} parent=0 // loop_body
    %s14 = ssub.s32 %s9, 1
    %s15 = ssub.s32 %s9, 2
    %s16 = sadd.s32 %s9, 1
    %s17 = ssub.s32 %s9, %s16
    %p18 = scmp.eq.s32.totalorder %s17, 0
    %s20 = sadd.s32 %s19, 1
    %s21 = scalar_select %p18, %s19, %s20
    %p24 = pneg %p18
    %p25 = scmp.eq.s32.totalorder %s9, 3
    %p26 = por %p24, %p25
    %p27 = scmp.ne.s32.totalorder %s19, %s22
    %p28 = scmp.eq.s32.totalorder %s9, 0
    %p29 = por %p27, %p28
    %p30 = scmp.ne.s32.totalorder %s19, %s22
    %p31 = scmp.eq.s32.totalorder %s14, 3
    %p32 = por %p30, %p31
    %p33 = scmp.ne.s32.totalorder %s22, %s23
    %p34 = scmp.eq.s32.totalorder %s14, 0
    %p35 = por %p33, %p34
    %p36 = scmp.ne.s32.totalorder %s22, %s23
    %p37 = scmp.eq.s32.totalorder %s15, 3
    %p38 = por %p36, %p37
    %p40 = scmp.ne.s32.totalorder %s23, %s39
    %p41 = scmp.eq.s32.totalorder %s15, 0
    %p42 = por %p40, %p41
    %s44 = sadd.s32 %s43, 1
    %p47 = scmp.eq.s32.totalorder %s9, 3
    %p48 = scmp.ne.s32.totalorder %s43, %s45
    %p49 = scmp.eq.s32.totalorder %s9, 0
    %p50 = por %p48, %p49
    %p51 = scmp.ne.s32.totalorder %s43, %s45
    %p52 = scmp.eq.s32.totalorder %s14, 3
    %p53 = por %p51, %p52
    %p54 = scmp.ne.s32.totalorder %s45, %s46
    %p55 = scmp.eq.s32.totalorder %s14, 0
    %p56 = por %p54, %p55
    %p57 = scmp.ne.s32.totalorder %s45, %s46
    %p58 = scmp.eq.s32.totalorder %s15, 3
    %p59 = por %p57, %p58
    %p61 = scmp.ne.s32.totalorder %s46, %s60
    %p62 = scmp.eq.s32.totalorder %s15, 0
    %p63 = por %p61, %p62
    %s65 = sadd.s32 %s64, 1
    %p68 = scmp.eq.s32.totalorder %s9, 3
    %p69 = scmp.ne.s32.totalorder %s64, %s66
    %p70 = scmp.eq.s32.totalorder %s9, 0
    %p71 = por %p69, %p70
    %p72 = scmp.ne.s32.totalorder %s64, %s66
    %p73 = scmp.eq.s32.totalorder %s14, 3
    %p74 = por %p72, %p73
    %p75 = scmp.ne.s32.totalorder %s66, %s67
    %p76 = scmp.eq.s32.totalorder %s14, 0
    %p77 = por %p75, %p76
    %p78 = scmp.ne.s32.totalorder %s66, %s67
    %p79 = scmp.eq.s32.totalorder %s15, 3
    %p80 = por %p78, %p79
    %p82 = scmp.ne.s32.totalorder %s67, %s81
    %p83 = scmp.eq.s32.totalorder %s15, 0
    %p84 = por %p82, %p83
    %s85 = ssub.s32 %s9, %s16
    %p86 = scmp.eq.s32.totalorder %s85, 0
    %s88 = sadd.s32 %s87, 1
    %s89 = scalar_select %p86, %s87, %s88
    %p92 = pneg %p86
    %p93 = scmp.eq.s32.totalorder %s9, 3
    %p94 = por %p92, %p93
    %p95 = scmp.ne.s32.totalorder %s87, %s90
    %p96 = scmp.eq.s32.totalorder %s9, 0
    %p97 = por %p95, %p96
    %p98 = scmp.ne.s32.totalorder %s87, %s90
    %p99 = scmp.eq.s32.totalorder %s14, 3
    %p100 = por %p98, %p99
    %p101 = scmp.ne.s32.totalorder %s90, %s91
    %p102 = scmp.eq.s32.totalorder %s14, 0
    %p103 = por %p101, %p102
    %p104 = scmp.ne.s32.totalorder %s90, %s91
    %p105 = scmp.eq.s32.totalorder %s15, 3
    %p106 = por %p104, %p105
    %p108 = scmp.ne.s32.totalorder %s91, %s107
    %p109 = scmp.eq.s32.totalorder %s15, 0
    %p110 = por %p108, %p109
    %p111 = scmp.le.s32.totalorder 1, %s9
    %p112 = scmp.lt.s32.totalorder %s9, 5
    %p113 = pnand %p111, %p112
    %p114 = pneg %p113
    // Predicated region
    $region9: #{_lambda_.12} parent=5 // pred_check
      _
    $region10: #{_lambda_.12} parent=5 // pred_check_branch
      %116 = sbr.rel (%p113) target = $region12
    $region11: #{_lambda_.12} parent=5 // pred_region
      %s117 = ssub.s32 %s9, 1
      // Predicated region
      $region13: #{_lambda_.12} parent=11 // pred_check
        %p118 = pneg %p56
      $region14: #{_lambda_.12} parent=11 // pred_check_branch
        %120 = sbr.rel (%p118) target = $region16
      $region15: #{_lambda_.12} parent=11 // pred_region
        _
      $region16: #{_lambda_.12} parent=11 // pred_fallthru
        _
      // Predicated region
      $region17: #{_lambda_.12} parent=11 // pred_check
        %p121 = pneg %p77
      $region18: #{_lambda_.12} parent=11 // pred_check_branch
        %123 = sbr.rel (%p121) target = $region20
      $region19: #{_lambda_.12} parent=11 // pred_region
        _
      $region20: #{_lambda_.12} parent=11 // pred_fallthru
        _
    $region12: #{_lambda_.12} parent=5 // pred_fallthru
      _
    %p124 = scmp.lt.s32.totalorder %s9, 4
    // Predicated region
    $region21: #{_lambda_.12} parent=5 // pred_check
      %p125 = pneg %p124
    $region22: #{_lambda_.12} parent=5 // pred_check_branch
      %127 = sbr.rel (%p125) target = $region24
    $region23: #{_lambda_.12} parent=5 // pred_region
      // Predicated region
      $region25: #{_lambda_.12} parent=23 // pred_check
        %p128 = pneg %p29
      $region26: #{_lambda_.12} parent=23 // pred_check_branch
        %130 = sbr.rel (%p128) target = $region28
      $region27: #{_lambda_.12} parent=23 // pred_region
        %p131 = scmp.lt.s32.totalorder %s9, 3
        %s132 = scalar_select %p131, %s9, 3
        %s133 = smul.addr %s132, 20
        %s134 = smul.addr %s133, 4
        %s135 = scalar_lea.vmem %s0, %s134
      $region28: #{_lambda_.12} parent=23 // pred_fallthru
        _
    $region24: #{_lambda_.12} parent=5 // pred_fallthru
      _
    %p136 = scmp.le.s32.totalorder 1, %s9
    %p137 = scmp.lt.s32.totalorder %s9, 5
    %p138 = pnand %p136, %p137
    %p139 = pneg %p138
    // Predicated region
    $region29: #{_lambda_.12} parent=5 // pred_check
      _
    $region30: #{_lambda_.12} parent=5 // pred_check_branch
      %141 = sbr.rel (%p138) target = $region32
    $region31: #{_lambda_.12} parent=5 // pred_region
      %s142 = ssub.s32 %s9, 1
      %p143 = scmp.lt.s32.totalorder %s14, 3
      %s144 = scalar_select %p143, %s14, 3
      %s145 = smul.addr %s144, 20
      %s146 = smul.addr %s145, 4
      %s147 = scalar_lea.vmem %s0, %s146
      %p148 = pneg %p35
      %p149 = pneg %p32
      %p150 = pneg %p56
      %p151 = pneg %p53
      %p152 = pneg %p77
      %p153 = pneg %p74
      %p154 = pneg %p103
      %p155 = pneg %p100
      %p156 = scmp.lt.s32.totalorder %s14, 3
      %s157 = scalar_select %p156, %s14, 3
      %s158 = smul.addr %s157, 8
      %s159 = smul.addr %s158, 4
      %s160 = scalar_lea.vmem %s3, %s159
      %p161 = scmp.lt.s32.totalorder %s14, 3
      %s162 = scalar_select %p161, %s14, 3
      %s163 = smul.addr %s162, 20
      %s164 = smul.addr %s163, 4
      %s165 = scalar_lea.vmem %s0, %s164
      %p166 = scmp.lt.s32.totalorder %s14, 3
      %s167 = scalar_select %p166, %s14, 3
      %s168 = smul.addr %s167, 8
      %s169 = smul.addr %s168, 4
      %s170 = scalar_lea.vmem %s3, %s169
      %v172 = vld [vmem:[%s165] sm:$0xf]
      %v173 = vld [vmem:[%s165 + $0x4] sm:$0x1]
      %v174 = vld [vmem:[%s165 + $0x8] sm:$0xf]
      %v175 = vld [vmem:[%s165 + $0xc] sm:$0x1]
      %v176 = vld [vmem:[%s165 + $0x10] sm:$0xf]
      %v177 = vld [vmem:[%s165 + $0x14] sm:$0x1]
      %v178 = vld [vmem:[%s165 + $0x18] sm:$0xf]
      %v179 = vld [vmem:[%s165 + $0x1c] sm:$0x1]
      %v180 = vld [vmem:[%s165 + $0x20] sm:$0xf]
      %v181 = vld [vmem:[%s165 + $0x24] sm:$0x1]
      %v182 = vld [vmem:[%s165 + $0x28] sm:$0xf]
      %v183 = vld [vmem:[%s165 + $0x2c] sm:$0x1]
      %v184 = vld [vmem:[%s165 + $0x30] sm:$0xf]
      %v185 = vld [vmem:[%s165 + $0x34] sm:$0x1]
      %v186 = vld [vmem:[%s165 + $0x38] sm:$0xf]
      %v187 = vld [vmem:[%s165 + $0x3c] sm:$0x1]
      %v188 = vld [vmem:[%s165 + $0x40] sm:$0xf]
      %v189 = vld [vmem:[%s165 + $0x44] sm:$0x1]
      %v190 = vld [vmem:[%s165 + $0x48] sm:$0xf]
      %v191 = vld [vmem:[%s165 + $0x4c] sm:$0x1]
      %v192 = vld [vmem:[%s1] sm:$0xf]
      %v193 = vld [vmem:[%s1 + $0x4] sm:$0xf]
      %v194 = vld [vmem:[%s1 + $0x8] sm:$0xf]
      %v195 = vld [vmem:[%s1 + $0xc] sm:$0xf]
      %v196 = vld [vmem:[%s1 + $0x10] sm:$0xf]
      %v197 = vld [vmem:[%s1 + $0x14] sm:$0xf]
      %v198 = vld [vmem:[%s1 + $0x18] sm:$0xf]
      %v199 = vld [vmem:[%s1 + $0x1c] sm:$0xf]
      %v200 = vld [vmem:[%s1 + $0x20] sm:$0xf]
      %v201 = vld [vmem:[%s1 + $0x24] sm:$0xf]
      %v202 = vld [vmem:[%s1 + $0x28] sm:$0xf]
      %v203 = vld [vmem:[%s1 + $0x2c] sm:$0xf]
      %v204 = vld [vmem:[%s1 + $0x30] sm:$0xf]
      %v205 = vld [vmem:[%s1 + $0x34] sm:$0xf]
      %v206 = vld [vmem:[%s1 + $0x38] sm:$0xf]
      %v207 = vld [vmem:[%s1 + $0x3c] sm:$0xf]
      %vm208 = vsmask.f32 3328
      %vm209 = vsmask.f32 7440
      %vm210 = vmor %vm208, %vm209
      %v212 = vshrl.u32 %v172, 16
      %v214 = vrot.slane %v212, 4
      %v215 = vshll.u32 %v172, 16
      %v217 = vrot.slane %v215, 5
      %v218 = vor.u32 %v214, %v217
      %v219 = vrot.slane %v218, 4
      %v221 = vshll.u32 %v173, 16
      %v223 = vrot.slane %v221, 5
      %v224 = vsel %vm210, %v219, %v223
      %v226 = vshrl.u32 %v174, 16
      %v228 = vrot.slane %v226, 4
      %v229 = vshll.u32 %v174, 16
      %v231 = vrot.slane %v229, 5
      %v232 = vor.u32 %v228, %v231
      %v233 = vrot.slane %v232, 4
      %v235 = vshll.u32 %v175, 16
      %v237 = vrot.slane %v235, 5
      %v238 = vsel %vm210, %v233, %v237
      %v240 = vshrl.u32 %v176, 16
      %v242 = vrot.slane %v240, 4
      %v243 = vshll.u32 %v176, 16
      %v245 = vrot.slane %v243, 5
      %v246 = vor.u32 %v242, %v245
      %v247 = vrot.slane %v246, 4
      %v249 = vshll.u32 %v177, 16
      %v251 = vrot.slane %v249, 5
      %v252 = vsel %vm210, %v247, %v251
      %v254 = vshrl.u32 %v178, 16
      %v256 = vrot.slane %v254, 4
      %v257 = vshll.u32 %v178, 16
      %v259 = vrot.slane %v257, 5
      %v260 = vor.u32 %v256, %v259
      %v261 = vrot.slane %v260, 4
      %v263 = vshll.u32 %v179, 16
      %v265 = vrot.slane %v263, 5
      %v266 = vsel %vm210, %v261, %v265
      %v268 = vshrl.u32 %v180, 16
      %v270 = vrot.slane %v268, 4
      %v271 = vshll.u32 %v180, 16
      %v273 = vrot.slane %v271, 5
      %v274 = vor.u32 %v270, %v273
      %v275 = vrot.slane %v274, 4
      %v277 = vshll.u32 %v181, 16
      %v279 = vrot.slane %v277, 5
      %v280 = vsel %vm210, %v275, %v279
      %v282 = vshrl.u32 %v182, 16
      %v284 = vrot.slane %v282, 4
      %v285 = vshll.u32 %v182, 16
      %v287 = vrot.slane %v285, 5
      %v288 = vor.u32 %v284, %v287
      %v289 = vrot.slane %v288, 4
      %v291 = vshll.u32 %v183, 16
      %v293 = vrot.slane %v291, 5
      %v294 = vsel %vm210, %v289, %v293
      %v296 = vshrl.u32 %v184, 16
      %v298 = vrot.slane %v296, 4
      %v299 = vshll.u32 %v184, 16
      %v301 = vrot.slane %v299, 5
      %v302 = vor.u32 %v298, %v301
      %v303 = vrot.slane %v302, 4
      %v305 = vshll.u32 %v185, 16
      %v307 = vrot.slane %v305, 5
      %v308 = vsel %vm210, %v303, %v307
      %v310 = vshrl.u32 %v186, 16
      %v312 = vrot.slane %v310, 4
      %v313 = vshll.u32 %v186, 16
      %v315 = vrot.slane %v313, 5
      %v316 = vor.u32 %v312, %v315
      %v317 = vrot.slane %v316, 4
      %v319 = vshll.u32 %v187, 16
      %v321 = vrot.slane %v319, 5
      %v322 = vsel %vm210, %v317, %v321
      %s323 = scalar_lea.vmem %s1, 64
      %v324 = vld [vmem:[%s323] sm:$0xf]
      %v325 = vld [vmem:[%s323 + $0x4] sm:$0xf]
      %v326 = vld [vmem:[%s323 + $0x8] sm:$0xf]
      %v327 = vld [vmem:[%s323 + $0xc] sm:$0xf]
      %v328 = vld [vmem:[%s323 + $0x10] sm:$0xf]
      %v329 = vld [vmem:[%s323 + $0x14] sm:$0xf]
      %v330 = vld [vmem:[%s323 + $0x18] sm:$0xf]
      %v331 = vld [vmem:[%s323 + $0x1c] sm:$0xf]
      %v332 = vld [vmem:[%s323 + $0x20] sm:$0xf]
      %v333 = vld [vmem:[%s323 + $0x24] sm:$0xf]
      %v334 = vld [vmem:[%s323 + $0x28] sm:$0xf]
      %v335 = vld [vmem:[%s323 + $0x2c] sm:$0xf]
      %v336 = vld [vmem:[%s323 + $0x30] sm:$0xf]
      %v337 = vld [vmem:[%s323 + $0x34] sm:$0xf]
      %v338 = vld [vmem:[%s323 + $0x38] sm:$0xf]
      %v339 = vld [vmem:[%s323 + $0x3c] sm:$0xf]
      %v340 = vunpack.c.l.b16 %v224
      %v341 = vunpack.c.l.b16 %v238
      %v342 = vunpack.c.l.b16 %v252
      %v343 = vunpack.c.l.b16 %v266
      %v344 = vunpack.c.l.b16 %v280
      %v345 = vunpack.c.l.b16 %v294
      %v346 = vunpack.c.l.b16 %v308
      %v347 = vunpack.c.l.b16 %v322
      %v348 = vpack.c.b16 %v341, %v340
      %v349 = vpack.c.b16 %v343, %v342
      %v350 = vpack.c.b16 %v345, %v344
      %v351 = vpack.c.b16 %v347, %v346
      %v372 = vunpack.c.l.b16 %v324
      %v373 = vunpack.c.l.b16 %v325
      %v374 = vunpack.c.l.b16 %v326
      %v375 = vunpack.c.l.b16 %v327
      %v376 = vunpack.c.l.b16 %v328
      %v377 = vunpack.c.l.b16 %v329
      %v378 = vunpack.c.l.b16 %v330
      %v379 = vunpack.c.l.b16 %v331
      %v380 = vunpack.c.l.b16 %v332
      %v381 = vunpack.c.l.b16 %v333
      %v382 = vunpack.c.l.b16 %v334
      %v383 = vunpack.c.l.b16 %v335
      %v384 = vunpack.c.l.b16 %v336
      %v385 = vunpack.c.l.b16 %v337
      %v386 = vunpack.c.l.b16 %v338
      %v387 = vunpack.c.l.b16 %v339
      %v388 = vpack.c.b16 %v373, %v372
      %v389 = vpack.c.b16 %v375, %v374
      %v390 = vpack.c.b16 %v377, %v376
      %v391 = vpack.c.b16 %v379, %v378
      %v392 = vpack.c.b16 %v381, %v380
      %v393 = vpack.c.b16 %v383, %v382
      %v394 = vpack.c.b16 %v385, %v384
      %v395 = vpack.c.b16 %v387, %v386
      %404 = vmatprep.subr.bf16.mxu0 0
      %405 = vmatpush1.bf16.msra.mxu0 %v388
      %406 = vmatprep.subr.bf16.mxu0 0
      %407 = vmatpush1.bf16.msra.mxu0 %v389
      %408 = vmatprep.subr.bf16.mxu0 0
      %409 = vmatpush1.bf16.msra.mxu0 %v390
      %410 = vmatprep.subr.bf16.mxu0 0
      %411 = vmatpush1.bf16.msra.mxu0 %v391
      %412 = vmatprep.subr.bf16.mxu0 0
      %413 = vmatpush1.bf16.msra.mxu0 %v392
      %414 = vmatprep.subr.bf16.mxu0 0
      %415 = vmatpush1.bf16.msra.mxu0 %v393
      %416 = vmatprep.subr.bf16.mxu0 0
      %417 = vmatpush1.bf16.msra.mxu0 %v394
      %418 = vmatprep.subr.bf16.mxu0 0
      %419 = vmatpush1.bf16.msra.mxu0 %v395
      %420 = vmatprep.subr.bf16.mxu0 0
      %421 = vmatpush1.bf16.msra.mxu0 0
      %422 = vmatprep.subr.bf16.mxu0 0
      %423 = vmatpush1.bf16.msra.mxu0 0
      %424 = vmatprep.subr.bf16.mxu0 0
      %425 = vmatpush1.bf16.msra.mxu0 0
      %426 = vmatprep.subr.bf16.mxu0 0
      %427 = vmatpush1.bf16.msra.mxu0 0
      %428 = vmatprep.subr.bf16.mxu0 0
      %429 = vmatpush1.bf16.msra.mxu0 0
      %430 = vmatprep.subr.bf16.mxu0 0
      %431 = vmatpush1.bf16.msra.mxu0 0
      %432 = vmatprep.subr.bf16.mxu0 0
      %433 = vmatpush1.bf16.msra.mxu0 0
      %434 = vmatprep.subr.bf16.mxu0 0
      %435 = vmatpush1.bf16.msra.mxu0 0
      %436 = vmatprep.mubr.bf16.mxu0 0
      %437 = vmatmul.mubr.bf16.gmra.mrb[0].mxu0 %v348
      %v438 = vpop.f32.mrb[0].mxu0
      %v439 = vadd.f32 0.0, %v438
      %v440 = vpop.f32.mrb[0].mxu0
      %v441 = vpop.f32.mrb[0].mxu0
      %v442 = vadd.f32 0.0, %v441
      %v443 = vpop.f32.mrb[0].mxu0
      %444 = vmatprep.mubr.bf16.mxu0 0
      %445 = vmatmul.mubr.bf16.gmra.mrb[0].mxu0 %v349
      %v446 = vpop.f32.mrb[0].mxu0
      %v447 = vadd.f32 0.0, %v446
      %v448 = vpop.f32.mrb[0].mxu0
      %v449 = vpop.f32.mrb[0].mxu0
      %v450 = vadd.f32 0.0, %v449
      %v451 = vpop.f32.mrb[0].mxu0
      %452 = vmatprep.mubr.bf16.mxu0 0
      %453 = vmatmul.mubr.bf16.gmra.mrb[0].mxu0 %v350
      %v454 = vpop.f32.mrb[0].mxu0
      %v455 = vadd.f32 0.0, %v454
      %v456 = vpop.f32.mrb[0].mxu0
      %v457 = vpop.f32.mrb[0].mxu0
      %v458 = vadd.f32 0.0, %v457
      %v459 = vpop.f32.mrb[0].mxu0
      %460 = vmatprep.mubr.bf16.mxu0 0
      %461 = vmatmul.mubr.bf16.gmra.mrb[0].mxu0 %v351
      %v462 = vpop.f32.mrb[0].mxu0
      %v463 = vadd.f32 0.0, %v462
      %v464 = vpop.f32.mrb[0].mxu0
      %v465 = vpop.f32.mrb[0].mxu0
      %v466 = vadd.f32 0.0, %v465
      %v467 = vpop.f32.mrb[0].mxu0
      %468 = vdwg.mxu0
      %v477 = vunpack.c.l.b16 %v172
      %v478 = vunpack.c.l.b16 %v174
      %v479 = vunpack.c.l.b16 %v176
      %v480 = vunpack.c.l.b16 %v178
      %v481 = vunpack.c.l.b16 %v180
      %v482 = vunpack.c.l.b16 %v182
      %v483 = vunpack.c.l.b16 %v184
      %v484 = vunpack.c.l.b16 %v186
      %v485 = vpack.c.b16 %v478, %v477
      %v486 = vpack.c.b16 %v480, %v479
      %v487 = vpack.c.b16 %v482, %v481
      %v488 = vpack.c.b16 %v484, %v483
      %v509 = vunpack.c.l.b16 %v192
      %v510 = vunpack.c.l.b16 %v193
      %v511 = vunpack.c.l.b16 %v194
      %v512 = vunpack.c.l.b16 %v195
      %v513 = vunpack.c.l.b16 %v196
      %v514 = vunpack.c.l.b16 %v197
      %v515 = vunpack.c.l.b16 %v198
      %v516 = vunpack.c.l.b16 %v199
      %v517 = vunpack.c.l.b16 %v200
      %v518 = vunpack.c.l.b16 %v201
      %v519 = vunpack.c.l.b16 %v202
      %v520 = vunpack.c.l.b16 %v203
      %v521 = vunpack.c.l.b16 %v204
      %v522 = vunpack.c.l.b16 %v205
      %v523 = vunpack.c.l.b16 %v206
      %v524 = vunpack.c.l.b16 %v207
      %v525 = vpack.c.b16 %v510, %v509
      %v526 = vpack.c.b16 %v512, %v511
      %v527 = vpack.c.b16 %v514, %v513
      %v528 = vpack.c.b16 %v516, %v515
      %v529 = vpack.c.b16 %v518, %v517
      %v530 = vpack.c.b16 %v520, %v519
      %v531 = vpack.c.b16 %v522, %v521
      %v532 = vpack.c.b16 %v524, %v523
      %541 = vmatprep.subr.bf16.mxu0 0
      %542 = vmatpush1.bf16.msra.mxu0 %v525
      %543 = vmatprep.subr.bf16.mxu0 0
      %544 = vmatpush1.bf16.msra.mxu0 %v526
      %545 = vmatprep.subr.bf16.mxu0 0
      %546 = vmatpush1.bf16.msra.mxu0 %v527
      %547 = vmatprep.subr.bf16.mxu0 0
      %548 = vmatpush1.bf16.msra.mxu0 %v528
      %549 = vmatprep.subr.bf16.mxu0 0
      %550 = vmatpush1.bf16.msra.mxu0 %v529
      %551 = vmatprep.subr.bf16.mxu0 0
      %552 = vmatpush1.bf16.msra.mxu0 %v530
      %553 = vmatprep.subr.bf16.mxu0 0
      %554 = vmatpush1.bf16.msra.mxu0 %v531
      %555 = vmatprep.subr.bf16.mxu0 0
      %556 = vmatpush1.bf16.msra.mxu0 %v532
      %557 = vmatprep.subr.bf16.mxu0 0
      %558 = vmatpush1.bf16.msra.mxu0 0
      %559 = vmatprep.subr.bf16.mxu0 0
      %560 = vmatpush1.bf16.msra.mxu0 0
      %561 = vmatprep.subr.bf16.mxu0 0
      %562 = vmatpush1.bf16.msra.mxu0 0
      %563 = vmatprep.subr.bf16.mxu0 0
      %564 = vmatpush1.bf16.msra.mxu0 0
      %565 = vmatprep.subr.bf16.mxu0 0
      %566 = vmatpush1.bf16.msra.mxu0 0
      %567 = vmatprep.subr.bf16.mxu0 0
      %568 = vmatpush1.bf16.msra.mxu0 0
      %569 = vmatprep.subr.bf16.mxu0 0
      %570 = vmatpush1.bf16.msra.mxu0 0
      %571 = vmatprep.subr.bf16.mxu0 0
      %572 = vmatpush1.bf16.msra.mxu0 0
      %573 = vmatprep.mubr.bf16.mxu0 0
      %574 = vmatmul.mubr.bf16.gmra.mrb[0].mxu0 %v485
      %v575 = vpop.f32.mrb[0].mxu0
      %v576 = vadd.f32 %v439, %v575
      %v577 = vpop.f32.mrb[0].mxu0
      %v578 = vpop.f32.mrb[0].mxu0
      %v579 = vadd.f32 %v442, %v578
      %v580 = vpop.f32.mrb[0].mxu0
      %581 = vmatprep.mubr.bf16.mxu0 0
      %582 = vmatmul.mubr.bf16.gmra.mrb[0].mxu0 %v486
      %v583 = vpop.f32.mrb[0].mxu0
      %v584 = vadd.f32 %v447, %v583
      %v585 = vpop.f32.mrb[0].mxu0
      %v586 = vpop.f32.mrb[0].mxu0
      %v587 = vadd.f32 %v450, %v586
      %v588 = vpop.f32.mrb[0].mxu0
      %589 = vmatprep.mubr.bf16.mxu0 0
      %590 = vmatmul.mubr.bf16.gmra.mrb[0].mxu0 %v487
      %v591 = vpop.f32.mrb[0].mxu0
      %v592 = vadd.f32 %v455, %v591
      %v593 = vpop.f32.mrb[0].mxu0
      %v594 = vpop.f32.mrb[0].mxu0
      %v595 = vadd.f32 %v458, %v594
      %v596 = vpop.f32.mrb[0].mxu0
      %597 = vmatprep.mubr.bf16.mxu0 0
      %598 = vmatmul.mubr.bf16.gmra.mrb[0].mxu0 %v488
      %v599 = vpop.f32.mrb[0].mxu0
      %v600 = vadd.f32 %v463, %v599
      %v601 = vpop.f32.mrb[0].mxu0
      %v602 = vpop.f32.mrb[0].mxu0
      %v603 = vadd.f32 %v466, %v602
      %v604 = vpop.f32.mrb[0].mxu0
      %605 = vdwg.mxu0
      %vm614 = vcmask 1042432
      %vm615 = vcmask 1046532
      %vm616 = vmor %vm614, %vm615
      %v617 = vrot.slane %v172, 5
      %v618 = vrot.slane %v617, 4
      %v619 = vrot.slane %v173, 5
      %v620 = vsel %vm616, %v618, %v619
      %v621 = vrot.slane %v174, 5
      %v622 = vrot.slane %v621, 4
      %v623 = vrot.slane %v175, 5
      %v624 = vsel %vm616, %v622, %v623
      %v625 = vrot.slane %v176, 5
      %v626 = vrot.slane %v625, 4
      %v627 = vrot.slane %v177, 5
      %v628 = vsel %vm616, %v626, %v627
      %v629 = vrot.slane %v178, 5
      %v630 = vrot.slane %v629, 4
      %v631 = vrot.slane %v179, 5
      %v632 = vsel %vm616, %v630, %v631
      %v633 = vrot.slane %v180, 5
      %v634 = vrot.slane %v633, 4
      %v635 = vrot.slane %v181, 5
      %v636 = vsel %vm616, %v634, %v635
      %v637 = vrot.slane %v182, 5
      %v638 = vrot.slane %v637, 4
      %v639 = vrot.slane %v183, 5
      %v640 = vsel %vm616, %v638, %v639
      %v641 = vrot.slane %v184, 5
      %v642 = vrot.slane %v641, 4
      %v643 = vrot.slane %v185, 5
      %v644 = vsel %vm616, %v642, %v643
      %v645 = vrot.slane %v186, 5
      %v646 = vrot.slane %v645, 4
      %v647 = vrot.slane %v187, 5
      %v648 = vsel %vm616, %v646, %v647
      %s649 = scalar_lea.vmem %s1, 128
      %v650 = vld [vmem:[%s649] sm:$0xf]
      %v651 = vld [vmem:[%s649 + $0x4] sm:$0xf]
      %v652 = vld [vmem:[%s649 + $0x8] sm:$0xf]
      %v653 = vld [vmem:[%s649 + $0xc] sm:$0xf]
      %v654 = vld [vmem:[%s649 + $0x10] sm:$0xf]
      %v655 = vld [vmem:[%s649 + $0x14] sm:$0xf]
      %v656 = vld [vmem:[%s649 + $0x18] sm:$0xf]
      %v657 = vld [vmem:[%s649 + $0x1c] sm:$0xf]
      %v658 = vld [vmem:[%s649 + $0x20] sm:$0xf]
      %v659 = vld [vmem:[%s649 + $0x24] sm:$0xf]
      %v660 = vld [vmem:[%s649 + $0x28] sm:$0xf]
      %v661 = vld [vmem:[%s649 + $0x2c] sm:$0xf]
      %v662 = vld [vmem:[%s649 + $0x30] sm:$0xf]
      %v663 = vld [vmem:[%s649 + $0x34] sm:$0xf]
      %v664 = vld [vmem:[%s649 + $0x38] sm:$0xf]
      %v665 = vld [vmem:[%s649 + $0x3c] sm:$0xf]
      %v666 = vunpack.c.l.b16 %v620
      %v667 = vunpack.c.l.b16 %v624
      %v668 = vunpack.c.l.b16 %v628
      %v669 = vunpack.c.l.b16 %v632
      %v670 = vunpack.c.l.b16 %v636
      %v671 = vunpack.c.l.b16 %v640
      %v672 = vunpack.c.l.b16 %v644
      %v673 = vunpack.c.l.b16 %v648
      %v674 = vpack.c.b16 %v667, %v666
      %v675 = vpack.c.b16 %v669, %v668
      %v676 = vpack.c.b16 %v671, %v670
      %v677 = vpack.c.b16 %v673, %v672
      %v698 = vunpack.c.l.b16 %v650
      %v699 = vunpack.c.l.b16 %v651
      %v700 = vunpack.c.l.b16 %v652
      %v701 = vunpack.c.l.b16 %v653
      %v702 = vunpack.c.l.b16 %v654
      %v703 = vunpack.c.l.b16 %v655
      %v704 = vunpack.c.l.b16 %v656
      %v705 = vunpack.c.l.b16 %v657
      %v706 = vunpack.c.l.b16 %v658
      %v707 = vunpack.c.l.b16 %v659
      %v708 = vunpack.c.l.b16 %v660
      %v709 = vunpack.c.l.b16 %v661
      %v710 = vunpack.c.l.b16 %v662
      %v711 = vunpack.c.l.b16 %v663
      %v712 = vunpack.c.l.b16 %v664
      %v713 = vunpack.c.l.b16 %v665
      %v714 = vpack.c.b16 %v699, %v698
      %v715 = vpack.c.b16 %v701, %v700
      %v716 = vpack.c.b16 %v703, %v702
      %v717 = vpack.c.b16 %v705, %v704
      %v718 = vpack.c.b16 %v707, %v706
      %v719 = vpack.c.b16 %v709, %v708
      %v720 = vpack.c.b16 %v711, %v710
      %v721 = vpack.c.b16 %v713, %v712
      %730 = vmatprep.subr.bf16.mxu0 0
      %731 = vmatpush1.bf16.msra.mxu0 %v714
      %732 = vmatprep.subr.bf16.mxu0 0
      %733 = vmatpush1.bf16.msra.mxu0 %v715
      %734 = vmatprep.subr.bf16.mxu0 0
      %735 = vmatpush1.bf16.msra.mxu0 %v716
      %736 = vmatprep.subr.bf16.mxu0 0
      %737 = vmatpush1.bf16.msra.mxu0 %v717
      %738 = vmatprep.subr.bf16.mxu0 0
      %739 = vmatpush1.bf16.msra.mxu0 %v718
      %740 = vmatprep.subr.bf16.mxu0 0
      %741 = vmatpush1.bf16.msra.mxu0 %v719
      %742 = vmatprep.subr.bf16.mxu0 0
      %743 = vmatpush1.bf16.msra.mxu0 %v720
      %744 = vmatprep.subr.bf16.mxu0 0
      %745 = vmatpush1.bf16.msra.mxu0 %v721
      %746 = vmatprep.subr.bf16.mxu0 0
      %747 = vmatpush1.bf16.msra.mxu0 0
      %748 = vmatprep.subr.bf16.mxu0 0
      %749 = vmatpush1.bf16.msra.mxu0 0
      %750 = vmatprep.subr.bf16.mxu0 0
      %751 = vmatpush1.bf16.msra.mxu0 0
      %752 = vmatprep.subr.bf16.mxu0 0
      %753 = vmatpush1.bf16.msra.mxu0 0
      %754 = vmatprep.subr.bf16.mxu0 0
      %755 = vmatpush1.bf16.msra.mxu0 0
      %756 = vmatprep.subr.bf16.mxu0 0
      %757 = vmatpush1.bf16.msra.mxu0 0
      %758 = vmatprep.subr.bf16.mxu0 0
      %759 = vmatpush1.bf16.msra.mxu0 0
      %760 = vmatprep.subr.bf16.mxu0 0
      %761 = vmatpush1.bf16.msra.mxu0 0
      %762 = vmatprep.mubr.bf16.mxu0 0
      %763 = vmatmul.mubr.bf16.gmra.mrb[0].mxu0 %v674
      %v764 = vpop.f32.mrb[0].mxu0
      %v765 = vadd.f32 0.0, %v764
      %v766 = vpop.f32.mrb[0].mxu0
      %v767 = vpop.f32.mrb[0].mxu0
      %v768 = vadd.f32 0.0, %v767
      %v769 = vpop.f32.mrb[0].mxu0
      %770 = vmatprep.mubr.bf16.mxu0 0
      %771 = vmatmul.mubr.bf16.gmra.mrb[0].mxu0 %v675
      %v772 = vpop.f32.mrb[0].mxu0
      %v773 = vadd.f32 0.0, %v772
      %v774 = vpop.f32.mrb[0].mxu0
      %v775 = vpop.f32.mrb[0].mxu0
      %v776 = vadd.f32 0.0, %v775
      %v777 = vpop.f32.mrb[0].mxu0
      %778 = vmatprep.mubr.bf16.mxu0 0
      %779 = vmatmul.mubr.bf16.gmra.mrb[0].mxu0 %v676
      %v780 = vpop.f32.mrb[0].mxu0
      %v781 = vadd.f32 0.0, %v780
      %v782 = vpop.f32.mrb[0].mxu0
      %v783 = vpop.f32.mrb[0].mxu0
      %v784 = vadd.f32 0.0, %v783
      %v785 = vpop.f32.mrb[0].mxu0
      %786 = vmatprep.mubr.bf16.mxu0 0
      %787 = vmatmul.mubr.bf16.gmra.mrb[0].mxu0 %v677
      %v788 = vpop.f32.mrb[0].mxu0
      %v789 = vadd.f32 0.0, %v788
      %v790 = vpop.f32.mrb[0].mxu0
      %v791 = vpop.f32.mrb[0].mxu0
      %v792 = vadd.f32 0.0, %v791
      %v793 = vpop.f32.mrb[0].mxu0
      %794 = vdwg.mxu0
      %v795 = vadd.f32 %v576, %v765
      %v796 = vadd.f32 %v579, %v768
      %v797 = vadd.f32 %v584, %v773
      %v798 = vadd.f32 %v587, %v776
      %v799 = vadd.f32 %v592, %v781
      %v800 = vadd.f32 %v595, %v784
      %v801 = vadd.f32 %v600, %v789
      %v802 = vadd.f32 %v603, %v792
      %s803 = scalar_lea.vmem %s1, 192
      %v804 = vld [vmem:[%s803] sm:$0xf]
      %v805 = vld [vmem:[%s803 + $0x4] sm:$0xf]
      %v806 = vld [vmem:[%s803 + $0x8] sm:$0xf]
      %v807 = vld [vmem:[%s803 + $0xc] sm:$0xf]
      %v808 = vld [vmem:[%s803 + $0x10] sm:$0xf]
      %v809 = vld [vmem:[%s803 + $0x14] sm:$0xf]
      %v810 = vld [vmem:[%s803 + $0x18] sm:$0xf]
      %v811 = vld [vmem:[%s803 + $0x1c] sm:$0xf]
      %v812 = vld [vmem:[%s803 + $0x20] sm:$0xf]
      %v813 = vld [vmem:[%s803 + $0x24] sm:$0xf]
      %v814 = vld [vmem:[%s803 + $0x28] sm:$0xf]
      %v815 = vld [vmem:[%s803 + $0x2c] sm:$0xf]
      %v816 = vld [vmem:[%s803 + $0x30] sm:$0xf]
      %v817 = vld [vmem:[%s803 + $0x34] sm:$0xf]
      %v818 = vld [vmem:[%s803 + $0x38] sm:$0xf]
      %v819 = vld [vmem:[%s803 + $0x3c] sm:$0xf]
      %v821 = vunpack.c.l.b16 %v188
      %v822 = vpack.c.b16 %v479, %v478
      %v823 = vpack.c.b16 %v481, %v480
      %v824 = vpack.c.b16 %v483, %v482
      %v825 = vpack.c.b16 %v821, %v484
      %v846 = vunpack.c.l.b16 %v804
      %v847 = vunpack.c.l.b16 %v805
      %v848 = vunpack.c.l.b16 %v806
      %v849 = vunpack.c.l.b16 %v807
      %v850 = vunpack.c.l.b16 %v808
      %v851 = vunpack.c.l.b16 %v809
      %v852 = vunpack.c.l.b16 %v810
      %v853 = vunpack.c.l.b16 %v811
      %v854 = vunpack.c.l.b16 %v812
      %v855 = vunpack.c.l.b16 %v813
      %v856 = vunpack.c.l.b16 %v814
      %v857 = vunpack.c.l.b16 %v815
      %v858 = vunpack.c.l.b16 %v816
      %v859 = vunpack.c.l.b16 %v817
      %v860 = vunpack.c.l.b16 %v818
      %v861 = vunpack.c.l.b16 %v819
      %v862 = vpack.c.b16 %v847, %v846
      %v863 = vpack.c.b16 %v849, %v848
      %v864 = vpack.c.b16 %v851, %v850
      %v865 = vpack.c.b16 %v853, %v852
      %v866 = vpack.c.b16 %v855, %v854
      %v867 = vpack.c.b16 %v857, %v856
      %v868 = vpack.c.b16 %v859, %v858
      %v869 = vpack.c.b16 %v861, %v860
      %878 = vmatprep.subr.bf16.mxu0 0
      %879 = vmatpush1.bf16.msra.mxu0 %v862
      %880 = vmatprep.subr.bf16.mxu0 0
      %881 = vmatpush1.bf16.msra.mxu0 %v863
      %882 = vmatprep.subr.bf16.mxu0 0
      %883 = vmatpush1.bf16.msra.mxu0 %v864
      %884 = vmatprep.subr.bf16.mxu0 0
      %885 = vmatpush1.bf16.msra.mxu0 %v865
      %886 = vmatprep.subr.bf16.mxu0 0
      %887 = vmatpush1.bf16.msra.mxu0 %v866
      %888 = vmatprep.subr.bf16.mxu0 0
      %889 = vmatpush1.bf16.msra.mxu0 %v867
      %890 = vmatprep.subr.bf16.mxu0 0
      %891 = vmatpush1.bf16.msra.mxu0 %v868
      %892 = vmatprep.subr.bf16.mxu0 0
      %893 = vmatpush1.bf16.msra.mxu0 %v869
      %894 = vmatprep.subr.bf16.mxu0 0
      %895 = vmatpush1.bf16.msra.mxu0 0
      %896 = vmatprep.subr.bf16.mxu0 0
      %897 = vmatpush1.bf16.msra.mxu0 0
      %898 = vmatprep.subr.bf16.mxu0 0
      %899 = vmatpush1.bf16.msra.mxu0 0
      %900 = vmatprep.subr.bf16.mxu0 0
      %901 = vmatpush1.bf16.msra.mxu0 0
      %902 = vmatprep.subr.bf16.mxu0 0
      %903 = vmatpush1.bf16.msra.mxu0 0
      %904 = vmatprep.subr.bf16.mxu0 0
      %905 = vmatpush1.bf16.msra.mxu0 0
      %906 = vmatprep.subr.bf16.mxu0 0
      %907 = vmatpush1.bf16.msra.mxu0 0
      %908 = vmatprep.subr.bf16.mxu0 0
      %909 = vmatpush1.bf16.msra.mxu0 0
      %910 = vmatprep.mubr.bf16.mxu0 0
      %911 = vmatmul.mubr.bf16.gmra.mrb[0].mxu0 %v822
      %v912 = vpop.f32.mrb[0].mxu0
      %v913 = vadd.f32 0.0, %v912
      %v914 = vpop.f32.mrb[0].mxu0
      %v915 = vpop.f32.mrb[0].mxu0
      %v916 = vadd.f32 0.0, %v915
      %v917 = vpop.f32.mrb[0].mxu0
      %918 = vmatprep.mubr.bf16.mxu0 0
      %919 = vmatmul.mubr.bf16.gmra.mrb[0].mxu0 %v823
      %v920 = vpop.f32.mrb[0].mxu0
      %v921 = vadd.f32 0.0, %v920
      %v922 = vpop.f32.mrb[0].mxu0
      %v923 = vpop.f32.mrb[0].mxu0
      %v924 = vadd.f32 0.0, %v923
      %v925 = vpop.f32.mrb[0].mxu0
      %926 = vmatprep.mubr.bf16.mxu0 0
      %927 = vmatmul.mubr.bf16.gmra.mrb[0].mxu0 %v824
      %v928 = vpop.f32.mrb[0].mxu0
      %v929 = vadd.f32 0.0, %v928
      %v930 = vpop.f32.mrb[0].mxu0
      %v931 = vpop.f32.mrb[0].mxu0
      %v932 = vadd.f32 0.0, %v931
      %v933 = vpop.f32.mrb[0].mxu0
      %934 = vmatprep.mubr.bf16.mxu0 0
      %935 = vmatmul.mubr.bf16.gmra.mrb[0].mxu0 %v825
      %v936 = vpop.f32.mrb[0].mxu0
      %v937 = vadd.f32 0.0, %v936
      %v938 = vpop.f32.mrb[0].mxu0
      %v939 = vpop.f32.mrb[0].mxu0
      %v940 = vadd.f32 0.0, %v939
      %v941 = vpop.f32.mrb[0].mxu0
      %942 = vdwg.mxu0
      %v943 = vadd.f32 %v795, %v913
      %v944 = vadd.f32 %v796, %v916
      %v945 = vadd.f32 %v797, %v921
      %v946 = vadd.f32 %v798, %v924
      %v947 = vadd.f32 %v799, %v929
      %v948 = vadd.f32 %v800, %v932
      %v949 = vadd.f32 %v801, %v937
      %v950 = vadd.f32 %v802, %v940
      %v952 = vshrl.u32 %v188, 16
      %v954 = vrot.slane %v952, 4
      %v955 = vshll.u32 %v188, 16
      %v957 = vrot.slane %v955, 5
      %v958 = vor.u32 %v954, %v957
      %v959 = vrot.slane %v958, 4
      %v961 = vshll.u32 %v189, 16
      %v963 = vrot.slane %v961, 5
      %v964 = vsel %vm210, %v959, %v963
      %s965 = scalar_lea.vmem %s1, 256
      %v966 = vld [vmem:[%s965] sm:$0xf]
      %v967 = vld [vmem:[%s965 + $0x4] sm:$0xf]
      %v968 = vld [vmem:[%s965 + $0x8] sm:$0xf]
      %v969 = vld [vmem:[%s965 + $0xc] sm:$0xf]
      %v970 = vld [vmem:[%s965 + $0x10] sm:$0xf]
      %v971 = vld [vmem:[%s965 + $0x14] sm:$0xf]
      %v972 = vld [vmem:[%s965 + $0x18] sm:$0xf]
      %v973 = vld [vmem:[%s965 + $0x1c] sm:$0xf]
      %v974 = vld [vmem:[%s965 + $0x20] sm:$0xf]
      %v975 = vld [vmem:[%s965 + $0x24] sm:$0xf]
      %v976 = vld [vmem:[%s965 + $0x28] sm:$0xf]
      %v977 = vld [vmem:[%s965 + $0x2c] sm:$0xf]
      %v978 = vld [vmem:[%s965 + $0x30] sm:$0xf]
      %v979 = vld [vmem:[%s965 + $0x34] sm:$0xf]
      %v980 = vld [vmem:[%s965 + $0x38] sm:$0xf]
      %v981 = vld [vmem:[%s965 + $0x3c] sm:$0xf]
      %v982 = vunpack.c.l.b16 %v964
      %v983 = vpack.c.b16 %v342, %v341
      %v984 = vpack.c.b16 %v344, %v343
      %v985 = vpack.c.b16 %v346, %v345
      %v986 = vpack.c.b16 %v982, %v347
      %v1007 = vunpack.c.l.b16 %v966
      %v1008 = vunpack.c.l.b16 %v967
      %v1009 = vunpack.c.l.b16 %v968
      %v1010 = vunpack.c.l.b16 %v969
      %v1011 = vunpack.c.l.b16 %v970
      %v1012 = vunpack.c.l.b16 %v971
      %v1013 = vunpack.c.l.b16 %v972
      %v1014 = vunpack.c.l.b16 %v973
      %v1015 = vunpack.c.l.b16 %v974
      %v1016 = vunpack.c.l.b16 %v975
      %v1017 = vunpack.c.l.b16 %v976
      %v1018 = vunpack.c.l.b16 %v977
      %v1019 = vunpack.c.l.b16 %v978
      %v1020 = vunpack.c.l.b16 %v979
      %v1021 = vunpack.c.l.b16 %v980
      %v1022 = vunpack.c.l.b16 %v981
      %v1023 = vpack.c.b16 %v1008, %v1007
      %v1024 = vpack.c.b16 %v1010, %v1009
      %v1025 = vpack.c.b16 %v1012, %v1011
      %v1026 = vpack.c.b16 %v1014, %v1013
      %v1027 = vpack.c.b16 %v1016, %v1015
      %v1028 = vpack.c.b16 %v1018, %v1017
      %v1029 = vpack.c.b16 %v1020, %v1019
      %v1030 = vpack.c.b16 %v1022, %v1021
      %1039 = vmatprep.subr.bf16.mxu0 0
      %1040 = vmatpush1.bf16.msra.mxu0 %v1023
      %1041 = vmatprep.subr.bf16.mxu0 0
      %1042 = vmatpush1.bf16.msra.mxu0 %v1024
      %1043 = vmatprep.subr.bf16.mxu0 0
      %1044 = vmatpush1.bf16.msra.mxu0 %v1025
      %1045 = vmatprep.subr.bf16.mxu0 0
      %1046 = vmatpush1.bf16.msra.mxu0 %v1026
      %1047 = vmatprep.subr.bf16.mxu0 0
      %1048 = vmatpush1.bf16.msra.mxu0 %v1027
      %1049 = vmatprep.subr.bf16.mxu0 0
      %1050 = vmatpush1.bf16.msra.mxu0 %v1028
      %1051 = vmatprep.subr.bf16.mxu0 0
      %1052 = vmatpush1.bf16.msra.mxu0 %v1029
      %1053 = vmatprep.subr.bf16.mxu0 0
      %1054 = vmatpush1.bf16.msra.mxu0 %v1030
      %1055 = vmatprep.subr.bf16.mxu0 0
      %1056 = vmatpush1.bf16.msra.mxu0 0
      %1057 = vmatprep.subr.bf16.mxu0 0
      %1058 = vmatpush1.bf16.msra.mxu0 0
      %1059 = vmatprep.subr.bf16.mxu0 0
      %1060 = vmatpush1.bf16.msra.mxu0 0
      %1061 = vmatprep.subr.bf16.mxu0 0
      %1062 = vmatpush1.bf16.msra.mxu0 0
      %1063 = vmatprep.subr.bf16.mxu0 0
      %1064 = vmatpush1.bf16.msra.mxu0 0
      %1065 = vmatprep.subr.bf16.mxu0 0
      %1066 = vmatpush1.bf16.msra.mxu0 0
      %1067 = vmatprep.subr.bf16.mxu0 0
      %1068 = vmatpush1.bf16.msra.mxu0 0
      %1069 = vmatprep.subr.bf16.mxu0 0
      %1070 = vmatpush1.bf16.msra.mxu0 0
      %1071 = vmatprep.mubr.bf16.mxu0 0
      %1072 = vmatmul.mubr.bf16.gmra.mrb[0].mxu0 %v983
      %v1073 = vpop.f32.mrb[0].mxu0
      %v1074 = vadd.f32 0.0, %v1073
      %v1075 = vpop.f32.mrb[0].mxu0
      %v1076 = vpop.f32.mrb[0].mxu0
      %v1077 = vadd.f32 0.0, %v1076
      %v1078 = vpop.f32.mrb[0].mxu0
      %1079 = vmatprep.mubr.bf16.mxu0 0
      %1080 = vmatmul.mubr.bf16.gmra.mrb[0].mxu0 %v984
      %v1081 = vpop.f32.mrb[0].mxu0
      %v1082 = vadd.f32 0.0, %v1081
      %v1083 = vpop.f32.mrb[0].mxu0
      %v1084 = vpop.f32.mrb[0].mxu0
      %v1085 = vadd.f32 0.0, %v1084
      %v1086 = vpop.f32.mrb[0].mxu0
      %1087 = vmatprep.mubr.bf16.mxu0 0
      %1088 = vmatmul.mubr.bf16.gmra.mrb[0].mxu0 %v985
      %v1089 = vpop.f32.mrb[0].mxu0
      %v1090 = vadd.f32 0.0, %v1089
      %v1091 = vpop.f32.mrb[0].mxu0
      %v1092 = vpop.f32.mrb[0].mxu0
      %v1093 = vadd.f32 0.0, %v1092
      %v1094 = vpop.f32.mrb[0].mxu0
      %1095 = vmatprep.mubr.bf16.mxu0 0
      %1096 = vmatmul.mubr.bf16.gmra.mrb[0].mxu0 %v986
      %v1097 = vpop.f32.mrb[0].mxu0
      %v1098 = vadd.f32 0.0, %v1097
      %v1099 = vpop.f32.mrb[0].mxu0
      %v1100 = vpop.f32.mrb[0].mxu0
      %v1101 = vadd.f32 0.0, %v1100
      %v1102 = vpop.f32.mrb[0].mxu0
      %1103 = vdwg.mxu0
      %v1104 = vadd.f32 %v943, %v1074
      %v1105 = vadd.f32 %v944, %v1077
      %v1106 = vadd.f32 %v945, %v1082
      %v1107 = vadd.f32 %v946, %v1085
      %v1108 = vadd.f32 %v947, %v1090
      %v1109 = vadd.f32 %v948, %v1093
      %v1110 = vadd.f32 %v949, %v1098
      %v1111 = vadd.f32 %v950, %v1101
      %v1113 = vrot.slane %v188, 5
      %v1114 = vrot.slane %v1113, 4
      %v1115 = vrot.slane %v189, 5
      %v1116 = vsel %vm616, %v1114, %v1115
      %s1117 = scalar_lea.vmem %s1, 320
      %v1118 = vld [vmem:[%s1117] sm:$0xf]
      %v1119 = vld [vmem:[%s1117 + $0x4] sm:$0xf]
      %v1120 = vld [vmem:[%s1117 + $0x8] sm:$0xf]
      %v1121 = vld [vmem:[%s1117 + $0xc] sm:$0xf]
      %v1122 = vld [vmem:[%s1117 + $0x10] sm:$0xf]
      %v1123 = vld [vmem:[%s1117 + $0x14] sm:$0xf]
      %v1124 = vld [vmem:[%s1117 + $0x18] sm:$0xf]
      %v1125 = vld [vmem:[%s1117 + $0x1c] sm:$0xf]
      %v1126 = vld [vmem:[%s1117 + $0x20] sm:$0xf]
      %v1127 = vld [vmem:[%s1117 + $0x24] sm:$0xf]
      %v1128 = vld [vmem:[%s1117 + $0x28] sm:$0xf]
      %v1129 = vld [vmem:[%s1117 + $0x2c] sm:$0xf]
      %v1130 = vld [vmem:[%s1117 + $0x30] sm:$0xf]
      %v1131 = vld [vmem:[%s1117 + $0x34] sm:$0xf]
      %v1132 = vld [vmem:[%s1117 + $0x38] sm:$0xf]
      %v1133 = vld [vmem:[%s1117 + $0x3c] sm:$0xf]
      %v1134 = vunpack.c.l.b16 %v1116
      %v1135 = vpack.c.b16 %v668, %v667
      %v1136 = vpack.c.b16 %v670, %v669
      %v1137 = vpack.c.b16 %v672, %v671
      %v1138 = vpack.c.b16 %v1134, %v673
      %v1159 = vunpack.c.l.b16 %v1118
      %v1160 = vunpack.c.l.b16 %v1119
      %v1161 = vunpack.c.l.b16 %v1120
      %v1162 = vunpack.c.l.b16 %v1121
      %v1163 = vunpack.c.l.b16 %v1122
      %v1164 = vunpack.c.l.b16 %v1123
      %v1165 = vunpack.c.l.b16 %v1124
      %v1166 = vunpack.c.l.b16 %v1125
      %v1167 = vunpack.c.l.b16 %v1126
      %v1168 = vunpack.c.l.b16 %v1127
      %v1169 = vunpack.c.l.b16 %v1128
      %v1170 = vunpack.c.l.b16 %v1129
      %v1171 = vunpack.c.l.b16 %v1130
      %v1172 = vunpack.c.l.b16 %v1131
      %v1173 = vunpack.c.l.b16 %v1132
      %v1174 = vunpack.c.l.b16 %v1133
      %v1175 = vpack.c.b16 %v1160, %v1159
      %v1176 = vpack.c.b16 %v1162, %v1161
      %v1177 = vpack.c.b16 %v1164, %v1163
      %v1178 = vpack.c.b16 %v1166, %v1165
      %v1179 = vpack.c.b16 %v1168, %v1167
      %v1180 = vpack.c.b16 %v1170, %v1169
      %v1181 = vpack.c.b16 %v1172, %v1171
      %v1182 = vpack.c.b16 %v1174, %v1173
      %1191 = vmatprep.subr.bf16.mxu0 0
      %1192 = vmatpush1.bf16.msra.mxu0 %v1175
      %1193 = vmatprep.subr.bf16.mxu0 0
      %1194 = vmatpush1.bf16.msra.mxu0 %v1176
      %1195 = vmatprep.subr.bf16.mxu0 0
      %1196 = vmatpush1.bf16.msra.mxu0 %v1177
      %1197 = vmatprep.subr.bf16.mxu0 0
      %1198 = vmatpush1.bf16.msra.mxu0 %v1178
      %1199 = vmatprep.subr.bf16.mxu0 0
      %1200 = vmatpush1.bf16.msra.mxu0 %v1179
      %1201 = vmatprep.subr.bf16.mxu0 0
      %1202 = vmatpush1.bf16.msra.mxu0 %v1180
      %1203 = vmatprep.subr.bf16.mxu0 0
      %1204 = vmatpush1.bf16.msra.mxu0 %v1181
      %1205 = vmatprep.subr.bf16.mxu0 0
      %1206 = vmatpush1.bf16.msra.mxu0 %v1182
      %1207 = vmatprep.subr.bf16.mxu0 0
      %1208 = vmatpush1.bf16.msra.mxu0 0
      %1209 = vmatprep.subr.bf16.mxu0 0
      %1210 = vmatpush1.bf16.msra.mxu0 0
      %1211 = vmatprep.subr.bf16.mxu0 0
      %1212 = vmatpush1.bf16.msra.mxu0 0
      %1213 = vmatprep.subr.bf16.mxu0 0
      %1214 = vmatpush1.bf16.msra.mxu0 0
      %1215 = vmatprep.subr.bf16.mxu0 0
      %1216 = vmatpush1.bf16.msra.mxu0 0
      %1217 = vmatprep.subr.bf16.mxu0 0
      %1218 = vmatpush1.bf16.msra.mxu0 0
      %1219 = vmatprep.subr.bf16.mxu0 0
      %1220 = vmatpush1.bf16.msra.mxu0 0
      %1221 = vmatprep.subr.bf16.mxu0 0
      %1222 = vmatpush1.bf16.msra.mxu0 0
      %1223 = vmatprep.mubr.bf16.mxu0 0
      %1224 = vmatmul.mubr.bf16.gmra.mrb[0].mxu0 %v1135
      %v1225 = vpop.f32.mrb[0].mxu0
      %v1226 = vadd.f32 0.0, %v1225
      %v1227 = vpop.f32.mrb[0].mxu0
      %v1228 = vpop.f32.mrb[0].mxu0
      %v1229 = vadd.f32 0.0, %v1228
      %v1230 = vpop.f32.mrb[0].mxu0
      %1231 = vmatprep.mubr.bf16.mxu0 0
      %1232 = vmatmul.mubr.bf16.gmra.mrb[0].mxu0 %v1136
      %v1233 = vpop.f32.mrb[0].mxu0
      %v1234 = vadd.f32 0.0, %v1233
      %v1235 = vpop.f32.mrb[0].mxu0
      %v1236 = vpop.f32.mrb[0].mxu0
      %v1237 = vadd.f32 0.0, %v1236
      %v1238 = vpop.f32.mrb[0].mxu0
      %1239 = vmatprep.mubr.bf16.mxu0 0
      %1240 = vmatmul.mubr.bf16.gmra.mrb[0].mxu0 %v1137
      %v1241 = vpop.f32.mrb[0].mxu0
      %v1242 = vadd.f32 0.0, %v1241
      %v1243 = vpop.f32.mrb[0].mxu0
      %v1244 = vpop.f32.mrb[0].mxu0
      %v1245 = vadd.f32 0.0, %v1244
      %v1246 = vpop.f32.mrb[0].mxu0
      %1247 = vmatprep.mubr.bf16.mxu0 0
      %1248 = vmatmul.mubr.bf16.gmra.mrb[0].mxu0 %v1138
      %v1249 = vpop.f32.mrb[0].mxu0
      %v1250 = vadd.f32 0.0, %v1249
      %v1251 = vpop.f32.mrb[0].mxu0
      %v1252 = vpop.f32.mrb[0].mxu0
      %v1253 = vadd.f32 0.0, %v1252
      %v1254 = vpop.f32.mrb[0].mxu0
      %1255 = vdwg.mxu0
      %v1256 = vadd.f32 %v1104, %v1226
      %v1257 = vadd.f32 %v1105, %v1229
      %v1258 = vadd.f32 %v1106, %v1234
      %v1259 = vadd.f32 %v1107, %v1237
      %v1260 = vadd.f32 %v1108, %v1242
      %v1261 = vadd.f32 %v1109, %v1245
      %v1262 = vadd.f32 %v1110, %v1250
      %v1263 = vadd.f32 %v1111, %v1253
      %s1264 = scalar_lea.vmem %s1, 384
      %v1265 = vld [vmem:[%s1264] sm:$0xf]
      %v1266 = vld [vmem:[%s1264 + $0x4] sm:$0xf]
      %v1267 = vld [vmem:[%s1264 + $0x8] sm:$0xf]
      %v1268 = vld [vmem:[%s1264 + $0xc] sm:$0xf]
      %v1269 = vld [vmem:[%s1264 + $0x10] sm:$0xf]
      %v1270 = vld [vmem:[%s1264 + $0x14] sm:$0xf]
      %v1271 = vld [vmem:[%s1264 + $0x18] sm:$0xf]
      %v1272 = vld [vmem:[%s1264 + $0x1c] sm:$0xf]
      %v1273 = vld [vmem:[%s1264 + $0x20] sm:$0xf]
      %v1274 = vld [vmem:[%s1264 + $0x24] sm:$0xf]
      %v1275 = vld [vmem:[%s1264 + $0x28] sm:$0xf]
      %v1276 = vld [vmem:[%s1264 + $0x2c] sm:$0xf]
      %v1277 = vld [vmem:[%s1264 + $0x30] sm:$0xf]
      %v1278 = vld [vmem:[%s1264 + $0x34] sm:$0xf]
      %v1279 = vld [vmem:[%s1264 + $0x38] sm:$0xf]
      %v1280 = vld [vmem:[%s1264 + $0x3c] sm:$0xf]
      %v1282 = vunpack.c.l.b16 %v190
      %v1283 = vpack.c.b16 %v1282, %v821
      %v1301 = vunpack.c.l.b16 %v1265
      %v1302 = vunpack.c.l.b16 %v1266
      %v1303 = vunpack.c.l.b16 %v1267
      %v1304 = vunpack.c.l.b16 %v1268
      %v1305 = vunpack.c.l.b16 %v1269
      %v1306 = vunpack.c.l.b16 %v1270
      %v1307 = vunpack.c.l.b16 %v1271
      %v1308 = vunpack.c.l.b16 %v1272
      %v1309 = vunpack.c.l.b16 %v1273
      %v1310 = vunpack.c.l.b16 %v1274
      %v1311 = vunpack.c.l.b16 %v1275
      %v1312 = vunpack.c.l.b16 %v1276
      %v1313 = vunpack.c.l.b16 %v1277
      %v1314 = vunpack.c.l.b16 %v1278
      %v1315 = vunpack.c.l.b16 %v1279
      %v1316 = vunpack.c.l.b16 %v1280
      %v1317 = vpack.c.b16 %v1302, %v1301
      %v1318 = vpack.c.b16 %v1304, %v1303
      %v1319 = vpack.c.b16 %v1306, %v1305
      %v1320 = vpack.c.b16 %v1308, %v1307
      %v1321 = vpack.c.b16 %v1310, %v1309
      %v1322 = vpack.c.b16 %v1312, %v1311
      %v1323 = vpack.c.b16 %v1314, %v1313
      %v1324 = vpack.c.b16 %v1316, %v1315
      %1333 = vmatprep.subr.bf16.mxu0 0
      %1334 = vmatpush1.bf16.msra.mxu0 %v1317
      %1335 = vmatprep.subr.bf16.mxu0 0
      %1336 = vmatpush1.bf16.msra.mxu0 %v1318
      %1337 = vmatprep.subr.bf16.mxu0 0
      %1338 = vmatpush1.bf16.msra.mxu0 %v1319
      %1339 = vmatprep.subr.bf16.mxu0 0
      %1340 = vmatpush1.bf16.msra.mxu0 %v1320
      %1341 = vmatprep.subr.bf16.mxu0 0
      %1342 = vmatpush1.bf16.msra.mxu0 %v1321
      %1343 = vmatprep.subr.bf16.mxu0 0
      %1344 = vmatpush1.bf16.msra.mxu0 %v1322
      %1345 = vmatprep.subr.bf16.mxu0 0
      %1346 = vmatpush1.bf16.msra.mxu0 %v1323
      %1347 = vmatprep.subr.bf16.mxu0 0
      %1348 = vmatpush1.bf16.msra.mxu0 %v1324
      %1349 = vmatprep.subr.bf16.mxu0 0
      %1350 = vmatpush1.bf16.msra.mxu0 0
      %1351 = vmatprep.subr.bf16.mxu0 0
      %1352 = vmatpush1.bf16.msra.mxu0 0
      %1353 = vmatprep.subr.bf16.mxu0 0
      %1354 = vmatpush1.bf16.msra.mxu0 0
      %1355 = vmatprep.subr.bf16.mxu0 0
      %1356 = vmatpush1.bf16.msra.mxu0 0
      %1357 = vmatprep.subr.bf16.mxu0 0
      %1358 = vmatpush1.bf16.msra.mxu0 0
      %1359 = vmatprep.subr.bf16.mxu0 0
      %1360 = vmatpush1.bf16.msra.mxu0 0
      %1361 = vmatprep.subr.bf16.mxu0 0
      %1362 = vmatpush1.bf16.msra.mxu0 0
      %1363 = vmatprep.subr.bf16.mxu0 0
      %1364 = vmatpush1.bf16.msra.mxu0 0
      %1365 = vmatprep.mubr.bf16.mxu0 0
      %1366 = vmatmul.mubr.bf16.gmra.mrb[0].mxu0 %v486
      %v1367 = vpop.f32.mrb[0].mxu0
      %v1368 = vadd.f32 0.0, %v1367
      %v1369 = vpop.f32.mrb[0].mxu0
      %v1370 = vpop.f32.mrb[0].mxu0
      %v1371 = vadd.f32 0.0, %v1370
      %v1372 = vpop.f32.mrb[0].mxu0
      %1373 = vmatprep.mubr.bf16.mxu0 0
      %1374 = vmatmul.mubr.bf16.gmra.mrb[0].mxu0 %v487
      %v1375 = vpop.f32.mrb[0].mxu0
      %v1376 = vadd.f32 0.0, %v1375
      %v1377 = vpop.f32.mrb[0].mxu0
      %v1378 = vpop.f32.mrb[0].mxu0
      %v1379 = vadd.f32 0.0, %v1378
      %v1380 = vpop.f32.mrb[0].mxu0
      %1381 = vmatprep.mubr.bf16.mxu0 0
      %1382 = vmatmul.mubr.bf16.gmra.mrb[0].mxu0 %v488
      %v1383 = vpop.f32.mrb[0].mxu0
      %v1384 = vadd.f32 0.0, %v1383
      %v1385 = vpop.f32.mrb[0].mxu0
      %v1386 = vpop.f32.mrb[0].mxu0
      %v1387 = vadd.f32 0.0, %v1386
      %v1388 = vpop.f32.mrb[0].mxu0
      %1389 = vmatprep.mubr.bf16.mxu0 0
      %1390 = vmatmul.mubr.bf16.gmra.mrb[0].mxu0 %v1283
      %v1391 = vpop.f32.mrb[0].mxu0
      %v1392 = vadd.f32 0.0, %v1391
      %v1393 = vpop.f32.mrb[0].mxu0
      %v1394 = vpop.f32.mrb[0].mxu0
      %v1395 = vadd.f32 0.0, %v1394
      %v1396 = vpop.f32.mrb[0].mxu0
      %1397 = vdwg.mxu0
      %v1398 = vadd.f32 %v1256, %v1368
      %v1399 = vadd.f32 %v1257, %v1371
      %v1400 = vadd.f32 %v1258, %v1376
      %v1401 = vadd.f32 %v1259, %v1379
      %v1402 = vadd.f32 %v1260, %v1384
      %v1403 = vadd.f32 %v1261, %v1387
      %v1404 = vadd.f32 %v1262, %v1392
      %v1405 = vadd.f32 %v1263, %v1395
      %v1407 = vshrl.u32 %v190, 16
      %v1409 = vrot.slane %v1407, 4
      %v1410 = vshll.u32 %v190, 16
      %v1412 = vrot.slane %v1410, 5
      %v1413 = vor.u32 %v1409, %v1412
      %v1414 = vrot.slane %v1413, 4
      %v1416 = vshll.u32 %v191, 16
      %v1418 = vrot.slane %v1416, 5
      %v1419 = vsel %vm210, %v1414, %v1418
      %s1420 = scalar_lea.vmem %s1, 448
      %v1421 = vld [vmem:[%s1420] sm:$0xf]
      %v1422 = vld [vmem:[%s1420 + $0x4] sm:$0xf]
      %v1423 = vld [vmem:[%s1420 + $0x8] sm:$0xf]
      %v1424 = vld [vmem:[%s1420 + $0xc] sm:$0xf]
      %v1425 = vld [vmem:[%s1420 + $0x10] sm:$0xf]
      %v1426 = vld [vmem:[%s1420 + $0x14] sm:$0xf]
      %v1427 = vld [vmem:[%s1420 + $0x18] sm:$0xf]
      %v1428 = vld [vmem:[%s1420 + $0x1c] sm:$0xf]
      %v1429 = vld [vmem:[%s1420 + $0x20] sm:$0xf]
      %v1430 = vld [vmem:[%s1420 + $0x24] sm:$0xf]
      %v1431 = vld [vmem:[%s1420 + $0x28] sm:$0xf]
      %v1432 = vld [vmem:[%s1420 + $0x2c] sm:$0xf]
      %v1433 = vld [vmem:[%s1420 + $0x30] sm:$0xf]
      %v1434 = vld [vmem:[%s1420 + $0x34] sm:$0xf]
      %v1435 = vld [vmem:[%s1420 + $0x38] sm:$0xf]
      %v1436 = vld [vmem:[%s1420 + $0x3c] sm:$0xf]
      %v1437 = vunpack.c.l.b16 %v1419
      %v1438 = vpack.c.b16 %v1437, %v982
      %v1456 = vunpack.c.l.b16 %v1421
      %v1457 = vunpack.c.l.b16 %v1422
      %v1458 = vunpack.c.l.b16 %v1423
      %v1459 = vunpack.c.l.b16 %v1424
      %v1460 = vunpack.c.l.b16 %v1425
      %v1461 = vunpack.c.l.b16 %v1426
      %v1462 = vunpack.c.l.b16 %v1427
      %v1463 = vunpack.c.l.b16 %v1428
      %v1464 = vunpack.c.l.b16 %v1429
      %v1465 = vunpack.c.l.b16 %v1430
      %v1466 = vunpack.c.l.b16 %v1431
      %v1467 = vunpack.c.l.b16 %v1432
      %v1468 = vunpack.c.l.b16 %v1433
      %v1469 = vunpack.c.l.b16 %v1434
      %v1470 = vunpack.c.l.b16 %v1435
      %v1471 = vunpack.c.l.b16 %v1436
      %v1472 = vpack.c.b16 %v1457, %v1456
      %v1473 = vpack.c.b16 %v1459, %v1458
      %v1474 = vpack.c.b16 %v1461, %v1460
      %v1475 = vpack.c.b16 %v1463, %v1462
      %v1476 = vpack.c.b16 %v1465, %v1464
      %v1477 = vpack.c.b16 %v1467, %v1466
      %v1478 = vpack.c.b16 %v1469, %v1468
      %v1479 = vpack.c.b16 %v1471, %v1470
      %1488 = vmatprep.subr.bf16.mxu0 0
      %1489 = vmatpush1.bf16.msra.mxu0 %v1472
      %1490 = vmatprep.subr.bf16.mxu0 0
      %1491 = vmatpush1.bf16.msra.mxu0 %v1473
      %1492 = vmatprep.subr.bf16.mxu0 0
      %1493 = vmatpush1.bf16.msra.mxu0 %v1474
      %1494 = vmatprep.subr.bf16.mxu0 0
      %1495 = vmatpush1.bf16.msra.mxu0 %v1475
      %1496 = vmatprep.subr.bf16.mxu0 0
      %1497 = vmatpush1.bf16.msra.mxu0 %v1476
      %1498 = vmatprep.subr.bf16.mxu0 0
      %1499 = vmatpush1.bf16.msra.mxu0 %v1477
      %1500 = vmatprep.subr.bf16.mxu0 0
      %1501 = vmatpush1.bf16.msra.mxu0 %v1478
      %1502 = vmatprep.subr.bf16.mxu0 0
      %1503 = vmatpush1.bf16.msra.mxu0 %v1479
      %1504 = vmatprep.subr.bf16.mxu0 0
      %1505 = vmatpush1.bf16.msra.mxu0 0
      %1506 = vmatprep.subr.bf16.mxu0 0
      %1507 = vmatpush1.bf16.msra.mxu0 0
      %1508 = vmatprep.subr.bf16.mxu0 0
      %1509 = vmatpush1.bf16.msra.mxu0 0
      %1510 = vmatprep.subr.bf16.mxu0 0
      %1511 = vmatpush1.bf16.msra.mxu0 0
      %1512 = vmatprep.subr.bf16.mxu0 0
      %1513 = vmatpush1.bf16.msra.mxu0 0
      %1514 = vmatprep.subr.bf16.mxu0 0
      %1515 = vmatpush1.bf16.msra.mxu0 0
      %1516 = vmatprep.subr.bf16.mxu0 0
      %1517 = vmatpush1.bf16.msra.mxu0 0
      %1518 = vmatprep.subr.bf16.mxu0 0
      %1519 = vmatpush1.bf16.msra.mxu0 0
      %1520 = vmatprep.mubr.bf16.mxu0 0
      %1521 = vmatmul.mubr.bf16.gmra.mrb[0].mxu0 %v349
      %v1522 = vpop.f32.mrb[0].mxu0
      %v1523 = vadd.f32 0.0, %v1522
      %v1524 = vpop.f32.mrb[0].mxu0
      %v1525 = vpop.f32.mrb[0].mxu0
      %v1526 = vadd.f32 0.0, %v1525
      %v1527 = vpop.f32.mrb[0].mxu0
      %1528 = vmatprep.mubr.bf16.mxu0 0
      %1529 = vmatmul.mubr.bf16.gmra.mrb[0].mxu0 %v350
      %v1530 = vpop.f32.mrb[0].mxu0
      %v1531 = vadd.f32 0.0, %v1530
      %v1532 = vpop.f32.mrb[0].mxu0
      %v1533 = vpop.f32.mrb[0].mxu0
      %v1534 = vadd.f32 0.0, %v1533
      %v1535 = vpop.f32.mrb[0].mxu0
      %1536 = vmatprep.mubr.bf16.mxu0 0
      %1537 = vmatmul.mubr.bf16.gmra.mrb[0].mxu0 %v351
      %v1538 = vpop.f32.mrb[0].mxu0
      %v1539 = vadd.f32 0.0, %v1538
      %v1540 = vpop.f32.mrb[0].mxu0
      %v1541 = vpop.f32.mrb[0].mxu0
      %v1542 = vadd.f32 0.0, %v1541
      %v1543 = vpop.f32.mrb[0].mxu0
      %1544 = vmatprep.mubr.bf16.mxu0 0
      %1545 = vmatmul.mubr.bf16.gmra.mrb[0].mxu0 %v1438
      %v1546 = vpop.f32.mrb[0].mxu0
      %v1547 = vadd.f32 0.0, %v1546
      %v1548 = vpop.f32.mrb[0].mxu0
      %v1549 = vpop.f32.mrb[0].mxu0
      %v1550 = vadd.f32 0.0, %v1549
      %v1551 = vpop.f32.mrb[0].mxu0
      %1552 = vdwg.mxu0
      %v1553 = vadd.f32 %v1398, %v1523
      %v1554 = vadd.f32 %v1399, %v1526
      %v1555 = vadd.f32 %v1400, %v1531
      %v1556 = vadd.f32 %v1401, %v1534
      %v1557 = vadd.f32 %v1402, %v1539
      %v1558 = vadd.f32 %v1403, %v1542
      %v1559 = vadd.f32 %v1404, %v1547
      %v1560 = vadd.f32 %v1405, %v1550
      %v1562 = vrot.slane %v190, 5
      %v1563 = vrot.slane %v1562, 4
      %v1564 = vrot.slane %v191, 5
      %v1565 = vsel %vm616, %v1563, %v1564
      %s1566 = scalar_lea.vmem %s1, 512
      %v1567 = vld [vmem:[%s1566] sm:$0xf]
      %v1568 = vld [vmem:[%s1566 + $0x4] sm:$0xf]
      %v1569 = vld [vmem:[%s1566 + $0x8] sm:$0xf]
      %v1570 = vld [vmem:[%s1566 + $0xc] sm:$0xf]
      %v1571 = vld [vmem:[%s1566 + $0x10] sm:$0xf]
      %v1572 = vld [vmem:[%s1566 + $0x14] sm:$0xf]
      %v1573 = vld [vmem:[%s1566 + $0x18] sm:$0xf]
      %v1574 = vld [vmem:[%s1566 + $0x1c] sm:$0xf]
      %v1575 = vld [vmem:[%s1566 + $0x20] sm:$0xf]
      %v1576 = vld [vmem:[%s1566 + $0x24] sm:$0xf]
      %v1577 = vld [vmem:[%s1566 + $0x28] sm:$0xf]
      %v1578 = vld [vmem:[%s1566 + $0x2c] sm:$0xf]
      %v1579 = vld [vmem:[%s1566 + $0x30] sm:$0xf]
      %v1580 = vld [vmem:[%s1566 + $0x34] sm:$0xf]
      %v1581 = vld [vmem:[%s1566 + $0x38] sm:$0xf]
      %v1582 = vld [vmem:[%s1566 + $0x3c] sm:$0xf]
      %v1583 = vunpack.c.l.b16 %v1565
      %v1584 = vpack.c.b16 %v1583, %v1134
      %v1602 = vunpack.c.l.b16 %v1567
      %v1603 = vunpack.c.l.b16 %v1568
      %v1604 = vunpack.c.l.b16 %v1569
      %v1605 = vunpack.c.l.b16 %v1570
      %v1606 = vunpack.c.l.b16 %v1571
      %v1607 = vunpack.c.l.b16 %v1572
      %v1608 = vunpack.c.l.b16 %v1573
      %v1609 = vunpack.c.l.b16 %v1574
      %v1610 = vunpack.c.l.b16 %v1575
      %v1611 = vunpack.c.l.b16 %v1576
      %v1612 = vunpack.c.l.b16 %v1577
      %v1613 = vunpack.c.l.b16 %v1578
      %v1614 = vunpack.c.l.b16 %v1579
      %v1615 = vunpack.c.l.b16 %v1580
      %v1616 = vunpack.c.l.b16 %v1581
      %v1617 = vunpack.c.l.b16 %v1582
      %v1618 = vpack.c.b16 %v1603, %v1602
      %v1619 = vpack.c.b16 %v1605, %v1604
      %v1620 = vpack.c.b16 %v1607, %v1606
      %v1621 = vpack.c.b16 %v1609, %v1608
      %v1622 = vpack.c.b16 %v1611, %v1610
      %v1623 = vpack.c.b16 %v1613, %v1612
      %v1624 = vpack.c.b16 %v1615, %v1614
      %v1625 = vpack.c.b16 %v1617, %v1616
      %1634 = vmatprep.subr.bf16.mxu0 0
      %1635 = vmatpush1.bf16.msra.mxu0 %v1618
      %1636 = vmatprep.subr.bf16.mxu0 0
      %1637 = vmatpush1.bf16.msra.mxu0 %v1619
      %1638 = vmatprep.subr.bf16.mxu0 0
      %1639 = vmatpush1.bf16.msra.mxu0 %v1620
      %1640 = vmatprep.subr.bf16.mxu0 0
      %1641 = vmatpush1.bf16.msra.mxu0 %v1621
      %1642 = vmatprep.subr.bf16.mxu0 0
      %1643 = vmatpush1.bf16.msra.mxu0 %v1622
      %1644 = vmatprep.subr.bf16.mxu0 0
      %1645 = vmatpush1.bf16.msra.mxu0 %v1623
      %1646 = vmatprep.subr.bf16.mxu0 0
      %1647 = vmatpush1.bf16.msra.mxu0 %v1624
      %1648 = vmatprep.subr.bf16.mxu0 0
      %1649 = vmatpush1.bf16.msra.mxu0 %v1625
      %1650 = vmatprep.subr.bf16.mxu0 0
      %1651 = vmatpush1.bf16.msra.mxu0 0
      %1652 = vmatprep.subr.bf16.mxu0 0
      %1653 = vmatpush1.bf16.msra.mxu0 0
      %1654 = vmatprep.subr.bf16.mxu0 0
      %1655 = vmatpush1.bf16.msra.mxu0 0
      %1656 = vmatprep.subr.bf16.mxu0 0
      %1657 = vmatpush1.bf16.msra.mxu0 0
      %1658 = vmatprep.subr.bf16.mxu0 0
      %1659 = vmatpush1.bf16.msra.mxu0 0
      %1660 = vmatprep.subr.bf16.mxu0 0
      %1661 = vmatpush1.bf16.msra.mxu0 0
      %1662 = vmatprep.subr.bf16.mxu0 0
      %1663 = vmatpush1.bf16.msra.mxu0 0
      %1664 = vmatprep.subr.bf16.mxu0 0
      %1665 = vmatpush1.bf16.msra.mxu0 0
      %1666 = vmatprep.mubr.bf16.mxu0 0
      %1667 = vmatmul.mubr.bf16.gmra.mrb[0].mxu0 %v675
      %v1668 = vpop.f32.mrb[0].mxu0
      %v1669 = vadd.f32 0.0, %v1668
      %v1670 = vpop.f32.mrb[0].mxu0
      %v1671 = vpop.f32.mrb[0].mxu0
      %v1672 = vadd.f32 0.0, %v1671
      %v1673 = vpop.f32.mrb[0].mxu0
      %1674 = vmatprep.mubr.bf16.mxu0 0
      %1675 = vmatmul.mubr.bf16.gmra.mrb[0].mxu0 %v676
      %v1676 = vpop.f32.mrb[0].mxu0
      %v1677 = vadd.f32 0.0, %v1676
      %v1678 = vpop.f32.mrb[0].mxu0
      %v1679 = vpop.f32.mrb[0].mxu0
      %v1680 = vadd.f32 0.0, %v1679
      %v1681 = vpop.f32.mrb[0].mxu0
      %1682 = vmatprep.mubr.bf16.mxu0 0
      %1683 = vmatmul.mubr.bf16.gmra.mrb[0].mxu0 %v677
      %v1684 = vpop.f32.mrb[0].mxu0
      %v1685 = vadd.f32 0.0, %v1684
      %v1686 = vpop.f32.mrb[0].mxu0
      %v1687 = vpop.f32.mrb[0].mxu0
      %v1688 = vadd.f32 0.0, %v1687
      %v1689 = vpop.f32.mrb[0].mxu0
      %1690 = vmatprep.mubr.bf16.mxu0 0
      %1691 = vmatmul.mubr.bf16.gmra.mrb[0].mxu0 %v1584
      %v1692 = vpop.f32.mrb[0].mxu0
      %v1693 = vadd.f32 0.0, %v1692
      %v1694 = vpop.f32.mrb[0].mxu0
      %v1695 = vpop.f32.mrb[0].mxu0
      %v1696 = vadd.f32 0.0, %v1695
      %v1697 = vpop.f32.mrb[0].mxu0
      %1698 = vdwg.mxu0
      %v1699 = vadd.f32 %v1553, %v1669
      %v1700 = vadd.f32 %v1554, %v1672
      %v1701 = vadd.f32 %v1555, %v1677
      %v1702 = vadd.f32 %v1556, %v1680
      %v1703 = vadd.f32 %v1557, %v1685
      %v1704 = vadd.f32 %v1558, %v1688
      %v1705 = vadd.f32 %v1559, %v1693
      %v1706 = vadd.f32 %v1560, %v1696
      %v1707 = vld [vmem:[%s2] sm:$0x1]
      %v1709 = vlaneseq
      %v1710 = vshrl.u32 %v1709, 7
      %v1711 = vsub.s32 0, %v1710
      %v1712 = vrot.slane %v1707, %v1711
      %v1714 = vadd.f32 %v1699, %v1712
      %v1715 = vadd.f32 %v1700, %v1712
      %v1716 = vadd.f32 %v1701, %v1712
      %v1717 = vadd.f32 %v1702, %v1712
      %v1718 = vadd.f32 %v1703, %v1712
      %v1719 = vadd.f32 %v1704, %v1712
      %v1720 = vadd.f32 %v1705, %v1712
      %v1721 = vadd.f32 %v1706, %v1712
      %v1722 = vmax.f32 %v1714, 0.0
      %v1723 = vmax.f32 %v1715, 0.0
      %v1724 = vmax.f32 %v1716, 0.0
      %v1725 = vmax.f32 %v1717, 0.0
      %v1726 = vmax.f32 %v1718, 0.0
      %v1727 = vmax.f32 %v1719, 0.0
      %v1728 = vmax.f32 %v1720, 0.0
      %v1729 = vmax.f32 %v1721, 0.0
      %v1730 = vpack.c.bf16 %v1722, %v1722
      %v1731 = vpack.c.bf16 %v1723, %v1723
      %v1732 = vpack.c.bf16 %v1724, %v1724
      %v1733 = vpack.c.bf16 %v1725, %v1725
      %v1734 = vpack.c.bf16 %v1726, %v1726
      %v1735 = vpack.c.bf16 %v1727, %v1727
      %v1736 = vpack.c.bf16 %v1728, %v1728
      %v1737 = vpack.c.bf16 %v1729, %v1729
      %1738 = vst [vmem:[%s170] sm:$0xf] %v1730
      %1739 = vst [vmem:[%s170 + $0x4] sm:$0xf] %v1731
      %1740 = vst [vmem:[%s170 + $0x8] sm:$0xf] %v1732
      %1741 = vst [vmem:[%s170 + $0xc] sm:$0xf] %v1733
      %1742 = vst [vmem:[%s170 + $0x10] sm:$0xf] %v1734
      %1743 = vst [vmem:[%s170 + $0x14] sm:$0xf] %v1735
      %1744 = vst [vmem:[%s170 + $0x18] sm:$0xf] %v1736
      %1745 = vst [vmem:[%s170 + $0x1c] sm:$0xf] %v1737
      %p1746 = scmp.lt.s32.totalorder %s14, 3
      %s1747 = scalar_select %p1746, %s14, 3
      %s1748 = smul.addr %s1747, 8
      %s1749 = smul.addr %s1748, 4
      %s1750 = scalar_lea.vmem %s3, %s1749
      // Predicated region
      $region33: #{_lambda_.12} parent=31 // pred_check
        %p1751 = pneg %p100
      $region34: #{_lambda_.12} parent=31 // pred_check_branch
        %1753 = sbr.rel (%p1751) target = $region36
      $region35: #{_lambda_.12} parent=31 // pred_region
        _
      $region36: #{_lambda_.12} parent=31 // pred_fallthru
        _
    $region32: #{_lambda_.12} parent=5 // pred_fallthru
      _
    %p1754 = scmp.le.s32.totalorder 2, %s9
    // Predicated region
    $region37: #{_lambda_.12} parent=5 // pred_check
      %p1755 = pneg %p1754
    $region38: #{_lambda_.12} parent=5 // pred_check_branch
      %1757 = sbr.rel (%p1755) target = $region40
    $region39: #{_lambda_.12} parent=5 // pred_region
      %s1758 = ssub.s32 %s9, 2
      // Predicated region
      $region41: #{_lambda_.12} parent=39 // pred_check
        %p1759 = pneg %p106
      $region42: #{_lambda_.12} parent=39 // pred_check_branch
        %1761 = sbr.rel (%p1759) target = $region44
      $region43: #{_lambda_.12} parent=39 // pred_region
        %p1762 = scmp.lt.s32.totalorder %s15, 3
        %s1763 = scalar_select %p1762, %s15, 3
        %s1764 = smul.addr %s1763, 8
        %s1765 = smul.addr %s1764, 4
        %s1766 = scalar_lea.vmem %s3, %s1765
      $region44: #{_lambda_.12} parent=39 // pred_fallthru
        _
    $region40: #{_lambda_.12} parent=5 // pred_fallthru
      _
  $region6: #{_lambda_.12} parent=0 // loop_footer
    %s13 = sadd.s32 1, %s9
  $region7: #{_lambda_.12} parent=0 // loop_footer_branch
    %8 = sbr.rel target = $region3
  $region8: #{_lambda_.12} parent=0 // loop_exit
    _

// kernel: _lambda_.10
$region0: #{_lambda_.10}
  #allocation0 [shape = 'u32[]', space=smem, size = 0x4, offset = 0x4, fixed_abs, tag = 'smem constant byte address 0x4 - core index']
  #allocation1 [shape = 'u32[144,128]{1,0:T(1,128)}', space=vmem, size = 0x12000, scoped, tag = 'internal scratch']
  %s0 = inlined_call_operand.vmem [shape: bf16[4,18,18,128], index: 0, kind: input, shape index: {}]
  %s1 = inlined_call_operand.vmem [shape: bf16[3,3,128,128], index: 1, kind: input, shape index: {}]
  %s2 = inlined_call_operand.vmem [shape: f32[1,128], index: 2, kind: input, shape index: {}]
  %s3 = inlined_call_operand.vmem [shape: bf16[4,16,16,128], index: 3, kind: output, shape index: {}]
  %s4 = sld [smem:[#allocation0]]
  $region45: #{_lambda_.10} parent=0
    _
  %s6 = ssub.s32 1, %s4
  %s7 = scalar_select 0, %s6, %s4
  loop: start=0, step=1, limit=6
  $region2: #{_lambda_.10} parent=0 // loop_pre_header
    _
  $region3: #{_lambda_.10} parent=0 // loop_header
    %s9 = sphi 0, %s13
    %p10 = scmp.ge.s32.totalorder %s9, 6
    %s19 = sphi 0, %s21
    %s22 = sphi 0, %s19
    %s23 = sphi 0, %s22
    %s39 = sphi 0, %s23
    %s43 = sphi 0, %s43
    %s45 = sphi 0, %s43
    %s46 = sphi 0, %s45
    %s60 = sphi 0, %s46
    %s64 = sphi 0, %s64
    %s66 = sphi 0, %s64
    %s67 = sphi 0, %s66
    %s81 = sphi 0, %s67
    %s87 = sphi 0, %s89
    %s90 = sphi 0, %s87
    %s91 = sphi 0, %s90
    %s107 = sphi 0, %s91
  $region4: #{_lambda_.10} parent=0 // loop_header_branch
    %12 = sbr.rel (%p10) target = $region8
  $region5: #{_lambda_.10} parent=0 // loop_body
    %s14 = ssub.s32 %s9, 1
    %s15 = ssub.s32 %s9, 2
    %s16 = sadd.s32 %s9, 1
    %s17 = ssub.s32 %s9, %s16
    %p18 = scmp.eq.s32.totalorder %s17, 0
    %s20 = sadd.s32 %s19, 1
    %s21 = scalar_select %p18, %s19, %s20
    %p24 = pneg %p18
    %p25 = scmp.eq.s32.totalorder %s9, 3
    %p26 = por %p24, %p25
    %p27 = scmp.ne.s32.totalorder %s19, %s22
    %p28 = scmp.eq.s32.totalorder %s9, 0
    %p29 = por %p27, %p28
    %p30 = scmp.ne.s32.totalorder %s19, %s22
    %p31 = scmp.eq.s32.totalorder %s14, 3
    %p32 = por %p30, %p31
    %p33 = scmp.ne.s32.totalorder %s22, %s23
    %p34 = scmp.eq.s32.totalorder %s14, 0
    %p35 = por %p33, %p34
    %p36 = scmp.ne.s32.totalorder %s22, %s23
    %p37 = scmp.eq.s32.totalorder %s15, 3
    %p38 = por %p36, %p37
    %p40 = scmp.ne.s32.totalorder %s23, %s39
    %p41 = scmp.eq.s32.totalorder %s15, 0
    %p42 = por %p40, %p41
    %s44 = sadd.s32 %s43, 1
    %p47 = scmp.eq.s32.totalorder %s9, 3
    %p48 = scmp.ne.s32.totalorder %s43, %s45
    %p49 = scmp.eq.s32.totalorder %s9, 0
    %p50 = por %p48, %p49
    %p51 = scmp.ne.s32.totalorder %s43, %s45
    %p52 = scmp.eq.s32.totalorder %s14, 3
    %p53 = por %p51, %p52
    %p54 = scmp.ne.s32.totalorder %s45, %s46
    %p55 = scmp.eq.s32.totalorder %s14, 0
    %p56 = por %p54, %p55
    %p57 = scmp.ne.s32.totalorder %s45, %s46
    %p58 = scmp.eq.s32.totalorder %s15, 3
    %p59 = por %p57, %p58
    %p61 = scmp.ne.s32.totalorder %s46, %s60
    %p62 = scmp.eq.s32.totalorder %s15, 0
    %p63 = por %p61, %p62
    %s65 = sadd.s32 %s64, 1
    %p68 = scmp.eq.s32.totalorder %s9, 3
    %p69 = scmp.ne.s32.totalorder %s64, %s66
    %p70 = scmp.eq.s32.totalorder %s9, 0
    %p71 = por %p69, %p70
    %p72 = scmp.ne.s32.totalorder %s64, %s66
    %p73 = scmp.eq.s32.totalorder %s14, 3
    %p74 = por %p72, %p73
    %p75 = scmp.ne.s32.totalorder %s66, %s67
    %p76 = scmp.eq.s32.totalorder %s14, 0
    %p77 = por %p75, %p76
    %p78 = scmp.ne.s32.totalorder %s66, %s67
    %p79 = scmp.eq.s32.totalorder %s15, 3
    %p80 = por %p78, %p79
    %p82 = scmp.ne.s32.totalorder %s67, %s81
    %p83 = scmp.eq.s32.totalorder %s15, 0
    %p84 = por %p82, %p83
    %s85 = ssub.s32 %s9, %s16
    %p86 = scmp.eq.s32.totalorder %s85, 0
    %s88 = sadd.s32 %s87, 1
    %s89 = scalar_select %p86, %s87, %s88
    %p92 = pneg %p86
    %p93 = scmp.eq.s32.totalorder %s9, 3
    %p94 = por %p92, %p93
    %p95 = scmp.ne.s32.totalorder %s87, %s90
    %p96 = scmp.eq.s32.totalorder %s9, 0
    %p97 = por %p95, %p96
    %p98 = scmp.ne.s32.totalorder %s87, %s90
    %p99 = scmp.eq.s32.totalorder %s14, 3
    %p100 = por %p98, %p99
    %p101 = scmp.ne.s32.totalorder %s90, %s91
    %p102 = scmp.eq.s32.totalorder %s14, 0
    %p103 = por %p101, %p102
    %p104 = scmp.ne.s32.totalorder %s90, %s91
    %p105 = scmp.eq.s32.totalorder %s15, 3
    %p106 = por %p104, %p105
    %p108 = scmp.ne.s32.totalorder %s91, %s107
    %p109 = scmp.eq.s32.totalorder %s15, 0
    %p110 = por %p108, %p109
    %p111 = scmp.le.s32.totalorder 1, %s9
    %p112 = scmp.lt.s32.totalorder %s9, 5
    %p113 = pnand %p111, %p112
    %p114 = pneg %p113
    // Predicated region
    $region9: #{_lambda_.10} parent=5 // pred_check
      _
    $region10: #{_lambda_.10} parent=5 // pred_check_branch
      %116 = sbr.rel (%p113) target = $region12
    $region11: #{_lambda_.10} parent=5 // pred_region
      %s117 = ssub.s32 %s9, 1
      // Predicated region
      $region13: #{_lambda_.10} parent=11 // pred_check
        %p118 = pneg %p56
      $region14: #{_lambda_.10} parent=11 // pred_check_branch
        %120 = sbr.rel (%p118) target = $region16
      $region15: #{_lambda_.10} parent=11 // pred_region
        _
      $region16: #{_lambda_.10} parent=11 // pred_fallthru
        _
      // Predicated region
      $region17: #{_lambda_.10} parent=11 // pred_check
        %p121 = pneg %p77
      $region18: #{_lambda_.10} parent=11 // pred_check_branch
        %123 = sbr.rel (%p121) target = $region20
      $region19: #{_lambda_.10} parent=11 // pred_region
        _
      $region20: #{_lambda_.10} parent=11 // pred_fallthru
        _
    $region12: #{_lambda_.10} parent=5 // pred_fallthru
      _
    %p124 = scmp.lt.s32.totalorder %s9, 4
    // Predicated region
    $region21: #{_lambda_.10} parent=5 // pred_check
      %p125 = pneg %p124
    $region22: #{_lambda_.10} parent=5 // pred_check_branch
      %127 = sbr.rel (%p125) target = $region24
    $region23: #{_lambda_.10} parent=5 // pred_region
      // Predicated region
      $region25: #{_lambda_.10} parent=23 // pred_check
        %p128 = pneg %p29
      $region26: #{_lambda_.10} parent=23 // pred_check_branch
        %130 = sbr.rel (%p128) target = $region28
      $region27: #{_lambda_.10} parent=23 // pred_region
        %p131 = scmp.lt.s32.totalorder %s9, 3
        %s132 = scalar_select %p131, %s9, 3
        %s133 = smul.addr %s132, 54
        %s134 = smul.addr %s133, 4
        %s135 = scalar_lea.vmem %s0, %s134
      $region28: #{_lambda_.10} parent=23 // pred_fallthru
        _
    $region24: #{_lambda_.10} parent=5 // pred_fallthru
      _
    %p136 = scmp.le.s32.totalorder 1, %s9
    %p137 = scmp.lt.s32.totalorder %s9, 5
    %p138 = pnand %p136, %p137
    %p139 = pneg %p138
    // Predicated region
    $region29: #{_lambda_.10} parent=5 // pred_check
      _
    $region30: #{_lambda_.10} parent=5 // pred_check_branch
      %141 = sbr.rel (%p138) target = $region32
    $region31: #{_lambda_.10} parent=5 // pred_region
      %s142 = ssub.s32 %s9, 1
      %p143 = scmp.lt.s32.totalorder %s14, 3
      %s144 = scalar_select %p143, %s14, 3
      %s145 = smul.addr %s144, 54
      %s146 = smul.addr %s145, 4
      %s147 = scalar_lea.vmem %s0, %s146
      %p148 = pneg %p35
      %p149 = pneg %p32
      %p150 = pneg %p56
      %p151 = pneg %p53
      %p152 = pneg %p77
      %p153 = pneg %p74
      %p154 = pneg %p103
      %p155 = pneg %p100
      %p156 = scmp.lt.s32.totalorder %s14, 3
      %s157 = scalar_select %p156, %s14, 3
      %s158 = smul.addr %s157, 32
      %s159 = smul.addr %s158, 4
      %s160 = scalar_lea.vmem %s3, %s159
      %p161 = scmp.lt.s32.totalorder %s14, 3
      %s162 = scalar_select %p161, %s14, 3
      %s163 = smul.addr %s162, 54
      %s164 = smul.addr %s163, 4
      %s165 = scalar_lea.vmem %s0, %s164
      %p166 = scmp.lt.s32.totalorder %s14, 3
      %s167 = scalar_select %p166, %s14, 3
      %s168 = smul.addr %s167, 32
      %s169 = smul.addr %s168, 4
      %s170 = scalar_lea.vmem %s3, %s169
      %v172 = vld [vmem:[%s165] sm:$0xf]
      %v173 = vld [vmem:[%s165 + $0x4] sm:$0xf]
      %v174 = vld [vmem:[%s165 + $0x8] sm:$0x1]
      %v175 = vld [vmem:[%s165 + $0xc] sm:$0xf]
      %v176 = vld [vmem:[%s165 + $0x10] sm:$0xf]
      %v177 = vld [vmem:[%s165 + $0x14] sm:$0x1]
      %v178 = vld [vmem:[%s165 + $0x18] sm:$0xf]
      %v179 = vld [vmem:[%s165 + $0x1c] sm:$0xf]
      %v180 = vld [vmem:[%s165 + $0x20] sm:$0x1]
      %v181 = vld [vmem:[%s165 + $0x24] sm:$0xf]
      %v182 = vld [vmem:[%s165 + $0x28] sm:$0xf]
      %v183 = vld [vmem:[%s165 + $0x2c] sm:$0x1]
      %v184 = vld [vmem:[%s165 + $0x30] sm:$0xf]
      %v185 = vld [vmem:[%s165 + $0x34] sm:$0xf]
      %v186 = vld [vmem:[%s165 + $0x38] sm:$0x1]
      %v187 = vld [vmem:[%s165 + $0x3c] sm:$0xf]
      %v188 = vld [vmem:[%s165 + $0x40] sm:$0xf]
      %v189 = vld [vmem:[%s165 + $0x44] sm:$0x1]
      %v190 = vld [vmem:[%s165 + $0x48] sm:$0xf]
      %v191 = vld [vmem:[%s165 + $0x4c] sm:$0xf]
      %v192 = vld [vmem:[%s165 + $0x50] sm:$0x1]
      %v193 = vld [vmem:[%s165 + $0x54] sm:$0xf]
      %v194 = vld [vmem:[%s165 + $0x58] sm:$0xf]
      %v195 = vld [vmem:[%s165 + $0x5c] sm:$0x1]
      %v196 = vld [vmem:[%s165 + $0x60] sm:$0xf]
      %v197 = vld [vmem:[%s165 + $0x64] sm:$0xf]
      %v198 = vld [vmem:[%s165 + $0x68] sm:$0x1]
      %v199 = vld [vmem:[%s165 + $0x6c] sm:$0xf]
      %v200 = vld [vmem:[%s165 + $0x70] sm:$0xf]
      %v201 = vld [vmem:[%s165 + $0x74] sm:$0x1]
      %v202 = vld [vmem:[%s165 + $0x78] sm:$0xf]
      %v203 = vld [vmem:[%s165 + $0x7c] sm:$0xf]
      %v204 = vld [vmem:[%s165 + $0x80] sm:$0x1]
      %v205 = vld [vmem:[%s165 + $0x84] sm:$0xf]
      %v206 = vld [vmem:[%s165 + $0x88] sm:$0xf]
      %v207 = vld [vmem:[%s165 + $0x8c] sm:$0x1]
      %v208 = vld [vmem:[%s165 + $0x90] sm:$0xf]
      %v209 = vld [vmem:[%s165 + $0x94] sm:$0xf]
      %v210 = vld [vmem:[%s165 + $0x98] sm:$0x1]
      %v211 = vld [vmem:[%s165 + $0x9c] sm:$0xf]
      %v212 = vld [vmem:[%s165 + $0xa0] sm:$0xf]
      %v213 = vld [vmem:[%s165 + $0xa4] sm:$0x1]
      %v214 = vld [vmem:[%s165 + $0xa8] sm:$0xf]
      %v215 = vld [vmem:[%s165 + $0xac] sm:$0xf]
      %v216 = vld [vmem:[%s165 + $0xb0] sm:$0x1]
      %v217 = vld [vmem:[%s165 + $0xb4] sm:$0xf]
      %v218 = vld [vmem:[%s165 + $0xb8] sm:$0xf]
      %v219 = vld [vmem:[%s165 + $0xbc] sm:$0x1]
      %v220 = vld [vmem:[%s165 + $0xc0] sm:$0xf]
      %v221 = vld [vmem:[%s165 + $0xc4] sm:$0xf]
      %v222 = vld [vmem:[%s165 + $0xc8] sm:$0x1]
      %v223 = vld [vmem:[%s165 + $0xcc] sm:$0xf]
      %v224 = vld [vmem:[%s165 + $0xd0] sm:$0xf]
      %v225 = vld [vmem:[%s165 + $0xd4] sm:$0x1]
      %v226 = vld [vmem:[%s1] sm:$0xf]
      %v227 = vld [vmem:[%s1 + $0x4] sm:$0xf]
      %v228 = vld [vmem:[%s1 + $0x8] sm:$0xf]
      %v229 = vld [vmem:[%s1 + $0xc] sm:$0xf]
      %v230 = vld [vmem:[%s1 + $0x10] sm:$0xf]
      %v231 = vld [vmem:[%s1 + $0x14] sm:$0xf]
      %v232 = vld [vmem:[%s1 + $0x18] sm:$0xf]
      %v233 = vld [vmem:[%s1 + $0x1c] sm:$0xf]
      %v234 = vld [vmem:[%s1 + $0x20] sm:$0xf]
      %v235 = vld [vmem:[%s1 + $0x24] sm:$0xf]
      %v236 = vld [vmem:[%s1 + $0x28] sm:$0xf]
      %v237 = vld [vmem:[%s1 + $0x2c] sm:$0xf]
      %v238 = vld [vmem:[%s1 + $0x30] sm:$0xf]
      %v239 = vld [vmem:[%s1 + $0x34] sm:$0xf]
      %v240 = vld [vmem:[%s1 + $0x38] sm:$0xf]
      %v241 = vld [vmem:[%s1 + $0x3c] sm:$0xf]
      %vm242 = vsmask.f32 3328
      %vm243 = vsmask.f32 7440
      %vm244 = vmor %vm242, %vm243
      %v246 = vshrl.u32 %v172, 16
      %v248 = vrot.slane %v246, 4
      %v249 = vshll.u32 %v172, 16
      %v251 = vrot.slane %v249, 5
      %v252 = vor.u32 %v248, %v251
      %v253 = vrot.slane %v252, 4
      %v255 = vshll.u32 %v173, 16
      %v257 = vrot.slane %v255, 5
      %v258 = vsel %vm244, %v253, %v257
      %v259 = vshrl.u32 %v173, 16
      %v261 = vrot.slane %v259, 4
      %v262 = vor.u32 %v261, %v257
      %v263 = vrot.slane %v262, 4
      %v265 = vshll.u32 %v174, 16
      %v267 = vrot.slane %v265, 5
      %v268 = vsel %vm244, %v263, %v267
      %v270 = vshrl.u32 %v175, 16
      %v272 = vrot.slane %v270, 4
      %v273 = vshll.u32 %v175, 16
      %v275 = vrot.slane %v273, 5
      %v276 = vor.u32 %v272, %v275
      %v277 = vrot.slane %v276, 4
      %v279 = vshll.u32 %v176, 16
      %v281 = vrot.slane %v279, 5
      %v282 = vsel %vm244, %v277, %v281
      %v283 = vshrl.u32 %v176, 16
      %v285 = vrot.slane %v283, 4
      %v286 = vor.u32 %v285, %v281
      %v287 = vrot.slane %v286, 4
      %v289 = vshll.u32 %v177, 16
      %v291 = vrot.slane %v289, 5
      %v292 = vsel %vm244, %v287, %v291
      %v294 = vshrl.u32 %v178, 16
      %v296 = vrot.slane %v294, 4
      %v297 = vshll.u32 %v178, 16
      %v299 = vrot.slane %v297, 5
      %v300 = vor.u32 %v296, %v299
      %v301 = vrot.slane %v300, 4
      %v303 = vshll.u32 %v179, 16
      %v305 = vrot.slane %v303, 5
      %v306 = vsel %vm244, %v301, %v305
      %v307 = vshrl.u32 %v179, 16
      %v309 = vrot.slane %v307, 4
      %v310 = vor.u32 %v309, %v305
      %v311 = vrot.slane %v310, 4
      %v313 = vshll.u32 %v180, 16
      %v315 = vrot.slane %v313, 5
      %v316 = vsel %vm244, %v311, %v315
      %v318 = vshrl.u32 %v181, 16
      %v320 = vrot.slane %v318, 4
      %v321 = vshll.u32 %v181, 16
      %v323 = vrot.slane %v321, 5
      %v324 = vor.u32 %v320, %v323
      %v325 = vrot.slane %v324, 4
      %v327 = vshll.u32 %v182, 16
      %v329 = vrot.slane %v327, 5
      %v330 = vsel %vm244, %v325, %v329
      %v331 = vshrl.u32 %v182, 16
      %v333 = vrot.slane %v331, 4
      %v334 = vor.u32 %v333, %v329
      %v335 = vrot.slane %v334, 4
      %v337 = vshll.u32 %v183, 16
      %v339 = vrot.slane %v337, 5
      %v340 = vsel %vm244, %v335, %v339
      %v342 = vshrl.u32 %v184, 16
      %v344 = vrot.slane %v342, 4
      %v345 = vshll.u32 %v184, 16
      %v347 = vrot.slane %v345, 5
      %v348 = vor.u32 %v344, %v347
      %v349 = vrot.slane %v348, 4
      %v351 = vshll.u32 %v185, 16
      %v353 = vrot.slane %v351, 5
      %v354 = vsel %vm244, %v349, %v353
      %v355 = vshrl.u32 %v185, 16
      %v357 = vrot.slane %v355, 4
      %v358 = vor.u32 %v357, %v353
      %v359 = vrot.slane %v358, 4
      %v361 = vshll.u32 %v186, 16
      %v363 = vrot.slane %v361, 5
      %v364 = vsel %vm244, %v359, %v363
      %v366 = vshrl.u32 %v187, 16
      %v368 = vrot.slane %v366, 4
      %v369 = vshll.u32 %v187, 16
      %v371 = vrot.slane %v369, 5
      %v372 = vor.u32 %v368, %v371
      %v373 = vrot.slane %v372, 4
      %v375 = vshll.u32 %v188, 16
      %v377 = vrot.slane %v375, 5
      %v378 = vsel %vm244, %v373, %v377
      %v379 = vshrl.u32 %v188, 16
      %v381 = vrot.slane %v379, 4
      %v382 = vor.u32 %v381, %v377
      %v383 = vrot.slane %v382, 4
      %v385 = vshll.u32 %v189, 16
      %v387 = vrot.slane %v385, 5
      %v388 = vsel %vm244, %v383, %v387
      %v390 = vshrl.u32 %v190, 16
      %v392 = vrot.slane %v390, 4
      %v393 = vshll.u32 %v190, 16
      %v395 = vrot.slane %v393, 5
      %v396 = vor.u32 %v392, %v395
      %v397 = vrot.slane %v396, 4
      %v399 = vshll.u32 %v191, 16
      %v401 = vrot.slane %v399, 5
      %v402 = vsel %vm244, %v397, %v401
      %v403 = vshrl.u32 %v191, 16
      %v405 = vrot.slane %v403, 4
      %v406 = vor.u32 %v405, %v401
      %v407 = vrot.slane %v406, 4
      %v409 = vshll.u32 %v192, 16
      %v411 = vrot.slane %v409, 5
      %v412 = vsel %vm244, %v407, %v411
      %v414 = vshrl.u32 %v193, 16
      %v416 = vrot.slane %v414, 4
      %v417 = vshll.u32 %v193, 16
      %v419 = vrot.slane %v417, 5
      %v420 = vor.u32 %v416, %v419
      %v421 = vrot.slane %v420, 4
      %v423 = vshll.u32 %v194, 16
      %v425 = vrot.slane %v423, 5
      %v426 = vsel %vm244, %v421, %v425
      %v427 = vshrl.u32 %v194, 16
      %v429 = vrot.slane %v427, 4
      %v430 = vor.u32 %v429, %v425
      %v431 = vrot.slane %v430, 4
      %v433 = vshll.u32 %v195, 16
      %v435 = vrot.slane %v433, 5
      %v436 = vsel %vm244, %v431, %v435
      %v438 = vshrl.u32 %v196, 16
      %v440 = vrot.slane %v438, 4
      %v441 = vshll.u32 %v196, 16
      %v443 = vrot.slane %v441, 5
      %v444 = vor.u32 %v440, %v443
      %v445 = vrot.slane %v444, 4
      %v447 = vshll.u32 %v197, 16
      %v449 = vrot.slane %v447, 5
      %v450 = vsel %vm244, %v445, %v449
      %v451 = vshrl.u32 %v197, 16
      %v453 = vrot.slane %v451, 4
      %v454 = vor.u32 %v453, %v449
      %v455 = vrot.slane %v454, 4
      %v457 = vshll.u32 %v198, 16
      %v459 = vrot.slane %v457, 5
      %v460 = vsel %vm244, %v455, %v459
      %v462 = vshrl.u32 %v199, 16
      %v464 = vrot.slane %v462, 4
      %v465 = vshll.u32 %v199, 16
      %v467 = vrot.slane %v465, 5
      %v468 = vor.u32 %v464, %v467
      %v469 = vrot.slane %v468, 4
      %v471 = vshll.u32 %v200, 16
      %v473 = vrot.slane %v471, 5
      %v474 = vsel %vm244, %v469, %v473
      %v475 = vshrl.u32 %v200, 16
      %v477 = vrot.slane %v475, 4
      %v478 = vor.u32 %v477, %v473
      %v479 = vrot.slane %v478, 4
      %v481 = vshll.u32 %v201, 16
      %v483 = vrot.slane %v481, 5
      %v484 = vsel %vm244, %v479, %v483
      %v486 = vshrl.u32 %v202, 16
      %v488 = vrot.slane %v486, 4
      %v489 = vshll.u32 %v202, 16
      %v491 = vrot.slane %v489, 5
      %v492 = vor.u32 %v488, %v491
      %v493 = vrot.slane %v492, 4
      %v495 = vshll.u32 %v203, 16
      %v497 = vrot.slane %v495, 5
      %v498 = vsel %vm244, %v493, %v497
      %v499 = vshrl.u32 %v203, 16
      %v501 = vrot.slane %v499, 4
      %v502 = vor.u32 %v501, %v497
      %v503 = vrot.slane %v502, 4
      %v505 = vshll.u32 %v204, 16
      %v507 = vrot.slane %v505, 5
      %v508 = vsel %vm244, %v503, %v507
      %v510 = vshrl.u32 %v205, 16
      %v512 = vrot.slane %v510, 4
      %v513 = vshll.u32 %v205, 16
      %v515 = vrot.slane %v513, 5
      %v516 = vor.u32 %v512, %v515
      %v517 = vrot.slane %v516, 4
      %v519 = vshll.u32 %v206, 16
      %v521 = vrot.slane %v519, 5
      %v522 = vsel %vm244, %v517, %v521
      %v523 = vshrl.u32 %v206, 16
      %v525 = vrot.slane %v523, 4
      %v526 = vor.u32 %v525, %v521
      %v527 = vrot.slane %v526, 4
      %v529 = vshll.u32 %v207, 16
      %v531 = vrot.slane %v529, 5
      %v532 = vsel %vm244, %v527, %v531
      %v534 = vshrl.u32 %v208, 16
      %v536 = vrot.slane %v534, 4
      %v537 = vshll.u32 %v208, 16
      %v539 = vrot.slane %v537, 5
      %v540 = vor.u32 %v536, %v539
      %v541 = vrot.slane %v540, 4
      %v543 = vshll.u32 %v209, 16
      %v545 = vrot.slane %v543, 5
      %v546 = vsel %vm244, %v541, %v545
      %v547 = vshrl.u32 %v209, 16
      %v549 = vrot.slane %v547, 4
      %v550 = vor.u32 %v549, %v545
      %v551 = vrot.slane %v550, 4
      %v553 = vshll.u32 %v210, 16
      %v555 = vrot.slane %v553, 5
      %v556 = vsel %vm244, %v551, %v555
      %v558 = vshrl.u32 %v211, 16
      %v560 = vrot.slane %v558, 4
      %v561 = vshll.u32 %v211, 16
      %v563 = vrot.slane %v561, 5
      %v564 = vor.u32 %v560, %v563
      %v565 = vrot.slane %v564, 4
      %v567 = vshll.u32 %v212, 16
      %v569 = vrot.slane %v567, 5
      %v570 = vsel %vm244, %v565, %v569
      %v571 = vshrl.u32 %v212, 16
      %v573 = vrot.slane %v571, 4
      %v574 = vor.u32 %v573, %v569
      %v575 = vrot.slane %v574, 4
      %v577 = vshll.u32 %v213, 16
      %v579 = vrot.slane %v577, 5
      %v580 = vsel %vm244, %v575, %v579
      %v582 = vshrl.u32 %v214, 16
      %v584 = vrot.slane %v582, 4
      %v585 = vshll.u32 %v214, 16
      %v587 = vrot.slane %v585, 5
      %v588 = vor.u32 %v584, %v587
      %v589 = vrot.slane %v588, 4
      %v591 = vshll.u32 %v215, 16
      %v593 = vrot.slane %v591, 5
      %v594 = vsel %vm244, %v589, %v593
      %v595 = vshrl.u32 %v215, 16
      %v597 = vrot.slane %v595, 4
      %v598 = vor.u32 %v597, %v593
      %v599 = vrot.slane %v598, 4
      %v601 = vshll.u32 %v216, 16
      %v603 = vrot.slane %v601, 5
      %v604 = vsel %vm244, %v599, %v603
      %v606 = vshrl.u32 %v217, 16
      %v608 = vrot.slane %v606, 4
      %v609 = vshll.u32 %v217, 16
      %v611 = vrot.slane %v609, 5
      %v612 = vor.u32 %v608, %v611
      %v613 = vrot.slane %v612, 4
      %v615 = vshll.u32 %v218, 16
      %v617 = vrot.slane %v615, 5
      %v618 = vsel %vm244, %v613, %v617
      %v619 = vshrl.u32 %v218, 16
      %v621 = vrot.slane %v619, 4
      %v622 = vor.u32 %v621, %v617
      %v623 = vrot.slane %v622, 4
      %v625 = vshll.u32 %v219, 16
      %v627 = vrot.slane %v625, 5
      %v628 = vsel %vm244, %v623, %v627
      %s629 = scalar_lea.vmem %s1, 64
      %v630 = vld [vmem:[%s629] sm:$0xf]
      %v631 = vld [vmem:[%s629 + $0x4] sm:$0xf]
      %v632 = vld [vmem:[%s629 + $0x8] sm:$0xf]
      %v633 = vld [vmem:[%s629 + $0xc] sm:$0xf]
      %v634 = vld [vmem:[%s629 + $0x10] sm:$0xf]
      %v635 = vld [vmem:[%s629 + $0x14] sm:$0xf]
      %v636 = vld [vmem:[%s629 + $0x18] sm:$0xf]
      %v637 = vld [vmem:[%s629 + $0x1c] sm:$0xf]
      %v638 = vld [vmem:[%s629 + $0x20] sm:$0xf]
      %v639 = vld [vmem:[%s629 + $0x24] sm:$0xf]
      %v640 = vld [vmem:[%s629 + $0x28] sm:$0xf]
      %v641 = vld [vmem:[%s629 + $0x2c] sm:$0xf]
      %v642 = vld [vmem:[%s629 + $0x30] sm:$0xf]
      %v643 = vld [vmem:[%s629 + $0x34] sm:$0xf]
      %v644 = vld [vmem:[%s629 + $0x38] sm:$0xf]
      %v645 = vld [vmem:[%s629 + $0x3c] sm:$0xf]
      %v646 = vunpack.c.l.b16 %v258
      %v647 = vunpack.c.l.b16 %v268
      %v648 = vunpack.c.l.b16 %v282
      %v649 = vunpack.c.l.b16 %v292
      %v650 = vunpack.c.l.b16 %v306
      %v651 = vunpack.c.l.b16 %v316
      %v652 = vunpack.c.l.b16 %v330
      %v653 = vunpack.c.l.b16 %v340
      %v654 = vunpack.c.l.b16 %v354
      %v655 = vunpack.c.l.b16 %v364
      %v656 = vunpack.c.l.b16 %v378
      %v657 = vunpack.c.l.b16 %v388
      %v658 = vunpack.c.l.b16 %v402
      %v659 = vunpack.c.l.b16 %v412
      %v660 = vunpack.c.l.b16 %v426
      %v661 = vunpack.c.l.b16 %v436
      %v662 = vunpack.c.l.b16 %v450
      %v663 = vunpack.c.l.b16 %v460
      %v664 = vunpack.c.l.b16 %v474
      %v665 = vunpack.c.l.b16 %v484
      %v666 = vunpack.c.l.b16 %v498
      %v667 = vunpack.c.l.b16 %v508
      %v668 = vunpack.c.l.b16 %v522
      %v669 = vunpack.c.l.b16 %v532
      %v670 = vunpack.c.l.b16 %v546
      %v671 = vunpack.c.l.b16 %v556
      %v672 = vunpack.c.l.b16 %v570
      %v673 = vunpack.c.l.b16 %v580
      %v674 = vunpack.c.l.b16 %v594
      %v675 = vunpack.c.l.b16 %v604
      %v676 = vunpack.c.l.b16 %v618
      %v677 = vunpack.c.l.b16 %v628
      %v678 = vpack.c.b16 %v647, %v646
      %v679 = vpack.c.b16 %v649, %v648
      %v680 = vpack.c.b16 %v651, %v650
      %v681 = vpack.c.b16 %v653, %v652
      %v682 = vpack.c.b16 %v655, %v654
      %v683 = vpack.c.b16 %v657, %v656
      %v684 = vpack.c.b16 %v659, %v658
      %v685 = vpack.c.b16 %v661, %v660
      %v686 = vpack.c.b16 %v663, %v662
      %v687 = vpack.c.b16 %v665, %v664
      %v688 = vpack.c.b16 %v667, %v666
      %v689 = vpack.c.b16 %v669, %v668
      %v690 = vpack.c.b16 %v671, %v670
      %v691 = vpack.c.b16 %v673, %v672
      %v692 = vpack.c.b16 %v675, %v674
      %v693 = vpack.c.b16 %v677, %v676
      %v726 = vunpack.c.l.b16 %v630
      %v727 = vunpack.c.l.b16 %v631
      %v728 = vunpack.c.l.b16 %v632
      %v729 = vunpack.c.l.b16 %v633
      %v730 = vunpack.c.l.b16 %v634
      %v731 = vunpack.c.l.b16 %v635
      %v732 = vunpack.c.l.b16 %v636
      %v733 = vunpack.c.l.b16 %v637
      %v734 = vunpack.c.l.b16 %v638
      %v735 = vunpack.c.l.b16 %v639
      %v736 = vunpack.c.l.b16 %v640
      %v737 = vunpack.c.l.b16 %v641
      %v738 = vunpack.c.l.b16 %v642
      %v739 = vunpack.c.l.b16 %v643
      %v740 = vunpack.c.l.b16 %v644
      %v741 = vunpack.c.l.b16 %v645
      %v742 = vpack.c.b16 %v727, %v726
      %v743 = vpack.c.b16 %v729, %v728
      %v744 = vpack.c.b16 %v731, %v730
      %v745 = vpack.c.b16 %v733, %v732
      %v746 = vpack.c.b16 %v735, %v734
      %v747 = vpack.c.b16 %v737, %v736
      %v748 = vpack.c.b16 %v739, %v738
      %v749 = vpack.c.b16 %v741, %v740
      %758 = vmatprep.subr.bf16.mxu0 0
      %759 = vmatpush1.bf16.msra.mxu0 %v742
      %760 = vmatprep.subr.bf16.mxu0 0
      %761 = vmatpush1.bf16.msra.mxu0 %v743
      %762 = vmatprep.subr.bf16.mxu0 0
      %763 = vmatpush1.bf16.msra.mxu0 %v744
      %764 = vmatprep.subr.bf16.mxu0 0
      %765 = vmatpush1.bf16.msra.mxu0 %v745
      %766 = vmatprep.subr.bf16.mxu0 0
      %767 = vmatpush1.bf16.msra.mxu0 %v746
      %768 = vmatprep.subr.bf16.mxu0 0
      %769 = vmatpush1.bf16.msra.mxu0 %v747
      %770 = vmatprep.subr.bf16.mxu0 0
      %771 = vmatpush1.bf16.msra.mxu0 %v748
      %772 = vmatprep.subr.bf16.mxu0 0
      %773 = vmatpush1.bf16.msra.mxu0 %v749
      %774 = vmatprep.subr.bf16.mxu0 0
      %775 = vmatpush1.bf16.msra.mxu0 0
      %776 = vmatprep.subr.bf16.mxu0 0
      %777 = vmatpush1.bf16.msra.mxu0 0
      %778 = vmatprep.subr.bf16.mxu0 0
      %779 = vmatpush1.bf16.msra.mxu0 0
      %780 = vmatprep.subr.bf16.mxu0 0
      %781 = vmatpush1.bf16.msra.mxu0 0
      %782 = vmatprep.subr.bf16.mxu0 0
      %783 = vmatpush1.bf16.msra.mxu0 0
      %784 = vmatprep.subr.bf16.mxu0 0
      %785 = vmatpush1.bf16.msra.mxu0 0
      %786 = vmatprep.subr.bf16.mxu0 0
      %787 = vmatpush1.bf16.msra.mxu0 0
      %788 = vmatprep.subr.bf16.mxu0 0
      %789 = vmatpush1.bf16.msra.mxu0 0
      %790 = vmatprep.mubr.bf16.mxu0 0
      %791 = vmatmul.mubr.bf16.gmra.mrb[0].mxu0 %v678
      %v792 = vpop.f32.mrb[0].mxu0
      %v793 = vadd.f32 0.0, %v792
      %v794 = vpop.f32.mrb[0].mxu0
      %v795 = vpop.f32.mrb[0].mxu0
      %v796 = vadd.f32 0.0, %v795
      %v797 = vpop.f32.mrb[0].mxu0
      %798 = vmatprep.mubr.bf16.mxu0 0
      %799 = vmatmul.mubr.bf16.gmra.mrb[0].mxu0 %v679
      %v800 = vpop.f32.mrb[0].mxu0
      %v801 = vadd.f32 0.0, %v800
      %v802 = vpop.f32.mrb[0].mxu0
      %v803 = vpop.f32.mrb[0].mxu0
      %v804 = vadd.f32 0.0, %v803
      %v805 = vpop.f32.mrb[0].mxu0
      %806 = vmatprep.mubr.bf16.mxu0 0
      %807 = vmatmul.mubr.bf16.gmra.mrb[0].mxu0 %v680
      %v808 = vpop.f32.mrb[0].mxu0
      %v809 = vadd.f32 0.0, %v808
      %v810 = vpop.f32.mrb[0].mxu0
      %v811 = vpop.f32.mrb[0].mxu0
      %v812 = vadd.f32 0.0, %v811
      %v813 = vpop.f32.mrb[0].mxu0
      %814 = vmatprep.mubr.bf16.mxu0 0
      %815 = vmatmul.mubr.bf16.gmra.mrb[0].mxu0 %v681
      %v816 = vpop.f32.mrb[0].mxu0
      %v817 = vadd.f32 0.0, %v816
      %v818 = vpop.f32.mrb[0].mxu0
      %v819 = vpop.f32.mrb[0].mxu0
      %v820 = vadd.f32 0.0, %v819
      %v821 = vpop.f32.mrb[0].mxu0
      %822 = vmatprep.mubr.bf16.mxu0 0
      %823 = vmatmul.mubr.bf16.gmra.mrb[0].mxu0 %v682
      %v824 = vpop.f32.mrb[0].mxu0
      %v825 = vadd.f32 0.0, %v824
      %v826 = vpop.f32.mrb[0].mxu0
      %v827 = vpop.f32.mrb[0].mxu0
      %v828 = vadd.f32 0.0, %v827
      %v829 = vpop.f32.mrb[0].mxu0
      %830 = vmatprep.mubr.bf16.mxu0 0
      %831 = vmatmul.mubr.bf16.gmra.mrb[0].mxu0 %v683
      %v832 = vpop.f32.mrb[0].mxu0
      %v833 = vadd.f32 0.0, %v832
      %v834 = vpop.f32.mrb[0].mxu0
      %v835 = vpop.f32.mrb[0].mxu0
      %v836 = vadd.f32 0.0, %v835
      %v837 = vpop.f32.mrb[0].mxu0
      %838 = vmatprep.mubr.bf16.mxu0 0
      %839 = vmatmul.mubr.bf16.gmra.mrb[0].mxu0 %v684
      %v840 = vpop.f32.mrb[0].mxu0
      %v841 = vadd.f32 0.0, %v840
      %v842 = vpop.f32.mrb[0].mxu0
      %v843 = vpop.f32.mrb[0].mxu0
      %v844 = vadd.f32 0.0, %v843
      %v845 = vpop.f32.mrb[0].mxu0
      %846 = vmatprep.mubr.bf16.mxu0 0
      %847 = vmatmul.mubr.bf16.gmra.mrb[0].mxu0 %v685
      %v848 = vpop.f32.mrb[0].mxu0
      %v849 = vadd.f32 0.0, %v848
      %v850 = vpop.f32.mrb[0].mxu0
      %v851 = vpop.f32.mrb[0].mxu0
      %v852 = vadd.f32 0.0, %v851
      %v853 = vpop.f32.mrb[0].mxu0
      %854 = vmatprep.mubr.bf16.mxu0 0
      %855 = vmatmul.mubr.bf16.gmra.mrb[0].mxu0 %v686
      %v856 = vpop.f32.mrb[0].mxu0
      %v857 = vadd.f32 0.0, %v856
      %v858 = vpop.f32.mrb[0].mxu0
      %v859 = vpop.f32.mrb[0].mxu0
      %v860 = vadd.f32 0.0, %v859
      %v861 = vpop.f32.mrb[0].mxu0
      %862 = vmatprep.mubr.bf16.mxu0 0
      %863 = vmatmul.mubr.bf16.gmra.mrb[0].mxu0 %v687
      %v864 = vpop.f32.mrb[0].mxu0
      %v865 = vadd.f32 0.0, %v864
      %v866 = vpop.f32.mrb[0].mxu0
      %v867 = vpop.f32.mrb[0].mxu0
      %v868 = vadd.f32 0.0, %v867
      %v869 = vpop.f32.mrb[0].mxu0
      %870 = vmatprep.mubr.bf16.mxu0 0
      %871 = vmatmul.mubr.bf16.gmra.mrb[0].mxu0 %v688
      %v872 = vpop.f32.mrb[0].mxu0
      %v873 = vadd.f32 0.0, %v872
      %v874 = vpop.f32.mrb[0].mxu0
      %v875 = vpop.f32.mrb[0].mxu0
      %v876 = vadd.f32 0.0, %v875
      %v877 = vpop.f32.mrb[0].mxu0
      %878 = vmatprep.mubr.bf16.mxu0 0
      %879 = vmatmul.mubr.bf16.gmra.mrb[0].mxu0 %v689
      %v880 = vpop.f32.mrb[0].mxu0
      %v881 = vadd.f32 0.0, %v880
      %v882 = vpop.f32.mrb[0].mxu0
      %v883 = vpop.f32.mrb[0].mxu0
      %v884 = vadd.f32 0.0, %v883
      %v885 = vpop.f32.mrb[0].mxu0
      %886 = vmatprep.mubr.bf16.mxu0 0
      %887 = vmatmul.mubr.bf16.gmra.mrb[0].mxu0 %v690
      %v888 = vpop.f32.mrb[0].mxu0
      %v889 = vadd.f32 0.0, %v888
      %v890 = vpop.f32.mrb[0].mxu0
      %v891 = vpop.f32.mrb[0].mxu0
      %v892 = vadd.f32 0.0, %v891
      %v893 = vpop.f32.mrb[0].mxu0
      %894 = vmatprep.mubr.bf16.mxu0 0
      %895 = vmatmul.mubr.bf16.gmra.mrb[0].mxu0 %v691
      %v896 = vpop.f32.mrb[0].mxu0
      %v897 = vadd.f32 0.0, %v896
      %v898 = vpop.f32.mrb[0].mxu0
      %v899 = vpop.f32.mrb[0].mxu0
      %v900 = vadd.f32 0.0, %v899
      %v901 = vpop.f32.mrb[0].mxu0
      %902 = vmatprep.mubr.bf16.mxu0 0
      %903 = vmatmul.mubr.bf16.gmra.mrb[0].mxu0 %v692
      %v904 = vpop.f32.mrb[0].mxu0
      %v905 = vadd.f32 0.0, %v904
      %v906 = vpop.f32.mrb[0].mxu0
      %v907 = vpop.f32.mrb[0].mxu0
      %v908 = vadd.f32 0.0, %v907
      %v909 = vpop.f32.mrb[0].mxu0
      %910 = vmatprep.mubr.bf16.mxu0 0
      %911 = vmatmul.mubr.bf16.gmra.mrb[0].mxu0 %v693
      %v912 = vpop.f32.mrb[0].mxu0
      %v913 = vadd.f32 0.0, %v912
      %v914 = vpop.f32.mrb[0].mxu0
      %v915 = vpop.f32.mrb[0].mxu0
      %v916 = vadd.f32 0.0, %v915
      %v917 = vpop.f32.mrb[0].mxu0
      %918 = vdwg.mxu0
      %v951 = vunpack.c.l.b16 %v172
      %v952 = vunpack.c.l.b16 %v173
      %v953 = vunpack.c.l.b16 %v175
      %v954 = vunpack.c.l.b16 %v176
      %v955 = vunpack.c.l.b16 %v178
      %v956 = vunpack.c.l.b16 %v179
      %v957 = vunpack.c.l.b16 %v181
      %v958 = vunpack.c.l.b16 %v182
      %v959 = vunpack.c.l.b16 %v184
      %v960 = vunpack.c.l.b16 %v185
      %v961 = vunpack.c.l.b16 %v187
      %v962 = vunpack.c.l.b16 %v188
      %v963 = vunpack.c.l.b16 %v190
      %v964 = vunpack.c.l.b16 %v191
      %v965 = vunpack.c.l.b16 %v193
      %v966 = vunpack.c.l.b16 %v194
      %v967 = vunpack.c.l.b16 %v196
      %v968 = vunpack.c.l.b16 %v197
      %v969 = vunpack.c.l.b16 %v199
      %v970 = vunpack.c.l.b16 %v200
      %v971 = vunpack.c.l.b16 %v202
      %v972 = vunpack.c.l.b16 %v203
      %v973 = vunpack.c.l.b16 %v205
      %v974 = vunpack.c.l.b16 %v206
      %v975 = vunpack.c.l.b16 %v208
      %v976 = vunpack.c.l.b16 %v209
      %v977 = vunpack.c.l.b16 %v211
      %v978 = vunpack.c.l.b16 %v212
      %v979 = vunpack.c.l.b16 %v214
      %v980 = vunpack.c.l.b16 %v215
      %v981 = vunpack.c.l.b16 %v217
      %v982 = vunpack.c.l.b16 %v218
      %v983 = vpack.c.b16 %v952, %v951
      %v984 = vpack.c.b16 %v954, %v953
      %v985 = vpack.c.b16 %v956, %v955
      %v986 = vpack.c.b16 %v958, %v957
      %v987 = vpack.c.b16 %v960, %v959
      %v988 = vpack.c.b16 %v962, %v961
      %v989 = vpack.c.b16 %v964, %v963
      %v990 = vpack.c.b16 %v966, %v965
      %v991 = vpack.c.b16 %v968, %v967
      %v992 = vpack.c.b16 %v970, %v969
      %v993 = vpack.c.b16 %v972, %v971
      %v994 = vpack.c.b16 %v974, %v973
      %v995 = vpack.c.b16 %v976, %v975
      %v996 = vpack.c.b16 %v978, %v977
      %v997 = vpack.c.b16 %v980, %v979
      %v998 = vpack.c.b16 %v982, %v981
      %v1031 = vunpack.c.l.b16 %v226
      %v1032 = vunpack.c.l.b16 %v227
      %v1033 = vunpack.c.l.b16 %v228
      %v1034 = vunpack.c.l.b16 %v229
      %v1035 = vunpack.c.l.b16 %v230
      %v1036 = vunpack.c.l.b16 %v231
      %v1037 = vunpack.c.l.b16 %v232
      %v1038 = vunpack.c.l.b16 %v233
      %v1039 = vunpack.c.l.b16 %v234
      %v1040 = vunpack.c.l.b16 %v235
      %v1041 = vunpack.c.l.b16 %v236
      %v1042 = vunpack.c.l.b16 %v237
      %v1043 = vunpack.c.l.b16 %v238
      %v1044 = vunpack.c.l.b16 %v239
      %v1045 = vunpack.c.l.b16 %v240
      %v1046 = vunpack.c.l.b16 %v241
      %v1047 = vpack.c.b16 %v1032, %v1031
      %v1048 = vpack.c.b16 %v1034, %v1033
      %v1049 = vpack.c.b16 %v1036, %v1035
      %v1050 = vpack.c.b16 %v1038, %v1037
      %v1051 = vpack.c.b16 %v1040, %v1039
      %v1052 = vpack.c.b16 %v1042, %v1041
      %v1053 = vpack.c.b16 %v1044, %v1043
      %v1054 = vpack.c.b16 %v1046, %v1045
      %1063 = vmatprep.subr.bf16.mxu0 0
      %1064 = vmatpush1.bf16.msra.mxu0 %v1047
      %1065 = vmatprep.subr.bf16.mxu0 0
      %1066 = vmatpush1.bf16.msra.mxu0 %v1048
      %1067 = vmatprep.subr.bf16.mxu0 0
      %1068 = vmatpush1.bf16.msra.mxu0 %v1049
      %1069 = vmatprep.subr.bf16.mxu0 0
      %1070 = vmatpush1.bf16.msra.mxu0 %v1050
      %1071 = vmatprep.subr.bf16.mxu0 0
      %1072 = vmatpush1.bf16.msra.mxu0 %v1051
      %1073 = vmatprep.subr.bf16.mxu0 0
      %1074 = vmatpush1.bf16.msra.mxu0 %v1052
      %1075 = vmatprep.subr.bf16.mxu0 0
      %1076 = vmatpush1.bf16.msra.mxu0 %v1053
      %1077 = vmatprep.subr.bf16.mxu0 0
      %1078 = vmatpush1.bf16.msra.mxu0 %v1054
      %1079 = vmatprep.subr.bf16.mxu0 0
      %1080 = vmatpush1.bf16.msra.mxu0 0
      %1081 = vmatprep.subr.bf16.mxu0 0
      %1082 = vmatpush1.bf16.msra.mxu0 0
      %1083 = vmatprep.subr.bf16.mxu0 0
      %1084 = vmatpush1.bf16.msra.mxu0 0
      %1085 = vmatprep.subr.bf16.mxu0 0
      %1086 = vmatpush1.bf16.msra.mxu0 0
      %1087 = vmatprep.subr.bf16.mxu0 0
      %1088 = vmatpush1.bf16.msra.mxu0 0
      %1089 = vmatprep.subr.bf16.mxu0 0
      %1090 = vmatpush1.bf16.msra.mxu0 0
      %1091 = vmatprep.subr.bf16.mxu0 0
      %1092 = vmatpush1.bf16.msra.mxu0 0
      %1093 = vmatprep.subr.bf16.mxu0 0
      %1094 = vmatpush1.bf16.msra.mxu0 0
      %1095 = vmatprep.mubr.bf16.mxu0 0
      %1096 = vmatmul.mubr.bf16.gmra.mrb[0].mxu0 %v983
      %v1097 = vpop.f32.mrb[0].mxu0
      %v1098 = vadd.f32 %v793, %v1097
      %v1099 = vpop.f32.mrb[0].mxu0
      %v1100 = vpop.f32.mrb[0].mxu0
      %v1101 = vadd.f32 %v796, %v1100
      %v1102 = vpop.f32.mrb[0].mxu0
      %1103 = vmatprep.mubr.bf16.mxu0 0
      %1104 = vmatmul.mubr.bf16.gmra.mrb[0].mxu0 %v984
      %v1105 = vpop.f32.mrb[0].mxu0
      %v1106 = vadd.f32 %v801, %v1105
      %v1107 = vpop.f32.mrb[0].mxu0
      %v1108 = vpop.f32.mrb[0].mxu0
      %v1109 = vadd.f32 %v804, %v1108
      %v1110 = vpop.f32.mrb[0].mxu0
      %1111 = vmatprep.mubr.bf16.mxu0 0
      %1112 = vmatmul.mubr.bf16.gmra.mrb[0].mxu0 %v985
      %v1113 = vpop.f32.mrb[0].mxu0
      %v1114 = vadd.f32 %v809, %v1113
      %v1115 = vpop.f32.mrb[0].mxu0
      %v1116 = vpop.f32.mrb[0].mxu0
      %v1117 = vadd.f32 %v812, %v1116
      %v1118 = vpop.f32.mrb[0].mxu0
      %1119 = vmatprep.mubr.bf16.mxu0 0
      %1120 = vmatmul.mubr.bf16.gmra.mrb[0].mxu0 %v986
      %v1121 = vpop.f32.mrb[0].mxu0
      %v1122 = vadd.f32 %v817, %v1121
      %v1123 = vpop.f32.mrb[0].mxu0
      %v1124 = vpop.f32.mrb[0].mxu0
      %v1125 = vadd.f32 %v820, %v1124
      %v1126 = vpop.f32.mrb[0].mxu0
      %1127 = vmatprep.mubr.bf16.mxu0 0
      %1128 = vmatmul.mubr.bf16.gmra.mrb[0].mxu0 %v987
      %v1129 = vpop.f32.mrb[0].mxu0
      %v1130 = vadd.f32 %v825, %v1129
      %v1131 = vpop.f32.mrb[0].mxu0
      %v1132 = vpop.f32.mrb[0].mxu0
      %v1133 = vadd.f32 %v828, %v1132
      %v1134 = vpop.f32.mrb[0].mxu0
      %1135 = vmatprep.mubr.bf16.mxu0 0
      %1136 = vmatmul.mubr.bf16.gmra.mrb[0].mxu0 %v988
      %v1137 = vpop.f32.mrb[0].mxu0
      %v1138 = vadd.f32 %v833, %v1137
      %v1139 = vpop.f32.mrb[0].mxu0
      %v1140 = vpop.f32.mrb[0].mxu0
      %v1141 = vadd.f32 %v836, %v1140
      %v1142 = vpop.f32.mrb[0].mxu0
      %1143 = vmatprep.mubr.bf16.mxu0 0
      %1144 = vmatmul.mubr.bf16.gmra.mrb[0].mxu0 %v989
      %v1145 = vpop.f32.mrb[0].mxu0
      %v1146 = vadd.f32 %v841, %v1145
      %v1147 = vpop.f32.mrb[0].mxu0
      %v1148 = vpop.f32.mrb[0].mxu0
      %v1149 = vadd.f32 %v844, %v1148
      %v1150 = vpop.f32.mrb[0].mxu0
      %1151 = vmatprep.mubr.bf16.mxu0 0
      %1152 = vmatmul.mubr.bf16.gmra.mrb[0].mxu0 %v990
      %v1153 = vpop.f32.mrb[0].mxu0
      %v1154 = vadd.f32 %v849, %v1153
      %v1155 = vpop.f32.mrb[0].mxu0
      %v1156 = vpop.f32.mrb[0].mxu0
      %v1157 = vadd.f32 %v852, %v1156
      %v1158 = vpop.f32.mrb[0].mxu0
      %1159 = vmatprep.mubr.bf16.mxu0 0
      %1160 = vmatmul.mubr.bf16.gmra.mrb[0].mxu0 %v991
      %v1161 = vpop.f32.mrb[0].mxu0
      %v1162 = vadd.f32 %v857, %v1161
      %v1163 = vpop.f32.mrb[0].mxu0
      %v1164 = vpop.f32.mrb[0].mxu0
      %v1165 = vadd.f32 %v860, %v1164
      %v1166 = vpop.f32.mrb[0].mxu0
      %1167 = vmatprep.mubr.bf16.mxu0 0
      %1168 = vmatmul.mubr.bf16.gmra.mrb[0].mxu0 %v992
      %v1169 = vpop.f32.mrb[0].mxu0
      %v1170 = vadd.f32 %v865, %v1169
      %v1171 = vpop.f32.mrb[0].mxu0
      %v1172 = vpop.f32.mrb[0].mxu0
      %v1173 = vadd.f32 %v868, %v1172
      %v1174 = vpop.f32.mrb[0].mxu0
      %1175 = vmatprep.mubr.bf16.mxu0 0
      %1176 = vmatmul.mubr.bf16.gmra.mrb[0].mxu0 %v993
      %v1177 = vpop.f32.mrb[0].mxu0
      %v1178 = vadd.f32 %v873, %v1177
      %v1179 = vpop.f32.mrb[0].mxu0
      %v1180 = vpop.f32.mrb[0].mxu0
      %v1181 = vadd.f32 %v876, %v1180
      %v1182 = vpop.f32.mrb[0].mxu0
      %1183 = vmatprep.mubr.bf16.mxu0 0
      %1184 = vmatmul.mubr.bf16.gmra.mrb[0].mxu0 %v994
      %v1185 = vpop.f32.mrb[0].mxu0
      %v1186 = vadd.f32 %v881, %v1185
      %v1187 = vpop.f32.mrb[0].mxu0
      %v1188 = vpop.f32.mrb[0].mxu0
      %v1189 = vadd.f32 %v884, %v1188
      %v1190 = vpop.f32.mrb[0].mxu0
      %1191 = vmatprep.mubr.bf16.mxu0 0
      %1192 = vmatmul.mubr.bf16.gmra.mrb[0].mxu0 %v995
      %v1193 = vpop.f32.mrb[0].mxu0
      %v1194 = vadd.f32 %v889, %v1193
      %v1195 = vpop.f32.mrb[0].mxu0
      %v1196 = vpop.f32.mrb[0].mxu0
      %v1197 = vadd.f32 %v892, %v1196
      %v1198 = vpop.f32.mrb[0].mxu0
      %1199 = vmatprep.mubr.bf16.mxu0 0
      %1200 = vmatmul.mubr.bf16.gmra.mrb[0].mxu0 %v996
      %v1201 = vpop.f32.mrb[0].mxu0
      %v1202 = vadd.f32 %v897, %v1201
      %v1203 = vpop.f32.mrb[0].mxu0
      %v1204 = vpop.f32.mrb[0].mxu0
      %v1205 = vadd.f32 %v900, %v1204
      %v1206 = vpop.f32.mrb[0].mxu0
      %1207 = vmatprep.mubr.bf16.mxu0 0
      %1208 = vmatmul.mubr.bf16.gmra.mrb[0].mxu0 %v997
      %v1209 = vpop.f32.mrb[0].mxu0
      %v1210 = vadd.f32 %v905, %v1209
      %v1211 = vpop.f32.mrb[0].mxu0
      %v1212 = vpop.f32.mrb[0].mxu0
      %v1213 = vadd.f32 %v908, %v1212
      %v1214 = vpop.f32.mrb[0].mxu0
      %1215 = vmatprep.mubr.bf16.mxu0 0
      %1216 = vmatmul.mubr.bf16.gmra.mrb[0].mxu0 %v998
      %v1217 = vpop.f32.mrb[0].mxu0
      %v1218 = vadd.f32 %v913, %v1217
      %v1219 = vpop.f32.mrb[0].mxu0
      %v1220 = vpop.f32.mrb[0].mxu0
      %v1221 = vadd.f32 %v916, %v1220
      %v1222 = vpop.f32.mrb[0].mxu0
      %1223 = vdwg.mxu0
      %vm1240 = vcmask 1042432
      %vm1241 = vcmask 1046532
      %vm1242 = vmor %vm1240, %vm1241
      %v1243 = vrot.slane %v172, 5
      %v1244 = vrot.slane %v1243, 4
      %v1245 = vrot.slane %v173, 5
      %v1246 = vsel %vm1242, %v1244, %v1245
      %v1247 = vrot.slane %v1245, 4
      %v1248 = vrot.slane %v174, 5
      %v1249 = vsel %vm1242, %v1247, %v1248
      %v1250 = vrot.slane %v175, 5
      %v1251 = vrot.slane %v1250, 4
      %v1252 = vrot.slane %v176, 5
      %v1253 = vsel %vm1242, %v1251, %v1252
      %v1254 = vrot.slane %v1252, 4
      %v1255 = vrot.slane %v177, 5
      %v1256 = vsel %vm1242, %v1254, %v1255
      %v1257 = vrot.slane %v178, 5
      %v1258 = vrot.slane %v1257, 4
      %v1259 = vrot.slane %v179, 5
      %v1260 = vsel %vm1242, %v1258, %v1259
      %v1261 = vrot.slane %v1259, 4
      %v1262 = vrot.slane %v180, 5
      %v1263 = vsel %vm1242, %v1261, %v1262
      %v1264 = vrot.slane %v181, 5
      %v1265 = vrot.slane %v1264, 4
      %v1266 = vrot.slane %v182, 5
      %v1267 = vsel %vm1242, %v1265, %v1266
      %v1268 = vrot.slane %v1266, 4
      %v1269 = vrot.slane %v183, 5
      %v1270 = vsel %vm1242, %v1268, %v1269
      %v1271 = vrot.slane %v184, 5
      %v1272 = vrot.slane %v1271, 4
      %v1273 = vrot.slane %v185, 5
      %v1274 = vsel %vm1242, %v1272, %v1273
      %v1275 = vrot.slane %v1273, 4
      %v1276 = vrot.slane %v186, 5
      %v1277 = vsel %vm1242, %v1275, %v1276
      %v1278 = vrot.slane %v187, 5
      %v1279 = vrot.slane %v1278, 4
      %v1280 = vrot.slane %v188, 5
      %v1281 = vsel %vm1242, %v1279, %v1280
      %v1282 = vrot.slane %v1280, 4
      %v1283 = vrot.slane %v189, 5
      %v1284 = vsel %vm1242, %v1282, %v1283
      %v1285 = vrot.slane %v190, 5
      %v1286 = vrot.slane %v1285, 4
      %v1287 = vrot.slane %v191, 5
      %v1288 = vsel %vm1242, %v1286, %v1287
      %v1289 = vrot.slane %v1287, 4
      %v1290 = vrot.slane %v192, 5
      %v1291 = vsel %vm1242, %v1289, %v1290
      %v1292 = vrot.slane %v193, 5
      %v1293 = vrot.slane %v1292, 4
      %v1294 = vrot.slane %v194, 5
      %v1295 = vsel %vm1242, %v1293, %v1294
      %v1296 = vrot.slane %v1294, 4
      %v1297 = vrot.slane %v195, 5
      %v1298 = vsel %vm1242, %v1296, %v1297
      %v1299 = vrot.slane %v196, 5
      %v1300 = vrot.slane %v1299, 4
      %v1301 = vrot.slane %v197, 5
      %v1302 = vsel %vm1242, %v1300, %v1301
      %v1303 = vrot.slane %v1301, 4
      %v1304 = vrot.slane %v198, 5
      %v1305 = vsel %vm1242, %v1303, %v1304
      %v1306 = vrot.slane %v199, 5
      %v1307 = vrot.slane %v1306, 4
      %v1308 = vrot.slane %v200, 5
      %v1309 = vsel %vm1242, %v1307, %v1308
      %v1310 = vrot.slane %v1308, 4
      %v1311 = vrot.slane %v201, 5
      %v1312 = vsel %vm1242, %v1310, %v1311
      %v1313 = vrot.slane %v202, 5
      %v1314 = vrot.slane %v1313, 4
      %v1315 = vrot.slane %v203, 5
      %v1316 = vsel %vm1242, %v1314, %v1315
      %v1317 = vrot.slane %v1315, 4
      %v1318 = vrot.slane %v204, 5
      %v1319 = vsel %vm1242, %v1317, %v1318
      %v1320 = vrot.slane %v205, 5
      %v1321 = vrot.slane %v1320, 4
      %v1322 = vrot.slane %v206, 5
      %v1323 = vsel %vm1242, %v1321, %v1322
      %v1324 = vrot.slane %v1322, 4
      %v1325 = vrot.slane %v207, 5
      %v1326 = vsel %vm1242, %v1324, %v1325
      %v1327 = vrot.slane %v208, 5
      %v1328 = vrot.slane %v1327, 4
      %v1329 = vrot.slane %v209, 5
      %v1330 = vsel %vm1242, %v1328, %v1329
      %v1331 = vrot.slane %v1329, 4
      %v1332 = vrot.slane %v210, 5
      %v1333 = vsel %vm1242, %v1331, %v1332
      %v1334 = vrot.slane %v211, 5
      %v1335 = vrot.slane %v1334, 4
      %v1336 = vrot.slane %v212, 5
      %v1337 = vsel %vm1242, %v1335, %v1336
      %v1338 = vrot.slane %v1336, 4
      %v1339 = vrot.slane %v213, 5
      %v1340 = vsel %vm1242, %v1338, %v1339
      %v1341 = vrot.slane %v214, 5
      %v1342 = vrot.slane %v1341, 4
      %v1343 = vrot.slane %v215, 5
      %v1344 = vsel %vm1242, %v1342, %v1343
      %v1345 = vrot.slane %v1343, 4
      %v1346 = vrot.slane %v216, 5
      %v1347 = vsel %vm1242, %v1345, %v1346
      %v1348 = vrot.slane %v217, 5
      %v1349 = vrot.slane %v1348, 4
      %v1350 = vrot.slane %v218, 5
      %v1351 = vsel %vm1242, %v1349, %v1350
      %v1352 = vrot.slane %v1350, 4
      %v1353 = vrot.slane %v219, 5
      %v1354 = vsel %vm1242, %v1352, %v1353
      %s1355 = scalar_lea.vmem %s1, 128
      %v1356 = vld [vmem:[%s1355] sm:$0xf]
      %v1357 = vld [vmem:[%s1355 + $0x4] sm:$0xf]
      %v1358 = vld [vmem:[%s1355 + $0x8] sm:$0xf]
      %v1359 = vld [vmem:[%s1355 + $0xc] sm:$0xf]
      %v1360 = vld [vmem:[%s1355 + $0x10] sm:$0xf]
      %v1361 = vld [vmem:[%s1355 + $0x14] sm:$0xf]
      %v1362 = vld [vmem:[%s1355 + $0x18] sm:$0xf]
      %v1363 = vld [vmem:[%s1355 + $0x1c] sm:$0xf]
      %v1364 = vld [vmem:[%s1355 + $0x20] sm:$0xf]
      %v1365 = vld [vmem:[%s1355 + $0x24] sm:$0xf]
      %v1366 = vld [vmem:[%s1355 + $0x28] sm:$0xf]
      %v1367 = vld [vmem:[%s1355 + $0x2c] sm:$0xf]
      %v1368 = vld [vmem:[%s1355 + $0x30] sm:$0xf]
      %v1369 = vld [vmem:[%s1355 + $0x34] sm:$0xf]
      %v1370 = vld [vmem:[%s1355 + $0x38] sm:$0xf]
      %v1371 = vld [vmem:[%s1355 + $0x3c] sm:$0xf]
      %v1372 = vunpack.c.l.b16 %v1246
      %v1373 = vunpack.c.l.b16 %v1249
      %v1374 = vunpack.c.l.b16 %v1253
      %v1375 = vunpack.c.l.b16 %v1256
      %v1376 = vunpack.c.l.b16 %v1260
      %v1377 = vunpack.c.l.b16 %v1263
      %v1378 = vunpack.c.l.b16 %v1267
      %v1379 = vunpack.c.l.b16 %v1270
      %v1380 = vunpack.c.l.b16 %v1274
      %v1381 = vunpack.c.l.b16 %v1277
      %v1382 = vunpack.c.l.b16 %v1281
      %v1383 = vunpack.c.l.b16 %v1284
      %v1384 = vunpack.c.l.b16 %v1288
      %v1385 = vunpack.c.l.b16 %v1291
      %v1386 = vunpack.c.l.b16 %v1295
      %v1387 = vunpack.c.l.b16 %v1298
      %v1388 = vunpack.c.l.b16 %v1302
      %v1389 = vunpack.c.l.b16 %v1305
      %v1390 = vunpack.c.l.b16 %v1309
      %v1391 = vunpack.c.l.b16 %v1312
      %v1392 = vunpack.c.l.b16 %v1316
      %v1393 = vunpack.c.l.b16 %v1319
      %v1394 = vunpack.c.l.b16 %v1323
      %v1395 = vunpack.c.l.b16 %v1326
      %v1396 = vunpack.c.l.b16 %v1330
      %v1397 = vunpack.c.l.b16 %v1333
      %v1398 = vunpack.c.l.b16 %v1337
      %v1399 = vunpack.c.l.b16 %v1340
      %v1400 = vunpack.c.l.b16 %v1344
      %v1401 = vunpack.c.l.b16 %v1347
      %v1402 = vunpack.c.l.b16 %v1351
      %v1403 = vunpack.c.l.b16 %v1354
      %v1404 = vpack.c.b16 %v1373, %v1372
      %v1405 = vpack.c.b16 %v1375, %v1374
      %v1406 = vpack.c.b16 %v1377, %v1376
      %v1407 = vpack.c.b16 %v1379, %v1378
      %v1408 = vpack.c.b16 %v1381, %v1380
      %v1409 = vpack.c.b16 %v1383, %v1382
      %v1410 = vpack.c.b16 %v1385, %v1384
      %v1411 = vpack.c.b16 %v1387, %v1386
      %v1412 = vpack.c.b16 %v1389, %v1388
      %v1413 = vpack.c.b16 %v1391, %v1390
      %v1414 = vpack.c.b16 %v1393, %v1392
      %v1415 = vpack.c.b16 %v1395, %v1394
      %v1416 = vpack.c.b16 %v1397, %v1396
      %v1417 = vpack.c.b16 %v1399, %v1398
      %v1418 = vpack.c.b16 %v1401, %v1400
      %v1419 = vpack.c.b16 %v1403, %v1402
      %v1452 = vunpack.c.l.b16 %v1356
      %v1453 = vunpack.c.l.b16 %v1357
      %v1454 = vunpack.c.l.b16 %v1358
      %v1455 = vunpack.c.l.b16 %v1359
      %v1456 = vunpack.c.l.b16 %v1360
      %v1457 = vunpack.c.l.b16 %v1361
      %v1458 = vunpack.c.l.b16 %v1362
      %v1459 = vunpack.c.l.b16 %v1363
      %v1460 = vunpack.c.l.b16 %v1364
      %v1461 = vunpack.c.l.b16 %v1365
      %v1462 = vunpack.c.l.b16 %v1366
      %v1463 = vunpack.c.l.b16 %v1367
      %v1464 = vunpack.c.l.b16 %v1368
      %v1465 = vunpack.c.l.b16 %v1369
      %v1466 = vunpack.c.l.b16 %v1370
      %v1467 = vunpack.c.l.b16 %v1371
      %v1468 = vpack.c.b16 %v1453, %v1452
      %v1469 = vpack.c.b16 %v1455, %v1454
      %v1470 = vpack.c.b16 %v1457, %v1456
      %v1471 = vpack.c.b16 %v1459, %v1458
      %v1472 = vpack.c.b16 %v1461, %v1460
      %v1473 = vpack.c.b16 %v1463, %v1462
      %v1474 = vpack.c.b16 %v1465, %v1464
      %v1475 = vpack.c.b16 %v1467, %v1466
      %1484 = vmatprep.subr.bf16.mxu0 0
      %1485 = vmatpush1.bf16.msra.mxu0 %v1468
      %1486 = vmatprep.subr.bf16.mxu0 0
      %1487 = vmatpush1.bf16.msra.mxu0 %v1469
      %1488 = vmatprep.subr.bf16.mxu0 0
      %1489 = vmatpush1.bf16.msra.mxu0 %v1470
      %1490 = vmatprep.subr.bf16.mxu0 0
      %1491 = vmatpush1.bf16.msra.mxu0 %v1471
      %1492 = vmatprep.subr.bf16.mxu0 0
      %1493 = vmatpush1.bf16.msra.mxu0 %v1472
      %1494 = vmatprep.subr.bf16.mxu0 0
      %1495 = vmatpush1.bf16.msra.mxu0 %v1473
      %1496 = vmatprep.subr.bf16.mxu0 0
      %1497 = vmatpush1.bf16.msra.mxu0 %v1474
      %1498 = vmatprep.subr.bf16.mxu0 0
      %1499 = vmatpush1.bf16.msra.mxu0 %v1475
      %1500 = vmatprep.subr.bf16.mxu0 0
      %1501 = vmatpush1.bf16.msra.mxu0 0
      %1502 = vmatprep.subr.bf16.mxu0 0
      %1503 = vmatpush1.bf16.msra.mxu0 0
      %1504 = vmatprep.subr.bf16.mxu0 0
      %1505 = vmatpush1.bf16.msra.mxu0 0
      %1506 = vmatprep.subr.bf16.mxu0 0
      %1507 = vmatpush1.bf16.msra.mxu0 0
      %1508 = vmatprep.subr.bf16.mxu0 0
      %1509 = vmatpush1.bf16.msra.mxu0 0
      %1510 = vmatprep.subr.bf16.mxu0 0
      %1511 = vmatpush1.bf16.msra.mxu0 0
      %1512 = vmatprep.subr.bf16.mxu0 0
      %1513 = vmatpush1.bf16.msra.mxu0 0
      %1514 = vmatprep.subr.bf16.mxu0 0
      %1515 = vmatpush1.bf16.msra.mxu0 0
      %1516 = vmatprep.mubr.bf16.mxu0 0
      %1517 = vmatmul.mubr.bf16.gmra.mrb[0].mxu0 %v1404
      %v1518 = vpop.f32.mrb[0].mxu0
      %v1519 = vadd.f32 0.0, %v1518
      %v1520 = vpop.f32.mrb[0].mxu0
      %v1521 = vpop.f32.mrb[0].mxu0
      %v1522 = vadd.f32 0.0, %v1521
      %v1523 = vpop.f32.mrb[0].mxu0
      %1524 = vmatprep.mubr.bf16.mxu0 0
      %1525 = vmatmul.mubr.bf16.gmra.mrb[0].mxu0 %v1405
      %v1526 = vpop.f32.mrb[0].mxu0
      %v1527 = vadd.f32 0.0, %v1526
      %v1528 = vpop.f32.mrb[0].mxu0
      %v1529 = vpop.f32.mrb[0].mxu0
      %v1530 = vadd.f32 0.0, %v1529
      %v1531 = vpop.f32.mrb[0].mxu0
      %1532 = vmatprep.mubr.bf16.mxu0 0
      %1533 = vmatmul.mubr.bf16.gmra.mrb[0].mxu0 %v1406
      %v1534 = vpop.f32.mrb[0].mxu0
      %v1535 = vadd.f32 0.0, %v1534
      %v1536 = vpop.f32.mrb[0].mxu0
      %v1537 = vpop.f32.mrb[0].mxu0
      %v1538 = vadd.f32 0.0, %v1537
      %v1539 = vpop.f32.mrb[0].mxu0
      %1540 = vmatprep.mubr.bf16.mxu0 0
      %1541 = vmatmul.mubr.bf16.gmra.mrb[0].mxu0 %v1407
      %v1542 = vpop.f32.mrb[0].mxu0
      %v1543 = vadd.f32 0.0, %v1542
      %v1544 = vpop.f32.mrb[0].mxu0
      %v1545 = vpop.f32.mrb[0].mxu0
      %v1546 = vadd.f32 0.0, %v1545
      %v1547 = vpop.f32.mrb[0].mxu0
      %1548 = vmatprep.mubr.bf16.mxu0 0
      %1549 = vmatmul.mubr.bf16.gmra.mrb[0].mxu0 %v1408
      %v1550 = vpop.f32.mrb[0].mxu0
      %v1551 = vadd.f32 0.0, %v1550
      %v1552 = vpop.f32.mrb[0].mxu0
      %v1553 = vpop.f32.mrb[0].mxu0
      %v1554 = vadd.f32 0.0, %v1553
      %v1555 = vpop.f32.mrb[0].mxu0
      %1556 = vmatprep.mubr.bf16.mxu0 0
      %1557 = vmatmul.mubr.bf16.gmra.mrb[0].mxu0 %v1409
      %v1558 = vpop.f32.mrb[0].mxu0
      %v1559 = vadd.f32 0.0, %v1558
      %v1560 = vpop.f32.mrb[0].mxu0
      %v1561 = vpop.f32.mrb[0].mxu0
      %v1562 = vadd.f32 0.0, %v1561
      %v1563 = vpop.f32.mrb[0].mxu0
      %1564 = vmatprep.mubr.bf16.mxu0 0
      %1565 = vmatmul.mubr.bf16.gmra.mrb[0].mxu0 %v1410
      %v1566 = vpop.f32.mrb[0].mxu0
      %v1567 = vadd.f32 0.0, %v1566
      %v1568 = vpop.f32.mrb[0].mxu0
      %v1569 = vpop.f32.mrb[0].mxu0
      %v1570 = vadd.f32 0.0, %v1569
      %v1571 = vpop.f32.mrb[0].mxu0
      %1572 = vmatprep.mubr.bf16.mxu0 0
      %1573 = vmatmul.mubr.bf16.gmra.mrb[0].mxu0 %v1411
      %v1574 = vpop.f32.mrb[0].mxu0
      %v1575 = vadd.f32 0.0, %v1574
      %v1576 = vpop.f32.mrb[0].mxu0
      %v1577 = vpop.f32.mrb[0].mxu0
      %v1578 = vadd.f32 0.0, %v1577
      %v1579 = vpop.f32.mrb[0].mxu0
      %1580 = vmatprep.mubr.bf16.mxu0 0
      %1581 = vmatmul.mubr.bf16.gmra.mrb[0].mxu0 %v1412
      %v1582 = vpop.f32.mrb[0].mxu0
      %v1583 = vadd.f32 0.0, %v1582
      %v1584 = vpop.f32.mrb[0].mxu0
      %v1585 = vpop.f32.mrb[0].mxu0
      %v1586 = vadd.f32 0.0, %v1585
      %v1587 = vpop.f32.mrb[0].mxu0
      %1588 = vmatprep.mubr.bf16.mxu0 0
      %1589 = vmatmul.mubr.bf16.gmra.mrb[0].mxu0 %v1413
      %v1590 = vpop.f32.mrb[0].mxu0
      %v1591 = vadd.f32 0.0, %v1590
      %v1592 = vpop.f32.mrb[0].mxu0
      %v1593 = vpop.f32.mrb[0].mxu0
      %v1594 = vadd.f32 0.0, %v1593
      %v1595 = vpop.f32.mrb[0].mxu0
      %1596 = vmatprep.mubr.bf16.mxu0 0
      %1597 = vmatmul.mubr.bf16.gmra.mrb[0].mxu0 %v1414
      %v1598 = vpop.f32.mrb[0].mxu0
      %v1599 = vadd.f32 0.0, %v1598
      %v1600 = vpop.f32.mrb[0].mxu0
      %v1601 = vpop.f32.mrb[0].mxu0
      %v1602 = vadd.f32 0.0, %v1601
      %v1603 = vpop.f32.mrb[0].mxu0
      %1604 = vmatprep.mubr.bf16.mxu0 0
      %1605 = vmatmul.mubr.bf16.gmra.mrb[0].mxu0 %v1415
      %v1606 = vpop.f32.mrb[0].mxu0
      %v1607 = vadd.f32 0.0, %v1606
      %v1608 = vpop.f32.mrb[0].mxu0
      %v1609 = vpop.f32.mrb[0].mxu0
      %v1610 = vadd.f32 0.0, %v1609
      %v1611 = vpop.f32.mrb[0].mxu0
      %1612 = vmatprep.mubr.bf16.mxu0 0
      %1613 = vmatmul.mubr.bf16.gmra.mrb[0].mxu0 %v1416
      %v1614 = vpop.f32.mrb[0].mxu0
      %v1615 = vadd.f32 0.0, %v1614
      %v1616 = vpop.f32.mrb[0].mxu0
      %v1617 = vpop.f32.mrb[0].mxu0
      %v1618 = vadd.f32 0.0, %v1617
      %v1619 = vpop.f32.mrb[0].mxu0
      %1620 = vmatprep.mubr.bf16.mxu0 0
      %1621 = vmatmul.mubr.bf16.gmra.mrb[0].mxu0 %v1417
      %v1622 = vpop.f32.mrb[0].mxu0
      %v1623 = vadd.f32 0.0, %v1622
      %v1624 = vpop.f32.mrb[0].mxu0
      %v1625 = vpop.f32.mrb[0].mxu0
      %v1626 = vadd.f32 0.0, %v1625
      %v1627 = vpop.f32.mrb[0].mxu0
      %1628 = vmatprep.mubr.bf16.mxu0 0
      %1629 = vmatmul.mubr.bf16.gmra.mrb[0].mxu0 %v1418
      %v1630 = vpop.f32.mrb[0].mxu0
      %v1631 = vadd.f32 0.0, %v1630
      %v1632 = vpop.f32.mrb[0].mxu0
      %v1633 = vpop.f32.mrb[0].mxu0
      %v1634 = vadd.f32 0.0, %v1633
      %v1635 = vpop.f32.mrb[0].mxu0
      %1636 = vmatprep.mubr.bf16.mxu0 0
      %1637 = vmatmul.mubr.bf16.gmra.mrb[0].mxu0 %v1419
      %v1638 = vpop.f32.mrb[0].mxu0
      %v1639 = vadd.f32 0.0, %v1638
      %v1640 = vpop.f32.mrb[0].mxu0
      %v1641 = vpop.f32.mrb[0].mxu0
      %v1642 = vadd.f32 0.0, %v1641
      %v1643 = vpop.f32.mrb[0].mxu0
      %1644 = vdwg.mxu0
      %v1645 = vadd.f32 %v1098, %v1519
      %v1646 = vadd.f32 %v1101, %v1522
      %v1647 = vadd.f32 %v1106, %v1527
      %v1648 = vadd.f32 %v1109, %v1530
      %v1649 = vadd.f32 %v1114, %v1535
      %v1650 = vadd.f32 %v1117, %v1538
      %v1651 = vadd.f32 %v1122, %v1543
      %v1652 = vadd.f32 %v1125, %v1546
      %v1653 = vadd.f32 %v1130, %v1551
      %v1654 = vadd.f32 %v1133, %v1554
      %v1655 = vadd.f32 %v1138, %v1559
      %v1656 = vadd.f32 %v1141, %v1562
      %v1657 = vadd.f32 %v1146, %v1567
      %v1658 = vadd.f32 %v1149, %v1570
      %v1659 = vadd.f32 %v1154, %v1575
      %v1660 = vadd.f32 %v1157, %v1578
      %v1661 = vadd.f32 %v1162, %v1583
      %v1662 = vadd.f32 %v1165, %v1586
      %v1663 = vadd.f32 %v1170, %v1591
      %v1664 = vadd.f32 %v1173, %v1594
      %v1665 = vadd.f32 %v1178, %v1599
      %v1666 = vadd.f32 %v1181, %v1602
      %v1667 = vadd.f32 %v1186, %v1607
      %v1668 = vadd.f32 %v1189, %v1610
      %v1669 = vadd.f32 %v1194, %v1615
      %v1670 = vadd.f32 %v1197, %v1618
      %v1671 = vadd.f32 %v1202, %v1623
      %v1672 = vadd.f32 %v1205, %v1626
      %v1673 = vadd.f32 %v1210, %v1631
      %v1674 = vadd.f32 %v1213, %v1634
      %v1675 = vadd.f32 %v1218, %v1639
      %v1676 = vadd.f32 %v1221, %v1642
      %s1677 = scalar_lea.vmem %s1, 192
      %v1678 = vld [vmem:[%s1677] sm:$0xf]
      %v1679 = vld [vmem:[%s1677 + $0x4] sm:$0xf]
      %v1680 = vld [vmem:[%s1677 + $0x8] sm:$0xf]
      %v1681 = vld [vmem:[%s1677 + $0xc] sm:$0xf]
      %v1682 = vld [vmem:[%s1677 + $0x10] sm:$0xf]
      %v1683 = vld [vmem:[%s1677 + $0x14] sm:$0xf]
      %v1684 = vld [vmem:[%s1677 + $0x18] sm:$0xf]
      %v1685 = vld [vmem:[%s1677 + $0x1c] sm:$0xf]
      %v1686 = vld [vmem:[%s1677 + $0x20] sm:$0xf]
      %v1687 = vld [vmem:[%s1677 + $0x24] sm:$0xf]
      %v1688 = vld [vmem:[%s1677 + $0x28] sm:$0xf]
      %v1689 = vld [vmem:[%s1677 + $0x2c] sm:$0xf]
      %v1690 = vld [vmem:[%s1677 + $0x30] sm:$0xf]
      %v1691 = vld [vmem:[%s1677 + $0x34] sm:$0xf]
      %v1692 = vld [vmem:[%s1677 + $0x38] sm:$0xf]
      %v1693 = vld [vmem:[%s1677 + $0x3c] sm:$0xf]
      %v1696 = vunpack.c.l.b16 %v220
      %v1697 = vunpack.c.l.b16 %v221
      %v1698 = vpack.c.b16 %v1697, %v1696
      %v1716 = vunpack.c.l.b16 %v1678
      %v1717 = vunpack.c.l.b16 %v1679
      %v1718 = vunpack.c.l.b16 %v1680
      %v1719 = vunpack.c.l.b16 %v1681
      %v1720 = vunpack.c.l.b16 %v1682
      %v1721 = vunpack.c.l.b16 %v1683
      %v1722 = vunpack.c.l.b16 %v1684
      %v1723 = vunpack.c.l.b16 %v1685
      %v1724 = vunpack.c.l.b16 %v1686
      %v1725 = vunpack.c.l.b16 %v1687
      %v1726 = vunpack.c.l.b16 %v1688
      %v1727 = vunpack.c.l.b16 %v1689
      %v1728 = vunpack.c.l.b16 %v1690
      %v1729 = vunpack.c.l.b16 %v1691
      %v1730 = vunpack.c.l.b16 %v1692
      %v1731 = vunpack.c.l.b16 %v1693
      %v1732 = vpack.c.b16 %v1717, %v1716
      %v1733 = vpack.c.b16 %v1719, %v1718
      %v1734 = vpack.c.b16 %v1721, %v1720
      %v1735 = vpack.c.b16 %v1723, %v1722
      %v1736 = vpack.c.b16 %v1725, %v1724
      %v1737 = vpack.c.b16 %v1727, %v1726
      %v1738 = vpack.c.b16 %v1729, %v1728
      %v1739 = vpack.c.b16 %v1731, %v1730
      %1748 = vmatprep.subr.bf16.mxu0 0
      %1749 = vmatpush1.bf16.msra.mxu0 %v1732
      %1750 = vmatprep.subr.bf16.mxu0 0
      %1751 = vmatpush1.bf16.msra.mxu0 %v1733
      %1752 = vmatprep.subr.bf16.mxu0 0
      %1753 = vmatpush1.bf16.msra.mxu0 %v1734
      %1754 = vmatprep.subr.bf16.mxu0 0
      %1755 = vmatpush1.bf16.msra.mxu0 %v1735
      %1756 = vmatprep.subr.bf16.mxu0 0
      %1757 = vmatpush1.bf16.msra.mxu0 %v1736
      %1758 = vmatprep.subr.bf16.mxu0 0
      %1759 = vmatpush1.bf16.msra.mxu0 %v1737
      %1760 = vmatprep.subr.bf16.mxu0 0
      %1761 = vmatpush1.bf16.msra.mxu0 %v1738
      %1762 = vmatprep.subr.bf16.mxu0 0
      %1763 = vmatpush1.bf16.msra.mxu0 %v1739
      %1764 = vmatprep.subr.bf16.mxu0 0
      %1765 = vmatpush1.bf16.msra.mxu0 0
      %1766 = vmatprep.subr.bf16.mxu0 0
      %1767 = vmatpush1.bf16.msra.mxu0 0
      %1768 = vmatprep.subr.bf16.mxu0 0
      %1769 = vmatpush1.bf16.msra.mxu0 0
      %1770 = vmatprep.subr.bf16.mxu0 0
      %1771 = vmatpush1.bf16.msra.mxu0 0
      %1772 = vmatprep.subr.bf16.mxu0 0
      %1773 = vmatpush1.bf16.msra.mxu0 0
      %1774 = vmatprep.subr.bf16.mxu0 0
      %1775 = vmatpush1.bf16.msra.mxu0 0
      %1776 = vmatprep.subr.bf16.mxu0 0
      %1777 = vmatpush1.bf16.msra.mxu0 0
      %1778 = vmatprep.subr.bf16.mxu0 0
      %1779 = vmatpush1.bf16.msra.mxu0 0
      %1780 = vmatprep.mubr.bf16.mxu0 0
      %1781 = vmatmul.mubr.bf16.gmra.mrb[0].mxu0 %v984
      %v1782 = vpop.f32.mrb[0].mxu0
      %v1783 = vadd.f32 0.0, %v1782
      %v1784 = vpop.f32.mrb[0].mxu0
      %v1785 = vpop.f32.mrb[0].mxu0
      %v1786 = vadd.f32 0.0, %v1785
      %v1787 = vpop.f32.mrb[0].mxu0
      %1788 = vmatprep.mubr.bf16.mxu0 0
      %1789 = vmatmul.mubr.bf16.gmra.mrb[0].mxu0 %v985
      %v1790 = vpop.f32.mrb[0].mxu0
      %v1791 = vadd.f32 0.0, %v1790
      %v1792 = vpop.f32.mrb[0].mxu0
      %v1793 = vpop.f32.mrb[0].mxu0
      %v1794 = vadd.f32 0.0, %v1793
      %v1795 = vpop.f32.mrb[0].mxu0
      %1796 = vmatprep.mubr.bf16.mxu0 0
      %1797 = vmatmul.mubr.bf16.gmra.mrb[0].mxu0 %v986
      %v1798 = vpop.f32.mrb[0].mxu0
      %v1799 = vadd.f32 0.0, %v1798
      %v1800 = vpop.f32.mrb[0].mxu0
      %v1801 = vpop.f32.mrb[0].mxu0
      %v1802 = vadd.f32 0.0, %v1801
      %v1803 = vpop.f32.mrb[0].mxu0
      %1804 = vmatprep.mubr.bf16.mxu0 0
      %1805 = vmatmul.mubr.bf16.gmra.mrb[0].mxu0 %v987
      %v1806 = vpop.f32.mrb[0].mxu0
      %v1807 = vadd.f32 0.0, %v1806
      %v1808 = vpop.f32.mrb[0].mxu0
      %v1809 = vpop.f32.mrb[0].mxu0
      %v1810 = vadd.f32 0.0, %v1809
      %v1811 = vpop.f32.mrb[0].mxu0
      %1812 = vmatprep.mubr.bf16.mxu0 0
      %1813 = vmatmul.mubr.bf16.gmra.mrb[0].mxu0 %v988
      %v1814 = vpop.f32.mrb[0].mxu0
      %v1815 = vadd.f32 0.0, %v1814
      %v1816 = vpop.f32.mrb[0].mxu0
      %v1817 = vpop.f32.mrb[0].mxu0
      %v1818 = vadd.f32 0.0, %v1817
      %v1819 = vpop.f32.mrb[0].mxu0
      %1820 = vmatprep.mubr.bf16.mxu0 0
      %1821 = vmatmul.mubr.bf16.gmra.mrb[0].mxu0 %v989
      %v1822 = vpop.f32.mrb[0].mxu0
      %v1823 = vadd.f32 0.0, %v1822
      %v1824 = vpop.f32.mrb[0].mxu0
      %v1825 = vpop.f32.mrb[0].mxu0
      %v1826 = vadd.f32 0.0, %v1825
      %v1827 = vpop.f32.mrb[0].mxu0
      %1828 = vmatprep.mubr.bf16.mxu0 0
      %1829 = vmatmul.mubr.bf16.gmra.mrb[0].mxu0 %v990
      %v1830 = vpop.f32.mrb[0].mxu0
      %v1831 = vadd.f32 0.0, %v1830
      %v1832 = vpop.f32.mrb[0].mxu0
      %v1833 = vpop.f32.mrb[0].mxu0
      %v1834 = vadd.f32 0.0, %v1833
      %v1835 = vpop.f32.mrb[0].mxu0
      %1836 = vmatprep.mubr.bf16.mxu0 0
      %1837 = vmatmul.mubr.bf16.gmra.mrb[0].mxu0 %v991
      %v1838 = vpop.f32.mrb[0].mxu0
      %v1839 = vadd.f32 0.0, %v1838
      %v1840 = vpop.f32.mrb[0].mxu0
      %v1841 = vpop.f32.mrb[0].mxu0
      %v1842 = vadd.f32 0.0, %v1841
      %v1843 = vpop.f32.mrb[0].mxu0
      %1844 = vmatprep.mubr.bf16.mxu0 0
      %1845 = vmatmul.mubr.bf16.gmra.mrb[0].mxu0 %v992
      %v1846 = vpop.f32.mrb[0].mxu0
      %v1847 = vadd.f32 0.0, %v1846
      %v1848 = vpop.f32.mrb[0].mxu0
      %v1849 = vpop.f32.mrb[0].mxu0
      %v1850 = vadd.f32 0.0, %v1849
      %v1851 = vpop.f32.mrb[0].mxu0
      %1852 = vmatprep.mubr.bf16.mxu0 0
      %1853 = vmatmul.mubr.bf16.gmra.mrb[0].mxu0 %v993
      %v1854 = vpop.f32.mrb[0].mxu0
      %v1855 = vadd.f32 0.0, %v1854
      %v1856 = vpop.f32.mrb[0].mxu0
      %v1857 = vpop.f32.mrb[0].mxu0
      %v1858 = vadd.f32 0.0, %v1857
      %v1859 = vpop.f32.mrb[0].mxu0
      %1860 = vmatprep.mubr.bf16.mxu0 0
      %1861 = vmatmul.mubr.bf16.gmra.mrb[0].mxu0 %v994
      %v1862 = vpop.f32.mrb[0].mxu0
      %v1863 = vadd.f32 0.0, %v1862
      %v1864 = vpop.f32.mrb[0].mxu0
      %v1865 = vpop.f32.mrb[0].mxu0
      %v1866 = vadd.f32 0.0, %v1865
      %v1867 = vpop.f32.mrb[0].mxu0
      %1868 = vmatprep.mubr.bf16.mxu0 0
      %1869 = vmatmul.mubr.bf16.gmra.mrb[0].mxu0 %v995
      %v1870 = vpop.f32.mrb[0].mxu0
      %v1871 = vadd.f32 0.0, %v1870
      %v1872 = vpop.f32.mrb[0].mxu0
      %v1873 = vpop.f32.mrb[0].mxu0
      %v1874 = vadd.f32 0.0, %v1873
      %v1875 = vpop.f32.mrb[0].mxu0
      %1876 = vmatprep.mubr.bf16.mxu0 0
      %1877 = vmatmul.mubr.bf16.gmra.mrb[0].mxu0 %v996
      %v1878 = vpop.f32.mrb[0].mxu0
      %v1879 = vadd.f32 0.0, %v1878
      %v1880 = vpop.f32.mrb[0].mxu0
      %v1881 = vpop.f32.mrb[0].mxu0
      %v1882 = vadd.f32 0.0, %v1881
      %v1883 = vpop.f32.mrb[0].mxu0
      %1884 = vmatprep.mubr.bf16.mxu0 0
      %1885 = vmatmul.mubr.bf16.gmra.mrb[0].mxu0 %v997
      %v1886 = vpop.f32.mrb[0].mxu0
      %v1887 = vadd.f32 0.0, %v1886
      %v1888 = vpop.f32.mrb[0].mxu0
      %v1889 = vpop.f32.mrb[0].mxu0
      %v1890 = vadd.f32 0.0, %v1889
      %v1891 = vpop.f32.mrb[0].mxu0
      %1892 = vmatprep.mubr.bf16.mxu0 0
      %1893 = vmatmul.mubr.bf16.gmra.mrb[0].mxu0 %v998
      %v1894 = vpop.f32.mrb[0].mxu0
      %v1895 = vadd.f32 0.0, %v1894
      %v1896 = vpop.f32.mrb[0].mxu0
      %v1897 = vpop.f32.mrb[0].mxu0
      %v1898 = vadd.f32 0.0, %v1897
      %v1899 = vpop.f32.mrb[0].mxu0
      %1900 = vmatprep.mubr.bf16.mxu0 0
      %1901 = vmatmul.mubr.bf16.gmra.mrb[0].mxu0 %v1698
      %v1902 = vpop.f32.mrb[0].mxu0
      %v1903 = vadd.f32 0.0, %v1902
      %v1904 = vpop.f32.mrb[0].mxu0
      %v1905 = vpop.f32.mrb[0].mxu0
      %v1906 = vadd.f32 0.0, %v1905
      %v1907 = vpop.f32.mrb[0].mxu0
      %1908 = vdwg.mxu0
      %v1909 = vadd.f32 %v1645, %v1783
      %v1910 = vadd.f32 %v1646, %v1786
      %v1911 = vadd.f32 %v1647, %v1791
      %v1912 = vadd.f32 %v1648, %v1794
      %v1913 = vadd.f32 %v1649, %v1799
      %v1914 = vadd.f32 %v1650, %v1802
      %v1915 = vadd.f32 %v1651, %v1807
      %v1916 = vadd.f32 %v1652, %v1810
      %v1917 = vadd.f32 %v1653, %v1815
      %v1918 = vadd.f32 %v1654, %v1818
      %v1919 = vadd.f32 %v1655, %v1823
      %v1920 = vadd.f32 %v1656, %v1826
      %v1921 = vadd.f32 %v1657, %v1831
      %v1922 = vadd.f32 %v1658, %v1834
      %v1923 = vadd.f32 %v1659, %v1839
      %v1924 = vadd.f32 %v1660, %v1842
      %v1925 = vadd.f32 %v1661, %v1847
      %v1926 = vadd.f32 %v1662, %v1850
      %v1927 = vadd.f32 %v1663, %v1855
      %v1928 = vadd.f32 %v1664, %v1858
      %v1929 = vadd.f32 %v1665, %v1863
      %v1930 = vadd.f32 %v1666, %v1866
      %v1931 = vadd.f32 %v1667, %v1871
      %v1932 = vadd.f32 %v1668, %v1874
      %v1933 = vadd.f32 %v1669, %v1879
      %v1934 = vadd.f32 %v1670, %v1882
      %v1935 = vadd.f32 %v1671, %v1887
      %v1936 = vadd.f32 %v1672, %v1890
      %v1937 = vadd.f32 %v1673, %v1895
      %v1938 = vadd.f32 %v1674, %v1898
      %v1939 = vadd.f32 %v1675, %v1903
      %v1940 = vadd.f32 %v1676, %v1906
      %v1942 = vshrl.u32 %v220, 16
      %v1944 = vrot.slane %v1942, 4
      %v1945 = vshll.u32 %v220, 16
      %v1947 = vrot.slane %v1945, 5
      %v1948 = vor.u32 %v1944, %v1947
      %v1949 = vrot.slane %v1948, 4
      %v1951 = vshll.u32 %v221, 16
      %v1953 = vrot.slane %v1951, 5
      %v1954 = vsel %vm244, %v1949, %v1953
      %v1955 = vshrl.u32 %v221, 16
      %v1957 = vrot.slane %v1955, 4
      %v1958 = vor.u32 %v1957, %v1953
      %v1959 = vrot.slane %v1958, 4
      %v1961 = vshll.u32 %v222, 16
      %v1963 = vrot.slane %v1961, 5
      %v1964 = vsel %vm244, %v1959, %v1963
      %s1965 = scalar_lea.vmem %s1, 256
      %v1966 = vld [vmem:[%s1965] sm:$0xf]
      %v1967 = vld [vmem:[%s1965 + $0x4] sm:$0xf]
      %v1968 = vld [vmem:[%s1965 + $0x8] sm:$0xf]
      %v1969 = vld [vmem:[%s1965 + $0xc] sm:$0xf]
      %v1970 = vld [vmem:[%s1965 + $0x10] sm:$0xf]
      %v1971 = vld [vmem:[%s1965 + $0x14] sm:$0xf]
      %v1972 = vld [vmem:[%s1965 + $0x18] sm:$0xf]
      %v1973 = vld [vmem:[%s1965 + $0x1c] sm:$0xf]
      %v1974 = vld [vmem:[%s1965 + $0x20] sm:$0xf]
      %v1975 = vld [vmem:[%s1965 + $0x24] sm:$0xf]
      %v1976 = vld [vmem:[%s1965 + $0x28] sm:$0xf]
      %v1977 = vld [vmem:[%s1965 + $0x2c] sm:$0xf]
      %v1978 = vld [vmem:[%s1965 + $0x30] sm:$0xf]
      %v1979 = vld [vmem:[%s1965 + $0x34] sm:$0xf]
      %v1980 = vld [vmem:[%s1965 + $0x38] sm:$0xf]
      %v1981 = vld [vmem:[%s1965 + $0x3c] sm:$0xf]
      %v1982 = vunpack.c.l.b16 %v1954
      %v1983 = vunpack.c.l.b16 %v1964
      %v1984 = vpack.c.b16 %v1983, %v1982
      %v2002 = vunpack.c.l.b16 %v1966
      %v2003 = vunpack.c.l.b16 %v1967
      %v2004 = vunpack.c.l.b16 %v1968
      %v2005 = vunpack.c.l.b16 %v1969
      %v2006 = vunpack.c.l.b16 %v1970
      %v2007 = vunpack.c.l.b16 %v1971
      %v2008 = vunpack.c.l.b16 %v1972
      %v2009 = vunpack.c.l.b16 %v1973
      %v2010 = vunpack.c.l.b16 %v1974
      %v2011 = vunpack.c.l.b16 %v1975
      %v2012 = vunpack.c.l.b16 %v1976
      %v2013 = vunpack.c.l.b16 %v1977
      %v2014 = vunpack.c.l.b16 %v1978
      %v2015 = vunpack.c.l.b16 %v1979
      %v2016 = vunpack.c.l.b16 %v1980
      %v2017 = vunpack.c.l.b16 %v1981
      %v2018 = vpack.c.b16 %v2003, %v2002
      %v2019 = vpack.c.b16 %v2005, %v2004
      %v2020 = vpack.c.b16 %v2007, %v2006
      %v2021 = vpack.c.b16 %v2009, %v2008
      %v2022 = vpack.c.b16 %v2011, %v2010
      %v2023 = vpack.c.b16 %v2013, %v2012
      %v2024 = vpack.c.b16 %v2015, %v2014
      %v2025 = vpack.c.b16 %v2017, %v2016
      %2034 = vmatprep.subr.bf16.mxu0 0
      %2035 = vmatpush1.bf16.msra.mxu0 %v2018
      %2036 = vmatprep.subr.bf16.mxu0 0
      %2037 = vmatpush1.bf16.msra.mxu0 %v2019
      %2038 = vmatprep.subr.bf16.mxu0 0
      %2039 = vmatpush1.bf16.msra.mxu0 %v2020
      %2040 = vmatprep.subr.bf16.mxu0 0
      %2041 = vmatpush1.bf16.msra.mxu0 %v2021
      %2042 = vmatprep.subr.bf16.mxu0 0
      %2043 = vmatpush1.bf16.msra.mxu0 %v2022
      %2044 = vmatprep.subr.bf16.mxu0 0
      %2045 = vmatpush1.bf16.msra.mxu0 %v2023
      %2046 = vmatprep.subr.bf16.mxu0 0
      %2047 = vmatpush1.bf16.msra.mxu0 %v2024
      %2048 = vmatprep.subr.bf16.mxu0 0
      %2049 = vmatpush1.bf16.msra.mxu0 %v2025
      %2050 = vmatprep.subr.bf16.mxu0 0
      %2051 = vmatpush1.bf16.msra.mxu0 0
      %2052 = vmatprep.subr.bf16.mxu0 0
      %2053 = vmatpush1.bf16.msra.mxu0 0
      %2054 = vmatprep.subr.bf16.mxu0 0
      %2055 = vmatpush1.bf16.msra.mxu0 0
      %2056 = vmatprep.subr.bf16.mxu0 0
      %2057 = vmatpush1.bf16.msra.mxu0 0
      %2058 = vmatprep.subr.bf16.mxu0 0
      %2059 = vmatpush1.bf16.msra.mxu0 0
      %2060 = vmatprep.subr.bf16.mxu0 0
      %2061 = vmatpush1.bf16.msra.mxu0 0
      %2062 = vmatprep.subr.bf16.mxu0 0
      %2063 = vmatpush1.bf16.msra.mxu0 0
      %2064 = vmatprep.subr.bf16.mxu0 0
      %2065 = vmatpush1.bf16.msra.mxu0 0
      %2066 = vmatprep.mubr.bf16.mxu0 0
      %2067 = vmatmul.mubr.bf16.gmra.mrb[0].mxu0 %v679
      %v2068 = vpop.f32.mrb[0].mxu0
      %v2069 = vadd.f32 0.0, %v2068
      %v2070 = vpop.f32.mrb[0].mxu0
      %v2071 = vpop.f32.mrb[0].mxu0
      %v2072 = vadd.f32 0.0, %v2071
      %v2073 = vpop.f32.mrb[0].mxu0
      %2074 = vmatprep.mubr.bf16.mxu0 0
      %2075 = vmatmul.mubr.bf16.gmra.mrb[0].mxu0 %v680
      %v2076 = vpop.f32.mrb[0].mxu0
      %v2077 = vadd.f32 0.0, %v2076
      %v2078 = vpop.f32.mrb[0].mxu0
      %v2079 = vpop.f32.mrb[0].mxu0
      %v2080 = vadd.f32 0.0, %v2079
      %v2081 = vpop.f32.mrb[0].mxu0
      %2082 = vmatprep.mubr.bf16.mxu0 0
      %2083 = vmatmul.mubr.bf16.gmra.mrb[0].mxu0 %v681
      %v2084 = vpop.f32.mrb[0].mxu0
      %v2085 = vadd.f32 0.0, %v2084
      %v2086 = vpop.f32.mrb[0].mxu0
      %v2087 = vpop.f32.mrb[0].mxu0
      %v2088 = vadd.f32 0.0, %v2087
      %v2089 = vpop.f32.mrb[0].mxu0
      %2090 = vmatprep.mubr.bf16.mxu0 0
      %2091 = vmatmul.mubr.bf16.gmra.mrb[0].mxu0 %v682
      %v2092 = vpop.f32.mrb[0].mxu0
      %v2093 = vadd.f32 0.0, %v2092
      %v2094 = vpop.f32.mrb[0].mxu0
      %v2095 = vpop.f32.mrb[0].mxu0
      %v2096 = vadd.f32 0.0, %v2095
      %v2097 = vpop.f32.mrb[0].mxu0
      %2098 = vmatprep.mubr.bf16.mxu0 0
      %2099 = vmatmul.mubr.bf16.gmra.mrb[0].mxu0 %v683
      %v2100 = vpop.f32.mrb[0].mxu0
      %v2101 = vadd.f32 0.0, %v2100
      %v2102 = vpop.f32.mrb[0].mxu0
      %v2103 = vpop.f32.mrb[0].mxu0
      %v2104 = vadd.f32 0.0, %v2103
      %v2105 = vpop.f32.mrb[0].mxu0
      %2106 = vmatprep.mubr.bf16.mxu0 0
      %2107 = vmatmul.mubr.bf16.gmra.mrb[0].mxu0 %v684
      %v2108 = vpop.f32.mrb[0].mxu0
      %v2109 = vadd.f32 0.0, %v2108
      %v2110 = vpop.f32.mrb[0].mxu0
      %v2111 = vpop.f32.mrb[0].mxu0
      %v2112 = vadd.f32 0.0, %v2111
      %v2113 = vpop.f32.mrb[0].mxu0
      %2114 = vmatprep.mubr.bf16.mxu0 0
      %2115 = vmatmul.mubr.bf16.gmra.mrb[0].mxu0 %v685
      %v2116 = vpop.f32.mrb[0].mxu0
      %v2117 = vadd.f32 0.0, %v2116
      %v2118 = vpop.f32.mrb[0].mxu0
      %v2119 = vpop.f32.mrb[0].mxu0
      %v2120 = vadd.f32 0.0, %v2119
      %v2121 = vpop.f32.mrb[0].mxu0
      %2122 = vmatprep.mubr.bf16.mxu0 0
      %2123 = vmatmul.mubr.bf16.gmra.mrb[0].mxu0 %v686
      %v2124 = vpop.f32.mrb[0].mxu0
      %v2125 = vadd.f32 0.0, %v2124
      %v2126 = vpop.f32.mrb[0].mxu0
      %v2127 = vpop.f32.mrb[0].mxu0
      %v2128 = vadd.f32 0.0, %v2127
      %v2129 = vpop.f32.mrb[0].mxu0
      %2130 = vmatprep.mubr.bf16.mxu0 0
      %2131 = vmatmul.mubr.bf16.gmra.mrb[0].mxu0 %v687
      %v2132 = vpop.f32.mrb[0].mxu0
      %v2133 = vadd.f32 0.0, %v2132
      %v2134 = vpop.f32.mrb[0].mxu0
      %v2135 = vpop.f32.mrb[0].mxu0
      %v2136 = vadd.f32 0.0, %v2135
      %v2137 = vpop.f32.mrb[0].mxu0
      %2138 = vmatprep.mubr.bf16.mxu0 0
      %2139 = vmatmul.mubr.bf16.gmra.mrb[0].mxu0 %v688
      %v2140 = vpop.f32.mrb[0].mxu0
      %v2141 = vadd.f32 0.0, %v2140
      %v2142 = vpop.f32.mrb[0].mxu0
      %v2143 = vpop.f32.mrb[0].mxu0
      %v2144 = vadd.f32 0.0, %v2143
      %v2145 = vpop.f32.mrb[0].mxu0
      %2146 = vmatprep.mubr.bf16.mxu0 0
      %2147 = vmatmul.mubr.bf16.gmra.mrb[0].mxu0 %v689
      %v2148 = vpop.f32.mrb[0].mxu0
      %v2149 = vadd.f32 0.0, %v2148
      %v2150 = vpop.f32.mrb[0].mxu0
      %v2151 = vpop.f32.mrb[0].mxu0
      %v2152 = vadd.f32 0.0, %v2151
      %v2153 = vpop.f32.mrb[0].mxu0
      %2154 = vmatprep.mubr.bf16.mxu0 0
      %2155 = vmatmul.mubr.bf16.gmra.mrb[0].mxu0 %v690
      %v2156 = vpop.f32.mrb[0].mxu0
      %v2157 = vadd.f32 0.0, %v2156
      %v2158 = vpop.f32.mrb[0].mxu0
      %v2159 = vpop.f32.mrb[0].mxu0
      %v2160 = vadd.f32 0.0, %v2159
      %v2161 = vpop.f32.mrb[0].mxu0
      %2162 = vmatprep.mubr.bf16.mxu0 0
      %2163 = vmatmul.mubr.bf16.gmra.mrb[0].mxu0 %v691
      %v2164 = vpop.f32.mrb[0].mxu0
      %v2165 = vadd.f32 0.0, %v2164
      %v2166 = vpop.f32.mrb[0].mxu0
      %v2167 = vpop.f32.mrb[0].mxu0
      %v2168 = vadd.f32 0.0, %v2167
      %v2169 = vpop.f32.mrb[0].mxu0
      %2170 = vmatprep.mubr.bf16.mxu0 0
      %2171 = vmatmul.mubr.bf16.gmra.mrb[0].mxu0 %v692
      %v2172 = vpop.f32.mrb[0].mxu0
      %v2173 = vadd.f32 0.0, %v2172
      %v2174 = vpop.f32.mrb[0].mxu0
      %v2175 = vpop.f32.mrb[0].mxu0
      %v2176 = vadd.f32 0.0, %v2175
      %v2177 = vpop.f32.mrb[0].mxu0
      %2178 = vmatprep.mubr.bf16.mxu0 0
      %2179 = vmatmul.mubr.bf16.gmra.mrb[0].mxu0 %v693
      %v2180 = vpop.f32.mrb[0].mxu0
      %v2181 = vadd.f32 0.0, %v2180
      %v2182 = vpop.f32.mrb[0].mxu0
      %v2183 = vpop.f32.mrb[0].mxu0
      %v2184 = vadd.f32 0.0, %v2183
      %v2185 = vpop.f32.mrb[0].mxu0
      %2186 = vmatprep.mubr.bf16.mxu0 0
      %2187 = vmatmul.mubr.bf16.gmra.mrb[0].mxu0 %v1984
      %v2188 = vpop.f32.mrb[0].mxu0
      %v2189 = vadd.f32 0.0, %v2188
      %v2190 = vpop.f32.mrb[0].mxu0
      %v2191 = vpop.f32.mrb[0].mxu0
      %v2192 = vadd.f32 0.0, %v2191
      %v2193 = vpop.f32.mrb[0].mxu0
      %2194 = vdwg.mxu0
      %v2195 = vadd.f32 %v1909, %v2069
      %v2196 = vadd.f32 %v1910, %v2072
      %v2197 = vadd.f32 %v1911, %v2077
      %v2198 = vadd.f32 %v1912, %v2080
      %v2199 = vadd.f32 %v1913, %v2085
      %v2200 = vadd.f32 %v1914, %v2088
      %v2201 = vadd.f32 %v1915, %v2093
      %v2202 = vadd.f32 %v1916, %v2096
      %v2203 = vadd.f32 %v1917, %v2101
      %v2204 = vadd.f32 %v1918, %v2104
      %v2205 = vadd.f32 %v1919, %v2109
      %v2206 = vadd.f32 %v1920, %v2112
      %v2207 = vadd.f32 %v1921, %v2117
      %v2208 = vadd.f32 %v1922, %v2120
      %v2209 = vadd.f32 %v1923, %v2125
      %v2210 = vadd.f32 %v1924, %v2128
      %v2211 = vadd.f32 %v1925, %v2133
      %v2212 = vadd.f32 %v1926, %v2136
      %v2213 = vadd.f32 %v1927, %v2141
      %v2214 = vadd.f32 %v1928, %v2144
      %v2215 = vadd.f32 %v1929, %v2149
      %v2216 = vadd.f32 %v1930, %v2152
      %v2217 = vadd.f32 %v1931, %v2157
      %v2218 = vadd.f32 %v1932, %v2160
      %v2219 = vadd.f32 %v1933, %v2165
      %v2220 = vadd.f32 %v1934, %v2168
      %v2221 = vadd.f32 %v1935, %v2173
      %v2222 = vadd.f32 %v1936, %v2176
      %v2223 = vadd.f32 %v1937, %v2181
      %v2224 = vadd.f32 %v1938, %v2184
      %v2225 = vadd.f32 %v1939, %v2189
      %v2226 = vadd.f32 %v1940, %v2192
      %v2228 = vrot.slane %v220, 5
      %v2229 = vrot.slane %v2228, 4
      %v2230 = vrot.slane %v221, 5
      %v2231 = vsel %vm1242, %v2229, %v2230
      %v2232 = vrot.slane %v2230, 4
      %v2233 = vrot.slane %v222, 5
      %v2234 = vsel %vm1242, %v2232, %v2233
      %s2235 = scalar_lea.vmem %s1, 320
      %v2236 = vld [vmem:[%s2235] sm:$0xf]
      %v2237 = vld [vmem:[%s2235 + $0x4] sm:$0xf]
      %v2238 = vld [vmem:[%s2235 + $0x8] sm:$0xf]
      %v2239 = vld [vmem:[%s2235 + $0xc] sm:$0xf]
      %v2240 = vld [vmem:[%s2235 + $0x10] sm:$0xf]
      %v2241 = vld [vmem:[%s2235 + $0x14] sm:$0xf]
      %v2242 = vld [vmem:[%s2235 + $0x18] sm:$0xf]
      %v2243 = vld [vmem:[%s2235 + $0x1c] sm:$0xf]
      %v2244 = vld [vmem:[%s2235 + $0x20] sm:$0xf]
      %v2245 = vld [vmem:[%s2235 + $0x24] sm:$0xf]
      %v2246 = vld [vmem:[%s2235 + $0x28] sm:$0xf]
      %v2247 = vld [vmem:[%s2235 + $0x2c] sm:$0xf]
      %v2248 = vld [vmem:[%s2235 + $0x30] sm:$0xf]
      %v2249 = vld [vmem:[%s2235 + $0x34] sm:$0xf]
      %v2250 = vld [vmem:[%s2235 + $0x38] sm:$0xf]
      %v2251 = vld [vmem:[%s2235 + $0x3c] sm:$0xf]
      %v2252 = vunpack.c.l.b16 %v2231
      %v2253 = vunpack.c.l.b16 %v2234
      %v2254 = vpack.c.b16 %v2253, %v2252
      %v2272 = vunpack.c.l.b16 %v2236
      %v2273 = vunpack.c.l.b16 %v2237
      %v2274 = vunpack.c.l.b16 %v2238
      %v2275 = vunpack.c.l.b16 %v2239
      %v2276 = vunpack.c.l.b16 %v2240
      %v2277 = vunpack.c.l.b16 %v2241
      %v2278 = vunpack.c.l.b16 %v2242
      %v2279 = vunpack.c.l.b16 %v2243
      %v2280 = vunpack.c.l.b16 %v2244
      %v2281 = vunpack.c.l.b16 %v2245
      %v2282 = vunpack.c.l.b16 %v2246
      %v2283 = vunpack.c.l.b16 %v2247
      %v2284 = vunpack.c.l.b16 %v2248
      %v2285 = vunpack.c.l.b16 %v2249
      %v2286 = vunpack.c.l.b16 %v2250
      %v2287 = vunpack.c.l.b16 %v2251
      %v2288 = vpack.c.b16 %v2273, %v2272
      %v2289 = vpack.c.b16 %v2275, %v2274
      %v2290 = vpack.c.b16 %v2277, %v2276
      %v2291 = vpack.c.b16 %v2279, %v2278
      %v2292 = vpack.c.b16 %v2281, %v2280
      %v2293 = vpack.c.b16 %v2283, %v2282
      %v2294 = vpack.c.b16 %v2285, %v2284
      %v2295 = vpack.c.b16 %v2287, %v2286
      %2304 = vmatprep.subr.bf16.mxu0 0
      %2305 = vmatpush1.bf16.msra.mxu0 %v2288
      %2306 = vmatprep.subr.bf16.mxu0 0
      %2307 = vmatpush1.bf16.msra.mxu0 %v2289
      %2308 = vmatprep.subr.bf16.mxu0 0
      %2309 = vmatpush1.bf16.msra.mxu0 %v2290
      %2310 = vmatprep.subr.bf16.mxu0 0
      %2311 = vmatpush1.bf16.msra.mxu0 %v2291
      %2312 = vmatprep.subr.bf16.mxu0 0
      %2313 = vmatpush1.bf16.msra.mxu0 %v2292
      %2314 = vmatprep.subr.bf16.mxu0 0
      %2315 = vmatpush1.bf16.msra.mxu0 %v2293
      %2316 = vmatprep.subr.bf16.mxu0 0
      %2317 = vmatpush1.bf16.msra.mxu0 %v2294
      %2318 = vmatprep.subr.bf16.mxu0 0
      %2319 = vmatpush1.bf16.msra.mxu0 %v2295
      %2320 = vmatprep.subr.bf16.mxu0 0
      %2321 = vmatpush1.bf16.msra.mxu0 0
      %2322 = vmatprep.subr.bf16.mxu0 0
      %2323 = vmatpush1.bf16.msra.mxu0 0
      %2324 = vmatprep.subr.bf16.mxu0 0
      %2325 = vmatpush1.bf16.msra.mxu0 0
      %2326 = vmatprep.subr.bf16.mxu0 0
      %2327 = vmatpush1.bf16.msra.mxu0 0
      %2328 = vmatprep.subr.bf16.mxu0 0
      %2329 = vmatpush1.bf16.msra.mxu0 0
      %2330 = vmatprep.subr.bf16.mxu0 0
      %2331 = vmatpush1.bf16.msra.mxu0 0
      %2332 = vmatprep.subr.bf16.mxu0 0
      %2333 = vmatpush1.bf16.msra.mxu0 0
      %2334 = vmatprep.subr.bf16.mxu0 0
      %2335 = vmatpush1.bf16.msra.mxu0 0
      %2336 = vmatprep.mubr.bf16.mxu0 0
      %2337 = vmatmul.mubr.bf16.gmra.mrb[0].mxu0 %v1405
      %v2338 = vpop.f32.mrb[0].mxu0
      %v2339 = vadd.f32 0.0, %v2338
      %v2340 = vpop.f32.mrb[0].mxu0
      %v2341 = vpop.f32.mrb[0].mxu0
      %v2342 = vadd.f32 0.0, %v2341
      %v2343 = vpop.f32.mrb[0].mxu0
      %2344 = vmatprep.mubr.bf16.mxu0 0
      %2345 = vmatmul.mubr.bf16.gmra.mrb[0].mxu0 %v1406
      %v2346 = vpop.f32.mrb[0].mxu0
      %v2347 = vadd.f32 0.0, %v2346
      %v2348 = vpop.f32.mrb[0].mxu0
      %v2349 = vpop.f32.mrb[0].mxu0
      %v2350 = vadd.f32 0.0, %v2349
      %v2351 = vpop.f32.mrb[0].mxu0
      %2352 = vmatprep.mubr.bf16.mxu0 0
      %2353 = vmatmul.mubr.bf16.gmra.mrb[0].mxu0 %v1407
      %v2354 = vpop.f32.mrb[0].mxu0
      %v2355 = vadd.f32 0.0, %v2354
      %v2356 = vpop.f32.mrb[0].mxu0
      %v2357 = vpop.f32.mrb[0].mxu0
      %v2358 = vadd.f32 0.0, %v2357
      %v2359 = vpop.f32.mrb[0].mxu0
      %2360 = vmatprep.mubr.bf16.mxu0 0
      %2361 = vmatmul.mubr.bf16.gmra.mrb[0].mxu0 %v1408
      %v2362 = vpop.f32.mrb[0].mxu0
      %v2363 = vadd.f32 0.0, %v2362
      %v2364 = vpop.f32.mrb[0].mxu0
      %v2365 = vpop.f32.mrb[0].mxu0
      %v2366 = vadd.f32 0.0, %v2365
      %v2367 = vpop.f32.mrb[0].mxu0
      %2368 = vmatprep.mubr.bf16.mxu0 0
      %2369 = vmatmul.mubr.bf16.gmra.mrb[0].mxu0 %v1409
      %v2370 = vpop.f32.mrb[0].mxu0
      %v2371 = vadd.f32 0.0, %v2370
      %v2372 = vpop.f32.mrb[0].mxu0
      %v2373 = vpop.f32.mrb[0].mxu0
      %v2374 = vadd.f32 0.0, %v2373
      %v2375 = vpop.f32.mrb[0].mxu0
      %2376 = vmatprep.mubr.bf16.mxu0 0
      %2377 = vmatmul.mubr.bf16.gmra.mrb[0].mxu0 %v1410
      %v2378 = vpop.f32.mrb[0].mxu0
      %v2379 = vadd.f32 0.0, %v2378
      %v2380 = vpop.f32.mrb[0].mxu0
      %v2381 = vpop.f32.mrb[0].mxu0
      %v2382 = vadd.f32 0.0, %v2381
      %v2383 = vpop.f32.mrb[0].mxu0
      %2384 = vmatprep.mubr.bf16.mxu0 0
      %2385 = vmatmul.mubr.bf16.gmra.mrb[0].mxu0 %v1411
      %v2386 = vpop.f32.mrb[0].mxu0
      %v2387 = vadd.f32 0.0, %v2386
      %v2388 = vpop.f32.mrb[0].mxu0
      %v2389 = vpop.f32.mrb[0].mxu0
      %v2390 = vadd.f32 0.0, %v2389
      %v2391 = vpop.f32.mrb[0].mxu0
      %2392 = vmatprep.mubr.bf16.mxu0 0
      %2393 = vmatmul.mubr.bf16.gmra.mrb[0].mxu0 %v1412
      %v2394 = vpop.f32.mrb[0].mxu0
      %v2395 = vadd.f32 0.0, %v2394
      %v2396 = vpop.f32.mrb[0].mxu0
      %v2397 = vpop.f32.mrb[0].mxu0
      %v2398 = vadd.f32 0.0, %v2397
      %v2399 = vpop.f32.mrb[0].mxu0
      %2400 = vmatprep.mubr.bf16.mxu0 0
      %2401 = vmatmul.mubr.bf16.gmra.mrb[0].mxu0 %v1413
      %v2402 = vpop.f32.mrb[0].mxu0
      %v2403 = vadd.f32 0.0, %v2402
      %v2404 = vpop.f32.mrb[0].mxu0
      %v2405 = vpop.f32.mrb[0].mxu0
      %v2406 = vadd.f32 0.0, %v2405
      %v2407 = vpop.f32.mrb[0].mxu0
      %2408 = vmatprep.mubr.bf16.mxu0 0
      %2409 = vmatmul.mubr.bf16.gmra.mrb[0].mxu0 %v1414
      %v2410 = vpop.f32.mrb[0].mxu0
      %v2411 = vadd.f32 0.0, %v2410
      %v2412 = vpop.f32.mrb[0].mxu0
      %v2413 = vpop.f32.mrb[0].mxu0
      %v2414 = vadd.f32 0.0, %v2413
      %v2415 = vpop.f32.mrb[0].mxu0
      %2416 = vmatprep.mubr.bf16.mxu0 0
      %2417 = vmatmul.mubr.bf16.gmra.mrb[0].mxu0 %v1415
      %v2418 = vpop.f32.mrb[0].mxu0
      %v2419 = vadd.f32 0.0, %v2418
      %v2420 = vpop.f32.mrb[0].mxu0
      %v2421 = vpop.f32.mrb[0].mxu0
      %v2422 = vadd.f32 0.0, %v2421
      %v2423 = vpop.f32.mrb[0].mxu0
      %2424 = vmatprep.mubr.bf16.mxu0 0
      %2425 = vmatmul.mubr.bf16.gmra.mrb[0].mxu0 %v1416
      %v2426 = vpop.f32.mrb[0].mxu0
      %v2427 = vadd.f32 0.0, %v2426
      %v2428 = vpop.f32.mrb[0].mxu0
      %v2429 = vpop.f32.mrb[0].mxu0
      %v2430 = vadd.f32 0.0, %v2429
      %v2431 = vpop.f32.mrb[0].mxu0
      %2432 = vmatprep.mubr.bf16.mxu0 0
      %2433 = vmatmul.mubr.bf16.gmra.mrb[0].mxu0 %v1417
      %v2434 = vpop.f32.mrb[0].mxu0
      %v2435 = vadd.f32 0.0, %v2434
      %v2436 = vpop.f32.mrb[0].mxu0
      %v2437 = vpop.f32.mrb[0].mxu0
      %v2438 = vadd.f32 0.0, %v2437
      %v2439 = vpop.f32.mrb[0].mxu0
      %2440 = vmatprep.mubr.bf16.mxu0 0
      %2441 = vmatmul.mubr.bf16.gmra.mrb[0].mxu0 %v1418
      %v2442 = vpop.f32.mrb[0].mxu0
      %v2443 = vadd.f32 0.0, %v2442
      %v2444 = vpop.f32.mrb[0].mxu0
      %v2445 = vpop.f32.mrb[0].mxu0
      %v2446 = vadd.f32 0.0, %v2445
      %v2447 = vpop.f32.mrb[0].mxu0
      %2448 = vmatprep.mubr.bf16.mxu0 0
      %2449 = vmatmul.mubr.bf16.gmra.mrb[0].mxu0 %v1419
      %v2450 = vpop.f32.mrb[0].mxu0
      %v2451 = vadd.f32 0.0, %v2450
      %v2452 = vpop.f32.mrb[0].mxu0
      %v2453 = vpop.f32.mrb[0].mxu0
      %v2454 = vadd.f32 0.0, %v2453
      %v2455 = vpop.f32.mrb[0].mxu0
      %2456 = vmatprep.mubr.bf16.mxu0 0
      %2457 = vmatmul.mubr.bf16.gmra.mrb[0].mxu0 %v2254
      %v2458 = vpop.f32.mrb[0].mxu0
      %v2459 = vadd.f32 0.0, %v2458
      %v2460 = vpop.f32.mrb[0].mxu0
      %v2461 = vpop.f32.mrb[0].mxu0
      %v2462 = vadd.f32 0.0, %v2461
      %v2463 = vpop.f32.mrb[0].mxu0
      %2464 = vdwg.mxu0
      %v2465 = vadd.f32 %v2195, %v2339
      %v2466 = vadd.f32 %v2196, %v2342
      %v2467 = vadd.f32 %v2197, %v2347
      %v2468 = vadd.f32 %v2198, %v2350
      %v2469 = vadd.f32 %v2199, %v2355
      %v2470 = vadd.f32 %v2200, %v2358
      %v2471 = vadd.f32 %v2201, %v2363
      %v2472 = vadd.f32 %v2202, %v2366
      %v2473 = vadd.f32 %v2203, %v2371
      %v2474 = vadd.f32 %v2204, %v2374
      %v2475 = vadd.f32 %v2205, %v2379
      %v2476 = vadd.f32 %v2206, %v2382
      %v2477 = vadd.f32 %v2207, %v2387
      %v2478 = vadd.f32 %v2208, %v2390
      %v2479 = vadd.f32 %v2209, %v2395
      %v2480 = vadd.f32 %v2210, %v2398
      %v2481 = vadd.f32 %v2211, %v2403
      %v2482 = vadd.f32 %v2212, %v2406
      %v2483 = vadd.f32 %v2213, %v2411
      %v2484 = vadd.f32 %v2214, %v2414
      %v2485 = vadd.f32 %v2215, %v2419
      %v2486 = vadd.f32 %v2216, %v2422
      %v2487 = vadd.f32 %v2217, %v2427
      %v2488 = vadd.f32 %v2218, %v2430
      %v2489 = vadd.f32 %v2219, %v2435
      %v2490 = vadd.f32 %v2220, %v2438
      %v2491 = vadd.f32 %v2221, %v2443
      %v2492 = vadd.f32 %v2222, %v2446
      %v2493 = vadd.f32 %v2223, %v2451
      %v2494 = vadd.f32 %v2224, %v2454
      %v2495 = vadd.f32 %v2225, %v2459
      %v2496 = vadd.f32 %v2226, %v2462
      %s2497 = scalar_lea.vmem %s1, 384
      %v2498 = vld [vmem:[%s2497] sm:$0xf]
      %v2499 = vld [vmem:[%s2497 + $0x4] sm:$0xf]
      %v2500 = vld [vmem:[%s2497 + $0x8] sm:$0xf]
      %v2501 = vld [vmem:[%s2497 + $0xc] sm:$0xf]
      %v2502 = vld [vmem:[%s2497 + $0x10] sm:$0xf]
      %v2503 = vld [vmem:[%s2497 + $0x14] sm:$0xf]
      %v2504 = vld [vmem:[%s2497 + $0x18] sm:$0xf]
      %v2505 = vld [vmem:[%s2497 + $0x1c] sm:$0xf]
      %v2506 = vld [vmem:[%s2497 + $0x20] sm:$0xf]
      %v2507 = vld [vmem:[%s2497 + $0x24] sm:$0xf]
      %v2508 = vld [vmem:[%s2497 + $0x28] sm:$0xf]
      %v2509 = vld [vmem:[%s2497 + $0x2c] sm:$0xf]
      %v2510 = vld [vmem:[%s2497 + $0x30] sm:$0xf]
      %v2511 = vld [vmem:[%s2497 + $0x34] sm:$0xf]
      %v2512 = vld [vmem:[%s2497 + $0x38] sm:$0xf]
      %v2513 = vld [vmem:[%s2497 + $0x3c] sm:$0xf]
      %v2516 = vunpack.c.l.b16 %v223
      %v2517 = vunpack.c.l.b16 %v224
      %v2518 = vpack.c.b16 %v2517, %v2516
      %v2536 = vunpack.c.l.b16 %v2498
      %v2537 = vunpack.c.l.b16 %v2499
      %v2538 = vunpack.c.l.b16 %v2500
      %v2539 = vunpack.c.l.b16 %v2501
      %v2540 = vunpack.c.l.b16 %v2502
      %v2541 = vunpack.c.l.b16 %v2503
      %v2542 = vunpack.c.l.b16 %v2504
      %v2543 = vunpack.c.l.b16 %v2505
      %v2544 = vunpack.c.l.b16 %v2506
      %v2545 = vunpack.c.l.b16 %v2507
      %v2546 = vunpack.c.l.b16 %v2508
      %v2547 = vunpack.c.l.b16 %v2509
      %v2548 = vunpack.c.l.b16 %v2510
      %v2549 = vunpack.c.l.b16 %v2511
      %v2550 = vunpack.c.l.b16 %v2512
      %v2551 = vunpack.c.l.b16 %v2513
      %v2552 = vpack.c.b16 %v2537, %v2536
      %v2553 = vpack.c.b16 %v2539, %v2538
      %v2554 = vpack.c.b16 %v2541, %v2540
      %v2555 = vpack.c.b16 %v2543, %v2542
      %v2556 = vpack.c.b16 %v2545, %v2544
      %v2557 = vpack.c.b16 %v2547, %v2546
      %v2558 = vpack.c.b16 %v2549, %v2548
      %v2559 = vpack.c.b16 %v2551, %v2550
      %2568 = vmatprep.subr.bf16.mxu0 0
      %2569 = vmatpush1.bf16.msra.mxu0 %v2552
      %2570 = vmatprep.subr.bf16.mxu0 0
      %2571 = vmatpush1.bf16.msra.mxu0 %v2553
      %2572 = vmatprep.subr.bf16.mxu0 0
      %2573 = vmatpush1.bf16.msra.mxu0 %v2554
      %2574 = vmatprep.subr.bf16.mxu0 0
      %2575 = vmatpush1.bf16.msra.mxu0 %v2555
      %2576 = vmatprep.subr.bf16.mxu0 0
      %2577 = vmatpush1.bf16.msra.mxu0 %v2556
      %2578 = vmatprep.subr.bf16.mxu0 0
      %2579 = vmatpush1.bf16.msra.mxu0 %v2557
      %2580 = vmatprep.subr.bf16.mxu0 0
      %2581 = vmatpush1.bf16.msra.mxu0 %v2558
      %2582 = vmatprep.subr.bf16.mxu0 0
      %2583 = vmatpush1.bf16.msra.mxu0 %v2559
      %2584 = vmatprep.subr.bf16.mxu0 0
      %2585 = vmatpush1.bf16.msra.mxu0 0
      %2586 = vmatprep.subr.bf16.mxu0 0
      %2587 = vmatpush1.bf16.msra.mxu0 0
      %2588 = vmatprep.subr.bf16.mxu0 0
      %2589 = vmatpush1.bf16.msra.mxu0 0
      %2590 = vmatprep.subr.bf16.mxu0 0
      %2591 = vmatpush1.bf16.msra.mxu0 0
      %2592 = vmatprep.subr.bf16.mxu0 0
      %2593 = vmatpush1.bf16.msra.mxu0 0
      %2594 = vmatprep.subr.bf16.mxu0 0
      %2595 = vmatpush1.bf16.msra.mxu0 0
      %2596 = vmatprep.subr.bf16.mxu0 0
      %2597 = vmatpush1.bf16.msra.mxu0 0
      %2598 = vmatprep.subr.bf16.mxu0 0
      %2599 = vmatpush1.bf16.msra.mxu0 0
      %2600 = vmatprep.mubr.bf16.mxu0 0
      %2601 = vmatmul.mubr.bf16.gmra.mrb[0].mxu0 %v985
      %v2602 = vpop.f32.mrb[0].mxu0
      %v2603 = vadd.f32 0.0, %v2602
      %v2604 = vpop.f32.mrb[0].mxu0
      %v2605 = vpop.f32.mrb[0].mxu0
      %v2606 = vadd.f32 0.0, %v2605
      %v2607 = vpop.f32.mrb[0].mxu0
      %2608 = vmatprep.mubr.bf16.mxu0 0
      %2609 = vmatmul.mubr.bf16.gmra.mrb[0].mxu0 %v986
      %v2610 = vpop.f32.mrb[0].mxu0
      %v2611 = vadd.f32 0.0, %v2610
      %v2612 = vpop.f32.mrb[0].mxu0
      %v2613 = vpop.f32.mrb[0].mxu0
      %v2614 = vadd.f32 0.0, %v2613
      %v2615 = vpop.f32.mrb[0].mxu0
      %2616 = vmatprep.mubr.bf16.mxu0 0
      %2617 = vmatmul.mubr.bf16.gmra.mrb[0].mxu0 %v987
      %v2618 = vpop.f32.mrb[0].mxu0
      %v2619 = vadd.f32 0.0, %v2618
      %v2620 = vpop.f32.mrb[0].mxu0
      %v2621 = vpop.f32.mrb[0].mxu0
      %v2622 = vadd.f32 0.0, %v2621
      %v2623 = vpop.f32.mrb[0].mxu0
      %2624 = vmatprep.mubr.bf16.mxu0 0
      %2625 = vmatmul.mubr.bf16.gmra.mrb[0].mxu0 %v988
      %v2626 = vpop.f32.mrb[0].mxu0
      %v2627 = vadd.f32 0.0, %v2626
      %v2628 = vpop.f32.mrb[0].mxu0
      %v2629 = vpop.f32.mrb[0].mxu0
      %v2630 = vadd.f32 0.0, %v2629
      %v2631 = vpop.f32.mrb[0].mxu0
      %2632 = vmatprep.mubr.bf16.mxu0 0
      %2633 = vmatmul.mubr.bf16.gmra.mrb[0].mxu0 %v989
      %v2634 = vpop.f32.mrb[0].mxu0
      %v2635 = vadd.f32 0.0, %v2634
      %v2636 = vpop.f32.mrb[0].mxu0
      %v2637 = vpop.f32.mrb[0].mxu0
      %v2638 = vadd.f32 0.0, %v2637
      %v2639 = vpop.f32.mrb[0].mxu0
      %2640 = vmatprep.mubr.bf16.mxu0 0
      %2641 = vmatmul.mubr.bf16.gmra.mrb[0].mxu0 %v990
      %v2642 = vpop.f32.mrb[0].mxu0
      %v2643 = vadd.f32 0.0, %v2642
      %v2644 = vpop.f32.mrb[0].mxu0
      %v2645 = vpop.f32.mrb[0].mxu0
      %v2646 = vadd.f32 0.0, %v2645
      %v2647 = vpop.f32.mrb[0].mxu0
      %2648 = vmatprep.mubr.bf16.mxu0 0
      %2649 = vmatmul.mubr.bf16.gmra.mrb[0].mxu0 %v991
      %v2650 = vpop.f32.mrb[0].mxu0
      %v2651 = vadd.f32 0.0, %v2650
      %v2652 = vpop.f32.mrb[0].mxu0
      %v2653 = vpop.f32.mrb[0].mxu0
      %v2654 = vadd.f32 0.0, %v2653
      %v2655 = vpop.f32.mrb[0].mxu0
      %2656 = vmatprep.mubr.bf16.mxu0 0
      %2657 = vmatmul.mubr.bf16.gmra.mrb[0].mxu0 %v992
      %v2658 = vpop.f32.mrb[0].mxu0
      %v2659 = vadd.f32 0.0, %v2658
      %v2660 = vpop.f32.mrb[0].mxu0
      %v2661 = vpop.f32.mrb[0].mxu0
      %v2662 = vadd.f32 0.0, %v2661
      %v2663 = vpop.f32.mrb[0].mxu0
      %2664 = vmatprep.mubr.bf16.mxu0 0
      %2665 = vmatmul.mubr.bf16.gmra.mrb[0].mxu0 %v993
      %v2666 = vpop.f32.mrb[0].mxu0
      %v2667 = vadd.f32 0.0, %v2666
      %v2668 = vpop.f32.mrb[0].mxu0
      %v2669 = vpop.f32.mrb[0].mxu0
      %v2670 = vadd.f32 0.0, %v2669
      %v2671 = vpop.f32.mrb[0].mxu0
      %2672 = vmatprep.mubr.bf16.mxu0 0
      %2673 = vmatmul.mubr.bf16.gmra.mrb[0].mxu0 %v994
      %v2674 = vpop.f32.mrb[0].mxu0
      %v2675 = vadd.f32 0.0, %v2674
      %v2676 = vpop.f32.mrb[0].mxu0
      %v2677 = vpop.f32.mrb[0].mxu0
      %v2678 = vadd.f32 0.0, %v2677
      %v2679 = vpop.f32.mrb[0].mxu0
      %2680 = vmatprep.mubr.bf16.mxu0 0
      %2681 = vmatmul.mubr.bf16.gmra.mrb[0].mxu0 %v995
      %v2682 = vpop.f32.mrb[0].mxu0
      %v2683 = vadd.f32 0.0, %v2682
      %v2684 = vpop.f32.mrb[0].mxu0
      %v2685 = vpop.f32.mrb[0].mxu0
      %v2686 = vadd.f32 0.0, %v2685
      %v2687 = vpop.f32.mrb[0].mxu0
      %2688 = vmatprep.mubr.bf16.mxu0 0
      %2689 = vmatmul.mubr.bf16.gmra.mrb[0].mxu0 %v996
      %v2690 = vpop.f32.mrb[0].mxu0
      %v2691 = vadd.f32 0.0, %v2690
      %v2692 = vpop.f32.mrb[0].mxu0
      %v2693 = vpop.f32.mrb[0].mxu0
      %v2694 = vadd.f32 0.0, %v2693
      %v2695 = vpop.f32.mrb[0].mxu0
      %2696 = vmatprep.mubr.bf16.mxu0 0
      %2697 = vmatmul.mubr.bf16.gmra.mrb[0].mxu0 %v997
      %v2698 = vpop.f32.mrb[0].mxu0
      %v2699 = vadd.f32 0.0, %v2698
      %v2700 = vpop.f32.mrb[0].mxu0
      %v2701 = vpop.f32.mrb[0].mxu0
      %v2702 = vadd.f32 0.0, %v2701
      %v2703 = vpop.f32.mrb[0].mxu0
      %2704 = vmatprep.mubr.bf16.mxu0 0
      %2705 = vmatmul.mubr.bf16.gmra.mrb[0].mxu0 %v998
      %v2706 = vpop.f32.mrb[0].mxu0
      %v2707 = vadd.f32 0.0, %v2706
      %v2708 = vpop.f32.mrb[0].mxu0
      %v2709 = vpop.f32.mrb[0].mxu0
      %v2710 = vadd.f32 0.0, %v2709
      %v2711 = vpop.f32.mrb[0].mxu0
      %2712 = vmatprep.mubr.bf16.mxu0 0
      %2713 = vmatmul.mubr.bf16.gmra.mrb[0].mxu0 %v1698
      %v2714 = vpop.f32.mrb[0].mxu0
      %v2715 = vadd.f32 0.0, %v2714
      %v2716 = vpop.f32.mrb[0].mxu0
      %v2717 = vpop.f32.mrb[0].mxu0
      %v2718 = vadd.f32 0.0, %v2717
      %v2719 = vpop.f32.mrb[0].mxu0
      %2720 = vmatprep.mubr.bf16.mxu0 0
      %2721 = vmatmul.mubr.bf16.gmra.mrb[0].mxu0 %v2518
      %v2722 = vpop.f32.mrb[0].mxu0
      %v2723 = vadd.f32 0.0, %v2722
      %v2724 = vpop.f32.mrb[0].mxu0
      %v2725 = vpop.f32.mrb[0].mxu0
      %v2726 = vadd.f32 0.0, %v2725
      %v2727 = vpop.f32.mrb[0].mxu0
      %2728 = vdwg.mxu0
      %v2729 = vadd.f32 %v2465, %v2603
      %v2730 = vadd.f32 %v2466, %v2606
      %v2731 = vadd.f32 %v2467, %v2611
      %v2732 = vadd.f32 %v2468, %v2614
      %v2733 = vadd.f32 %v2469, %v2619
      %v2734 = vadd.f32 %v2470, %v2622
      %v2735 = vadd.f32 %v2471, %v2627
      %v2736 = vadd.f32 %v2472, %v2630
      %v2737 = vadd.f32 %v2473, %v2635
      %v2738 = vadd.f32 %v2474, %v2638
      %v2739 = vadd.f32 %v2475, %v2643
      %v2740 = vadd.f32 %v2476, %v2646
      %v2741 = vadd.f32 %v2477, %v2651
      %v2742 = vadd.f32 %v2478, %v2654
      %v2743 = vadd.f32 %v2479, %v2659
      %v2744 = vadd.f32 %v2480, %v2662
      %v2745 = vadd.f32 %v2481, %v2667
      %v2746 = vadd.f32 %v2482, %v2670
      %v2747 = vadd.f32 %v2483, %v2675
      %v2748 = vadd.f32 %v2484, %v2678
      %v2749 = vadd.f32 %v2485, %v2683
      %v2750 = vadd.f32 %v2486, %v2686
      %v2751 = vadd.f32 %v2487, %v2691
      %v2752 = vadd.f32 %v2488, %v2694
      %v2753 = vadd.f32 %v2489, %v2699
      %v2754 = vadd.f32 %v2490, %v2702
      %v2755 = vadd.f32 %v2491, %v2707
      %v2756 = vadd.f32 %v2492, %v2710
      %v2757 = vadd.f32 %v2493, %v2715
      %v2758 = vadd.f32 %v2494, %v2718
      %v2759 = vadd.f32 %v2495, %v2723
      %v2760 = vadd.f32 %v2496, %v2726
      %v2762 = vshrl.u32 %v223, 16
      %v2764 = vrot.slane %v2762, 4
      %v2765 = vshll.u32 %v223, 16
      %v2767 = vrot.slane %v2765, 5
      %v2768 = vor.u32 %v2764, %v2767
      %v2769 = vrot.slane %v2768, 4
      %v2771 = vshll.u32 %v224, 16
      %v2773 = vrot.slane %v2771, 5
      %v2774 = vsel %vm244, %v2769, %v2773
      %v2775 = vshrl.u32 %v224, 16
      %v2777 = vrot.slane %v2775, 4
      %v2778 = vor.u32 %v2777, %v2773
      %v2779 = vrot.slane %v2778, 4
      %v2781 = vshll.u32 %v225, 16
      %v2783 = vrot.slane %v2781, 5
      %v2784 = vsel %vm244, %v2779, %v2783
      %s2785 = scalar_lea.vmem %s1, 448
      %v2786 = vld [vmem:[%s2785] sm:$0xf]
      %v2787 = vld [vmem:[%s2785 + $0x4] sm:$0xf]
      %v2788 = vld [vmem:[%s2785 + $0x8] sm:$0xf]
      %v2789 = vld [vmem:[%s2785 + $0xc] sm:$0xf]
      %v2790 = vld [vmem:[%s2785 + $0x10] sm:$0xf]
      %v2791 = vld [vmem:[%s2785 + $0x14] sm:$0xf]
      %v2792 = vld [vmem:[%s2785 + $0x18] sm:$0xf]
      %v2793 = vld [vmem:[%s2785 + $0x1c] sm:$0xf]
      %v2794 = vld [vmem:[%s2785 + $0x20] sm:$0xf]
      %v2795 = vld [vmem:[%s2785 + $0x24] sm:$0xf]
      %v2796 = vld [vmem:[%s2785 + $0x28] sm:$0xf]
      %v2797 = vld [vmem:[%s2785 + $0x2c] sm:$0xf]
      %v2798 = vld [vmem:[%s2785 + $0x30] sm:$0xf]
      %v2799 = vld [vmem:[%s2785 + $0x34] sm:$0xf]
      %v2800 = vld [vmem:[%s2785 + $0x38] sm:$0xf]
      %v2801 = vld [vmem:[%s2785 + $0x3c] sm:$0xf]
      %v2802 = vunpack.c.l.b16 %v2774
      %v2803 = vunpack.c.l.b16 %v2784
      %v2804 = vpack.c.b16 %v2803, %v2802
      %v2822 = vunpack.c.l.b16 %v2786
      %v2823 = vunpack.c.l.b16 %v2787
      %v2824 = vunpack.c.l.b16 %v2788
      %v2825 = vunpack.c.l.b16 %v2789
      %v2826 = vunpack.c.l.b16 %v2790
      %v2827 = vunpack.c.l.b16 %v2791
      %v2828 = vunpack.c.l.b16 %v2792
      %v2829 = vunpack.c.l.b16 %v2793
      %v2830 = vunpack.c.l.b16 %v2794
      %v2831 = vunpack.c.l.b16 %v2795
      %v2832 = vunpack.c.l.b16 %v2796
      %v2833 = vunpack.c.l.b16 %v2797
      %v2834 = vunpack.c.l.b16 %v2798
      %v2835 = vunpack.c.l.b16 %v2799
      %v2836 = vunpack.c.l.b16 %v2800
      %v2837 = vunpack.c.l.b16 %v2801
      %v2838 = vpack.c.b16 %v2823, %v2822
      %v2839 = vpack.c.b16 %v2825, %v2824
      %v2840 = vpack.c.b16 %v2827, %v2826
      %v2841 = vpack.c.b16 %v2829, %v2828
      %v2842 = vpack.c.b16 %v2831, %v2830
      %v2843 = vpack.c.b16 %v2833, %v2832
      %v2844 = vpack.c.b16 %v2835, %v2834
      %v2845 = vpack.c.b16 %v2837, %v2836
      %2854 = vmatprep.subr.bf16.mxu0 0
      %2855 = vmatpush1.bf16.msra.mxu0 %v2838
      %2856 = vmatprep.subr.bf16.mxu0 0
      %2857 = vmatpush1.bf16.msra.mxu0 %v2839
      %2858 = vmatprep.subr.bf16.mxu0 0
      %2859 = vmatpush1.bf16.msra.mxu0 %v2840
      %2860 = vmatprep.subr.bf16.mxu0 0
      %2861 = vmatpush1.bf16.msra.mxu0 %v2841
      %2862 = vmatprep.subr.bf16.mxu0 0
      %2863 = vmatpush1.bf16.msra.mxu0 %v2842
      %2864 = vmatprep.subr.bf16.mxu0 0
      %2865 = vmatpush1.bf16.msra.mxu0 %v2843
      %2866 = vmatprep.subr.bf16.mxu0 0
      %2867 = vmatpush1.bf16.msra.mxu0 %v2844
      %2868 = vmatprep.subr.bf16.mxu0 0
      %2869 = vmatpush1.bf16.msra.mxu0 %v2845
      %2870 = vmatprep.subr.bf16.mxu0 0
      %2871 = vmatpush1.bf16.msra.mxu0 0
      %2872 = vmatprep.subr.bf16.mxu0 0
      %2873 = vmatpush1.bf16.msra.mxu0 0
      %2874 = vmatprep.subr.bf16.mxu0 0
      %2875 = vmatpush1.bf16.msra.mxu0 0
      %2876 = vmatprep.subr.bf16.mxu0 0
      %2877 = vmatpush1.bf16.msra.mxu0 0
      %2878 = vmatprep.subr.bf16.mxu0 0
      %2879 = vmatpush1.bf16.msra.mxu0 0
      %2880 = vmatprep.subr.bf16.mxu0 0
      %2881 = vmatpush1.bf16.msra.mxu0 0
      %2882 = vmatprep.subr.bf16.mxu0 0
      %2883 = vmatpush1.bf16.msra.mxu0 0
      %2884 = vmatprep.subr.bf16.mxu0 0
      %2885 = vmatpush1.bf16.msra.mxu0 0
      %2886 = vmatprep.mubr.bf16.mxu0 0
      %2887 = vmatmul.mubr.bf16.gmra.mrb[0].mxu0 %v680
      %v2888 = vpop.f32.mrb[0].mxu0
      %v2889 = vadd.f32 0.0, %v2888
      %v2890 = vpop.f32.mrb[0].mxu0
      %v2891 = vpop.f32.mrb[0].mxu0
      %v2892 = vadd.f32 0.0, %v2891
      %v2893 = vpop.f32.mrb[0].mxu0
      %2894 = vmatprep.mubr.bf16.mxu0 0
      %2895 = vmatmul.mubr.bf16.gmra.mrb[0].mxu0 %v681
      %v2896 = vpop.f32.mrb[0].mxu0
      %v2897 = vadd.f32 0.0, %v2896
      %v2898 = vpop.f32.mrb[0].mxu0
      %v2899 = vpop.f32.mrb[0].mxu0
      %v2900 = vadd.f32 0.0, %v2899
      %v2901 = vpop.f32.mrb[0].mxu0
      %2902 = vmatprep.mubr.bf16.mxu0 0
      %2903 = vmatmul.mubr.bf16.gmra.mrb[0].mxu0 %v682
      %v2904 = vpop.f32.mrb[0].mxu0
      %v2905 = vadd.f32 0.0, %v2904
      %v2906 = vpop.f32.mrb[0].mxu0
      %v2907 = vpop.f32.mrb[0].mxu0
      %v2908 = vadd.f32 0.0, %v2907
      %v2909 = vpop.f32.mrb[0].mxu0
      %2910 = vmatprep.mubr.bf16.mxu0 0
      %2911 = vmatmul.mubr.bf16.gmra.mrb[0].mxu0 %v683
      %v2912 = vpop.f32.mrb[0].mxu0
      %v2913 = vadd.f32 0.0, %v2912
      %v2914 = vpop.f32.mrb[0].mxu0
      %v2915 = vpop.f32.mrb[0].mxu0
      %v2916 = vadd.f32 0.0, %v2915
      %v2917 = vpop.f32.mrb[0].mxu0
      %2918 = vmatprep.mubr.bf16.mxu0 0
      %2919 = vmatmul.mubr.bf16.gmra.mrb[0].mxu0 %v684
      %v2920 = vpop.f32.mrb[0].mxu0
      %v2921 = vadd.f32 0.0, %v2920
      %v2922 = vpop.f32.mrb[0].mxu0
      %v2923 = vpop.f32.mrb[0].mxu0
      %v2924 = vadd.f32 0.0, %v2923
      %v2925 = vpop.f32.mrb[0].mxu0
      %2926 = vmatprep.mubr.bf16.mxu0 0
      %2927 = vmatmul.mubr.bf16.gmra.mrb[0].mxu0 %v685
      %v2928 = vpop.f32.mrb[0].mxu0
      %v2929 = vadd.f32 0.0, %v2928
      %v2930 = vpop.f32.mrb[0].mxu0
      %v2931 = vpop.f32.mrb[0].mxu0
      %v2932 = vadd.f32 0.0, %v2931
      %v2933 = vpop.f32.mrb[0].mxu0
      %2934 = vmatprep.mubr.bf16.mxu0 0
      %2935 = vmatmul.mubr.bf16.gmra.mrb[0].mxu0 %v686
      %v2936 = vpop.f32.mrb[0].mxu0
      %v2937 = vadd.f32 0.0, %v2936
      %v2938 = vpop.f32.mrb[0].mxu0
      %v2939 = vpop.f32.mrb[0].mxu0
      %v2940 = vadd.f32 0.0, %v2939
      %v2941 = vpop.f32.mrb[0].mxu0
      %2942 = vmatprep.mubr.bf16.mxu0 0
      %2943 = vmatmul.mubr.bf16.gmra.mrb[0].mxu0 %v687
      %v2944 = vpop.f32.mrb[0].mxu0
      %v2945 = vadd.f32 0.0, %v2944
      %v2946 = vpop.f32.mrb[0].mxu0
      %v2947 = vpop.f32.mrb[0].mxu0
      %v2948 = vadd.f32 0.0, %v2947
      %v2949 = vpop.f32.mrb[0].mxu0
      %2950 = vmatprep.mubr.bf16.mxu0 0
      %2951 = vmatmul.mubr.bf16.gmra.mrb[0].mxu0 %v688
      %v2952 = vpop.f32.mrb[0].mxu0
      %v2953 = vadd.f32 0.0, %v2952
      %v2954 = vpop.f32.mrb[0].mxu0
      %v2955 = vpop.f32.mrb[0].mxu0
      %v2956 = vadd.f32 0.0, %v2955
      %v2957 = vpop.f32.mrb[0].mxu0
      %2958 = vmatprep.mubr.bf16.mxu0 0
      %2959 = vmatmul.mubr.bf16.gmra.mrb[0].mxu0 %v689
      %v2960 = vpop.f32.mrb[0].mxu0
      %v2961 = vadd.f32 0.0, %v2960
      %v2962 = vpop.f32.mrb[0].mxu0
      %v2963 = vpop.f32.mrb[0].mxu0
      %v2964 = vadd.f32 0.0, %v2963
      %v2965 = vpop.f32.mrb[0].mxu0
      %2966 = vmatprep.mubr.bf16.mxu0 0
      %2967 = vmatmul.mubr.bf16.gmra.mrb[0].mxu0 %v690
      %v2968 = vpop.f32.mrb[0].mxu0
      %v2969 = vadd.f32 0.0, %v2968
      %v2970 = vpop.f32.mrb[0].mxu0
      %v2971 = vpop.f32.mrb[0].mxu0
      %v2972 = vadd.f32 0.0, %v2971
      %v2973 = vpop.f32.mrb[0].mxu0
      %2974 = vmatprep.mubr.bf16.mxu0 0
      %2975 = vmatmul.mubr.bf16.gmra.mrb[0].mxu0 %v691
      %v2976 = vpop.f32.mrb[0].mxu0
      %v2977 = vadd.f32 0.0, %v2976
      %v2978 = vpop.f32.mrb[0].mxu0
      %v2979 = vpop.f32.mrb[0].mxu0
      %v2980 = vadd.f32 0.0, %v2979
      %v2981 = vpop.f32.mrb[0].mxu0
      %2982 = vmatprep.mubr.bf16.mxu0 0
      %2983 = vmatmul.mubr.bf16.gmra.mrb[0].mxu0 %v692
      %v2984 = vpop.f32.mrb[0].mxu0
      %v2985 = vadd.f32 0.0, %v2984
      %v2986 = vpop.f32.mrb[0].mxu0
      %v2987 = vpop.f32.mrb[0].mxu0
      %v2988 = vadd.f32 0.0, %v2987
      %v2989 = vpop.f32.mrb[0].mxu0
      %2990 = vmatprep.mubr.bf16.mxu0 0
      %2991 = vmatmul.mubr.bf16.gmra.mrb[0].mxu0 %v693
      %v2992 = vpop.f32.mrb[0].mxu0
      %v2993 = vadd.f32 0.0, %v2992
      %v2994 = vpop.f32.mrb[0].mxu0
      %v2995 = vpop.f32.mrb[0].mxu0
      %v2996 = vadd.f32 0.0, %v2995
      %v2997 = vpop.f32.mrb[0].mxu0
      %2998 = vmatprep.mubr.bf16.mxu0 0
      %2999 = vmatmul.mubr.bf16.gmra.mrb[0].mxu0 %v1984
      %v3000 = vpop.f32.mrb[0].mxu0
      %v3001 = vadd.f32 0.0, %v3000
      %v3002 = vpop.f32.mrb[0].mxu0
      %v3003 = vpop.f32.mrb[0].mxu0
      %v3004 = vadd.f32 0.0, %v3003
      %v3005 = vpop.f32.mrb[0].mxu0
      %3006 = vmatprep.mubr.bf16.mxu0 0
      %3007 = vmatmul.mubr.bf16.gmra.mrb[0].mxu0 %v2804
      %v3008 = vpop.f32.mrb[0].mxu0
      %v3009 = vadd.f32 0.0, %v3008
      %v3010 = vpop.f32.mrb[0].mxu0
      %v3011 = vpop.f32.mrb[0].mxu0
      %v3012 = vadd.f32 0.0, %v3011
      %v3013 = vpop.f32.mrb[0].mxu0
      %3014 = vdwg.mxu0
      %v3015 = vadd.f32 %v2729, %v2889
      %v3016 = vadd.f32 %v2730, %v2892
      %v3017 = vadd.f32 %v2731, %v2897
      %v3018 = vadd.f32 %v2732, %v2900
      %v3019 = vadd.f32 %v2733, %v2905
      %v3020 = vadd.f32 %v2734, %v2908
      %v3021 = vadd.f32 %v2735, %v2913
      %v3022 = vadd.f32 %v2736, %v2916
      %v3023 = vadd.f32 %v2737, %v2921
      %v3024 = vadd.f32 %v2738, %v2924
      %v3025 = vadd.f32 %v2739, %v2929
      %v3026 = vadd.f32 %v2740, %v2932
      %v3027 = vadd.f32 %v2741, %v2937
      %v3028 = vadd.f32 %v2742, %v2940
      %v3029 = vadd.f32 %v2743, %v2945
      %v3030 = vadd.f32 %v2744, %v2948
      %v3031 = vadd.f32 %v2745, %v2953
      %v3032 = vadd.f32 %v2746, %v2956
      %v3033 = vadd.f32 %v2747, %v2961
      %v3034 = vadd.f32 %v2748, %v2964
      %v3035 = vadd.f32 %v2749, %v2969
      %v3036 = vadd.f32 %v2750, %v2972
      %v3037 = vadd.f32 %v2751, %v2977
      %v3038 = vadd.f32 %v2752, %v2980
      %v3039 = vadd.f32 %v2753, %v2985
      %v3040 = vadd.f32 %v2754, %v2988
      %v3041 = vadd.f32 %v2755, %v2993
      %v3042 = vadd.f32 %v2756, %v2996
      %v3043 = vadd.f32 %v2757, %v3001
      %v3044 = vadd.f32 %v2758, %v3004
      %v3045 = vadd.f32 %v2759, %v3009
      %v3046 = vadd.f32 %v2760, %v3012
      %v3048 = vrot.slane %v223, 5
      %v3049 = vrot.slane %v3048, 4
      %v3050 = vrot.slane %v224, 5
      %v3051 = vsel %vm1242, %v3049, %v3050
      %v3052 = vrot.slane %v3050, 4
      %v3053 = vrot.slane %v225, 5
      %v3054 = vsel %vm1242, %v3052, %v3053
      %s3055 = scalar_lea.vmem %s1, 512
      %v3056 = vld [vmem:[%s3055] sm:$0xf]
      %v3057 = vld [vmem:[%s3055 + $0x4] sm:$0xf]
      %v3058 = vld [vmem:[%s3055 + $0x8] sm:$0xf]
      %v3059 = vld [vmem:[%s3055 + $0xc] sm:$0xf]
      %v3060 = vld [vmem:[%s3055 + $0x10] sm:$0xf]
      %v3061 = vld [vmem:[%s3055 + $0x14] sm:$0xf]
      %v3062 = vld [vmem:[%s3055 + $0x18] sm:$0xf]
      %v3063 = vld [vmem:[%s3055 + $0x1c] sm:$0xf]
      %v3064 = vld [vmem:[%s3055 + $0x20] sm:$0xf]
      %v3065 = vld [vmem:[%s3055 + $0x24] sm:$0xf]
      %v3066 = vld [vmem:[%s3055 + $0x28] sm:$0xf]
      %v3067 = vld [vmem:[%s3055 + $0x2c] sm:$0xf]
      %v3068 = vld [vmem:[%s3055 + $0x30] sm:$0xf]
      %v3069 = vld [vmem:[%s3055 + $0x34] sm:$0xf]
      %v3070 = vld [vmem:[%s3055 + $0x38] sm:$0xf]
      %v3071 = vld [vmem:[%s3055 + $0x3c] sm:$0xf]
      %v3072 = vunpack.c.l.b16 %v3051
      %v3073 = vunpack.c.l.b16 %v3054
      %v3074 = vpack.c.b16 %v3073, %v3072
      %v3092 = vunpack.c.l.b16 %v3056
      %v3093 = vunpack.c.l.b16 %v3057
      %v3094 = vunpack.c.l.b16 %v3058
      %v3095 = vunpack.c.l.b16 %v3059
      %v3096 = vunpack.c.l.b16 %v3060
      %v3097 = vunpack.c.l.b16 %v3061
      %v3098 = vunpack.c.l.b16 %v3062
      %v3099 = vunpack.c.l.b16 %v3063
      %v3100 = vunpack.c.l.b16 %v3064
      %v3101 = vunpack.c.l.b16 %v3065
      %v3102 = vunpack.c.l.b16 %v3066
      %v3103 = vunpack.c.l.b16 %v3067
      %v3104 = vunpack.c.l.b16 %v3068
      %v3105 = vunpack.c.l.b16 %v3069
      %v3106 = vunpack.c.l.b16 %v3070
      %v3107 = vunpack.c.l.b16 %v3071
      %v3108 = vpack.c.b16 %v3093, %v3092
      %v3109 = vpack.c.b16 %v3095, %v3094
      %v3110 = vpack.c.b16 %v3097, %v3096
      %v3111 = vpack.c.b16 %v3099, %v3098
      %v3112 = vpack.c.b16 %v3101, %v3100
      %v3113 = vpack.c.b16 %v3103, %v3102
      %v3114 = vpack.c.b16 %v3105, %v3104
      %v3115 = vpack.c.b16 %v3107, %v3106
      %3124 = vmatprep.subr.bf16.mxu0 0
      %3125 = vmatpush1.bf16.msra.mxu0 %v3108
      %3126 = vmatprep.subr.bf16.mxu0 0
      %3127 = vmatpush1.bf16.msra.mxu0 %v3109
      %3128 = vmatprep.subr.bf16.mxu0 0
      %3129 = vmatpush1.bf16.msra.mxu0 %v3110
      %3130 = vmatprep.subr.bf16.mxu0 0
      %3131 = vmatpush1.bf16.msra.mxu0 %v3111
      %3132 = vmatprep.subr.bf16.mxu0 0
      %3133 = vmatpush1.bf16.msra.mxu0 %v3112
      %3134 = vmatprep.subr.bf16.mxu0 0
      %3135 = vmatpush1.bf16.msra.mxu0 %v3113
      %3136 = vmatprep.subr.bf16.mxu0 0
      %3137 = vmatpush1.bf16.msra.mxu0 %v3114
      %3138 = vmatprep.subr.bf16.mxu0 0
      %3139 = vmatpush1.bf16.msra.mxu0 %v3115
      %3140 = vmatprep.subr.bf16.mxu0 0
      %3141 = vmatpush1.bf16.msra.mxu0 0
      %3142 = vmatprep.subr.bf16.mxu0 0
      %3143 = vmatpush1.bf16.msra.mxu0 0
      %3144 = vmatprep.subr.bf16.mxu0 0
      %3145 = vmatpush1.bf16.msra.mxu0 0
      %3146 = vmatprep.subr.bf16.mxu0 0
      %3147 = vmatpush1.bf16.msra.mxu0 0
      %3148 = vmatprep.subr.bf16.mxu0 0
      %3149 = vmatpush1.bf16.msra.mxu0 0
      %3150 = vmatprep.subr.bf16.mxu0 0
      %3151 = vmatpush1.bf16.msra.mxu0 0
      %3152 = vmatprep.subr.bf16.mxu0 0
      %3153 = vmatpush1.bf16.msra.mxu0 0
      %3154 = vmatprep.subr.bf16.mxu0 0
      %3155 = vmatpush1.bf16.msra.mxu0 0
      %3156 = vmatprep.mubr.bf16.mxu0 0
      %3157 = vmatmul.mubr.bf16.gmra.mrb[0].mxu0 %v1406
      %v3158 = vpop.f32.mrb[0].mxu0
      %v3159 = vadd.f32 0.0, %v3158
      %v3160 = vpop.f32.mrb[0].mxu0
      %v3161 = vpop.f32.mrb[0].mxu0
      %v3162 = vadd.f32 0.0, %v3161
      %v3163 = vpop.f32.mrb[0].mxu0
      %3164 = vmatprep.mubr.bf16.mxu0 0
      %3165 = vmatmul.mubr.bf16.gmra.mrb[0].mxu0 %v1407
      %v3166 = vpop.f32.mrb[0].mxu0
      %v3167 = vadd.f32 0.0, %v3166
      %v3168 = vpop.f32.mrb[0].mxu0
      %v3169 = vpop.f32.mrb[0].mxu0
      %v3170 = vadd.f32 0.0, %v3169
      %v3171 = vpop.f32.mrb[0].mxu0
      %3172 = vmatprep.mubr.bf16.mxu0 0
      %3173 = vmatmul.mubr.bf16.gmra.mrb[0].mxu0 %v1408
      %v3174 = vpop.f32.mrb[0].mxu0
      %v3175 = vadd.f32 0.0, %v3174
      %v3176 = vpop.f32.mrb[0].mxu0
      %v3177 = vpop.f32.mrb[0].mxu0
      %v3178 = vadd.f32 0.0, %v3177
      %v3179 = vpop.f32.mrb[0].mxu0
      %3180 = vmatprep.mubr.bf16.mxu0 0
      %3181 = vmatmul.mubr.bf16.gmra.mrb[0].mxu0 %v1409
      %v3182 = vpop.f32.mrb[0].mxu0
      %v3183 = vadd.f32 0.0, %v3182
      %v3184 = vpop.f32.mrb[0].mxu0
      %v3185 = vpop.f32.mrb[0].mxu0
      %v3186 = vadd.f32 0.0, %v3185
      %v3187 = vpop.f32.mrb[0].mxu0
      %3188 = vmatprep.mubr.bf16.mxu0 0
      %3189 = vmatmul.mubr.bf16.gmra.mrb[0].mxu0 %v1410
      %v3190 = vpop.f32.mrb[0].mxu0
      %v3191 = vadd.f32 0.0, %v3190
      %v3192 = vpop.f32.mrb[0].mxu0
      %v3193 = vpop.f32.mrb[0].mxu0
      %v3194 = vadd.f32 0.0, %v3193
      %v3195 = vpop.f32.mrb[0].mxu0
      %3196 = vmatprep.mubr.bf16.mxu0 0
      %3197 = vmatmul.mubr.bf16.gmra.mrb[0].mxu0 %v1411
      %v3198 = vpop.f32.mrb[0].mxu0
      %v3199 = vadd.f32 0.0, %v3198
      %v3200 = vpop.f32.mrb[0].mxu0
      %v3201 = vpop.f32.mrb[0].mxu0
      %v3202 = vadd.f32 0.0, %v3201
      %v3203 = vpop.f32.mrb[0].mxu0
      %3204 = vmatprep.mubr.bf16.mxu0 0
      %3205 = vmatmul.mubr.bf16.gmra.mrb[0].mxu0 %v1412
      %v3206 = vpop.f32.mrb[0].mxu0
      %v3207 = vadd.f32 0.0, %v3206
      %v3208 = vpop.f32.mrb[0].mxu0
      %v3209 = vpop.f32.mrb[0].mxu0
      %v3210 = vadd.f32 0.0, %v3209
      %v3211 = vpop.f32.mrb[0].mxu0
      %3212 = vmatprep.mubr.bf16.mxu0 0
      %3213 = vmatmul.mubr.bf16.gmra.mrb[0].mxu0 %v1413
      %v3214 = vpop.f32.mrb[0].mxu0
      %v3215 = vadd.f32 0.0, %v3214
      %v3216 = vpop.f32.mrb[0].mxu0
      %v3217 = vpop.f32.mrb[0].mxu0
      %v3218 = vadd.f32 0.0, %v3217
      %v3219 = vpop.f32.mrb[0].mxu0
      %3220 = vmatprep.mubr.bf16.mxu0 0
      %3221 = vmatmul.mubr.bf16.gmra.mrb[0].mxu0 %v1414
      %v3222 = vpop.f32.mrb[0].mxu0
      %v3223 = vadd.f32 0.0, %v3222
      %v3224 = vpop.f32.mrb[0].mxu0
      %v3225 = vpop.f32.mrb[0].mxu0
      %v3226 = vadd.f32 0.0, %v3225
      %v3227 = vpop.f32.mrb[0].mxu0
      %3228 = vmatprep.mubr.bf16.mxu0 0
      %3229 = vmatmul.mubr.bf16.gmra.mrb[0].mxu0 %v1415
      %v3230 = vpop.f32.mrb[0].mxu0
      %v3231 = vadd.f32 0.0, %v3230
      %v3232 = vpop.f32.mrb[0].mxu0
      %v3233 = vpop.f32.mrb[0].mxu0
      %v3234 = vadd.f32 0.0, %v3233
      %v3235 = vpop.f32.mrb[0].mxu0
      %3236 = vmatprep.mubr.bf16.mxu0 0
      %3237 = vmatmul.mubr.bf16.gmra.mrb[0].mxu0 %v1416
      %v3238 = vpop.f32.mrb[0].mxu0
      %v3239 = vadd.f32 0.0, %v3238
      %v3240 = vpop.f32.mrb[0].mxu0
      %v3241 = vpop.f32.mrb[0].mxu0
      %v3242 = vadd.f32 0.0, %v3241
      %v3243 = vpop.f32.mrb[0].mxu0
      %3244 = vmatprep.mubr.bf16.mxu0 0
      %3245 = vmatmul.mubr.bf16.gmra.mrb[0].mxu0 %v1417
      %v3246 = vpop.f32.mrb[0].mxu0
      %v3247 = vadd.f32 0.0, %v3246
      %v3248 = vpop.f32.mrb[0].mxu0
      %v3249 = vpop.f32.mrb[0].mxu0
      %v3250 = vadd.f32 0.0, %v3249
      %v3251 = vpop.f32.mrb[0].mxu0
      %3252 = vmatprep.mubr.bf16.mxu0 0
      %3253 = vmatmul.mubr.bf16.gmra.mrb[0].mxu0 %v1418
      %v3254 = vpop.f32.mrb[0].mxu0
      %v3255 = vadd.f32 0.0, %v3254
      %v3256 = vpop.f32.mrb[0].mxu0
      %v3257 = vpop.f32.mrb[0].mxu0
      %v3258 = vadd.f32 0.0, %v3257
      %v3259 = vpop.f32.mrb[0].mxu0
      %3260 = vmatprep.mubr.bf16.mxu0 0
      %3261 = vmatmul.mubr.bf16.gmra.mrb[0].mxu0 %v1419
      %v3262 = vpop.f32.mrb[0].mxu0
      %v3263 = vadd.f32 0.0, %v3262
      %v3264 = vpop.f32.mrb[0].mxu0
      %v3265 = vpop.f32.mrb[0].mxu0
      %v3266 = vadd.f32 0.0, %v3265
      %v3267 = vpop.f32.mrb[0].mxu0
      %3268 = vmatprep.mubr.bf16.mxu0 0
      %3269 = vmatmul.mubr.bf16.gmra.mrb[0].mxu0 %v2254
      %v3270 = vpop.f32.mrb[0].mxu0
      %v3271 = vadd.f32 0.0, %v3270
      %v3272 = vpop.f32.mrb[0].mxu0
      %v3273 = vpop.f32.mrb[0].mxu0
      %v3274 = vadd.f32 0.0, %v3273
      %v3275 = vpop.f32.mrb[0].mxu0
      %3276 = vmatprep.mubr.bf16.mxu0 0
      %3277 = vmatmul.mubr.bf16.gmra.mrb[0].mxu0 %v3074
      %v3278 = vpop.f32.mrb[0].mxu0
      %v3279 = vadd.f32 0.0, %v3278
      %v3280 = vpop.f32.mrb[0].mxu0
      %v3281 = vpop.f32.mrb[0].mxu0
      %v3282 = vadd.f32 0.0, %v3281
      %v3283 = vpop.f32.mrb[0].mxu0
      %3284 = vdwg.mxu0
      %v3285 = vadd.f32 %v3015, %v3159
      %v3286 = vadd.f32 %v3016, %v3162
      %v3287 = vadd.f32 %v3017, %v3167
      %v3288 = vadd.f32 %v3018, %v3170
      %v3289 = vadd.f32 %v3019, %v3175
      %v3290 = vadd.f32 %v3020, %v3178
      %v3291 = vadd.f32 %v3021, %v3183
      %v3292 = vadd.f32 %v3022, %v3186
      %v3293 = vadd.f32 %v3023, %v3191
      %v3294 = vadd.f32 %v3024, %v3194
      %v3295 = vadd.f32 %v3025, %v3199
      %v3296 = vadd.f32 %v3026, %v3202
      %v3297 = vadd.f32 %v3027, %v3207
      %v3298 = vadd.f32 %v3028, %v3210
      %v3299 = vadd.f32 %v3029, %v3215
      %v3300 = vadd.f32 %v3030, %v3218
      %v3301 = vadd.f32 %v3031, %v3223
      %v3302 = vadd.f32 %v3032, %v3226
      %v3303 = vadd.f32 %v3033, %v3231
      %v3304 = vadd.f32 %v3034, %v3234
      %v3305 = vadd.f32 %v3035, %v3239
      %v3306 = vadd.f32 %v3036, %v3242
      %v3307 = vadd.f32 %v3037, %v3247
      %v3308 = vadd.f32 %v3038, %v3250
      %v3309 = vadd.f32 %v3039, %v3255
      %v3310 = vadd.f32 %v3040, %v3258
      %v3311 = vadd.f32 %v3041, %v3263
      %v3312 = vadd.f32 %v3042, %v3266
      %v3313 = vadd.f32 %v3043, %v3271
      %v3314 = vadd.f32 %v3044, %v3274
      %v3315 = vadd.f32 %v3045, %v3279
      %v3316 = vadd.f32 %v3046, %v3282
      %v3317 = vld [vmem:[%s2] sm:$0x1]
      %v3319 = vlaneseq
      %v3320 = vshrl.u32 %v3319, 7
      %v3321 = vsub.s32 0, %v3320
      %v3322 = vrot.slane %v3317, %v3321
      %v3324 = vadd.f32 %v3285, %v3322
      %v3325 = vadd.f32 %v3286, %v3322
      %v3326 = vadd.f32 %v3287, %v3322
      %v3327 = vadd.f32 %v3288, %v3322
      %v3328 = vadd.f32 %v3289, %v3322
      %v3329 = vadd.f32 %v3290, %v3322
      %v3330 = vadd.f32 %v3291, %v3322
      %v3331 = vadd.f32 %v3292, %v3322
      %v3332 = vadd.f32 %v3293, %v3322
      %v3333 = vadd.f32 %v3294, %v3322
      %v3334 = vadd.f32 %v3295, %v3322
      %v3335 = vadd.f32 %v3296, %v3322
      %v3336 = vadd.f32 %v3297, %v3322
      %v3337 = vadd.f32 %v3298, %v3322
      %v3338 = vadd.f32 %v3299, %v3322
      %v3339 = vadd.f32 %v3300, %v3322
      %v3340 = vadd.f32 %v3301, %v3322
      %v3341 = vadd.f32 %v3302, %v3322
      %v3342 = vadd.f32 %v3303, %v3322
      %v3343 = vadd.f32 %v3304, %v3322
      %v3344 = vadd.f32 %v3305, %v3322
      %v3345 = vadd.f32 %v3306, %v3322
      %v3346 = vadd.f32 %v3307, %v3322
      %v3347 = vadd.f32 %v3308, %v3322
      %v3348 = vadd.f32 %v3309, %v3322
      %v3349 = vadd.f32 %v3310, %v3322
      %v3350 = vadd.f32 %v3311, %v3322
      %v3351 = vadd.f32 %v3312, %v3322
      %v3352 = vadd.f32 %v3313, %v3322
      %v3353 = vadd.f32 %v3314, %v3322
      %v3354 = vadd.f32 %v3315, %v3322
      %v3355 = vadd.f32 %v3316, %v3322
      %v3356 = vmax.f32 %v3324, 0.0
      %v3357 = vmax.f32 %v3325, 0.0
      %v3358 = vmax.f32 %v3326, 0.0
      %v3359 = vmax.f32 %v3327, 0.0
      %v3360 = vmax.f32 %v3328, 0.0
      %v3361 = vmax.f32 %v3329, 0.0
      %v3362 = vmax.f32 %v3330, 0.0
      %v3363 = vmax.f32 %v3331, 0.0
      %v3364 = vmax.f32 %v3332, 0.0
      %v3365 = vmax.f32 %v3333, 0.0
      %v3366 = vmax.f32 %v3334, 0.0
      %v3367 = vmax.f32 %v3335, 0.0
      %v3368 = vmax.f32 %v3336, 0.0
      %v3369 = vmax.f32 %v3337, 0.0
      %v3370 = vmax.f32 %v3338, 0.0
      %v3371 = vmax.f32 %v3339, 0.0
      %v3372 = vmax.f32 %v3340, 0.0
      %v3373 = vmax.f32 %v3341, 0.0
      %v3374 = vmax.f32 %v3342, 0.0
      %v3375 = vmax.f32 %v3343, 0.0
      %v3376 = vmax.f32 %v3344, 0.0
      %v3377 = vmax.f32 %v3345, 0.0
      %v3378 = vmax.f32 %v3346, 0.0
      %v3379 = vmax.f32 %v3347, 0.0
      %v3380 = vmax.f32 %v3348, 0.0
      %v3381 = vmax.f32 %v3349, 0.0
      %v3382 = vmax.f32 %v3350, 0.0
      %v3383 = vmax.f32 %v3351, 0.0
      %v3384 = vmax.f32 %v3352, 0.0
      %v3385 = vmax.f32 %v3353, 0.0
      %v3386 = vmax.f32 %v3354, 0.0
      %v3387 = vmax.f32 %v3355, 0.0
      %v3388 = vpack.c.bf16 %v3357, %v3356
      %v3389 = vpack.c.bf16 %v3359, %v3358
      %v3390 = vpack.c.bf16 %v3361, %v3360
      %v3391 = vpack.c.bf16 %v3363, %v3362
      %v3392 = vpack.c.bf16 %v3365, %v3364
      %v3393 = vpack.c.bf16 %v3367, %v3366
      %v3394 = vpack.c.bf16 %v3369, %v3368
      %v3395 = vpack.c.bf16 %v3371, %v3370
      %v3396 = vpack.c.bf16 %v3373, %v3372
      %v3397 = vpack.c.bf16 %v3375, %v3374
      %v3398 = vpack.c.bf16 %v3377, %v3376
      %v3399 = vpack.c.bf16 %v3379, %v3378
      %v3400 = vpack.c.bf16 %v3381, %v3380
      %v3401 = vpack.c.bf16 %v3383, %v3382
      %v3402 = vpack.c.bf16 %v3385, %v3384
      %v3403 = vpack.c.bf16 %v3387, %v3386
      %v3420 = vunpack.c.l.b16 %v3388
      %v3421 = vunpack.c.h.b16 %v3388
      %v3422 = vunpack.c.l.b16 %v3389
      %v3423 = vunpack.c.h.b16 %v3389
      %v3424 = vunpack.c.l.b16 %v3390
      %v3425 = vunpack.c.h.b16 %v3390
      %v3426 = vunpack.c.l.b16 %v3391
      %v3427 = vunpack.c.h.b16 %v3391
      %v3428 = vunpack.c.l.b16 %v3392
      %v3429 = vunpack.c.h.b16 %v3392
      %v3430 = vunpack.c.l.b16 %v3393
      %v3431 = vunpack.c.h.b16 %v3393
      %v3432 = vunpack.c.l.b16 %v3394
      %v3433 = vunpack.c.h.b16 %v3394
      %v3434 = vunpack.c.l.b16 %v3395
      %v3435 = vunpack.c.h.b16 %v3395
      %v3436 = vunpack.c.l.b16 %v3396
      %v3437 = vunpack.c.h.b16 %v3396
      %v3438 = vunpack.c.l.b16 %v3397
      %v3439 = vunpack.c.h.b16 %v3397
      %v3440 = vunpack.c.l.b16 %v3398
      %v3441 = vunpack.c.h.b16 %v3398
      %v3442 = vunpack.c.l.b16 %v3399
      %v3443 = vunpack.c.h.b16 %v3399
      %v3444 = vunpack.c.l.b16 %v3400
      %v3445 = vunpack.c.h.b16 %v3400
      %v3446 = vunpack.c.l.b16 %v3401
      %v3447 = vunpack.c.h.b16 %v3401
      %v3448 = vunpack.c.l.b16 %v3402
      %v3449 = vunpack.c.h.b16 %v3402
      %v3450 = vunpack.c.l.b16 %v3403
      %v3451 = vunpack.c.h.b16 %v3403
      %v3452 = vpack.c.b16 %v3420, %v3420
      %v3453 = vpack.c.b16 %v3421, %v3421
      %v3454 = vpack.c.b16 %v3422, %v3422
      %v3455 = vpack.c.b16 %v3423, %v3423
      %v3456 = vpack.c.b16 %v3424, %v3424
      %v3457 = vpack.c.b16 %v3425, %v3425
      %v3458 = vpack.c.b16 %v3426, %v3426
      %v3459 = vpack.c.b16 %v3427, %v3427
      %v3460 = vpack.c.b16 %v3428, %v3428
      %v3461 = vpack.c.b16 %v3429, %v3429
      %v3462 = vpack.c.b16 %v3430, %v3430
      %v3463 = vpack.c.b16 %v3431, %v3431
      %v3464 = vpack.c.b16 %v3432, %v3432
      %v3465 = vpack.c.b16 %v3433, %v3433
      %v3466 = vpack.c.b16 %v3434, %v3434
      %v3467 = vpack.c.b16 %v3435, %v3435
      %v3468 = vpack.c.b16 %v3436, %v3436
      %v3469 = vpack.c.b16 %v3437, %v3437
      %v3470 = vpack.c.b16 %v3438, %v3438
      %v3471 = vpack.c.b16 %v3439, %v3439
      %v3472 = vpack.c.b16 %v3440, %v3440
      %v3473 = vpack.c.b16 %v3441, %v3441
      %v3474 = vpack.c.b16 %v3442, %v3442
      %v3475 = vpack.c.b16 %v3443, %v3443
      %v3476 = vpack.c.b16 %v3444, %v3444
      %v3477 = vpack.c.b16 %v3445, %v3445
      %v3478 = vpack.c.b16 %v3446, %v3446
      %v3479 = vpack.c.b16 %v3447, %v3447
      %v3480 = vpack.c.b16 %v3448, %v3448
      %v3481 = vpack.c.b16 %v3449, %v3449
      %v3482 = vpack.c.b16 %v3450, %v3450
      %v3483 = vpack.c.b16 %v3451, %v3451
      %3516 = vst [vmem:[%s170] sm:$0xf] %v3452
      %3517 = vst [vmem:[%s170 + $0x4] sm:$0xf] %v3453
      %3518 = vst [vmem:[%s170 + $0x8] sm:$0xf] %v3454
      %3519 = vst [vmem:[%s170 + $0xc] sm:$0xf] %v3455
      %3520 = vst [vmem:[%s170 + $0x10] sm:$0xf] %v3456
      %3521 = vst [vmem:[%s170 + $0x14] sm:$0xf] %v3457
      %3522 = vst [vmem:[%s170 + $0x18] sm:$0xf] %v3458
      %3523 = vst [vmem:[%s170 + $0x1c] sm:$0xf] %v3459
      %3524 = vst [vmem:[%s170 + $0x20] sm:$0xf] %v3460
      %3525 = vst [vmem:[%s170 + $0x24] sm:$0xf] %v3461
      %3526 = vst [vmem:[%s170 + $0x28] sm:$0xf] %v3462
      %3527 = vst [vmem:[%s170 + $0x2c] sm:$0xf] %v3463
      %3528 = vst [vmem:[%s170 + $0x30] sm:$0xf] %v3464
      %3529 = vst [vmem:[%s170 + $0x34] sm:$0xf] %v3465
      %3530 = vst [vmem:[%s170 + $0x38] sm:$0xf] %v3466
      %3531 = vst [vmem:[%s170 + $0x3c] sm:$0xf] %v3467
      %3532 = vst [vmem:[%s170 + $0x40] sm:$0xf] %v3468
      %3533 = vst [vmem:[%s170 + $0x44] sm:$0xf] %v3469
      %3534 = vst [vmem:[%s170 + $0x48] sm:$0xf] %v3470
      %3535 = vst [vmem:[%s170 + $0x4c] sm:$0xf] %v3471
      %3536 = vst [vmem:[%s170 + $0x50] sm:$0xf] %v3472
      %3537 = vst [vmem:[%s170 + $0x54] sm:$0xf] %v3473
      %3538 = vst [vmem:[%s170 + $0x58] sm:$0xf] %v3474
      %3539 = vst [vmem:[%s170 + $0x5c] sm:$0xf] %v3475
      %3540 = vst [vmem:[%s170 + $0x60] sm:$0xf] %v3476
      %3541 = vst [vmem:[%s170 + $0x64] sm:$0xf] %v3477
      %3542 = vst [vmem:[%s170 + $0x68] sm:$0xf] %v3478
      %3543 = vst [vmem:[%s170 + $0x6c] sm:$0xf] %v3479
      %3544 = vst [vmem:[%s170 + $0x70] sm:$0xf] %v3480
      %3545 = vst [vmem:[%s170 + $0x74] sm:$0xf] %v3481
      %3546 = vst [vmem:[%s170 + $0x78] sm:$0xf] %v3482
      %3547 = vst [vmem:[%s170 + $0x7c] sm:$0xf] %v3483
      %p3548 = scmp.lt.s32.totalorder %s14, 3
      %s3549 = scalar_select %p3548, %s14, 3
      %s3550 = smul.addr %s3549, 32
      %s3551 = smul.addr %s3550, 4
      %s3552 = scalar_lea.vmem %s3, %s3551
      // Predicated region
      $region33: #{_lambda_.10} parent=31 // pred_check
        %p3553 = pneg %p100
      $region34: #{_lambda_.10} parent=31 // pred_check_branch
        %3555 = sbr.rel (%p3553) target = $region36
      $region35: #{_lambda_.10} parent=31 // pred_region
        _
      $region36: #{_lambda_.10} parent=31 // pred_fallthru
        _
    $region32: #{_lambda_.10} parent=5 // pred_fallthru
      _
    %p3556 = scmp.le.s32.totalorder 2, %s9
    // Predicated region
    $region37: #{_lambda_.10} parent=5 // pred_check
      %p3557 = pneg %p3556
    $region38: #{_lambda_.10} parent=5 // pred_check_branch
      %3559 = sbr.rel (%p3557) target = $region40
    $region39: #{_lambda_.10} parent=5 // pred_region
      %s3560 = ssub.s32 %s9, 2
      // Predicated region
      $region41: #{_lambda_.10} parent=39 // pred_check
        %p3561 = pneg %p106
      $region42: #{_lambda_.10} parent=39 // pred_check_branch
        %3563 = sbr.rel (%p3561) target = $region44
      $region43: #{_lambda_.10} parent=39 // pred_region
        %p3564 = scmp.lt.s32.totalorder %s15, 3
        %s3565 = scalar_select %p3564, %s15, 3
        %s3566 = smul.addr %s3565, 32
        %s3567 = smul.addr %s3566, 4
        %s3568 = scalar_lea.vmem %s3, %s3567
      $region44: #{_lambda_.10} parent=39 // pred_fallthru
        _
    $region40: #{_lambda_.10} parent=5 // pred_fallthru
      _
  $region6: #{_lambda_.10} parent=0 // loop_footer
    %s13 = sadd.s32 1, %s9
  $region7: #{_lambda_.10} parent=0 // loop_footer_branch
    %8 = sbr.rel target = $region3
  $region8: #{_lambda_.10} parent=0 // loop_exit
    _

// kernel: _lambda_.14
$region0: #{_lambda_.14}
  #allocation0 [shape = 'u32[]', space=smem, size = 0x4, offset = 0x4, fixed_abs, tag = 'smem constant byte address 0x4 - core index']
  #allocation1 [shape = 'u32[144,128]{1,0:T(1,128)}', space=vmem, size = 0x12000, scoped, tag = 'internal scratch']
  %s0 = inlined_call_operand.vmem [shape: bf16[4,6,6,128], index: 0, kind: input, shape index: {}]
  %s1 = inlined_call_operand.vmem [shape: bf16[3,3,128,256], index: 1, kind: input, shape index: {}]
  %s2 = inlined_call_operand.vmem [shape: f32[1,256], index: 2, kind: input, shape index: {}]
  %s3 = inlined_call_operand.vmem [shape: bf16[4,4,4,256], index: 3, kind: output, shape index: {}]
  %s4 = sld [smem:[#allocation0]]
  $region45: #{_lambda_.14} parent=0
    _
  %s6 = ssub.s32 1, %s4
  %s7 = scalar_select 0, %s6, %s4
  loop: start=0, step=1, limit=6
  $region2: #{_lambda_.14} parent=0 // loop_pre_header
    _
  $region3: #{_lambda_.14} parent=0 // loop_header
    %s9 = sphi 0, %s13
    %p10 = scmp.ge.s32.totalorder %s9, 6
    %s19 = sphi 0, %s21
    %s22 = sphi 0, %s19
    %s23 = sphi 0, %s22
    %s39 = sphi 0, %s23
    %s43 = sphi 0, %s43
    %s45 = sphi 0, %s43
    %s46 = sphi 0, %s45
    %s60 = sphi 0, %s46
    %s64 = sphi 0, %s64
    %s66 = sphi 0, %s64
    %s67 = sphi 0, %s66
    %s81 = sphi 0, %s67
    %s87 = sphi 0, %s89
    %s90 = sphi 0, %s87
    %s91 = sphi 0, %s90
    %s107 = sphi 0, %s91
  $region4: #{_lambda_.14} parent=0 // loop_header_branch
    %12 = sbr.rel (%p10) target = $region8
  $region5: #{_lambda_.14} parent=0 // loop_body
    %s14 = ssub.s32 %s9, 1
    %s15 = ssub.s32 %s9, 2
    %s16 = sadd.s32 %s9, 1
    %s17 = ssub.s32 %s9, %s16
    %p18 = scmp.eq.s32.totalorder %s17, 0
    %s20 = sadd.s32 %s19, 1
    %s21 = scalar_select %p18, %s19, %s20
    %p24 = pneg %p18
    %p25 = scmp.eq.s32.totalorder %s9, 3
    %p26 = por %p24, %p25
    %p27 = scmp.ne.s32.totalorder %s19, %s22
    %p28 = scmp.eq.s32.totalorder %s9, 0
    %p29 = por %p27, %p28
    %p30 = scmp.ne.s32.totalorder %s19, %s22
    %p31 = scmp.eq.s32.totalorder %s14, 3
    %p32 = por %p30, %p31
    %p33 = scmp.ne.s32.totalorder %s22, %s23
    %p34 = scmp.eq.s32.totalorder %s14, 0
    %p35 = por %p33, %p34
    %p36 = scmp.ne.s32.totalorder %s22, %s23
    %p37 = scmp.eq.s32.totalorder %s15, 3
    %p38 = por %p36, %p37
    %p40 = scmp.ne.s32.totalorder %s23, %s39
    %p41 = scmp.eq.s32.totalorder %s15, 0
    %p42 = por %p40, %p41
    %s44 = sadd.s32 %s43, 1
    %p47 = scmp.eq.s32.totalorder %s9, 3
    %p48 = scmp.ne.s32.totalorder %s43, %s45
    %p49 = scmp.eq.s32.totalorder %s9, 0
    %p50 = por %p48, %p49
    %p51 = scmp.ne.s32.totalorder %s43, %s45
    %p52 = scmp.eq.s32.totalorder %s14, 3
    %p53 = por %p51, %p52
    %p54 = scmp.ne.s32.totalorder %s45, %s46
    %p55 = scmp.eq.s32.totalorder %s14, 0
    %p56 = por %p54, %p55
    %p57 = scmp.ne.s32.totalorder %s45, %s46
    %p58 = scmp.eq.s32.totalorder %s15, 3
    %p59 = por %p57, %p58
    %p61 = scmp.ne.s32.totalorder %s46, %s60
    %p62 = scmp.eq.s32.totalorder %s15, 0
    %p63 = por %p61, %p62
    %s65 = sadd.s32 %s64, 1
    %p68 = scmp.eq.s32.totalorder %s9, 3
    %p69 = scmp.ne.s32.totalorder %s64, %s66
    %p70 = scmp.eq.s32.totalorder %s9, 0
    %p71 = por %p69, %p70
    %p72 = scmp.ne.s32.totalorder %s64, %s66
    %p73 = scmp.eq.s32.totalorder %s14, 3
    %p74 = por %p72, %p73
    %p75 = scmp.ne.s32.totalorder %s66, %s67
    %p76 = scmp.eq.s32.totalorder %s14, 0
    %p77 = por %p75, %p76
    %p78 = scmp.ne.s32.totalorder %s66, %s67
    %p79 = scmp.eq.s32.totalorder %s15, 3
    %p80 = por %p78, %p79
    %p82 = scmp.ne.s32.totalorder %s67, %s81
    %p83 = scmp.eq.s32.totalorder %s15, 0
    %p84 = por %p82, %p83
    %s85 = ssub.s32 %s9, %s16
    %p86 = scmp.eq.s32.totalorder %s85, 0
    %s88 = sadd.s32 %s87, 1
    %s89 = scalar_select %p86, %s87, %s88
    %p92 = pneg %p86
    %p93 = scmp.eq.s32.totalorder %s9, 3
    %p94 = por %p92, %p93
    %p95 = scmp.ne.s32.totalorder %s87, %s90
    %p96 = scmp.eq.s32.totalorder %s9, 0
    %p97 = por %p95, %p96
    %p98 = scmp.ne.s32.totalorder %s87, %s90
    %p99 = scmp.eq.s32.totalorder %s14, 3
    %p100 = por %p98, %p99
    %p101 = scmp.ne.s32.totalorder %s90, %s91
    %p102 = scmp.eq.s32.totalorder %s14, 0
    %p103 = por %p101, %p102
    %p104 = scmp.ne.s32.totalorder %s90, %s91
    %p105 = scmp.eq.s32.totalorder %s15, 3
    %p106 = por %p104, %p105
    %p108 = scmp.ne.s32.totalorder %s91, %s107
    %p109 = scmp.eq.s32.totalorder %s15, 0
    %p110 = por %p108, %p109
    %p111 = scmp.le.s32.totalorder 1, %s9
    %p112 = scmp.lt.s32.totalorder %s9, 5
    %p113 = pnand %p111, %p112
    %p114 = pneg %p113
    // Predicated region
    $region9: #{_lambda_.14} parent=5 // pred_check
      _
    $region10: #{_lambda_.14} parent=5 // pred_check_branch
      %116 = sbr.rel (%p113) target = $region12
    $region11: #{_lambda_.14} parent=5 // pred_region
      %s117 = ssub.s32 %s9, 1
      // Predicated region
      $region13: #{_lambda_.14} parent=11 // pred_check
        %p118 = pneg %p56
      $region14: #{_lambda_.14} parent=11 // pred_check_branch
        %120 = sbr.rel (%p118) target = $region16
      $region15: #{_lambda_.14} parent=11 // pred_region
        _
      $region16: #{_lambda_.14} parent=11 // pred_fallthru
        _
      // Predicated region
      $region17: #{_lambda_.14} parent=11 // pred_check
        %p121 = pneg %p77
      $region18: #{_lambda_.14} parent=11 // pred_check_branch
        %123 = sbr.rel (%p121) target = $region20
      $region19: #{_lambda_.14} parent=11 // pred_region
        _
      $region20: #{_lambda_.14} parent=11 // pred_fallthru
        _
    $region12: #{_lambda_.14} parent=5 // pred_fallthru
      _
    %p124 = scmp.lt.s32.totalorder %s9, 4
    // Predicated region
    $region21: #{_lambda_.14} parent=5 // pred_check
      %p125 = pneg %p124
    $region22: #{_lambda_.14} parent=5 // pred_check_branch
      %127 = sbr.rel (%p125) target = $region24
    $region23: #{_lambda_.14} parent=5 // pred_region
      // Predicated region
      $region25: #{_lambda_.14} parent=23 // pred_check
        %p128 = pneg %p29
      $region26: #{_lambda_.14} parent=23 // pred_check_branch
        %130 = sbr.rel (%p128) target = $region28
      $region27: #{_lambda_.14} parent=23 // pred_region
        %p131 = scmp.lt.s32.totalorder %s9, 3
        %s132 = scalar_select %p131, %s9, 3
        %s133 = smul.addr %s132, 6
        %s134 = smul.addr %s133, 4
        %s135 = scalar_lea.vmem %s0, %s134
      $region28: #{_lambda_.14} parent=23 // pred_fallthru
        _
    $region24: #{_lambda_.14} parent=5 // pred_fallthru
      _
    %p136 = scmp.le.s32.totalorder 1, %s9
    %p137 = scmp.lt.s32.totalorder %s9, 5
    %p138 = pnand %p136, %p137
    %p139 = pneg %p138
    // Predicated region
    $region29: #{_lambda_.14} parent=5 // pred_check
      _
    $region30: #{_lambda_.14} parent=5 // pred_check_branch
      %141 = sbr.rel (%p138) target = $region32
    $region31: #{_lambda_.14} parent=5 // pred_region
      %s142 = ssub.s32 %s9, 1
      %p143 = scmp.lt.s32.totalorder %s14, 3
      %s144 = scalar_select %p143, %s14, 3
      %s145 = smul.addr %s144, 6
      %s146 = smul.addr %s145, 4
      %s147 = scalar_lea.vmem %s0, %s146
      %p148 = pneg %p35
      %p149 = pneg %p32
      %p150 = pneg %p56
      %p151 = pneg %p53
      %p152 = pneg %p77
      %p153 = pneg %p74
      %p154 = pneg %p103
      %p155 = pneg %p100
      %p156 = scmp.lt.s32.totalorder %s14, 3
      %s157 = scalar_select %p156, %s14, 3
      %s158 = smul.addr %s157, 8
      %s159 = smul.addr %s158, 2
      %s160 = scalar_lea.vmem %s3, %s159
      %p161 = scmp.lt.s32.totalorder %s14, 3
      %s162 = scalar_select %p161, %s14, 3
      %s163 = smul.addr %s162, 6
      %s164 = smul.addr %s163, 4
      %s165 = scalar_lea.vmem %s0, %s164
      %p166 = scmp.lt.s32.totalorder %s14, 3
      %s167 = scalar_select %p166, %s14, 3
      %s168 = smul.addr %s167, 8
      %s169 = smul.addr %s168, 2
      %s170 = scalar_lea.vmem %s3, %s169
      %v172 = vld [vmem:[%s165] sm:$0x7]
      %v173 = vld [vmem:[%s165 + $0x4] sm:$0x7]
      %v174 = vld [vmem:[%s165 + $0x8] sm:$0x7]
      %v175 = vld [vmem:[%s165 + $0xc] sm:$0x7]
      %v176 = vld [vmem:[%s165 + $0x10] sm:$0x7]
      %v177 = vld [vmem:[%s165 + $0x14] sm:$0x7]
      %v178 = vld [vmem:[%s1] sm:$0xff]
      %v179 = vld [vmem:[%s1 + $0x8] sm:$0xff]
      %v180 = vld [vmem:[%s1 + $0x10] sm:$0xff]
      %v181 = vld [vmem:[%s1 + $0x18] sm:$0xff]
      %v182 = vld [vmem:[%s1 + $0x20] sm:$0xff]
      %v183 = vld [vmem:[%s1 + $0x28] sm:$0xff]
      %v184 = vld [vmem:[%s1 + $0x30] sm:$0xff]
      %v185 = vld [vmem:[%s1 + $0x38] sm:$0xff]
      %v186 = vld [vmem:[%s1 + $0x40] sm:$0xff]
      %v187 = vld [vmem:[%s1 + $0x48] sm:$0xff]
      %v188 = vld [vmem:[%s1 + $0x50] sm:$0xff]
      %v189 = vld [vmem:[%s1 + $0x58] sm:$0xff]
      %v190 = vld [vmem:[%s1 + $0x60] sm:$0xff]
      %v191 = vld [vmem:[%s1 + $0x68] sm:$0xff]
      %v192 = vld [vmem:[%s1 + $0x70] sm:$0xff]
      %v193 = vld [vmem:[%s1 + $0x78] sm:$0xff]
      %v199 = vunpack.c.l.s4 1983009808
      %v200 = vunpack.c.0.s8 %v199
      %v201 = vlaneseq
      %v202 = vshrl.u32 %v201, 7
      %v203 = vsub.s32 %v200, %v202
      %v204 = vrot.slane %v172, %v203
      %v205 = vcombine.high %v204, %v204
      %v207 = vunpack.c.l.s4 1983009808
      %v208 = vunpack.c.0.s8 %v207
      %v209 = vlaneseq
      %v210 = vshrl.u32 %v209, 7
      %v211 = vsub.s32 %v208, %v210
      %v212 = vrot.slane %v173, %v211
      %v213 = vcombine.high %v212, %v212
      %v215 = vunpack.c.l.s4 1983009808
      %v216 = vunpack.c.0.s8 %v215
      %v217 = vlaneseq
      %v218 = vshrl.u32 %v217, 7
      %v219 = vsub.s32 %v216, %v218
      %v220 = vrot.slane %v174, %v219
      %v221 = vcombine.high %v220, %v220
      %v223 = vunpack.c.l.s4 1983009808
      %v224 = vunpack.c.0.s8 %v223
      %v225 = vlaneseq
      %v226 = vshrl.u32 %v225, 7
      %v227 = vsub.s32 %v224, %v226
      %v228 = vrot.slane %v175, %v227
      %v229 = vcombine.high %v228, %v228
      %vm230 = vsmask.f32 1280
      %vm231 = vsmask.f32 3336
      %vm232 = vmor %vm230, %vm231
      %vm233 = vsmask.f32 5392
      %vm234 = vmor %vm232, %vm233
      %vm235 = vsmask.f32 7448
      %vm236 = vmor %vm234, %vm235
      %v238 = vshrl.u32 %v204, 16
      %v240 = vrot.slane %v238, 6
      %v241 = vshll.u32 %v204, 16
      %v243 = vrot.slane %v241, 7
      %v244 = vor.u32 %v240, %v243
      %v245 = vrot.slane %v244, 2
      %v247 = vshll.u32 %v205, 16
      %v249 = vrot.slane %v247, 7
      %v250 = vsel %vm236, %v245, %v249
      %v252 = vshrl.u32 %v212, 16
      %v254 = vrot.slane %v252, 6
      %v255 = vshll.u32 %v212, 16
      %v257 = vrot.slane %v255, 7
      %v258 = vor.u32 %v254, %v257
      %v259 = vrot.slane %v258, 2
      %v261 = vshll.u32 %v213, 16
      %v263 = vrot.slane %v261, 7
      %v264 = vsel %vm236, %v259, %v263
      %v266 = vshrl.u32 %v220, 16
      %v268 = vrot.slane %v266, 6
      %v269 = vshll.u32 %v220, 16
      %v271 = vrot.slane %v269, 7
      %v272 = vor.u32 %v268, %v271
      %v273 = vrot.slane %v272, 2
      %v275 = vshll.u32 %v221, 16
      %v277 = vrot.slane %v275, 7
      %v278 = vsel %vm236, %v273, %v277
      %v280 = vshrl.u32 %v228, 16
      %v282 = vrot.slane %v280, 6
      %v283 = vshll.u32 %v228, 16
      %v285 = vrot.slane %v283, 7
      %v286 = vor.u32 %v282, %v285
      %v287 = vrot.slane %v286, 2
      %v289 = vshll.u32 %v229, 16
      %v291 = vrot.slane %v289, 7
      %v292 = vsel %vm236, %v287, %v291
      %s293 = scalar_lea.vmem %s1, 128
      %v294 = vld [vmem:[%s293] sm:$0xff]
      %v295 = vld [vmem:[%s293 + $0x8] sm:$0xff]
      %v296 = vld [vmem:[%s293 + $0x10] sm:$0xff]
      %v297 = vld [vmem:[%s293 + $0x18] sm:$0xff]
      %v298 = vld [vmem:[%s293 + $0x20] sm:$0xff]
      %v299 = vld [vmem:[%s293 + $0x28] sm:$0xff]
      %v300 = vld [vmem:[%s293 + $0x30] sm:$0xff]
      %v301 = vld [vmem:[%s293 + $0x38] sm:$0xff]
      %v302 = vld [vmem:[%s293 + $0x40] sm:$0xff]
      %v303 = vld [vmem:[%s293 + $0x48] sm:$0xff]
      %v304 = vld [vmem:[%s293 + $0x50] sm:$0xff]
      %v305 = vld [vmem:[%s293 + $0x58] sm:$0xff]
      %v306 = vld [vmem:[%s293 + $0x60] sm:$0xff]
      %v307 = vld [vmem:[%s293 + $0x68] sm:$0xff]
      %v308 = vld [vmem:[%s293 + $0x70] sm:$0xff]
      %v309 = vld [vmem:[%s293 + $0x78] sm:$0xff]
      %v310 = vcombine.low %v250, %v264
      %v311 = vcombine.low %v278, %v292
      %v313 = vunpack.c.l.s4 1983009808
      %v314 = vunpack.c.0.s8 %v313
      %v315 = vlaneseq
      %v316 = vshrl.u32 %v315, 7
      %v317 = vsub.s32 %v314, %v316
      %v318 = vrot.slane %v310, %v317
      %v320 = vunpack.c.l.s4 1983009808
      %v321 = vunpack.c.0.s8 %v320
      %v322 = vlaneseq
      %v323 = vshrl.u32 %v322, 7
      %v324 = vsub.s32 %v321, %v323
      %v325 = vrot.slane %v311, %v324
      %v326 = vcombine.low %v318, %v325
      %v344 = vunpack.c.l.b16 %v294
      %v345 = vunpack.c.h.b16 %v294
      %v346 = vunpack.c.l.b16 %v295
      %v347 = vunpack.c.h.b16 %v295
      %v348 = vunpack.c.l.b16 %v296
      %v349 = vunpack.c.h.b16 %v296
      %v350 = vunpack.c.l.b16 %v297
      %v351 = vunpack.c.h.b16 %v297
      %v352 = vunpack.c.l.b16 %v298
      %v353 = vunpack.c.h.b16 %v298
      %v354 = vunpack.c.l.b16 %v299
      %v355 = vunpack.c.h.b16 %v299
      %v356 = vunpack.c.l.b16 %v300
      %v357 = vunpack.c.h.b16 %v300
      %v358 = vunpack.c.l.b16 %v301
      %v359 = vunpack.c.h.b16 %v301
      %v360 = vunpack.c.l.b16 %v302
      %v361 = vunpack.c.h.b16 %v302
      %v362 = vunpack.c.l.b16 %v303
      %v363 = vunpack.c.h.b16 %v303
      %v364 = vunpack.c.l.b16 %v304
      %v365 = vunpack.c.h.b16 %v304
      %v366 = vunpack.c.l.b16 %v305
      %v367 = vunpack.c.h.b16 %v305
      %v368 = vunpack.c.l.b16 %v306
      %v369 = vunpack.c.h.b16 %v306
      %v370 = vunpack.c.l.b16 %v307
      %v371 = vunpack.c.h.b16 %v307
      %v372 = vunpack.c.l.b16 %v308
      %v373 = vunpack.c.h.b16 %v308
      %v374 = vunpack.c.l.b16 %v309
      %v375 = vunpack.c.h.b16 %v309
      %v376 = vpack.c.b16 %v346, %v344
      %v377 = vpack.c.b16 %v347, %v345
      %v378 = vpack.c.b16 %v350, %v348
      %v379 = vpack.c.b16 %v351, %v349
      %v380 = vpack.c.b16 %v354, %v352
      %v381 = vpack.c.b16 %v355, %v353
      %v382 = vpack.c.b16 %v358, %v356
      %v383 = vpack.c.b16 %v359, %v357
      %v384 = vpack.c.b16 %v362, %v360
      %v385 = vpack.c.b16 %v363, %v361
      %v386 = vpack.c.b16 %v366, %v364
      %v387 = vpack.c.b16 %v367, %v365
      %v388 = vpack.c.b16 %v370, %v368
      %v389 = vpack.c.b16 %v371, %v369
      %v390 = vpack.c.b16 %v374, %v372
      %v391 = vpack.c.b16 %v375, %v373
      %408 = vmatprep.subr.bf16.mxu0 %v377
      %409 = vmatpush1.bf16.msra.mxu0 %v376
      %410 = vmatprep.subr.bf16.mxu0 %v379
      %411 = vmatpush1.bf16.msra.mxu0 %v378
      %412 = vmatprep.subr.bf16.mxu0 %v381
      %413 = vmatpush1.bf16.msra.mxu0 %v380
      %414 = vmatprep.subr.bf16.mxu0 %v383
      %415 = vmatpush1.bf16.msra.mxu0 %v382
      %416 = vmatprep.subr.bf16.mxu0 %v385
      %417 = vmatpush1.bf16.msra.mxu0 %v384
      %418 = vmatprep.subr.bf16.mxu0 %v387
      %419 = vmatpush1.bf16.msra.mxu0 %v386
      %420 = vmatprep.subr.bf16.mxu0 %v389
      %421 = vmatpush1.bf16.msra.mxu0 %v388
      %422 = vmatprep.subr.bf16.mxu0 %v391
      %423 = vmatpush1.bf16.msra.mxu0 %v390
      %424 = vmatprep.subr.bf16.mxu0 0
      %425 = vmatpush1.bf16.msra.mxu0 0
      %426 = vmatprep.subr.bf16.mxu0 0
      %427 = vmatpush1.bf16.msra.mxu0 0
      %428 = vmatprep.subr.bf16.mxu0 0
      %429 = vmatpush1.bf16.msra.mxu0 0
      %430 = vmatprep.subr.bf16.mxu0 0
      %431 = vmatpush1.bf16.msra.mxu0 0
      %432 = vmatprep.subr.bf16.mxu0 0
      %433 = vmatpush1.bf16.msra.mxu0 0
      %434 = vmatprep.subr.bf16.mxu0 0
      %435 = vmatpush1.bf16.msra.mxu0 0
      %436 = vmatprep.subr.bf16.mxu0 0
      %437 = vmatpush1.bf16.msra.mxu0 0
      %438 = vmatprep.subr.bf16.mxu0 0
      %439 = vmatpush1.bf16.msra.mxu0 0
      %440 = vmatprep.mubr.bf16.mxu0 0
      %441 = vmatmul.mubr.bf16.gmra.mrb[0].mxu0 %v326
      %v442 = vpop.f32.mrb[0].mxu0
      %v443 = vadd.f32 0.0, %v442
      %v444 = vpop.f32.mrb[0].mxu0
      %v445 = vadd.f32 0.0, %v444
      %v446 = vpop.f32.mrb[0].mxu0
      %v447 = vadd.f32 0.0, %v446
      %v448 = vpop.f32.mrb[0].mxu0
      %v449 = vadd.f32 0.0, %v448
      %450 = vdwg.mxu0
      %v451 = vcombine.low %v172, %v173
      %v452 = vcombine.low %v174, %v175
      %v454 = vunpack.c.l.s4 1983009808
      %v455 = vunpack.c.0.s8 %v454
      %v456 = vlaneseq
      %v457 = vshrl.u32 %v456, 7
      %v458 = vsub.s32 %v455, %v457
      %v459 = vrot.slane %v451, %v458
      %v461 = vunpack.c.l.s4 1983009808
      %v462 = vunpack.c.0.s8 %v461
      %v463 = vlaneseq
      %v464 = vshrl.u32 %v463, 7
      %v465 = vsub.s32 %v462, %v464
      %v466 = vrot.slane %v452, %v465
      %v467 = vcombine.low %v459, %v466
      %v485 = vunpack.c.l.b16 %v178
      %v486 = vunpack.c.h.b16 %v178
      %v487 = vunpack.c.l.b16 %v179
      %v488 = vunpack.c.h.b16 %v179
      %v489 = vunpack.c.l.b16 %v180
      %v490 = vunpack.c.h.b16 %v180
      %v491 = vunpack.c.l.b16 %v181
      %v492 = vunpack.c.h.b16 %v181
      %v493 = vunpack.c.l.b16 %v182
      %v494 = vunpack.c.h.b16 %v182
      %v495 = vunpack.c.l.b16 %v183
      %v496 = vunpack.c.h.b16 %v183
      %v497 = vunpack.c.l.b16 %v184
      %v498 = vunpack.c.h.b16 %v184
      %v499 = vunpack.c.l.b16 %v185
      %v500 = vunpack.c.h.b16 %v185
      %v501 = vunpack.c.l.b16 %v186
      %v502 = vunpack.c.h.b16 %v186
      %v503 = vunpack.c.l.b16 %v187
      %v504 = vunpack.c.h.b16 %v187
      %v505 = vunpack.c.l.b16 %v188
      %v506 = vunpack.c.h.b16 %v188
      %v507 = vunpack.c.l.b16 %v189
      %v508 = vunpack.c.h.b16 %v189
      %v509 = vunpack.c.l.b16 %v190
      %v510 = vunpack.c.h.b16 %v190
      %v511 = vunpack.c.l.b16 %v191
      %v512 = vunpack.c.h.b16 %v191
      %v513 = vunpack.c.l.b16 %v192
      %v514 = vunpack.c.h.b16 %v192
      %v515 = vunpack.c.l.b16 %v193
      %v516 = vunpack.c.h.b16 %v193
      %v517 = vpack.c.b16 %v487, %v485
      %v518 = vpack.c.b16 %v488, %v486
      %v519 = vpack.c.b16 %v491, %v489
      %v520 = vpack.c.b16 %v492, %v490
      %v521 = vpack.c.b16 %v495, %v493
      %v522 = vpack.c.b16 %v496, %v494
      %v523 = vpack.c.b16 %v499, %v497
      %v524 = vpack.c.b16 %v500, %v498
      %v525 = vpack.c.b16 %v503, %v501
      %v526 = vpack.c.b16 %v504, %v502
      %v527 = vpack.c.b16 %v507, %v505
      %v528 = vpack.c.b16 %v508, %v506
      %v529 = vpack.c.b16 %v511, %v509
      %v530 = vpack.c.b16 %v512, %v510
      %v531 = vpack.c.b16 %v515, %v513
      %v532 = vpack.c.b16 %v516, %v514
      %549 = vmatprep.subr.bf16.mxu0 %v518
      %550 = vmatpush1.bf16.msra.mxu0 %v517
      %551 = vmatprep.subr.bf16.mxu0 %v520
      %552 = vmatpush1.bf16.msra.mxu0 %v519
      %553 = vmatprep.subr.bf16.mxu0 %v522
      %554 = vmatpush1.bf16.msra.mxu0 %v521
      %555 = vmatprep.subr.bf16.mxu0 %v524
      %556 = vmatpush1.bf16.msra.mxu0 %v523
      %557 = vmatprep.subr.bf16.mxu0 %v526
      %558 = vmatpush1.bf16.msra.mxu0 %v525
      %559 = vmatprep.subr.bf16.mxu0 %v528
      %560 = vmatpush1.bf16.msra.mxu0 %v527
      %561 = vmatprep.subr.bf16.mxu0 %v530
      %562 = vmatpush1.bf16.msra.mxu0 %v529
      %563 = vmatprep.subr.bf16.mxu0 %v532
      %564 = vmatpush1.bf16.msra.mxu0 %v531
      %565 = vmatprep.subr.bf16.mxu0 0
      %566 = vmatpush1.bf16.msra.mxu0 0
      %567 = vmatprep.subr.bf16.mxu0 0
      %568 = vmatpush1.bf16.msra.mxu0 0
      %569 = vmatprep.subr.bf16.mxu0 0
      %570 = vmatpush1.bf16.msra.mxu0 0
      %571 = vmatprep.subr.bf16.mxu0 0
      %572 = vmatpush1.bf16.msra.mxu0 0
      %573 = vmatprep.subr.bf16.mxu0 0
      %574 = vmatpush1.bf16.msra.mxu0 0
      %575 = vmatprep.subr.bf16.mxu0 0
      %576 = vmatpush1.bf16.msra.mxu0 0
      %577 = vmatprep.subr.bf16.mxu0 0
      %578 = vmatpush1.bf16.msra.mxu0 0
      %579 = vmatprep.subr.bf16.mxu0 0
      %580 = vmatpush1.bf16.msra.mxu0 0
      %581 = vmatprep.mubr.bf16.mxu0 0
      %582 = vmatmul.mubr.bf16.gmra.mrb[0].mxu0 %v467
      %v583 = vpop.f32.mrb[0].mxu0
      %v584 = vadd.f32 %v443, %v583
      %v585 = vpop.f32.mrb[0].mxu0
      %v586 = vadd.f32 %v445, %v585
      %v587 = vpop.f32.mrb[0].mxu0
      %v588 = vadd.f32 %v447, %v587
      %v589 = vpop.f32.mrb[0].mxu0
      %v590 = vadd.f32 %v449, %v589
      %591 = vdwg.mxu0
      %vm592 = vcmask 1040384
      %vm593 = vcmask 1042434
      %vm594 = vmor %vm592, %vm593
      %vm595 = vcmask 1044484
      %vm596 = vmor %vm594, %vm595
      %vm597 = vcmask 1046534
      %vm598 = vmor %vm596, %vm597
      %v599 = vrot.slane %v204, 7
      %v600 = vrot.slane %v599, 2
      %v601 = vrot.slane %v205, 7
      %v602 = vsel %vm598, %v600, %v601
      %v603 = vrot.slane %v212, 7
      %v604 = vrot.slane %v603, 2
      %v605 = vrot.slane %v213, 7
      %v606 = vsel %vm598, %v604, %v605
      %v607 = vrot.slane %v220, 7
      %v608 = vrot.slane %v607, 2
      %v609 = vrot.slane %v221, 7
      %v610 = vsel %vm598, %v608, %v609
      %v611 = vrot.slane %v228, 7
      %v612 = vrot.slane %v611, 2
      %v613 = vrot.slane %v229, 7
      %v614 = vsel %vm598, %v612, %v613
      %s615 = scalar_lea.vmem %s1, 256
      %v616 = vld [vmem:[%s615] sm:$0xff]
      %v617 = vld [vmem:[%s615 + $0x8] sm:$0xff]
      %v618 = vld [vmem:[%s615 + $0x10] sm:$0xff]
      %v619 = vld [vmem:[%s615 + $0x18] sm:$0xff]
      %v620 = vld [vmem:[%s615 + $0x20] sm:$0xff]
      %v621 = vld [vmem:[%s615 + $0x28] sm:$0xff]
      %v622 = vld [vmem:[%s615 + $0x30] sm:$0xff]
      %v623 = vld [vmem:[%s615 + $0x38] sm:$0xff]
      %v624 = vld [vmem:[%s615 + $0x40] sm:$0xff]
      %v625 = vld [vmem:[%s615 + $0x48] sm:$0xff]
      %v626 = vld [vmem:[%s615 + $0x50] sm:$0xff]
      %v627 = vld [vmem:[%s615 + $0x58] sm:$0xff]
      %v628 = vld [vmem:[%s615 + $0x60] sm:$0xff]
      %v629 = vld [vmem:[%s615 + $0x68] sm:$0xff]
      %v630 = vld [vmem:[%s615 + $0x70] sm:$0xff]
      %v631 = vld [vmem:[%s615 + $0x78] sm:$0xff]
      %v632 = vcombine.low %v602, %v606
      %v633 = vcombine.low %v610, %v614
      %v635 = vunpack.c.l.s4 1983009808
      %v636 = vunpack.c.0.s8 %v635
      %v637 = vlaneseq
      %v638 = vshrl.u32 %v637, 7
      %v639 = vsub.s32 %v636, %v638
      %v640 = vrot.slane %v632, %v639
      %v642 = vunpack.c.l.s4 1983009808
      %v643 = vunpack.c.0.s8 %v642
      %v644 = vlaneseq
      %v645 = vshrl.u32 %v644, 7
      %v646 = vsub.s32 %v643, %v645
      %v647 = vrot.slane %v633, %v646
      %v648 = vcombine.low %v640, %v647
      %v666 = vunpack.c.l.b16 %v616
      %v667 = vunpack.c.h.b16 %v616
      %v668 = vunpack.c.l.b16 %v617
      %v669 = vunpack.c.h.b16 %v617
      %v670 = vunpack.c.l.b16 %v618
      %v671 = vunpack.c.h.b16 %v618
      %v672 = vunpack.c.l.b16 %v619
      %v673 = vunpack.c.h.b16 %v619
      %v674 = vunpack.c.l.b16 %v620
      %v675 = vunpack.c.h.b16 %v620
      %v676 = vunpack.c.l.b16 %v621
      %v677 = vunpack.c.h.b16 %v621
      %v678 = vunpack.c.l.b16 %v622
      %v679 = vunpack.c.h.b16 %v622
      %v680 = vunpack.c.l.b16 %v623
      %v681 = vunpack.c.h.b16 %v623
      %v682 = vunpack.c.l.b16 %v624
      %v683 = vunpack.c.h.b16 %v624
      %v684 = vunpack.c.l.b16 %v625
      %v685 = vunpack.c.h.b16 %v625
      %v686 = vunpack.c.l.b16 %v626
      %v687 = vunpack.c.h.b16 %v626
      %v688 = vunpack.c.l.b16 %v627
      %v689 = vunpack.c.h.b16 %v627
      %v690 = vunpack.c.l.b16 %v628
      %v691 = vunpack.c.h.b16 %v628
      %v692 = vunpack.c.l.b16 %v629
      %v693 = vunpack.c.h.b16 %v629
      %v694 = vunpack.c.l.b16 %v630
      %v695 = vunpack.c.h.b16 %v630
      %v696 = vunpack.c.l.b16 %v631
      %v697 = vunpack.c.h.b16 %v631
      %v698 = vpack.c.b16 %v668, %v666
      %v699 = vpack.c.b16 %v669, %v667
      %v700 = vpack.c.b16 %v672, %v670
      %v701 = vpack.c.b16 %v673, %v671
      %v702 = vpack.c.b16 %v676, %v674
      %v703 = vpack.c.b16 %v677, %v675
      %v704 = vpack.c.b16 %v680, %v678
      %v705 = vpack.c.b16 %v681, %v679
      %v706 = vpack.c.b16 %v684, %v682
      %v707 = vpack.c.b16 %v685, %v683
      %v708 = vpack.c.b16 %v688, %v686
      %v709 = vpack.c.b16 %v689, %v687
      %v710 = vpack.c.b16 %v692, %v690
      %v711 = vpack.c.b16 %v693, %v691
      %v712 = vpack.c.b16 %v696, %v694
      %v713 = vpack.c.b16 %v697, %v695
      %730 = vmatprep.subr.bf16.mxu0 %v699
      %731 = vmatpush1.bf16.msra.mxu0 %v698
      %732 = vmatprep.subr.bf16.mxu0 %v701
      %733 = vmatpush1.bf16.msra.mxu0 %v700
      %734 = vmatprep.subr.bf16.mxu0 %v703
      %735 = vmatpush1.bf16.msra.mxu0 %v702
      %736 = vmatprep.subr.bf16.mxu0 %v705
      %737 = vmatpush1.bf16.msra.mxu0 %v704
      %738 = vmatprep.subr.bf16.mxu0 %v707
      %739 = vmatpush1.bf16.msra.mxu0 %v706
      %740 = vmatprep.subr.bf16.mxu0 %v709
      %741 = vmatpush1.bf16.msra.mxu0 %v708
      %742 = vmatprep.subr.bf16.mxu0 %v711
      %743 = vmatpush1.bf16.msra.mxu0 %v710
      %744 = vmatprep.subr.bf16.mxu0 %v713
      %745 = vmatpush1.bf16.msra.mxu0 %v712
      %746 = vmatprep.subr.bf16.mxu0 0
      %747 = vmatpush1.bf16.msra.mxu0 0
      %748 = vmatprep.subr.bf16.mxu0 0
      %749 = vmatpush1.bf16.msra.mxu0 0
      %750 = vmatprep.subr.bf16.mxu0 0
      %751 = vmatpush1.bf16.msra.mxu0 0
      %752 = vmatprep.subr.bf16.mxu0 0
      %753 = vmatpush1.bf16.msra.mxu0 0
      %754 = vmatprep.subr.bf16.mxu0 0
      %755 = vmatpush1.bf16.msra.mxu0 0
      %756 = vmatprep.subr.bf16.mxu0 0
      %757 = vmatpush1.bf16.msra.mxu0 0
      %758 = vmatprep.subr.bf16.mxu0 0
      %759 = vmatpush1.bf16.msra.mxu0 0
      %760 = vmatprep.subr.bf16.mxu0 0
      %761 = vmatpush1.bf16.msra.mxu0 0
      %762 = vmatprep.mubr.bf16.mxu0 0
      %763 = vmatmul.mubr.bf16.gmra.mrb[0].mxu0 %v648
      %v764 = vpop.f32.mrb[0].mxu0
      %v765 = vadd.f32 0.0, %v764
      %v766 = vpop.f32.mrb[0].mxu0
      %v767 = vadd.f32 0.0, %v766
      %v768 = vpop.f32.mrb[0].mxu0
      %v769 = vadd.f32 0.0, %v768
      %v770 = vpop.f32.mrb[0].mxu0
      %v771 = vadd.f32 0.0, %v770
      %772 = vdwg.mxu0
      %v773 = vadd.f32 %v584, %v765
      %v774 = vadd.f32 %v586, %v767
      %v775 = vadd.f32 %v588, %v769
      %v776 = vadd.f32 %v590, %v771
      %s777 = scalar_lea.vmem %s1, 384
      %v778 = vld [vmem:[%s777] sm:$0xff]
      %v779 = vld [vmem:[%s777 + $0x8] sm:$0xff]
      %v780 = vld [vmem:[%s777 + $0x10] sm:$0xff]
      %v781 = vld [vmem:[%s777 + $0x18] sm:$0xff]
      %v782 = vld [vmem:[%s777 + $0x20] sm:$0xff]
      %v783 = vld [vmem:[%s777 + $0x28] sm:$0xff]
      %v784 = vld [vmem:[%s777 + $0x30] sm:$0xff]
      %v785 = vld [vmem:[%s777 + $0x38] sm:$0xff]
      %v786 = vld [vmem:[%s777 + $0x40] sm:$0xff]
      %v787 = vld [vmem:[%s777 + $0x48] sm:$0xff]
      %v788 = vld [vmem:[%s777 + $0x50] sm:$0xff]
      %v789 = vld [vmem:[%s777 + $0x58] sm:$0xff]
      %v790 = vld [vmem:[%s777 + $0x60] sm:$0xff]
      %v791 = vld [vmem:[%s777 + $0x68] sm:$0xff]
      %v792 = vld [vmem:[%s777 + $0x70] sm:$0xff]
      %v793 = vld [vmem:[%s777 + $0x78] sm:$0xff]
      %v795 = vcombine.low %v173, %v174
      %v796 = vcombine.low %v175, %v176
      %v798 = vunpack.c.l.s4 1983009808
      %v799 = vunpack.c.0.s8 %v798
      %v800 = vlaneseq
      %v801 = vshrl.u32 %v800, 7
      %v802 = vsub.s32 %v799, %v801
      %v803 = vrot.slane %v795, %v802
      %v805 = vunpack.c.l.s4 1983009808
      %v806 = vunpack.c.0.s8 %v805
      %v807 = vlaneseq
      %v808 = vshrl.u32 %v807, 7
      %v809 = vsub.s32 %v806, %v808
      %v810 = vrot.slane %v796, %v809
      %v811 = vcombine.low %v803, %v810
      %v829 = vunpack.c.l.b16 %v778
      %v830 = vunpack.c.h.b16 %v778
      %v831 = vunpack.c.l.b16 %v779
      %v832 = vunpack.c.h.b16 %v779
      %v833 = vunpack.c.l.b16 %v780
      %v834 = vunpack.c.h.b16 %v780
      %v835 = vunpack.c.l.b16 %v781
      %v836 = vunpack.c.h.b16 %v781
      %v837 = vunpack.c.l.b16 %v782
      %v838 = vunpack.c.h.b16 %v782
      %v839 = vunpack.c.l.b16 %v783
      %v840 = vunpack.c.h.b16 %v783
      %v841 = vunpack.c.l.b16 %v784
      %v842 = vunpack.c.h.b16 %v784
      %v843 = vunpack.c.l.b16 %v785
      %v844 = vunpack.c.h.b16 %v785
      %v845 = vunpack.c.l.b16 %v786
      %v846 = vunpack.c.h.b16 %v786
      %v847 = vunpack.c.l.b16 %v787
      %v848 = vunpack.c.h.b16 %v787
      %v849 = vunpack.c.l.b16 %v788
      %v850 = vunpack.c.h.b16 %v788
      %v851 = vunpack.c.l.b16 %v789
      %v852 = vunpack.c.h.b16 %v789
      %v853 = vunpack.c.l.b16 %v790
      %v854 = vunpack.c.h.b16 %v790
      %v855 = vunpack.c.l.b16 %v791
      %v856 = vunpack.c.h.b16 %v791
      %v857 = vunpack.c.l.b16 %v792
      %v858 = vunpack.c.h.b16 %v792
      %v859 = vunpack.c.l.b16 %v793
      %v860 = vunpack.c.h.b16 %v793
      %v861 = vpack.c.b16 %v831, %v829
      %v862 = vpack.c.b16 %v832, %v830
      %v863 = vpack.c.b16 %v835, %v833
      %v864 = vpack.c.b16 %v836, %v834
      %v865 = vpack.c.b16 %v839, %v837
      %v866 = vpack.c.b16 %v840, %v838
      %v867 = vpack.c.b16 %v843, %v841
      %v868 = vpack.c.b16 %v844, %v842
      %v869 = vpack.c.b16 %v847, %v845
      %v870 = vpack.c.b16 %v848, %v846
      %v871 = vpack.c.b16 %v851, %v849
      %v872 = vpack.c.b16 %v852, %v850
      %v873 = vpack.c.b16 %v855, %v853
      %v874 = vpack.c.b16 %v856, %v854
      %v875 = vpack.c.b16 %v859, %v857
      %v876 = vpack.c.b16 %v860, %v858
      %893 = vmatprep.subr.bf16.mxu0 %v862
      %894 = vmatpush1.bf16.msra.mxu0 %v861
      %895 = vmatprep.subr.bf16.mxu0 %v864
      %896 = vmatpush1.bf16.msra.mxu0 %v863
      %897 = vmatprep.subr.bf16.mxu0 %v866
      %898 = vmatpush1.bf16.msra.mxu0 %v865
      %899 = vmatprep.subr.bf16.mxu0 %v868
      %900 = vmatpush1.bf16.msra.mxu0 %v867
      %901 = vmatprep.subr.bf16.mxu0 %v870
      %902 = vmatpush1.bf16.msra.mxu0 %v869
      %903 = vmatprep.subr.bf16.mxu0 %v872
      %904 = vmatpush1.bf16.msra.mxu0 %v871
      %905 = vmatprep.subr.bf16.mxu0 %v874
      %906 = vmatpush1.bf16.msra.mxu0 %v873
      %907 = vmatprep.subr.bf16.mxu0 %v876
      %908 = vmatpush1.bf16.msra.mxu0 %v875
      %909 = vmatprep.subr.bf16.mxu0 0
      %910 = vmatpush1.bf16.msra.mxu0 0
      %911 = vmatprep.subr.bf16.mxu0 0
      %912 = vmatpush1.bf16.msra.mxu0 0
      %913 = vmatprep.subr.bf16.mxu0 0
      %914 = vmatpush1.bf16.msra.mxu0 0
      %915 = vmatprep.subr.bf16.mxu0 0
      %916 = vmatpush1.bf16.msra.mxu0 0
      %917 = vmatprep.subr.bf16.mxu0 0
      %918 = vmatpush1.bf16.msra.mxu0 0
      %919 = vmatprep.subr.bf16.mxu0 0
      %920 = vmatpush1.bf16.msra.mxu0 0
      %921 = vmatprep.subr.bf16.mxu0 0
      %922 = vmatpush1.bf16.msra.mxu0 0
      %923 = vmatprep.subr.bf16.mxu0 0
      %924 = vmatpush1.bf16.msra.mxu0 0
      %925 = vmatprep.mubr.bf16.mxu0 0
      %926 = vmatmul.mubr.bf16.gmra.mrb[0].mxu0 %v811
      %v927 = vpop.f32.mrb[0].mxu0
      %v928 = vadd.f32 0.0, %v927
      %v929 = vpop.f32.mrb[0].mxu0
      %v930 = vadd.f32 0.0, %v929
      %v931 = vpop.f32.mrb[0].mxu0
      %v932 = vadd.f32 0.0, %v931
      %v933 = vpop.f32.mrb[0].mxu0
      %v934 = vadd.f32 0.0, %v933
      %935 = vdwg.mxu0
      %v936 = vadd.f32 %v773, %v928
      %v937 = vadd.f32 %v774, %v930
      %v938 = vadd.f32 %v775, %v932
      %v939 = vadd.f32 %v776, %v934
      %v941 = vunpack.c.l.s4 1983009808
      %v942 = vunpack.c.0.s8 %v941
      %v943 = vlaneseq
      %v944 = vshrl.u32 %v943, 7
      %v945 = vsub.s32 %v942, %v944
      %v946 = vrot.slane %v176, %v945
      %v947 = vcombine.high %v946, %v946
      %v949 = vshrl.u32 %v946, 16
      %v951 = vrot.slane %v949, 6
      %v952 = vshll.u32 %v946, 16
      %v954 = vrot.slane %v952, 7
      %v955 = vor.u32 %v951, %v954
      %v956 = vrot.slane %v955, 2
      %v958 = vshll.u32 %v947, 16
      %v960 = vrot.slane %v958, 7
      %v961 = vsel %vm236, %v956, %v960
      %s962 = scalar_lea.vmem %s1, 512
      %v963 = vld [vmem:[%s962] sm:$0xff]
      %v964 = vld [vmem:[%s962 + $0x8] sm:$0xff]
      %v965 = vld [vmem:[%s962 + $0x10] sm:$0xff]
      %v966 = vld [vmem:[%s962 + $0x18] sm:$0xff]
      %v967 = vld [vmem:[%s962 + $0x20] sm:$0xff]
      %v968 = vld [vmem:[%s962 + $0x28] sm:$0xff]
      %v969 = vld [vmem:[%s962 + $0x30] sm:$0xff]
      %v970 = vld [vmem:[%s962 + $0x38] sm:$0xff]
      %v971 = vld [vmem:[%s962 + $0x40] sm:$0xff]
      %v972 = vld [vmem:[%s962 + $0x48] sm:$0xff]
      %v973 = vld [vmem:[%s962 + $0x50] sm:$0xff]
      %v974 = vld [vmem:[%s962 + $0x58] sm:$0xff]
      %v975 = vld [vmem:[%s962 + $0x60] sm:$0xff]
      %v976 = vld [vmem:[%s962 + $0x68] sm:$0xff]
      %v977 = vld [vmem:[%s962 + $0x70] sm:$0xff]
      %v978 = vld [vmem:[%s962 + $0x78] sm:$0xff]
      %v979 = vcombine.low %v264, %v278
      %v980 = vcombine.low %v292, %v961
      %v982 = vunpack.c.l.s4 1983009808
      %v983 = vunpack.c.0.s8 %v982
      %v984 = vlaneseq
      %v985 = vshrl.u32 %v984, 7
      %v986 = vsub.s32 %v983, %v985
      %v987 = vrot.slane %v979, %v986
      %v989 = vunpack.c.l.s4 1983009808
      %v990 = vunpack.c.0.s8 %v989
      %v991 = vlaneseq
      %v992 = vshrl.u32 %v991, 7
      %v993 = vsub.s32 %v990, %v992
      %v994 = vrot.slane %v980, %v993
      %v995 = vcombine.low %v987, %v994
      %v1013 = vunpack.c.l.b16 %v963
      %v1014 = vunpack.c.h.b16 %v963
      %v1015 = vunpack.c.l.b16 %v964
      %v1016 = vunpack.c.h.b16 %v964
      %v1017 = vunpack.c.l.b16 %v965
      %v1018 = vunpack.c.h.b16 %v965
      %v1019 = vunpack.c.l.b16 %v966
      %v1020 = vunpack.c.h.b16 %v966
      %v1021 = vunpack.c.l.b16 %v967
      %v1022 = vunpack.c.h.b16 %v967
      %v1023 = vunpack.c.l.b16 %v968
      %v1024 = vunpack.c.h.b16 %v968
      %v1025 = vunpack.c.l.b16 %v969
      %v1026 = vunpack.c.h.b16 %v969
      %v1027 = vunpack.c.l.b16 %v970
      %v1028 = vunpack.c.h.b16 %v970
      %v1029 = vunpack.c.l.b16 %v971
      %v1030 = vunpack.c.h.b16 %v971
      %v1031 = vunpack.c.l.b16 %v972
      %v1032 = vunpack.c.h.b16 %v972
      %v1033 = vunpack.c.l.b16 %v973
      %v1034 = vunpack.c.h.b16 %v973
      %v1035 = vunpack.c.l.b16 %v974
      %v1036 = vunpack.c.h.b16 %v974
      %v1037 = vunpack.c.l.b16 %v975
      %v1038 = vunpack.c.h.b16 %v975
      %v1039 = vunpack.c.l.b16 %v976
      %v1040 = vunpack.c.h.b16 %v976
      %v1041 = vunpack.c.l.b16 %v977
      %v1042 = vunpack.c.h.b16 %v977
      %v1043 = vunpack.c.l.b16 %v978
      %v1044 = vunpack.c.h.b16 %v978
      %v1045 = vpack.c.b16 %v1015, %v1013
      %v1046 = vpack.c.b16 %v1016, %v1014
      %v1047 = vpack.c.b16 %v1019, %v1017
      %v1048 = vpack.c.b16 %v1020, %v1018
      %v1049 = vpack.c.b16 %v1023, %v1021
      %v1050 = vpack.c.b16 %v1024, %v1022
      %v1051 = vpack.c.b16 %v1027, %v1025
      %v1052 = vpack.c.b16 %v1028, %v1026
      %v1053 = vpack.c.b16 %v1031, %v1029
      %v1054 = vpack.c.b16 %v1032, %v1030
      %v1055 = vpack.c.b16 %v1035, %v1033
      %v1056 = vpack.c.b16 %v1036, %v1034
      %v1057 = vpack.c.b16 %v1039, %v1037
      %v1058 = vpack.c.b16 %v1040, %v1038
      %v1059 = vpack.c.b16 %v1043, %v1041
      %v1060 = vpack.c.b16 %v1044, %v1042
      %1077 = vmatprep.subr.bf16.mxu0 %v1046
      %1078 = vmatpush1.bf16.msra.mxu0 %v1045
      %1079 = vmatprep.subr.bf16.mxu0 %v1048
      %1080 = vmatpush1.bf16.msra.mxu0 %v1047
      %1081 = vmatprep.subr.bf16.mxu0 %v1050
      %1082 = vmatpush1.bf16.msra.mxu0 %v1049
      %1083 = vmatprep.subr.bf16.mxu0 %v1052
      %1084 = vmatpush1.bf16.msra.mxu0 %v1051
      %1085 = vmatprep.subr.bf16.mxu0 %v1054
      %1086 = vmatpush1.bf16.msra.mxu0 %v1053
      %1087 = vmatprep.subr.bf16.mxu0 %v1056
      %1088 = vmatpush1.bf16.msra.mxu0 %v1055
      %1089 = vmatprep.subr.bf16.mxu0 %v1058
      %1090 = vmatpush1.bf16.msra.mxu0 %v1057
      %1091 = vmatprep.subr.bf16.mxu0 %v1060
      %1092 = vmatpush1.bf16.msra.mxu0 %v1059
      %1093 = vmatprep.subr.bf16.mxu0 0
      %1094 = vmatpush1.bf16.msra.mxu0 0
      %1095 = vmatprep.subr.bf16.mxu0 0
      %1096 = vmatpush1.bf16.msra.mxu0 0
      %1097 = vmatprep.subr.bf16.mxu0 0
      %1098 = vmatpush1.bf16.msra.mxu0 0
      %1099 = vmatprep.subr.bf16.mxu0 0
      %1100 = vmatpush1.bf16.msra.mxu0 0
      %1101 = vmatprep.subr.bf16.mxu0 0
      %1102 = vmatpush1.bf16.msra.mxu0 0
      %1103 = vmatprep.subr.bf16.mxu0 0
      %1104 = vmatpush1.bf16.msra.mxu0 0
      %1105 = vmatprep.subr.bf16.mxu0 0
      %1106 = vmatpush1.bf16.msra.mxu0 0
      %1107 = vmatprep.subr.bf16.mxu0 0
      %1108 = vmatpush1.bf16.msra.mxu0 0
      %1109 = vmatprep.mubr.bf16.mxu0 0
      %1110 = vmatmul.mubr.bf16.gmra.mrb[0].mxu0 %v995
      %v1111 = vpop.f32.mrb[0].mxu0
      %v1112 = vadd.f32 0.0, %v1111
      %v1113 = vpop.f32.mrb[0].mxu0
      %v1114 = vadd.f32 0.0, %v1113
      %v1115 = vpop.f32.mrb[0].mxu0
      %v1116 = vadd.f32 0.0, %v1115
      %v1117 = vpop.f32.mrb[0].mxu0
      %v1118 = vadd.f32 0.0, %v1117
      %1119 = vdwg.mxu0
      %v1120 = vadd.f32 %v936, %v1112
      %v1121 = vadd.f32 %v937, %v1114
      %v1122 = vadd.f32 %v938, %v1116
      %v1123 = vadd.f32 %v939, %v1118
      %v1124 = vrot.slane %v946, 7
      %v1125 = vrot.slane %v1124, 2
      %v1126 = vrot.slane %v947, 7
      %v1127 = vsel %vm598, %v1125, %v1126
      %s1128 = scalar_lea.vmem %s1, 640
      %v1129 = vld [vmem:[%s1128] sm:$0xff]
      %v1130 = vld [vmem:[%s1128 + $0x8] sm:$0xff]
      %v1131 = vld [vmem:[%s1128 + $0x10] sm:$0xff]
      %v1132 = vld [vmem:[%s1128 + $0x18] sm:$0xff]
      %v1133 = vld [vmem:[%s1128 + $0x20] sm:$0xff]
      %v1134 = vld [vmem:[%s1128 + $0x28] sm:$0xff]
      %v1135 = vld [vmem:[%s1128 + $0x30] sm:$0xff]
      %v1136 = vld [vmem:[%s1128 + $0x38] sm:$0xff]
      %v1137 = vld [vmem:[%s1128 + $0x40] sm:$0xff]
      %v1138 = vld [vmem:[%s1128 + $0x48] sm:$0xff]
      %v1139 = vld [vmem:[%s1128 + $0x50] sm:$0xff]
      %v1140 = vld [vmem:[%s1128 + $0x58] sm:$0xff]
      %v1141 = vld [vmem:[%s1128 + $0x60] sm:$0xff]
      %v1142 = vld [vmem:[%s1128 + $0x68] sm:$0xff]
      %v1143 = vld [vmem:[%s1128 + $0x70] sm:$0xff]
      %v1144 = vld [vmem:[%s1128 + $0x78] sm:$0xff]
      %v1145 = vcombine.low %v606, %v610
      %v1146 = vcombine.low %v614, %v1127
      %v1148 = vunpack.c.l.s4 1983009808
      %v1149 = vunpack.c.0.s8 %v1148
      %v1150 = vlaneseq
      %v1151 = vshrl.u32 %v1150, 7
      %v1152 = vsub.s32 %v1149, %v1151
      %v1153 = vrot.slane %v1145, %v1152
      %v1155 = vunpack.c.l.s4 1983009808
      %v1156 = vunpack.c.0.s8 %v1155
      %v1157 = vlaneseq
      %v1158 = vshrl.u32 %v1157, 7
      %v1159 = vsub.s32 %v1156, %v1158
      %v1160 = vrot.slane %v1146, %v1159
      %v1161 = vcombine.low %v1153, %v1160
      %v1179 = vunpack.c.l.b16 %v1129
      %v1180 = vunpack.c.h.b16 %v1129
      %v1181 = vunpack.c.l.b16 %v1130
      %v1182 = vunpack.c.h.b16 %v1130
      %v1183 = vunpack.c.l.b16 %v1131
      %v1184 = vunpack.c.h.b16 %v1131
      %v1185 = vunpack.c.l.b16 %v1132
      %v1186 = vunpack.c.h.b16 %v1132
      %v1187 = vunpack.c.l.b16 %v1133
      %v1188 = vunpack.c.h.b16 %v1133
      %v1189 = vunpack.c.l.b16 %v1134
      %v1190 = vunpack.c.h.b16 %v1134
      %v1191 = vunpack.c.l.b16 %v1135
      %v1192 = vunpack.c.h.b16 %v1135
      %v1193 = vunpack.c.l.b16 %v1136
      %v1194 = vunpack.c.h.b16 %v1136
      %v1195 = vunpack.c.l.b16 %v1137
      %v1196 = vunpack.c.h.b16 %v1137
      %v1197 = vunpack.c.l.b16 %v1138
      %v1198 = vunpack.c.h.b16 %v1138
      %v1199 = vunpack.c.l.b16 %v1139
      %v1200 = vunpack.c.h.b16 %v1139
      %v1201 = vunpack.c.l.b16 %v1140
      %v1202 = vunpack.c.h.b16 %v1140
      %v1203 = vunpack.c.l.b16 %v1141
      %v1204 = vunpack.c.h.b16 %v1141
      %v1205 = vunpack.c.l.b16 %v1142
      %v1206 = vunpack.c.h.b16 %v1142
      %v1207 = vunpack.c.l.b16 %v1143
      %v1208 = vunpack.c.h.b16 %v1143
      %v1209 = vunpack.c.l.b16 %v1144
      %v1210 = vunpack.c.h.b16 %v1144
      %v1211 = vpack.c.b16 %v1181, %v1179
      %v1212 = vpack.c.b16 %v1182, %v1180
      %v1213 = vpack.c.b16 %v1185, %v1183
      %v1214 = vpack.c.b16 %v1186, %v1184
      %v1215 = vpack.c.b16 %v1189, %v1187
      %v1216 = vpack.c.b16 %v1190, %v1188
      %v1217 = vpack.c.b16 %v1193, %v1191
      %v1218 = vpack.c.b16 %v1194, %v1192
      %v1219 = vpack.c.b16 %v1197, %v1195
      %v1220 = vpack.c.b16 %v1198, %v1196
      %v1221 = vpack.c.b16 %v1201, %v1199
      %v1222 = vpack.c.b16 %v1202, %v1200
      %v1223 = vpack.c.b16 %v1205, %v1203
      %v1224 = vpack.c.b16 %v1206, %v1204
      %v1225 = vpack.c.b16 %v1209, %v1207
      %v1226 = vpack.c.b16 %v1210, %v1208
      %1243 = vmatprep.subr.bf16.mxu0 %v1212
      %1244 = vmatpush1.bf16.msra.mxu0 %v1211
      %1245 = vmatprep.subr.bf16.mxu0 %v1214
      %1246 = vmatpush1.bf16.msra.mxu0 %v1213
      %1247 = vmatprep.subr.bf16.mxu0 %v1216
      %1248 = vmatpush1.bf16.msra.mxu0 %v1215
      %1249 = vmatprep.subr.bf16.mxu0 %v1218
      %1250 = vmatpush1.bf16.msra.mxu0 %v1217
      %1251 = vmatprep.subr.bf16.mxu0 %v1220
      %1252 = vmatpush1.bf16.msra.mxu0 %v1219
      %1253 = vmatprep.subr.bf16.mxu0 %v1222
      %1254 = vmatpush1.bf16.msra.mxu0 %v1221
      %1255 = vmatprep.subr.bf16.mxu0 %v1224
      %1256 = vmatpush1.bf16.msra.mxu0 %v1223
      %1257 = vmatprep.subr.bf16.mxu0 %v1226
      %1258 = vmatpush1.bf16.msra.mxu0 %v1225
      %1259 = vmatprep.subr.bf16.mxu0 0
      %1260 = vmatpush1.bf16.msra.mxu0 0
      %1261 = vmatprep.subr.bf16.mxu0 0
      %1262 = vmatpush1.bf16.msra.mxu0 0
      %1263 = vmatprep.subr.bf16.mxu0 0
      %1264 = vmatpush1.bf16.msra.mxu0 0
      %1265 = vmatprep.subr.bf16.mxu0 0
      %1266 = vmatpush1.bf16.msra.mxu0 0
      %1267 = vmatprep.subr.bf16.mxu0 0
      %1268 = vmatpush1.bf16.msra.mxu0 0
      %1269 = vmatprep.subr.bf16.mxu0 0
      %1270 = vmatpush1.bf16.msra.mxu0 0
      %1271 = vmatprep.subr.bf16.mxu0 0
      %1272 = vmatpush1.bf16.msra.mxu0 0
      %1273 = vmatprep.subr.bf16.mxu0 0
      %1274 = vmatpush1.bf16.msra.mxu0 0
      %1275 = vmatprep.mubr.bf16.mxu0 0
      %1276 = vmatmul.mubr.bf16.gmra.mrb[0].mxu0 %v1161
      %v1277 = vpop.f32.mrb[0].mxu0
      %v1278 = vadd.f32 0.0, %v1277
      %v1279 = vpop.f32.mrb[0].mxu0
      %v1280 = vadd.f32 0.0, %v1279
      %v1281 = vpop.f32.mrb[0].mxu0
      %v1282 = vadd.f32 0.0, %v1281
      %v1283 = vpop.f32.mrb[0].mxu0
      %v1284 = vadd.f32 0.0, %v1283
      %1285 = vdwg.mxu0
      %v1286 = vadd.f32 %v1120, %v1278
      %v1287 = vadd.f32 %v1121, %v1280
      %v1288 = vadd.f32 %v1122, %v1282
      %v1289 = vadd.f32 %v1123, %v1284
      %s1290 = scalar_lea.vmem %s1, 768
      %v1291 = vld [vmem:[%s1290] sm:$0xff]
      %v1292 = vld [vmem:[%s1290 + $0x8] sm:$0xff]
      %v1293 = vld [vmem:[%s1290 + $0x10] sm:$0xff]
      %v1294 = vld [vmem:[%s1290 + $0x18] sm:$0xff]
      %v1295 = vld [vmem:[%s1290 + $0x20] sm:$0xff]
      %v1296 = vld [vmem:[%s1290 + $0x28] sm:$0xff]
      %v1297 = vld [vmem:[%s1290 + $0x30] sm:$0xff]
      %v1298 = vld [vmem:[%s1290 + $0x38] sm:$0xff]
      %v1299 = vld [vmem:[%s1290 + $0x40] sm:$0xff]
      %v1300 = vld [vmem:[%s1290 + $0x48] sm:$0xff]
      %v1301 = vld [vmem:[%s1290 + $0x50] sm:$0xff]
      %v1302 = vld [vmem:[%s1290 + $0x58] sm:$0xff]
      %v1303 = vld [vmem:[%s1290 + $0x60] sm:$0xff]
      %v1304 = vld [vmem:[%s1290 + $0x68] sm:$0xff]
      %v1305 = vld [vmem:[%s1290 + $0x70] sm:$0xff]
      %v1306 = vld [vmem:[%s1290 + $0x78] sm:$0xff]
      %v1308 = vcombine.low %v176, %v177
      %v1310 = vunpack.c.l.s4 1983009808
      %v1311 = vunpack.c.0.s8 %v1310
      %v1312 = vlaneseq
      %v1313 = vshrl.u32 %v1312, 7
      %v1314 = vsub.s32 %v1311, %v1313
      %v1315 = vrot.slane %v1308, %v1314
      %v1316 = vcombine.low %v466, %v1315
      %v1334 = vunpack.c.l.b16 %v1291
      %v1335 = vunpack.c.h.b16 %v1291
      %v1336 = vunpack.c.l.b16 %v1292
      %v1337 = vunpack.c.h.b16 %v1292
      %v1338 = vunpack.c.l.b16 %v1293
      %v1339 = vunpack.c.h.b16 %v1293
      %v1340 = vunpack.c.l.b16 %v1294
      %v1341 = vunpack.c.h.b16 %v1294
      %v1342 = vunpack.c.l.b16 %v1295
      %v1343 = vunpack.c.h.b16 %v1295
      %v1344 = vunpack.c.l.b16 %v1296
      %v1345 = vunpack.c.h.b16 %v1296
      %v1346 = vunpack.c.l.b16 %v1297
      %v1347 = vunpack.c.h.b16 %v1297
      %v1348 = vunpack.c.l.b16 %v1298
      %v1349 = vunpack.c.h.b16 %v1298
      %v1350 = vunpack.c.l.b16 %v1299
      %v1351 = vunpack.c.h.b16 %v1299
      %v1352 = vunpack.c.l.b16 %v1300
      %v1353 = vunpack.c.h.b16 %v1300
      %v1354 = vunpack.c.l.b16 %v1301
      %v1355 = vunpack.c.h.b16 %v1301
      %v1356 = vunpack.c.l.b16 %v1302
      %v1357 = vunpack.c.h.b16 %v1302
      %v1358 = vunpack.c.l.b16 %v1303
      %v1359 = vunpack.c.h.b16 %v1303
      %v1360 = vunpack.c.l.b16 %v1304
      %v1361 = vunpack.c.h.b16 %v1304
      %v1362 = vunpack.c.l.b16 %v1305
      %v1363 = vunpack.c.h.b16 %v1305
      %v1364 = vunpack.c.l.b16 %v1306
      %v1365 = vunpack.c.h.b16 %v1306
      %v1366 = vpack.c.b16 %v1336, %v1334
      %v1367 = vpack.c.b16 %v1337, %v1335
      %v1368 = vpack.c.b16 %v1340, %v1338
      %v1369 = vpack.c.b16 %v1341, %v1339
      %v1370 = vpack.c.b16 %v1344, %v1342
      %v1371 = vpack.c.b16 %v1345, %v1343
      %v1372 = vpack.c.b16 %v1348, %v1346
      %v1373 = vpack.c.b16 %v1349, %v1347
      %v1374 = vpack.c.b16 %v1352, %v1350
      %v1375 = vpack.c.b16 %v1353, %v1351
      %v1376 = vpack.c.b16 %v1356, %v1354
      %v1377 = vpack.c.b16 %v1357, %v1355
      %v1378 = vpack.c.b16 %v1360, %v1358
      %v1379 = vpack.c.b16 %v1361, %v1359
      %v1380 = vpack.c.b16 %v1364, %v1362
      %v1381 = vpack.c.b16 %v1365, %v1363
      %1398 = vmatprep.subr.bf16.mxu0 %v1367
      %1399 = vmatpush1.bf16.msra.mxu0 %v1366
      %1400 = vmatprep.subr.bf16.mxu0 %v1369
      %1401 = vmatpush1.bf16.msra.mxu0 %v1368
      %1402 = vmatprep.subr.bf16.mxu0 %v1371
      %1403 = vmatpush1.bf16.msra.mxu0 %v1370
      %1404 = vmatprep.subr.bf16.mxu0 %v1373
      %1405 = vmatpush1.bf16.msra.mxu0 %v1372
      %1406 = vmatprep.subr.bf16.mxu0 %v1375
      %1407 = vmatpush1.bf16.msra.mxu0 %v1374
      %1408 = vmatprep.subr.bf16.mxu0 %v1377
      %1409 = vmatpush1.bf16.msra.mxu0 %v1376
      %1410 = vmatprep.subr.bf16.mxu0 %v1379
      %1411 = vmatpush1.bf16.msra.mxu0 %v1378
      %1412 = vmatprep.subr.bf16.mxu0 %v1381
      %1413 = vmatpush1.bf16.msra.mxu0 %v1380
      %1414 = vmatprep.subr.bf16.mxu0 0
      %1415 = vmatpush1.bf16.msra.mxu0 0
      %1416 = vmatprep.subr.bf16.mxu0 0
      %1417 = vmatpush1.bf16.msra.mxu0 0
      %1418 = vmatprep.subr.bf16.mxu0 0
      %1419 = vmatpush1.bf16.msra.mxu0 0
      %1420 = vmatprep.subr.bf16.mxu0 0
      %1421 = vmatpush1.bf16.msra.mxu0 0
      %1422 = vmatprep.subr.bf16.mxu0 0
      %1423 = vmatpush1.bf16.msra.mxu0 0
      %1424 = vmatprep.subr.bf16.mxu0 0
      %1425 = vmatpush1.bf16.msra.mxu0 0
      %1426 = vmatprep.subr.bf16.mxu0 0
      %1427 = vmatpush1.bf16.msra.mxu0 0
      %1428 = vmatprep.subr.bf16.mxu0 0
      %1429 = vmatpush1.bf16.msra.mxu0 0
      %1430 = vmatprep.mubr.bf16.mxu0 0
      %1431 = vmatmul.mubr.bf16.gmra.mrb[0].mxu0 %v1316
      %v1432 = vpop.f32.mrb[0].mxu0
      %v1433 = vadd.f32 0.0, %v1432
      %v1434 = vpop.f32.mrb[0].mxu0
      %v1435 = vadd.f32 0.0, %v1434
      %v1436 = vpop.f32.mrb[0].mxu0
      %v1437 = vadd.f32 0.0, %v1436
      %v1438 = vpop.f32.mrb[0].mxu0
      %v1439 = vadd.f32 0.0, %v1438
      %1440 = vdwg.mxu0
      %v1441 = vadd.f32 %v1286, %v1433
      %v1442 = vadd.f32 %v1287, %v1435
      %v1443 = vadd.f32 %v1288, %v1437
      %v1444 = vadd.f32 %v1289, %v1439
      %v1446 = vunpack.c.l.s4 1983009808
      %v1447 = vunpack.c.0.s8 %v1446
      %v1448 = vlaneseq
      %v1449 = vshrl.u32 %v1448, 7
      %v1450 = vsub.s32 %v1447, %v1449
      %v1451 = vrot.slane %v177, %v1450
      %v1452 = vcombine.high %v1451, %v1451
      %v1454 = vshrl.u32 %v1451, 16
      %v1456 = vrot.slane %v1454, 6
      %v1457 = vshll.u32 %v1451, 16
      %v1459 = vrot.slane %v1457, 7
      %v1460 = vor.u32 %v1456, %v1459
      %v1461 = vrot.slane %v1460, 2
      %v1463 = vshll.u32 %v1452, 16
      %v1465 = vrot.slane %v1463, 7
      %v1466 = vsel %vm236, %v1461, %v1465
      %s1467 = scalar_lea.vmem %s1, 896
      %v1468 = vld [vmem:[%s1467] sm:$0xff]
      %v1469 = vld [vmem:[%s1467 + $0x8] sm:$0xff]
      %v1470 = vld [vmem:[%s1467 + $0x10] sm:$0xff]
      %v1471 = vld [vmem:[%s1467 + $0x18] sm:$0xff]
      %v1472 = vld [vmem:[%s1467 + $0x20] sm:$0xff]
      %v1473 = vld [vmem:[%s1467 + $0x28] sm:$0xff]
      %v1474 = vld [vmem:[%s1467 + $0x30] sm:$0xff]
      %v1475 = vld [vmem:[%s1467 + $0x38] sm:$0xff]
      %v1476 = vld [vmem:[%s1467 + $0x40] sm:$0xff]
      %v1477 = vld [vmem:[%s1467 + $0x48] sm:$0xff]
      %v1478 = vld [vmem:[%s1467 + $0x50] sm:$0xff]
      %v1479 = vld [vmem:[%s1467 + $0x58] sm:$0xff]
      %v1480 = vld [vmem:[%s1467 + $0x60] sm:$0xff]
      %v1481 = vld [vmem:[%s1467 + $0x68] sm:$0xff]
      %v1482 = vld [vmem:[%s1467 + $0x70] sm:$0xff]
      %v1483 = vld [vmem:[%s1467 + $0x78] sm:$0xff]
      %v1484 = vcombine.low %v961, %v1466
      %v1486 = vunpack.c.l.s4 1983009808
      %v1487 = vunpack.c.0.s8 %v1486
      %v1488 = vlaneseq
      %v1489 = vshrl.u32 %v1488, 7
      %v1490 = vsub.s32 %v1487, %v1489
      %v1491 = vrot.slane %v1484, %v1490
      %v1492 = vcombine.low %v325, %v1491
      %v1510 = vunpack.c.l.b16 %v1468
      %v1511 = vunpack.c.h.b16 %v1468
      %v1512 = vunpack.c.l.b16 %v1469
      %v1513 = vunpack.c.h.b16 %v1469
      %v1514 = vunpack.c.l.b16 %v1470
      %v1515 = vunpack.c.h.b16 %v1470
      %v1516 = vunpack.c.l.b16 %v1471
      %v1517 = vunpack.c.h.b16 %v1471
      %v1518 = vunpack.c.l.b16 %v1472
      %v1519 = vunpack.c.h.b16 %v1472
      %v1520 = vunpack.c.l.b16 %v1473
      %v1521 = vunpack.c.h.b16 %v1473
      %v1522 = vunpack.c.l.b16 %v1474
      %v1523 = vunpack.c.h.b16 %v1474
      %v1524 = vunpack.c.l.b16 %v1475
      %v1525 = vunpack.c.h.b16 %v1475
      %v1526 = vunpack.c.l.b16 %v1476
      %v1527 = vunpack.c.h.b16 %v1476
      %v1528 = vunpack.c.l.b16 %v1477
      %v1529 = vunpack.c.h.b16 %v1477
      %v1530 = vunpack.c.l.b16 %v1478
      %v1531 = vunpack.c.h.b16 %v1478
      %v1532 = vunpack.c.l.b16 %v1479
      %v1533 = vunpack.c.h.b16 %v1479
      %v1534 = vunpack.c.l.b16 %v1480
      %v1535 = vunpack.c.h.b16 %v1480
      %v1536 = vunpack.c.l.b16 %v1481
      %v1537 = vunpack.c.h.b16 %v1481
      %v1538 = vunpack.c.l.b16 %v1482
      %v1539 = vunpack.c.h.b16 %v1482
      %v1540 = vunpack.c.l.b16 %v1483
      %v1541 = vunpack.c.h.b16 %v1483
      %v1542 = vpack.c.b16 %v1512, %v1510
      %v1543 = vpack.c.b16 %v1513, %v1511
      %v1544 = vpack.c.b16 %v1516, %v1514
      %v1545 = vpack.c.b16 %v1517, %v1515
      %v1546 = vpack.c.b16 %v1520, %v1518
      %v1547 = vpack.c.b16 %v1521, %v1519
      %v1548 = vpack.c.b16 %v1524, %v1522
      %v1549 = vpack.c.b16 %v1525, %v1523
      %v1550 = vpack.c.b16 %v1528, %v1526
      %v1551 = vpack.c.b16 %v1529, %v1527
      %v1552 = vpack.c.b16 %v1532, %v1530
      %v1553 = vpack.c.b16 %v1533, %v1531
      %v1554 = vpack.c.b16 %v1536, %v1534
      %v1555 = vpack.c.b16 %v1537, %v1535
      %v1556 = vpack.c.b16 %v1540, %v1538
      %v1557 = vpack.c.b16 %v1541, %v1539
      %1574 = vmatprep.subr.bf16.mxu0 %v1543
      %1575 = vmatpush1.bf16.msra.mxu0 %v1542
      %1576 = vmatprep.subr.bf16.mxu0 %v1545
      %1577 = vmatpush1.bf16.msra.mxu0 %v1544
      %1578 = vmatprep.subr.bf16.mxu0 %v1547
      %1579 = vmatpush1.bf16.msra.mxu0 %v1546
      %1580 = vmatprep.subr.bf16.mxu0 %v1549
      %1581 = vmatpush1.bf16.msra.mxu0 %v1548
      %1582 = vmatprep.subr.bf16.mxu0 %v1551
      %1583 = vmatpush1.bf16.msra.mxu0 %v1550
      %1584 = vmatprep.subr.bf16.mxu0 %v1553
      %1585 = vmatpush1.bf16.msra.mxu0 %v1552
      %1586 = vmatprep.subr.bf16.mxu0 %v1555
      %1587 = vmatpush1.bf16.msra.mxu0 %v1554
      %1588 = vmatprep.subr.bf16.mxu0 %v1557
      %1589 = vmatpush1.bf16.msra.mxu0 %v1556
      %1590 = vmatprep.subr.bf16.mxu0 0
      %1591 = vmatpush1.bf16.msra.mxu0 0
      %1592 = vmatprep.subr.bf16.mxu0 0
      %1593 = vmatpush1.bf16.msra.mxu0 0
      %1594 = vmatprep.subr.bf16.mxu0 0
      %1595 = vmatpush1.bf16.msra.mxu0 0
      %1596 = vmatprep.subr.bf16.mxu0 0
      %1597 = vmatpush1.bf16.msra.mxu0 0
      %1598 = vmatprep.subr.bf16.mxu0 0
      %1599 = vmatpush1.bf16.msra.mxu0 0
      %1600 = vmatprep.subr.bf16.mxu0 0
      %1601 = vmatpush1.bf16.msra.mxu0 0
      %1602 = vmatprep.subr.bf16.mxu0 0
      %1603 = vmatpush1.bf16.msra.mxu0 0
      %1604 = vmatprep.subr.bf16.mxu0 0
      %1605 = vmatpush1.bf16.msra.mxu0 0
      %1606 = vmatprep.mubr.bf16.mxu0 0
      %1607 = vmatmul.mubr.bf16.gmra.mrb[0].mxu0 %v1492
      %v1608 = vpop.f32.mrb[0].mxu0
      %v1609 = vadd.f32 0.0, %v1608
      %v1610 = vpop.f32.mrb[0].mxu0
      %v1611 = vadd.f32 0.0, %v1610
      %v1612 = vpop.f32.mrb[0].mxu0
      %v1613 = vadd.f32 0.0, %v1612
      %v1614 = vpop.f32.mrb[0].mxu0
      %v1615 = vadd.f32 0.0, %v1614
      %1616 = vdwg.mxu0
      %v1617 = vadd.f32 %v1441, %v1609
      %v1618 = vadd.f32 %v1442, %v1611
      %v1619 = vadd.f32 %v1443, %v1613
      %v1620 = vadd.f32 %v1444, %v1615
      %v1621 = vrot.slane %v1451, 7
      %v1622 = vrot.slane %v1621, 2
      %v1623 = vrot.slane %v1452, 7
      %v1624 = vsel %vm598, %v1622, %v1623
      %s1625 = scalar_lea.vmem %s1, 1024
      %v1626 = vld [vmem:[%s1625] sm:$0xff]
      %v1627 = vld [vmem:[%s1625 + $0x8] sm:$0xff]
      %v1628 = vld [vmem:[%s1625 + $0x10] sm:$0xff]
      %v1629 = vld [vmem:[%s1625 + $0x18] sm:$0xff]
      %v1630 = vld [vmem:[%s1625 + $0x20] sm:$0xff]
      %v1631 = vld [vmem:[%s1625 + $0x28] sm:$0xff]
      %v1632 = vld [vmem:[%s1625 + $0x30] sm:$0xff]
      %v1633 = vld [vmem:[%s1625 + $0x38] sm:$0xff]
      %v1634 = vld [vmem:[%s1625 + $0x40] sm:$0xff]
      %v1635 = vld [vmem:[%s1625 + $0x48] sm:$0xff]
      %v1636 = vld [vmem:[%s1625 + $0x50] sm:$0xff]
      %v1637 = vld [vmem:[%s1625 + $0x58] sm:$0xff]
      %v1638 = vld [vmem:[%s1625 + $0x60] sm:$0xff]
      %v1639 = vld [vmem:[%s1625 + $0x68] sm:$0xff]
      %v1640 = vld [vmem:[%s1625 + $0x70] sm:$0xff]
      %v1641 = vld [vmem:[%s1625 + $0x78] sm:$0xff]
      %v1642 = vcombine.low %v1127, %v1624
      %v1644 = vunpack.c.l.s4 1983009808
      %v1645 = vunpack.c.0.s8 %v1644
      %v1646 = vlaneseq
      %v1647 = vshrl.u32 %v1646, 7
      %v1648 = vsub.s32 %v1645, %v1647
      %v1649 = vrot.slane %v1642, %v1648
      %v1650 = vcombine.low %v647, %v1649
      %v1668 = vunpack.c.l.b16 %v1626
      %v1669 = vunpack.c.h.b16 %v1626
      %v1670 = vunpack.c.l.b16 %v1627
      %v1671 = vunpack.c.h.b16 %v1627
      %v1672 = vunpack.c.l.b16 %v1628
      %v1673 = vunpack.c.h.b16 %v1628
      %v1674 = vunpack.c.l.b16 %v1629
      %v1675 = vunpack.c.h.b16 %v1629
      %v1676 = vunpack.c.l.b16 %v1630
      %v1677 = vunpack.c.h.b16 %v1630
      %v1678 = vunpack.c.l.b16 %v1631
      %v1679 = vunpack.c.h.b16 %v1631
      %v1680 = vunpack.c.l.b16 %v1632
      %v1681 = vunpack.c.h.b16 %v1632
      %v1682 = vunpack.c.l.b16 %v1633
      %v1683 = vunpack.c.h.b16 %v1633
      %v1684 = vunpack.c.l.b16 %v1634
      %v1685 = vunpack.c.h.b16 %v1634
      %v1686 = vunpack.c.l.b16 %v1635
      %v1687 = vunpack.c.h.b16 %v1635
      %v1688 = vunpack.c.l.b16 %v1636
      %v1689 = vunpack.c.h.b16 %v1636
      %v1690 = vunpack.c.l.b16 %v1637
      %v1691 = vunpack.c.h.b16 %v1637
      %v1692 = vunpack.c.l.b16 %v1638
      %v1693 = vunpack.c.h.b16 %v1638
      %v1694 = vunpack.c.l.b16 %v1639
      %v1695 = vunpack.c.h.b16 %v1639
      %v1696 = vunpack.c.l.b16 %v1640
      %v1697 = vunpack.c.h.b16 %v1640
      %v1698 = vunpack.c.l.b16 %v1641
      %v1699 = vunpack.c.h.b16 %v1641
      %v1700 = vpack.c.b16 %v1670, %v1668
      %v1701 = vpack.c.b16 %v1671, %v1669
      %v1702 = vpack.c.b16 %v1674, %v1672
      %v1703 = vpack.c.b16 %v1675, %v1673
      %v1704 = vpack.c.b16 %v1678, %v1676
      %v1705 = vpack.c.b16 %v1679, %v1677
      %v1706 = vpack.c.b16 %v1682, %v1680
      %v1707 = vpack.c.b16 %v1683, %v1681
      %v1708 = vpack.c.b16 %v1686, %v1684
      %v1709 = vpack.c.b16 %v1687, %v1685
      %v1710 = vpack.c.b16 %v1690, %v1688
      %v1711 = vpack.c.b16 %v1691, %v1689
      %v1712 = vpack.c.b16 %v1694, %v1692
      %v1713 = vpack.c.b16 %v1695, %v1693
      %v1714 = vpack.c.b16 %v1698, %v1696
      %v1715 = vpack.c.b16 %v1699, %v1697
      %1732 = vmatprep.subr.bf16.mxu0 %v1701
      %1733 = vmatpush1.bf16.msra.mxu0 %v1700
      %1734 = vmatprep.subr.bf16.mxu0 %v1703
      %1735 = vmatpush1.bf16.msra.mxu0 %v1702
      %1736 = vmatprep.subr.bf16.mxu0 %v1705
      %1737 = vmatpush1.bf16.msra.mxu0 %v1704
      %1738 = vmatprep.subr.bf16.mxu0 %v1707
      %1739 = vmatpush1.bf16.msra.mxu0 %v1706
      %1740 = vmatprep.subr.bf16.mxu0 %v1709
      %1741 = vmatpush1.bf16.msra.mxu0 %v1708
      %1742 = vmatprep.subr.bf16.mxu0 %v1711
      %1743 = vmatpush1.bf16.msra.mxu0 %v1710
      %1744 = vmatprep.subr.bf16.mxu0 %v1713
      %1745 = vmatpush1.bf16.msra.mxu0 %v1712
      %1746 = vmatprep.subr.bf16.mxu0 %v1715
      %1747 = vmatpush1.bf16.msra.mxu0 %v1714
      %1748 = vmatprep.subr.bf16.mxu0 0
      %1749 = vmatpush1.bf16.msra.mxu0 0
      %1750 = vmatprep.subr.bf16.mxu0 0
      %1751 = vmatpush1.bf16.msra.mxu0 0
      %1752 = vmatprep.subr.bf16.mxu0 0
      %1753 = vmatpush1.bf16.msra.mxu0 0
      %1754 = vmatprep.subr.bf16.mxu0 0
      %1755 = vmatpush1.bf16.msra.mxu0 0
      %1756 = vmatprep.subr.bf16.mxu0 0
      %1757 = vmatpush1.bf16.msra.mxu0 0
      %1758 = vmatprep.subr.bf16.mxu0 0
      %1759 = vmatpush1.bf16.msra.mxu0 0
      %1760 = vmatprep.subr.bf16.mxu0 0
      %1761 = vmatpush1.bf16.msra.mxu0 0
      %1762 = vmatprep.subr.bf16.mxu0 0
      %1763 = vmatpush1.bf16.msra.mxu0 0
      %1764 = vmatprep.mubr.bf16.mxu0 0
      %1765 = vmatmul.mubr.bf16.gmra.mrb[0].mxu0 %v1650
      %v1766 = vpop.f32.mrb[0].mxu0
      %v1767 = vadd.f32 0.0, %v1766
      %v1768 = vpop.f32.mrb[0].mxu0
      %v1769 = vadd.f32 0.0, %v1768
      %v1770 = vpop.f32.mrb[0].mxu0
      %v1771 = vadd.f32 0.0, %v1770
      %v1772 = vpop.f32.mrb[0].mxu0
      %v1773 = vadd.f32 0.0, %v1772
      %1774 = vdwg.mxu0
      %v1775 = vadd.f32 %v1617, %v1767
      %v1776 = vadd.f32 %v1618, %v1769
      %v1777 = vadd.f32 %v1619, %v1771
      %v1778 = vadd.f32 %v1620, %v1773
      %v1779 = vld [vmem:[%s2] sm:$0x3]
      %v1781 = vlaneseq
      %v1782 = vshrl.u32 %v1781, 7
      %v1783 = vsub.s32 0, %v1782
      %v1784 = vrot.slane %v1779, %v1783
      %v1785 = vlaneseq
      %v1786 = vshrl.u32 %v1785, 7
      %v1787 = vsub.s32 1, %v1786
      %v1788 = vrot.slane %v1779, %v1787
      %v1791 = vadd.f32 %v1775, %v1784
      %v1792 = vadd.f32 %v1776, %v1788
      %v1793 = vadd.f32 %v1777, %v1784
      %v1794 = vadd.f32 %v1778, %v1788
      %v1795 = vmax.f32 %v1791, 0.0
      %v1796 = vmax.f32 %v1792, 0.0
      %v1797 = vmax.f32 %v1793, 0.0
      %v1798 = vmax.f32 %v1794, 0.0
      %v1803 = vcombine.low %v1795, %v1796
      %v1804 = vcombine.high %v1795, %v1796
      %v1805 = vcombine.low %v1797, %v1798
      %v1806 = vcombine.high %v1797, %v1798
      %v1811 = vcombine.high %v1803, %v1803
      %v1812 = vcombine.high %v1804, %v1804
      %v1813 = vcombine.high %v1805, %v1805
      %v1814 = vcombine.high %v1806, %v1806
      %v1819 = vpack.c.bf16 %v1803, %v1803
      %v1820 = vpack.c.bf16 %v1811, %v1811
      %v1821 = vpack.c.bf16 %v1804, %v1804
      %v1822 = vpack.c.bf16 %v1812, %v1812
      %v1823 = vpack.c.bf16 %v1805, %v1805
      %v1824 = vpack.c.bf16 %v1813, %v1813
      %v1825 = vpack.c.bf16 %v1806, %v1806
      %v1826 = vpack.c.bf16 %v1814, %v1814
      %v1835 = vcombine.low %v1819, %v1820
      %v1837 = vunpack.c.l.s4 1983009808
      %v1838 = vunpack.c.0.s8 %v1837
      %v1839 = vlaneseq
      %v1840 = vshrl.u32 %v1839, 7
      %v1841 = vsub.s32 %v1838, %v1840
      %v1842 = vrot.slane %v1835, %v1841
      %v1843 = vcombine.low %v1821, %v1822
      %v1845 = vunpack.c.l.s4 1983009808
      %v1846 = vunpack.c.0.s8 %v1845
      %v1847 = vlaneseq
      %v1848 = vshrl.u32 %v1847, 7
      %v1849 = vsub.s32 %v1846, %v1848
      %v1850 = vrot.slane %v1843, %v1849
      %v1851 = vcombine.low %v1823, %v1824
      %v1853 = vunpack.c.l.s4 1983009808
      %v1854 = vunpack.c.0.s8 %v1853
      %v1855 = vlaneseq
      %v1856 = vshrl.u32 %v1855, 7
      %v1857 = vsub.s32 %v1854, %v1856
      %v1858 = vrot.slane %v1851, %v1857
      %v1859 = vcombine.low %v1825, %v1826
      %v1861 = vunpack.c.l.s4 1983009808
      %v1862 = vunpack.c.0.s8 %v1861
      %v1863 = vlaneseq
      %v1864 = vshrl.u32 %v1863, 7
      %v1865 = vsub.s32 %v1862, %v1864
      %v1866 = vrot.slane %v1859, %v1865
      %1871 = vst [vmem:[%s170] sm:$0xf] %v1842
      %1872 = vst [vmem:[%s170 + $0x4] sm:$0xf] %v1850
      %1873 = vst [vmem:[%s170 + $0x8] sm:$0xf] %v1858
      %1874 = vst [vmem:[%s170 + $0xc] sm:$0xf] %v1866
      %p1875 = scmp.lt.s32.totalorder %s14, 3
      %s1876 = scalar_select %p1875, %s14, 3
      %s1877 = smul.addr %s1876, 8
      %s1878 = smul.addr %s1877, 2
      %s1879 = scalar_lea.vmem %s3, %s1878
      // Predicated region
      $region33: #{_lambda_.14} parent=31 // pred_check
        %p1880 = pneg %p100
      $region34: #{_lambda_.14} parent=31 // pred_check_branch
        %1882 = sbr.rel (%p1880) target = $region36
      $region35: #{_lambda_.14} parent=31 // pred_region
        _
      $region36: #{_lambda_.14} parent=31 // pred_fallthru
        _
    $region32: #{_lambda_.14} parent=5 // pred_fallthru
      _
    %p1883 = scmp.le.s32.totalorder 2, %s9
    // Predicated region
    $region37: #{_lambda_.14} parent=5 // pred_check
      %p1884 = pneg %p1883
    $region38: #{_lambda_.14} parent=5 // pred_check_branch
      %1886 = sbr.rel (%p1884) target = $region40
    $region39: #{_lambda_.14} parent=5 // pred_region
      %s1887 = ssub.s32 %s9, 2
      // Predicated region
      $region41: #{_lambda_.14} parent=39 // pred_check
        %p1888 = pneg %p106
      $region42: #{_lambda_.14} parent=39 // pred_check_branch
        %1890 = sbr.rel (%p1888) target = $region44
      $region43: #{_lambda_.14} parent=39 // pred_region
        %p1891 = scmp.lt.s32.totalorder %s15, 3
        %s1892 = scalar_select %p1891, %s15, 3
        %s1893 = smul.addr %s1892, 8
        %s1894 = smul.addr %s1893, 2
        %s1895 = scalar_lea.vmem %s3, %s1894
      $region44: #{_lambda_.14} parent=39 // pred_fallthru
        _
    $region40: #{_lambda_.14} parent=5 // pred_fallthru
      _
  $region6: #{_lambda_.14} parent=0 // loop_footer
    %s13 = sadd.s32 1, %s9
  $region7: #{_lambda_.14} parent=0 // loop_footer_branch
    %8 = sbr.rel target = $region3
  $region8: #{_lambda_.14} parent=0 // loop_exit
    _

// kernel: _lambda_.17
$region0: #{_lambda_.17}
  #allocation0 [shape = 'u32[]', space=smem, size = 0x4, offset = 0x4, fixed_abs, tag = 'smem constant byte address 0x4 - core index']
  #allocation1 [shape = 'u32[144,128]{1,0:T(1,128)}', space=vmem, size = 0x12000, scoped, tag = 'internal scratch']
  %s0 = inlined_call_operand.vmem [shape: bf16[1,16,512], index: 0, kind: input, shape index: {}]
  %s1 = inlined_call_operand.vmem [shape: bf16[1,16,512], index: 1, kind: input, shape index: {}]
  %s2 = inlined_call_operand.vmem [shape: f32[1,1,512], index: 2, kind: output, shape index: {}]
  %s3 = sld [smem:[#allocation0]]
  $region18: #{_lambda_.17} parent=0
    _
  %s5 = ssub.s32 1, %s3
  %s6 = scalar_select 0, %s5, %s3
  // Predicated region
  $region2: #{_lambda_.17} parent=0 // pred_check
    _
  $region3: #{_lambda_.17} parent=0 // pred_check_branch
    %8 = sbr.rel (0) target = $region5
  $region4: #{_lambda_.17} parent=0 // pred_region
    _
  $region5: #{_lambda_.17} parent=0 // pred_fallthru
    _
  // Predicated region
  $region6: #{_lambda_.17} parent=0 // pred_check
    _
  $region7: #{_lambda_.17} parent=0 // pred_check_branch
    %10 = sbr.rel (0) target = $region9
  $region8: #{_lambda_.17} parent=0 // pred_region
    _
  $region9: #{_lambda_.17} parent=0 // pred_fallthru
    _
  %v11 = vld [vmem:[%s0] sm:$0xff]
  %v12 = vld [vmem:[%s0 + $0x8] sm:$0xff]
  %v13 = vld [vmem:[%s0 + $0x10] sm:$0xff]
  %v14 = vld [vmem:[%s0 + $0x18] sm:$0xff]
  %v15 = vunpack.c.l.bf16 %v11
  %v16 = vunpack.c.h.bf16 %v11
  %v17 = vunpack.c.l.bf16 %v12
  %v18 = vunpack.c.h.bf16 %v12
  %v19 = vunpack.c.l.bf16 %v13
  %v20 = vunpack.c.h.bf16 %v13
  %v21 = vunpack.c.l.bf16 %v14
  %v22 = vunpack.c.h.bf16 %v14
  %v23 = vld [vmem:[%s1] sm:$0xff]
  %v24 = vld [vmem:[%s1 + $0x8] sm:$0xff]
  %v25 = vld [vmem:[%s1 + $0x10] sm:$0xff]
  %v26 = vld [vmem:[%s1 + $0x18] sm:$0xff]
  %v27 = vunpack.c.l.bf16 %v23
  %v28 = vunpack.c.h.bf16 %v23
  %v29 = vunpack.c.l.bf16 %v24
  %v30 = vunpack.c.h.bf16 %v24
  %v31 = vunpack.c.l.bf16 %v25
  %v32 = vunpack.c.h.bf16 %v25
  %v33 = vunpack.c.l.bf16 %v26
  %v34 = vunpack.c.h.bf16 %v26
  %v35 = vsub.f32 %v15, %v27
  %v36 = vsub.f32 %v16, %v28
  %v37 = vsub.f32 %v17, %v29
  %v38 = vsub.f32 %v18, %v30
  %v39 = vsub.f32 %v19, %v31
  %v40 = vsub.f32 %v20, %v32
  %v41 = vsub.f32 %v21, %v33
  %v42 = vsub.f32 %v22, %v34
  %v43 = vmul.f32 %v35, %v35
  %v44 = vmul.f32 %v36, %v36
  %v45 = vmul.f32 %v37, %v37
  %v46 = vmul.f32 %v38, %v38
  %v47 = vmul.f32 %v39, %v39
  %v48 = vmul.f32 %v40, %v40
  %v49 = vmul.f32 %v41, %v41
  %v50 = vmul.f32 %v42, %v42
  %v51 = vadd.f32 %v43, %v47
  %v52 = vrot.slane %v51, 4
  %v53 = vadd.f32 %v51, %v52
  %v54 = vrot.slane %v53, 2
  %v55 = vadd.f32 %v53, %v54
  %v56 = vrot.slane %v55, 1
  %v57 = vadd.f32 %v55, %v56
  %v58 = vadd.f32 %v44, %v48
  %v59 = vrot.slane %v58, 4
  %v60 = vadd.f32 %v58, %v59
  %v61 = vrot.slane %v60, 2
  %v62 = vadd.f32 %v60, %v61
  %v63 = vrot.slane %v62, 1
  %v64 = vadd.f32 %v62, %v63
  %v65 = vadd.f32 %v45, %v49
  %v66 = vrot.slane %v65, 4
  %v67 = vadd.f32 %v65, %v66
  %v68 = vrot.slane %v67, 2
  %v69 = vadd.f32 %v67, %v68
  %v70 = vrot.slane %v69, 1
  %v71 = vadd.f32 %v69, %v70
  %v72 = vadd.f32 %v46, %v50
  %v73 = vrot.slane %v72, 4
  %v74 = vadd.f32 %v72, %v73
  %v75 = vrot.slane %v74, 2
  %v76 = vadd.f32 %v74, %v75
  %v77 = vrot.slane %v76, 1
  %v78 = vadd.f32 %v76, %v77
  %v83 = vcombine.low %v57, %v64
  %v84 = vcombine.low %v71, %v78
  %v86 = vunpack.c.l.s4 1966171168
  %v87 = vunpack.c.0.s8 %v86
  %v88 = vlaneseq
  %v89 = vshrl.u32 %v88, 7
  %v90 = vsub.s32 %v87, %v89
  %v91 = vrot.slane %v83, %v90
  %v93 = vunpack.c.l.s4 1966171168
  %v94 = vunpack.c.0.s8 %v93
  %v95 = vlaneseq
  %v96 = vshrl.u32 %v95, 7
  %v97 = vsub.s32 %v94, %v96
  %v98 = vrot.slane %v84, %v97
  %v99 = vcombine.low %v91, %v98
  %v101 = vunpack.c.l.s4 1966171168
  %v102 = vunpack.c.0.s8 %v101
  %v103 = vlaneseq
  %v104 = vshrl.u32 %v103, 7
  %v105 = vsub.s32 %v102, %v104
  %v106 = vrot.slane %v99, %v105
  %v108 = vlaneseq
  %vm109 = vcmp.ge.s32.totalorder %v108, 0
  %vm110 = vcmp.lt.s32.totalorder %v108, 512
  %vm111 = vmand %vm109, %vm110
  %112 = vst.msk [vmem:[%s2] sm:$0xf] %vm111, %v106
  // Predicated region
  $region10: #{_lambda_.17} parent=0 // pred_check
    _
  $region11: #{_lambda_.17} parent=0 // pred_check_branch
    %114 = sbr.rel (0) target = $region13
  $region12: #{_lambda_.17} parent=0 // pred_region
    _
  $region13: #{_lambda_.17} parent=0 // pred_fallthru
    _
  // Predicated region
  $region14: #{_lambda_.17} parent=0 // pred_check
    _
  $region15: #{_lambda_.17} parent=0 // pred_check_branch
    %116 = sbr.rel (0) target = $region17
  $region16: #{_lambda_.17} parent=0 // pred_region
    _
  $region17: #{_lambda_.17} parent=0 // pred_fallthru
    _

// kernel: _lambda_.15
$region0: #{_lambda_.15}
  #allocation0 [shape = 'u32[]', space=smem, size = 0x4, offset = 0x4, fixed_abs, tag = 'smem constant byte address 0x4 - core index']
  #allocation1 [shape = 'u32[144,128]{1,0:T(1,128)}', space=vmem, size = 0x12000, scoped, tag = 'internal scratch']
  %s0 = inlined_call_operand.vmem [shape: bf16[4,6,6,256], index: 0, kind: input, shape index: {}]
  %s1 = inlined_call_operand.vmem [shape: bf16[3,3,256,256], index: 1, kind: input, shape index: {}]
  %s2 = inlined_call_operand.vmem [shape: f32[1,256], index: 2, kind: input, shape index: {}]
  %s3 = inlined_call_operand.vmem [shape: bf16[4,4,4,256], index: 3, kind: output, shape index: {}]
  %s4 = sld [smem:[#allocation0]]
  $region45: #{_lambda_.15} parent=0
    _
  %s6 = ssub.s32 1, %s4
  %s7 = scalar_select 0, %s6, %s4
  loop: start=0, step=1, limit=6
  $region2: #{_lambda_.15} parent=0 // loop_pre_header
    _
  $region3: #{_lambda_.15} parent=0 // loop_header
    %s9 = sphi 0, %s13
    %p10 = scmp.ge.s32.totalorder %s9, 6
    %s19 = sphi 0, %s21
    %s22 = sphi 0, %s19
    %s23 = sphi 0, %s22
    %s39 = sphi 0, %s23
    %s43 = sphi 0, %s43
    %s45 = sphi 0, %s43
    %s46 = sphi 0, %s45
    %s60 = sphi 0, %s46
    %s64 = sphi 0, %s64
    %s66 = sphi 0, %s64
    %s67 = sphi 0, %s66
    %s81 = sphi 0, %s67
    %s87 = sphi 0, %s89
    %s90 = sphi 0, %s87
    %s91 = sphi 0, %s90
    %s107 = sphi 0, %s91
  $region4: #{_lambda_.15} parent=0 // loop_header_branch
    %12 = sbr.rel (%p10) target = $region8
  $region5: #{_lambda_.15} parent=0 // loop_body
    %s14 = ssub.s32 %s9, 1
    %s15 = ssub.s32 %s9, 2
    %s16 = sadd.s32 %s9, 1
    %s17 = ssub.s32 %s9, %s16
    %p18 = scmp.eq.s32.totalorder %s17, 0
    %s20 = sadd.s32 %s19, 1
    %s21 = scalar_select %p18, %s19, %s20
    %p24 = pneg %p18
    %p25 = scmp.eq.s32.totalorder %s9, 3
    %p26 = por %p24, %p25
    %p27 = scmp.ne.s32.totalorder %s19, %s22
    %p28 = scmp.eq.s32.totalorder %s9, 0
    %p29 = por %p27, %p28
    %p30 = scmp.ne.s32.totalorder %s19, %s22
    %p31 = scmp.eq.s32.totalorder %s14, 3
    %p32 = por %p30, %p31
    %p33 = scmp.ne.s32.totalorder %s22, %s23
    %p34 = scmp.eq.s32.totalorder %s14, 0
    %p35 = por %p33, %p34
    %p36 = scmp.ne.s32.totalorder %s22, %s23
    %p37 = scmp.eq.s32.totalorder %s15, 3
    %p38 = por %p36, %p37
    %p40 = scmp.ne.s32.totalorder %s23, %s39
    %p41 = scmp.eq.s32.totalorder %s15, 0
    %p42 = por %p40, %p41
    %s44 = sadd.s32 %s43, 1
    %p47 = scmp.eq.s32.totalorder %s9, 3
    %p48 = scmp.ne.s32.totalorder %s43, %s45
    %p49 = scmp.eq.s32.totalorder %s9, 0
    %p50 = por %p48, %p49
    %p51 = scmp.ne.s32.totalorder %s43, %s45
    %p52 = scmp.eq.s32.totalorder %s14, 3
    %p53 = por %p51, %p52
    %p54 = scmp.ne.s32.totalorder %s45, %s46
    %p55 = scmp.eq.s32.totalorder %s14, 0
    %p56 = por %p54, %p55
    %p57 = scmp.ne.s32.totalorder %s45, %s46
    %p58 = scmp.eq.s32.totalorder %s15, 3
    %p59 = por %p57, %p58
    %p61 = scmp.ne.s32.totalorder %s46, %s60
    %p62 = scmp.eq.s32.totalorder %s15, 0
    %p63 = por %p61, %p62
    %s65 = sadd.s32 %s64, 1
    %p68 = scmp.eq.s32.totalorder %s9, 3
    %p69 = scmp.ne.s32.totalorder %s64, %s66
    %p70 = scmp.eq.s32.totalorder %s9, 0
    %p71 = por %p69, %p70
    %p72 = scmp.ne.s32.totalorder %s64, %s66
    %p73 = scmp.eq.s32.totalorder %s14, 3
    %p74 = por %p72, %p73
    %p75 = scmp.ne.s32.totalorder %s66, %s67
    %p76 = scmp.eq.s32.totalorder %s14, 0
    %p77 = por %p75, %p76
    %p78 = scmp.ne.s32.totalorder %s66, %s67
    %p79 = scmp.eq.s32.totalorder %s15, 3
    %p80 = por %p78, %p79
    %p82 = scmp.ne.s32.totalorder %s67, %s81
    %p83 = scmp.eq.s32.totalorder %s15, 0
    %p84 = por %p82, %p83
    %s85 = ssub.s32 %s9, %s16
    %p86 = scmp.eq.s32.totalorder %s85, 0
    %s88 = sadd.s32 %s87, 1
    %s89 = scalar_select %p86, %s87, %s88
    %p92 = pneg %p86
    %p93 = scmp.eq.s32.totalorder %s9, 3
    %p94 = por %p92, %p93
    %p95 = scmp.ne.s32.totalorder %s87, %s90
    %p96 = scmp.eq.s32.totalorder %s9, 0
    %p97 = por %p95, %p96
    %p98 = scmp.ne.s32.totalorder %s87, %s90
    %p99 = scmp.eq.s32.totalorder %s14, 3
    %p100 = por %p98, %p99
    %p101 = scmp.ne.s32.totalorder %s90, %s91
    %p102 = scmp.eq.s32.totalorder %s14, 0
    %p103 = por %p101, %p102
    %p104 = scmp.ne.s32.totalorder %s90, %s91
    %p105 = scmp.eq.s32.totalorder %s15, 3
    %p106 = por %p104, %p105
    %p108 = scmp.ne.s32.totalorder %s91, %s107
    %p109 = scmp.eq.s32.totalorder %s15, 0
    %p110 = por %p108, %p109
    %p111 = scmp.le.s32.totalorder 1, %s9
    %p112 = scmp.lt.s32.totalorder %s9, 5
    %p113 = pnand %p111, %p112
    %p114 = pneg %p113
    // Predicated region
    $region9: #{_lambda_.15} parent=5 // pred_check
      _
    $region10: #{_lambda_.15} parent=5 // pred_check_branch
      %116 = sbr.rel (%p113) target = $region12
    $region11: #{_lambda_.15} parent=5 // pred_region
      %s117 = ssub.s32 %s9, 1
      // Predicated region
      $region13: #{_lambda_.15} parent=11 // pred_check
        %p118 = pneg %p56
      $region14: #{_lambda_.15} parent=11 // pred_check_branch
        %120 = sbr.rel (%p118) target = $region16
      $region15: #{_lambda_.15} parent=11 // pred_region
        _
      $region16: #{_lambda_.15} parent=11 // pred_fallthru
        _
      // Predicated region
      $region17: #{_lambda_.15} parent=11 // pred_check
        %p121 = pneg %p77
      $region18: #{_lambda_.15} parent=11 // pred_check_branch
        %123 = sbr.rel (%p121) target = $region20
      $region19: #{_lambda_.15} parent=11 // pred_region
        _
      $region20: #{_lambda_.15} parent=11 // pred_fallthru
        _
    $region12: #{_lambda_.15} parent=5 // pred_fallthru
      _
    %p124 = scmp.lt.s32.totalorder %s9, 4
    // Predicated region
    $region21: #{_lambda_.15} parent=5 // pred_check
      %p125 = pneg %p124
    $region22: #{_lambda_.15} parent=5 // pred_check_branch
      %127 = sbr.rel (%p125) target = $region24
    $region23: #{_lambda_.15} parent=5 // pred_region
      // Predicated region
      $region25: #{_lambda_.15} parent=23 // pred_check
        %p128 = pneg %p29
      $region26: #{_lambda_.15} parent=23 // pred_check_branch
        %130 = sbr.rel (%p128) target = $region28
      $region27: #{_lambda_.15} parent=23 // pred_region
        %p131 = scmp.lt.s32.totalorder %s9, 3
        %s132 = scalar_select %p131, %s9, 3
        %s133 = smul.addr %s132, 12
        %s134 = smul.addr %s133, 4
        %s135 = scalar_lea.vmem %s0, %s134
      $region28: #{_lambda_.15} parent=23 // pred_fallthru
        _
    $region24: #{_lambda_.15} parent=5 // pred_fallthru
      _
    %p136 = scmp.le.s32.totalorder 1, %s9
    %p137 = scmp.lt.s32.totalorder %s9, 5
    %p138 = pnand %p136, %p137
    %p139 = pneg %p138
    // Predicated region
    $region29: #{_lambda_.15} parent=5 // pred_check
      _
    $region30: #{_lambda_.15} parent=5 // pred_check_branch
      %141 = sbr.rel (%p138) target = $region32
    $region31: #{_lambda_.15} parent=5 // pred_region
      %s142 = ssub.s32 %s9, 1
      %p143 = scmp.lt.s32.totalorder %s14, 3
      %s144 = scalar_select %p143, %s14, 3
      %s145 = smul.addr %s144, 12
      %s146 = smul.addr %s145, 4
      %s147 = scalar_lea.vmem %s0, %s146
      %p148 = pneg %p35
      %p149 = pneg %p32
      %p150 = pneg %p56
      %p151 = pneg %p53
      %p152 = pneg %p77
      %p153 = pneg %p74
      %p154 = pneg %p103
      %p155 = pneg %p100
      %p156 = scmp.lt.s32.totalorder %s14, 3
      %s157 = scalar_select %p156, %s14, 3
      %s158 = smul.addr %s157, 8
      %s159 = smul.addr %s158, 2
      %s160 = scalar_lea.vmem %s3, %s159
      %p161 = scmp.lt.s32.totalorder %s14, 3
      %s162 = scalar_select %p161, %s14, 3
      %s163 = smul.addr %s162, 12
      %s164 = smul.addr %s163, 4
      %s165 = scalar_lea.vmem %s0, %s164
      %p166 = scmp.lt.s32.totalorder %s14, 3
      %s167 = scalar_select %p166, %s14, 3
      %s168 = smul.addr %s167, 8
      %s169 = smul.addr %s168, 2
      %s170 = scalar_lea.vmem %s3, %s169
      %v171 = vld [vmem:[%s165] sm:$0x77]
      %v172 = vld [vmem:[%s165 + $0x8] sm:$0x77]
      %v173 = vld [vmem:[%s165 + $0x10] sm:$0x77]
      %v174 = vld [vmem:[%s165 + $0x18] sm:$0x77]
      %v175 = vld [vmem:[%s165 + $0x20] sm:$0x77]
      %v176 = vld [vmem:[%s165 + $0x28] sm:$0x77]
      %v182 = vunpack.c.l.s4 1983009808
      %v183 = vunpack.c.0.s8 %v182
      %v184 = vlaneseq
      %v185 = vshrl.u32 %v184, 7
      %v186 = vsub.s32 %v183, %v185
      %v187 = vrot.slane %v171, %v186
      %v189 = vunpack.c.l.s4 1983009808
      %v190 = vunpack.c.0.s8 %v189
      %v191 = vlaneseq
      %v192 = vshrl.u32 %v191, 7
      %v193 = vsub.s32 %v190, %v192
      %v194 = vrot.slane %v172, %v193
      %v196 = vunpack.c.l.s4 1983009808
      %v197 = vunpack.c.0.s8 %v196
      %v198 = vlaneseq
      %v199 = vshrl.u32 %v198, 7
      %v200 = vsub.s32 %v197, %v199
      %v201 = vrot.slane %v173, %v200
      %v203 = vunpack.c.l.s4 1983009808
      %v204 = vunpack.c.0.s8 %v203
      %v205 = vlaneseq
      %v206 = vshrl.u32 %v205, 7
      %v207 = vsub.s32 %v204, %v206
      %v208 = vrot.slane %v174, %v207
      %v209 = vld [vmem:[%s1] sm:$0xff]
      %v210 = vld [vmem:[%s1 + $0x8] sm:$0xff]
      %v211 = vld [vmem:[%s1 + $0x10] sm:$0xff]
      %v212 = vld [vmem:[%s1 + $0x18] sm:$0xff]
      %v213 = vld [vmem:[%s1 + $0x20] sm:$0xff]
      %v214 = vld [vmem:[%s1 + $0x28] sm:$0xff]
      %v215 = vld [vmem:[%s1 + $0x30] sm:$0xff]
      %v216 = vld [vmem:[%s1 + $0x38] sm:$0xff]
      %v217 = vld [vmem:[%s1 + $0x40] sm:$0xff]
      %v218 = vld [vmem:[%s1 + $0x48] sm:$0xff]
      %v219 = vld [vmem:[%s1 + $0x50] sm:$0xff]
      %v220 = vld [vmem:[%s1 + $0x58] sm:$0xff]
      %v221 = vld [vmem:[%s1 + $0x60] sm:$0xff]
      %v222 = vld [vmem:[%s1 + $0x68] sm:$0xff]
      %v223 = vld [vmem:[%s1 + $0x70] sm:$0xff]
      %v224 = vld [vmem:[%s1 + $0x78] sm:$0xff]
      %v225 = vld [vmem:[%s1 + $0x80] sm:$0xff]
      %v226 = vld [vmem:[%s1 + $0x88] sm:$0xff]
      %v227 = vld [vmem:[%s1 + $0x90] sm:$0xff]
      %v228 = vld [vmem:[%s1 + $0x98] sm:$0xff]
      %v229 = vld [vmem:[%s1 + $0xa0] sm:$0xff]
      %v230 = vld [vmem:[%s1 + $0xa8] sm:$0xff]
      %v231 = vld [vmem:[%s1 + $0xb0] sm:$0xff]
      %v232 = vld [vmem:[%s1 + $0xb8] sm:$0xff]
      %v233 = vld [vmem:[%s1 + $0xc0] sm:$0xff]
      %v234 = vld [vmem:[%s1 + $0xc8] sm:$0xff]
      %v235 = vld [vmem:[%s1 + $0xd0] sm:$0xff]
      %v236 = vld [vmem:[%s1 + $0xd8] sm:$0xff]
      %v237 = vld [vmem:[%s1 + $0xe0] sm:$0xff]
      %v238 = vld [vmem:[%s1 + $0xe8] sm:$0xff]
      %v239 = vld [vmem:[%s1 + $0xf0] sm:$0xff]
      %v240 = vld [vmem:[%s1 + $0xf8] sm:$0xff]
      %v241 = vcombine.high %v187, %v187
      %v242 = vcombine.high %v194, %v194
      %v243 = vcombine.high %v201, %v201
      %v244 = vcombine.high %v208, %v208
      %vm245 = vsmask.f32 1280
      %vm246 = vsmask.f32 3336
      %vm247 = vmor %vm245, %vm246
      %vm248 = vsmask.f32 5392
      %vm249 = vmor %vm247, %vm248
      %vm250 = vsmask.f32 7448
      %vm251 = vmor %vm249, %vm250
      %v253 = vshrl.u32 %v187, 16
      %v255 = vrot.slane %v253, 6
      %v256 = vshll.u32 %v187, 16
      %v258 = vrot.slane %v256, 7
      %v259 = vor.u32 %v255, %v258
      %v260 = vrot.slane %v259, 2
      %v262 = vshll.u32 %v241, 16
      %v264 = vrot.slane %v262, 7
      %v265 = vsel %vm251, %v260, %v264
      %v267 = vshrl.u32 %v194, 16
      %v269 = vrot.slane %v267, 6
      %v270 = vshll.u32 %v194, 16
      %v272 = vrot.slane %v270, 7
      %v273 = vor.u32 %v269, %v272
      %v274 = vrot.slane %v273, 2
      %v276 = vshll.u32 %v242, 16
      %v278 = vrot.slane %v276, 7
      %v279 = vsel %vm251, %v274, %v278
      %v281 = vshrl.u32 %v201, 16
      %v283 = vrot.slane %v281, 6
      %v284 = vshll.u32 %v201, 16
      %v286 = vrot.slane %v284, 7
      %v287 = vor.u32 %v283, %v286
      %v288 = vrot.slane %v287, 2
      %v290 = vshll.u32 %v243, 16
      %v292 = vrot.slane %v290, 7
      %v293 = vsel %vm251, %v288, %v292
      %v295 = vshrl.u32 %v208, 16
      %v297 = vrot.slane %v295, 6
      %v298 = vshll.u32 %v208, 16
      %v300 = vrot.slane %v298, 7
      %v301 = vor.u32 %v297, %v300
      %v302 = vrot.slane %v301, 2
      %v304 = vshll.u32 %v244, 16
      %v306 = vrot.slane %v304, 7
      %v307 = vsel %vm251, %v302, %v306
      %s308 = scalar_lea.vmem %s1, 256
      %v309 = vld [vmem:[%s308] sm:$0xff]
      %v310 = vld [vmem:[%s308 + $0x8] sm:$0xff]
      %v311 = vld [vmem:[%s308 + $0x10] sm:$0xff]
      %v312 = vld [vmem:[%s308 + $0x18] sm:$0xff]
      %v313 = vld [vmem:[%s308 + $0x20] sm:$0xff]
      %v314 = vld [vmem:[%s308 + $0x28] sm:$0xff]
      %v315 = vld [vmem:[%s308 + $0x30] sm:$0xff]
      %v316 = vld [vmem:[%s308 + $0x38] sm:$0xff]
      %v317 = vld [vmem:[%s308 + $0x40] sm:$0xff]
      %v318 = vld [vmem:[%s308 + $0x48] sm:$0xff]
      %v319 = vld [vmem:[%s308 + $0x50] sm:$0xff]
      %v320 = vld [vmem:[%s308 + $0x58] sm:$0xff]
      %v321 = vld [vmem:[%s308 + $0x60] sm:$0xff]
      %v322 = vld [vmem:[%s308 + $0x68] sm:$0xff]
      %v323 = vld [vmem:[%s308 + $0x70] sm:$0xff]
      %v324 = vld [vmem:[%s308 + $0x78] sm:$0xff]
      %v325 = vld [vmem:[%s308 + $0x80] sm:$0xff]
      %v326 = vld [vmem:[%s308 + $0x88] sm:$0xff]
      %v327 = vld [vmem:[%s308 + $0x90] sm:$0xff]
      %v328 = vld [vmem:[%s308 + $0x98] sm:$0xff]
      %v329 = vld [vmem:[%s308 + $0xa0] sm:$0xff]
      %v330 = vld [vmem:[%s308 + $0xa8] sm:$0xff]
      %v331 = vld [vmem:[%s308 + $0xb0] sm:$0xff]
      %v332 = vld [vmem:[%s308 + $0xb8] sm:$0xff]
      %v333 = vld [vmem:[%s308 + $0xc0] sm:$0xff]
      %v334 = vld [vmem:[%s308 + $0xc8] sm:$0xff]
      %v335 = vld [vmem:[%s308 + $0xd0] sm:$0xff]
      %v336 = vld [vmem:[%s308 + $0xd8] sm:$0xff]
      %v337 = vld [vmem:[%s308 + $0xe0] sm:$0xff]
      %v338 = vld [vmem:[%s308 + $0xe8] sm:$0xff]
      %v339 = vld [vmem:[%s308 + $0xf0] sm:$0xff]
      %v340 = vld [vmem:[%s308 + $0xf8] sm:$0xff]
      %v341 = vcombine.low %v265, %v279
      %v342 = vcombine.low %v293, %v307
      %v344 = vunpack.c.l.s4 1983009808
      %v345 = vunpack.c.0.s8 %v344
      %v346 = vlaneseq
      %v347 = vshrl.u32 %v346, 7
      %v348 = vsub.s32 %v345, %v347
      %v349 = vrot.slane %v341, %v348
      %v351 = vunpack.c.l.s4 1983009808
      %v352 = vunpack.c.0.s8 %v351
      %v353 = vlaneseq
      %v354 = vshrl.u32 %v353, 7
      %v355 = vsub.s32 %v352, %v354
      %v356 = vrot.slane %v342, %v355
      %v357 = vcombine.low %v349, %v356
      %v358 = vcombine.high %v349, %v356
      %v393 = vunpack.c.l.b16 %v309
      %v394 = vunpack.c.h.b16 %v309
      %v395 = vunpack.c.l.b16 %v310
      %v396 = vunpack.c.h.b16 %v310
      %v397 = vunpack.c.l.b16 %v311
      %v398 = vunpack.c.h.b16 %v311
      %v399 = vunpack.c.l.b16 %v312
      %v400 = vunpack.c.h.b16 %v312
      %v401 = vunpack.c.l.b16 %v313
      %v402 = vunpack.c.h.b16 %v313
      %v403 = vunpack.c.l.b16 %v314
      %v404 = vunpack.c.h.b16 %v314
      %v405 = vunpack.c.l.b16 %v315
      %v406 = vunpack.c.h.b16 %v315
      %v407 = vunpack.c.l.b16 %v316
      %v408 = vunpack.c.h.b16 %v316
      %v409 = vunpack.c.l.b16 %v317
      %v410 = vunpack.c.h.b16 %v317
      %v411 = vunpack.c.l.b16 %v318
      %v412 = vunpack.c.h.b16 %v318
      %v413 = vunpack.c.l.b16 %v319
      %v414 = vunpack.c.h.b16 %v319
      %v415 = vunpack.c.l.b16 %v320
      %v416 = vunpack.c.h.b16 %v320
      %v417 = vunpack.c.l.b16 %v321
      %v418 = vunpack.c.h.b16 %v321
      %v419 = vunpack.c.l.b16 %v322
      %v420 = vunpack.c.h.b16 %v322
      %v421 = vunpack.c.l.b16 %v323
      %v422 = vunpack.c.h.b16 %v323
      %v423 = vunpack.c.l.b16 %v324
      %v424 = vunpack.c.h.b16 %v324
      %v425 = vunpack.c.l.b16 %v325
      %v426 = vunpack.c.h.b16 %v325
      %v427 = vunpack.c.l.b16 %v326
      %v428 = vunpack.c.h.b16 %v326
      %v429 = vunpack.c.l.b16 %v327
      %v430 = vunpack.c.h.b16 %v327
      %v431 = vunpack.c.l.b16 %v328
      %v432 = vunpack.c.h.b16 %v328
      %v433 = vunpack.c.l.b16 %v329
      %v434 = vunpack.c.h.b16 %v329
      %v435 = vunpack.c.l.b16 %v330
      %v436 = vunpack.c.h.b16 %v330
      %v437 = vunpack.c.l.b16 %v331
      %v438 = vunpack.c.h.b16 %v331
      %v439 = vunpack.c.l.b16 %v332
      %v440 = vunpack.c.h.b16 %v332
      %v441 = vunpack.c.l.b16 %v333
      %v442 = vunpack.c.h.b16 %v333
      %v443 = vunpack.c.l.b16 %v334
      %v444 = vunpack.c.h.b16 %v334
      %v445 = vunpack.c.l.b16 %v335
      %v446 = vunpack.c.h.b16 %v335
      %v447 = vunpack.c.l.b16 %v336
      %v448 = vunpack.c.h.b16 %v336
      %v449 = vunpack.c.l.b16 %v337
      %v450 = vunpack.c.h.b16 %v337
      %v451 = vunpack.c.l.b16 %v338
      %v452 = vunpack.c.h.b16 %v338
      %v453 = vunpack.c.l.b16 %v339
      %v454 = vunpack.c.h.b16 %v339
      %v455 = vunpack.c.l.b16 %v340
      %v456 = vunpack.c.h.b16 %v340
      %v457 = vpack.c.b16 %v395, %v393
      %v458 = vpack.c.b16 %v396, %v394
      %v459 = vpack.c.b16 %v399, %v397
      %v460 = vpack.c.b16 %v400, %v398
      %v461 = vpack.c.b16 %v403, %v401
      %v462 = vpack.c.b16 %v404, %v402
      %v463 = vpack.c.b16 %v407, %v405
      %v464 = vpack.c.b16 %v408, %v406
      %v465 = vpack.c.b16 %v411, %v409
      %v466 = vpack.c.b16 %v412, %v410
      %v467 = vpack.c.b16 %v415, %v413
      %v468 = vpack.c.b16 %v416, %v414
      %v469 = vpack.c.b16 %v419, %v417
      %v470 = vpack.c.b16 %v420, %v418
      %v471 = vpack.c.b16 %v423, %v421
      %v472 = vpack.c.b16 %v424, %v422
      %v473 = vpack.c.b16 %v427, %v425
      %v474 = vpack.c.b16 %v428, %v426
      %v475 = vpack.c.b16 %v431, %v429
      %v476 = vpack.c.b16 %v432, %v430
      %v477 = vpack.c.b16 %v435, %v433
      %v478 = vpack.c.b16 %v436, %v434
      %v479 = vpack.c.b16 %v439, %v437
      %v480 = vpack.c.b16 %v440, %v438
      %v481 = vpack.c.b16 %v443, %v441
      %v482 = vpack.c.b16 %v444, %v442
      %v483 = vpack.c.b16 %v447, %v445
      %v484 = vpack.c.b16 %v448, %v446
      %v485 = vpack.c.b16 %v451, %v449
      %v486 = vpack.c.b16 %v452, %v450
      %v487 = vpack.c.b16 %v455, %v453
      %v488 = vpack.c.b16 %v456, %v454
      %521 = vmatprep.subr.bf16.mxu0 %v458
      %522 = vmatpush1.bf16.msra.mxu0 %v457
      %523 = vmatprep.subr.bf16.mxu0 %v460
      %524 = vmatpush1.bf16.msra.mxu0 %v459
      %525 = vmatprep.subr.bf16.mxu0 %v462
      %526 = vmatpush1.bf16.msra.mxu0 %v461
      %527 = vmatprep.subr.bf16.mxu0 %v464
      %528 = vmatpush1.bf16.msra.mxu0 %v463
      %529 = vmatprep.subr.bf16.mxu0 %v466
      %530 = vmatpush1.bf16.msra.mxu0 %v465
      %531 = vmatprep.subr.bf16.mxu0 %v468
      %532 = vmatpush1.bf16.msra.mxu0 %v467
      %533 = vmatprep.subr.bf16.mxu0 %v470
      %534 = vmatpush1.bf16.msra.mxu0 %v469
      %535 = vmatprep.subr.bf16.mxu0 %v472
      %536 = vmatpush1.bf16.msra.mxu0 %v471
      %537 = vmatprep.subr.bf16.mxu0 %v474
      %538 = vmatpush1.bf16.msra.mxu0 %v473
      %539 = vmatprep.subr.bf16.mxu0 %v476
      %540 = vmatpush1.bf16.msra.mxu0 %v475
      %541 = vmatprep.subr.bf16.mxu0 %v478
      %542 = vmatpush1.bf16.msra.mxu0 %v477
      %543 = vmatprep.subr.bf16.mxu0 %v480
      %544 = vmatpush1.bf16.msra.mxu0 %v479
      %545 = vmatprep.subr.bf16.mxu0 %v482
      %546 = vmatpush1.bf16.msra.mxu0 %v481
      %547 = vmatprep.subr.bf16.mxu0 %v484
      %548 = vmatpush1.bf16.msra.mxu0 %v483
      %549 = vmatprep.subr.bf16.mxu0 %v486
      %550 = vmatpush1.bf16.msra.mxu0 %v485
      %551 = vmatprep.subr.bf16.mxu0 %v488
      %552 = vmatpush1.bf16.msra.mxu0 %v487
      %553 = vmatprep.mubr.bf16.mxu0 %v358
      %554 = vmatmul.mubr.bf16.gmra.mrb[0].mxu0 %v357
      %v555 = vpop.f32.mrb[0].mxu0
      %v556 = vadd.f32 0.0, %v555
      %v557 = vpop.f32.mrb[0].mxu0
      %v558 = vadd.f32 0.0, %v557
      %v559 = vpop.f32.mrb[0].mxu0
      %v560 = vadd.f32 0.0, %v559
      %v561 = vpop.f32.mrb[0].mxu0
      %v562 = vadd.f32 0.0, %v561
      %563 = vdwg.mxu0
      %v564 = vcombine.low %v187, %v194
      %v565 = vcombine.low %v201, %v208
      %v567 = vunpack.c.l.s4 1983009808
      %v568 = vunpack.c.0.s8 %v567
      %v569 = vlaneseq
      %v570 = vshrl.u32 %v569, 7
      %v571 = vsub.s32 %v568, %v570
      %v572 = vrot.slane %v564, %v571
      %v574 = vunpack.c.l.s4 1983009808
      %v575 = vunpack.c.0.s8 %v574
      %v576 = vlaneseq
      %v577 = vshrl.u32 %v576, 7
      %v578 = vsub.s32 %v575, %v577
      %v579 = vrot.slane %v565, %v578
      %v580 = vcombine.low %v572, %v579
      %v581 = vcombine.high %v572, %v579
      %v616 = vunpack.c.l.b16 %v209
      %v617 = vunpack.c.h.b16 %v209
      %v618 = vunpack.c.l.b16 %v210
      %v619 = vunpack.c.h.b16 %v210
      %v620 = vunpack.c.l.b16 %v211
      %v621 = vunpack.c.h.b16 %v211
      %v622 = vunpack.c.l.b16 %v212
      %v623 = vunpack.c.h.b16 %v212
      %v624 = vunpack.c.l.b16 %v213
      %v625 = vunpack.c.h.b16 %v213
      %v626 = vunpack.c.l.b16 %v214
      %v627 = vunpack.c.h.b16 %v214
      %v628 = vunpack.c.l.b16 %v215
      %v629 = vunpack.c.h.b16 %v215
      %v630 = vunpack.c.l.b16 %v216
      %v631 = vunpack.c.h.b16 %v216
      %v632 = vunpack.c.l.b16 %v217
      %v633 = vunpack.c.h.b16 %v217
      %v634 = vunpack.c.l.b16 %v218
      %v635 = vunpack.c.h.b16 %v218
      %v636 = vunpack.c.l.b16 %v219
      %v637 = vunpack.c.h.b16 %v219
      %v638 = vunpack.c.l.b16 %v220
      %v639 = vunpack.c.h.b16 %v220
      %v640 = vunpack.c.l.b16 %v221
      %v641 = vunpack.c.h.b16 %v221
      %v642 = vunpack.c.l.b16 %v222
      %v643 = vunpack.c.h.b16 %v222
      %v644 = vunpack.c.l.b16 %v223
      %v645 = vunpack.c.h.b16 %v223
      %v646 = vunpack.c.l.b16 %v224
      %v647 = vunpack.c.h.b16 %v224
      %v648 = vunpack.c.l.b16 %v225
      %v649 = vunpack.c.h.b16 %v225
      %v650 = vunpack.c.l.b16 %v226
      %v651 = vunpack.c.h.b16 %v226
      %v652 = vunpack.c.l.b16 %v227
      %v653 = vunpack.c.h.b16 %v227
      %v654 = vunpack.c.l.b16 %v228
      %v655 = vunpack.c.h.b16 %v228
      %v656 = vunpack.c.l.b16 %v229
      %v657 = vunpack.c.h.b16 %v229
      %v658 = vunpack.c.l.b16 %v230
      %v659 = vunpack.c.h.b16 %v230
      %v660 = vunpack.c.l.b16 %v231
      %v661 = vunpack.c.h.b16 %v231
      %v662 = vunpack.c.l.b16 %v232
      %v663 = vunpack.c.h.b16 %v232
      %v664 = vunpack.c.l.b16 %v233
      %v665 = vunpack.c.h.b16 %v233
      %v666 = vunpack.c.l.b16 %v234
      %v667 = vunpack.c.h.b16 %v234
      %v668 = vunpack.c.l.b16 %v235
      %v669 = vunpack.c.h.b16 %v235
      %v670 = vunpack.c.l.b16 %v236
      %v671 = vunpack.c.h.b16 %v236
      %v672 = vunpack.c.l.b16 %v237
      %v673 = vunpack.c.h.b16 %v237
      %v674 = vunpack.c.l.b16 %v238
      %v675 = vunpack.c.h.b16 %v238
      %v676 = vunpack.c.l.b16 %v239
      %v677 = vunpack.c.h.b16 %v239
      %v678 = vunpack.c.l.b16 %v240
      %v679 = vunpack.c.h.b16 %v240
      %v680 = vpack.c.b16 %v618, %v616
      %v681 = vpack.c.b16 %v619, %v617
      %v682 = vpack.c.b16 %v622, %v620
      %v683 = vpack.c.b16 %v623, %v621
      %v684 = vpack.c.b16 %v626, %v624
      %v685 = vpack.c.b16 %v627, %v625
      %v686 = vpack.c.b16 %v630, %v628
      %v687 = vpack.c.b16 %v631, %v629
      %v688 = vpack.c.b16 %v634, %v632
      %v689 = vpack.c.b16 %v635, %v633
      %v690 = vpack.c.b16 %v638, %v636
      %v691 = vpack.c.b16 %v639, %v637
      %v692 = vpack.c.b16 %v642, %v640
      %v693 = vpack.c.b16 %v643, %v641
      %v694 = vpack.c.b16 %v646, %v644
      %v695 = vpack.c.b16 %v647, %v645
      %v696 = vpack.c.b16 %v650, %v648
      %v697 = vpack.c.b16 %v651, %v649
      %v698 = vpack.c.b16 %v654, %v652
      %v699 = vpack.c.b16 %v655, %v653
      %v700 = vpack.c.b16 %v658, %v656
      %v701 = vpack.c.b16 %v659, %v657
      %v702 = vpack.c.b16 %v662, %v660
      %v703 = vpack.c.b16 %v663, %v661
      %v704 = vpack.c.b16 %v666, %v664
      %v705 = vpack.c.b16 %v667, %v665
      %v706 = vpack.c.b16 %v670, %v668
      %v707 = vpack.c.b16 %v671, %v669
      %v708 = vpack.c.b16 %v674, %v672
      %v709 = vpack.c.b16 %v675, %v673
      %v710 = vpack.c.b16 %v678, %v676
      %v711 = vpack.c.b16 %v679, %v677
      %744 = vmatprep.subr.bf16.mxu0 %v681
      %745 = vmatpush1.bf16.msra.mxu0 %v680
      %746 = vmatprep.subr.bf16.mxu0 %v683
      %747 = vmatpush1.bf16.msra.mxu0 %v682
      %748 = vmatprep.subr.bf16.mxu0 %v685
      %749 = vmatpush1.bf16.msra.mxu0 %v684
      %750 = vmatprep.subr.bf16.mxu0 %v687
      %751 = vmatpush1.bf16.msra.mxu0 %v686
      %752 = vmatprep.subr.bf16.mxu0 %v689
      %753 = vmatpush1.bf16.msra.mxu0 %v688
      %754 = vmatprep.subr.bf16.mxu0 %v691
      %755 = vmatpush1.bf16.msra.mxu0 %v690
      %756 = vmatprep.subr.bf16.mxu0 %v693
      %757 = vmatpush1.bf16.msra.mxu0 %v692
      %758 = vmatprep.subr.bf16.mxu0 %v695
      %759 = vmatpush1.bf16.msra.mxu0 %v694
      %760 = vmatprep.subr.bf16.mxu0 %v697
      %761 = vmatpush1.bf16.msra.mxu0 %v696
      %762 = vmatprep.subr.bf16.mxu0 %v699
      %763 = vmatpush1.bf16.msra.mxu0 %v698
      %764 = vmatprep.subr.bf16.mxu0 %v701
      %765 = vmatpush1.bf16.msra.mxu0 %v700
      %766 = vmatprep.subr.bf16.mxu0 %v703
      %767 = vmatpush1.bf16.msra.mxu0 %v702
      %768 = vmatprep.subr.bf16.mxu0 %v705
      %769 = vmatpush1.bf16.msra.mxu0 %v704
      %770 = vmatprep.subr.bf16.mxu0 %v707
      %771 = vmatpush1.bf16.msra.mxu0 %v706
      %772 = vmatprep.subr.bf16.mxu0 %v709
      %773 = vmatpush1.bf16.msra.mxu0 %v708
      %774 = vmatprep.subr.bf16.mxu0 %v711
      %775 = vmatpush1.bf16.msra.mxu0 %v710
      %776 = vmatprep.mubr.bf16.mxu0 %v581
      %777 = vmatmul.mubr.bf16.gmra.mrb[0].mxu0 %v580
      %v778 = vpop.f32.mrb[0].mxu0
      %v779 = vadd.f32 %v556, %v778
      %v780 = vpop.f32.mrb[0].mxu0
      %v781 = vadd.f32 %v558, %v780
      %v782 = vpop.f32.mrb[0].mxu0
      %v783 = vadd.f32 %v560, %v782
      %v784 = vpop.f32.mrb[0].mxu0
      %v785 = vadd.f32 %v562, %v784
      %786 = vdwg.mxu0
      %vm787 = vcmask 1040384
      %vm788 = vcmask 1042434
      %vm789 = vmor %vm787, %vm788
      %vm790 = vcmask 1044484
      %vm791 = vmor %vm789, %vm790
      %vm792 = vcmask 1046534
      %vm793 = vmor %vm791, %vm792
      %v794 = vrot.slane %v187, 7
      %v795 = vrot.slane %v794, 2
      %v796 = vrot.slane %v241, 7
      %v797 = vsel %vm793, %v795, %v796
      %v798 = vrot.slane %v194, 7
      %v799 = vrot.slane %v798, 2
      %v800 = vrot.slane %v242, 7
      %v801 = vsel %vm793, %v799, %v800
      %v802 = vrot.slane %v201, 7
      %v803 = vrot.slane %v802, 2
      %v804 = vrot.slane %v243, 7
      %v805 = vsel %vm793, %v803, %v804
      %v806 = vrot.slane %v208, 7
      %v807 = vrot.slane %v806, 2
      %v808 = vrot.slane %v244, 7
      %v809 = vsel %vm793, %v807, %v808
      %s810 = scalar_lea.vmem %s1, 512
      %v811 = vld [vmem:[%s810] sm:$0xff]
      %v812 = vld [vmem:[%s810 + $0x8] sm:$0xff]
      %v813 = vld [vmem:[%s810 + $0x10] sm:$0xff]
      %v814 = vld [vmem:[%s810 + $0x18] sm:$0xff]
      %v815 = vld [vmem:[%s810 + $0x20] sm:$0xff]
      %v816 = vld [vmem:[%s810 + $0x28] sm:$0xff]
      %v817 = vld [vmem:[%s810 + $0x30] sm:$0xff]
      %v818 = vld [vmem:[%s810 + $0x38] sm:$0xff]
      %v819 = vld [vmem:[%s810 + $0x40] sm:$0xff]
      %v820 = vld [vmem:[%s810 + $0x48] sm:$0xff]
      %v821 = vld [vmem:[%s810 + $0x50] sm:$0xff]
      %v822 = vld [vmem:[%s810 + $0x58] sm:$0xff]
      %v823 = vld [vmem:[%s810 + $0x60] sm:$0xff]
      %v824 = vld [vmem:[%s810 + $0x68] sm:$0xff]
      %v825 = vld [vmem:[%s810 + $0x70] sm:$0xff]
      %v826 = vld [vmem:[%s810 + $0x78] sm:$0xff]
      %v827 = vld [vmem:[%s810 + $0x80] sm:$0xff]
      %v828 = vld [vmem:[%s810 + $0x88] sm:$0xff]
      %v829 = vld [vmem:[%s810 + $0x90] sm:$0xff]
      %v830 = vld [vmem:[%s810 + $0x98] sm:$0xff]
      %v831 = vld [vmem:[%s810 + $0xa0] sm:$0xff]
      %v832 = vld [vmem:[%s810 + $0xa8] sm:$0xff]
      %v833 = vld [vmem:[%s810 + $0xb0] sm:$0xff]
      %v834 = vld [vmem:[%s810 + $0xb8] sm:$0xff]
      %v835 = vld [vmem:[%s810 + $0xc0] sm:$0xff]
      %v836 = vld [vmem:[%s810 + $0xc8] sm:$0xff]
      %v837 = vld [vmem:[%s810 + $0xd0] sm:$0xff]
      %v838 = vld [vmem:[%s810 + $0xd8] sm:$0xff]
      %v839 = vld [vmem:[%s810 + $0xe0] sm:$0xff]
      %v840 = vld [vmem:[%s810 + $0xe8] sm:$0xff]
      %v841 = vld [vmem:[%s810 + $0xf0] sm:$0xff]
      %v842 = vld [vmem:[%s810 + $0xf8] sm:$0xff]
      %v843 = vcombine.low %v797, %v801
      %v844 = vcombine.low %v805, %v809
      %v846 = vunpack.c.l.s4 1983009808
      %v847 = vunpack.c.0.s8 %v846
      %v848 = vlaneseq
      %v849 = vshrl.u32 %v848, 7
      %v850 = vsub.s32 %v847, %v849
      %v851 = vrot.slane %v843, %v850
      %v853 = vunpack.c.l.s4 1983009808
      %v854 = vunpack.c.0.s8 %v853
      %v855 = vlaneseq
      %v856 = vshrl.u32 %v855, 7
      %v857 = vsub.s32 %v854, %v856
      %v858 = vrot.slane %v844, %v857
      %v859 = vcombine.low %v851, %v858
      %v860 = vcombine.high %v851, %v858
      %v895 = vunpack.c.l.b16 %v811
      %v896 = vunpack.c.h.b16 %v811
      %v897 = vunpack.c.l.b16 %v812
      %v898 = vunpack.c.h.b16 %v812
      %v899 = vunpack.c.l.b16 %v813
      %v900 = vunpack.c.h.b16 %v813
      %v901 = vunpack.c.l.b16 %v814
      %v902 = vunpack.c.h.b16 %v814
      %v903 = vunpack.c.l.b16 %v815
      %v904 = vunpack.c.h.b16 %v815
      %v905 = vunpack.c.l.b16 %v816
      %v906 = vunpack.c.h.b16 %v816
      %v907 = vunpack.c.l.b16 %v817
      %v908 = vunpack.c.h.b16 %v817
      %v909 = vunpack.c.l.b16 %v818
      %v910 = vunpack.c.h.b16 %v818
      %v911 = vunpack.c.l.b16 %v819
      %v912 = vunpack.c.h.b16 %v819
      %v913 = vunpack.c.l.b16 %v820
      %v914 = vunpack.c.h.b16 %v820
      %v915 = vunpack.c.l.b16 %v821
      %v916 = vunpack.c.h.b16 %v821
      %v917 = vunpack.c.l.b16 %v822
      %v918 = vunpack.c.h.b16 %v822
      %v919 = vunpack.c.l.b16 %v823
      %v920 = vunpack.c.h.b16 %v823
      %v921 = vunpack.c.l.b16 %v824
      %v922 = vunpack.c.h.b16 %v824
      %v923 = vunpack.c.l.b16 %v825
      %v924 = vunpack.c.h.b16 %v825
      %v925 = vunpack.c.l.b16 %v826
      %v926 = vunpack.c.h.b16 %v826
      %v927 = vunpack.c.l.b16 %v827
      %v928 = vunpack.c.h.b16 %v827
      %v929 = vunpack.c.l.b16 %v828
      %v930 = vunpack.c.h.b16 %v828
      %v931 = vunpack.c.l.b16 %v829
      %v932 = vunpack.c.h.b16 %v829
      %v933 = vunpack.c.l.b16 %v830
      %v934 = vunpack.c.h.b16 %v830
      %v935 = vunpack.c.l.b16 %v831
      %v936 = vunpack.c.h.b16 %v831
      %v937 = vunpack.c.l.b16 %v832
      %v938 = vunpack.c.h.b16 %v832
      %v939 = vunpack.c.l.b16 %v833
      %v940 = vunpack.c.h.b16 %v833
      %v941 = vunpack.c.l.b16 %v834
      %v942 = vunpack.c.h.b16 %v834
      %v943 = vunpack.c.l.b16 %v835
      %v944 = vunpack.c.h.b16 %v835
      %v945 = vunpack.c.l.b16 %v836
      %v946 = vunpack.c.h.b16 %v836
      %v947 = vunpack.c.l.b16 %v837
      %v948 = vunpack.c.h.b16 %v837
      %v949 = vunpack.c.l.b16 %v838
      %v950 = vunpack.c.h.b16 %v838
      %v951 = vunpack.c.l.b16 %v839
      %v952 = vunpack.c.h.b16 %v839
      %v953 = vunpack.c.l.b16 %v840
      %v954 = vunpack.c.h.b16 %v840
      %v955 = vunpack.c.l.b16 %v841
      %v956 = vunpack.c.h.b16 %v841
      %v957 = vunpack.c.l.b16 %v842
      %v958 = vunpack.c.h.b16 %v842
      %v959 = vpack.c.b16 %v897, %v895
      %v960 = vpack.c.b16 %v898, %v896
      %v961 = vpack.c.b16 %v901, %v899
      %v962 = vpack.c.b16 %v902, %v900
      %v963 = vpack.c.b16 %v905, %v903
      %v964 = vpack.c.b16 %v906, %v904
      %v965 = vpack.c.b16 %v909, %v907
      %v966 = vpack.c.b16 %v910, %v908
      %v967 = vpack.c.b16 %v913, %v911
      %v968 = vpack.c.b16 %v914, %v912
      %v969 = vpack.c.b16 %v917, %v915
      %v970 = vpack.c.b16 %v918, %v916
      %v971 = vpack.c.b16 %v921, %v919
      %v972 = vpack.c.b16 %v922, %v920
      %v973 = vpack.c.b16 %v925, %v923
      %v974 = vpack.c.b16 %v926, %v924
      %v975 = vpack.c.b16 %v929, %v927
      %v976 = vpack.c.b16 %v930, %v928
      %v977 = vpack.c.b16 %v933, %v931
      %v978 = vpack.c.b16 %v934, %v932
      %v979 = vpack.c.b16 %v937, %v935
      %v980 = vpack.c.b16 %v938, %v936
      %v981 = vpack.c.b16 %v941, %v939
      %v982 = vpack.c.b16 %v942, %v940
      %v983 = vpack.c.b16 %v945, %v943
      %v984 = vpack.c.b16 %v946, %v944
      %v985 = vpack.c.b16 %v949, %v947
      %v986 = vpack.c.b16 %v950, %v948
      %v987 = vpack.c.b16 %v953, %v951
      %v988 = vpack.c.b16 %v954, %v952
      %v989 = vpack.c.b16 %v957, %v955
      %v990 = vpack.c.b16 %v958, %v956
      %1023 = vmatprep.subr.bf16.mxu0 %v960
      %1024 = vmatpush1.bf16.msra.mxu0 %v959
      %1025 = vmatprep.subr.bf16.mxu0 %v962
      %1026 = vmatpush1.bf16.msra.mxu0 %v961
      %1027 = vmatprep.subr.bf16.mxu0 %v964
      %1028 = vmatpush1.bf16.msra.mxu0 %v963
      %1029 = vmatprep.subr.bf16.mxu0 %v966
      %1030 = vmatpush1.bf16.msra.mxu0 %v965
      %1031 = vmatprep.subr.bf16.mxu0 %v968
      %1032 = vmatpush1.bf16.msra.mxu0 %v967
      %1033 = vmatprep.subr.bf16.mxu0 %v970
      %1034 = vmatpush1.bf16.msra.mxu0 %v969
      %1035 = vmatprep.subr.bf16.mxu0 %v972
      %1036 = vmatpush1.bf16.msra.mxu0 %v971
      %1037 = vmatprep.subr.bf16.mxu0 %v974
      %1038 = vmatpush1.bf16.msra.mxu0 %v973
      %1039 = vmatprep.subr.bf16.mxu0 %v976
      %1040 = vmatpush1.bf16.msra.mxu0 %v975
      %1041 = vmatprep.subr.bf16.mxu0 %v978
      %1042 = vmatpush1.bf16.msra.mxu0 %v977
      %1043 = vmatprep.subr.bf16.mxu0 %v980
      %1044 = vmatpush1.bf16.msra.mxu0 %v979
      %1045 = vmatprep.subr.bf16.mxu0 %v982
      %1046 = vmatpush1.bf16.msra.mxu0 %v981
      %1047 = vmatprep.subr.bf16.mxu0 %v984
      %1048 = vmatpush1.bf16.msra.mxu0 %v983
      %1049 = vmatprep.subr.bf16.mxu0 %v986
      %1050 = vmatpush1.bf16.msra.mxu0 %v985
      %1051 = vmatprep.subr.bf16.mxu0 %v988
      %1052 = vmatpush1.bf16.msra.mxu0 %v987
      %1053 = vmatprep.subr.bf16.mxu0 %v990
      %1054 = vmatpush1.bf16.msra.mxu0 %v989
      %1055 = vmatprep.mubr.bf16.mxu0 %v860
      %1056 = vmatmul.mubr.bf16.gmra.mrb[0].mxu0 %v859
      %v1057 = vpop.f32.mrb[0].mxu0
      %v1058 = vadd.f32 0.0, %v1057
      %v1059 = vpop.f32.mrb[0].mxu0
      %v1060 = vadd.f32 0.0, %v1059
      %v1061 = vpop.f32.mrb[0].mxu0
      %v1062 = vadd.f32 0.0, %v1061
      %v1063 = vpop.f32.mrb[0].mxu0
      %v1064 = vadd.f32 0.0, %v1063
      %1065 = vdwg.mxu0
      %v1066 = vadd.f32 %v779, %v1058
      %v1067 = vadd.f32 %v781, %v1060
      %v1068 = vadd.f32 %v783, %v1062
      %v1069 = vadd.f32 %v785, %v1064
      %v1072 = vunpack.c.l.s4 1983009808
      %v1073 = vunpack.c.0.s8 %v1072
      %v1074 = vlaneseq
      %v1075 = vshrl.u32 %v1074, 7
      %v1076 = vsub.s32 %v1073, %v1075
      %v1077 = vrot.slane %v175, %v1076
      %s1078 = scalar_lea.vmem %s1, 768
      %v1079 = vld [vmem:[%s1078] sm:$0xff]
      %v1080 = vld [vmem:[%s1078 + $0x8] sm:$0xff]
      %v1081 = vld [vmem:[%s1078 + $0x10] sm:$0xff]
      %v1082 = vld [vmem:[%s1078 + $0x18] sm:$0xff]
      %v1083 = vld [vmem:[%s1078 + $0x20] sm:$0xff]
      %v1084 = vld [vmem:[%s1078 + $0x28] sm:$0xff]
      %v1085 = vld [vmem:[%s1078 + $0x30] sm:$0xff]
      %v1086 = vld [vmem:[%s1078 + $0x38] sm:$0xff]
      %v1087 = vld [vmem:[%s1078 + $0x40] sm:$0xff]
      %v1088 = vld [vmem:[%s1078 + $0x48] sm:$0xff]
      %v1089 = vld [vmem:[%s1078 + $0x50] sm:$0xff]
      %v1090 = vld [vmem:[%s1078 + $0x58] sm:$0xff]
      %v1091 = vld [vmem:[%s1078 + $0x60] sm:$0xff]
      %v1092 = vld [vmem:[%s1078 + $0x68] sm:$0xff]
      %v1093 = vld [vmem:[%s1078 + $0x70] sm:$0xff]
      %v1094 = vld [vmem:[%s1078 + $0x78] sm:$0xff]
      %v1095 = vld [vmem:[%s1078 + $0x80] sm:$0xff]
      %v1096 = vld [vmem:[%s1078 + $0x88] sm:$0xff]
      %v1097 = vld [vmem:[%s1078 + $0x90] sm:$0xff]
      %v1098 = vld [vmem:[%s1078 + $0x98] sm:$0xff]
      %v1099 = vld [vmem:[%s1078 + $0xa0] sm:$0xff]
      %v1100 = vld [vmem:[%s1078 + $0xa8] sm:$0xff]
      %v1101 = vld [vmem:[%s1078 + $0xb0] sm:$0xff]
      %v1102 = vld [vmem:[%s1078 + $0xb8] sm:$0xff]
      %v1103 = vld [vmem:[%s1078 + $0xc0] sm:$0xff]
      %v1104 = vld [vmem:[%s1078 + $0xc8] sm:$0xff]
      %v1105 = vld [vmem:[%s1078 + $0xd0] sm:$0xff]
      %v1106 = vld [vmem:[%s1078 + $0xd8] sm:$0xff]
      %v1107 = vld [vmem:[%s1078 + $0xe0] sm:$0xff]
      %v1108 = vld [vmem:[%s1078 + $0xe8] sm:$0xff]
      %v1109 = vld [vmem:[%s1078 + $0xf0] sm:$0xff]
      %v1110 = vld [vmem:[%s1078 + $0xf8] sm:$0xff]
      %v1111 = vcombine.low %v194, %v201
      %v1112 = vcombine.low %v208, %v1077
      %v1114 = vunpack.c.l.s4 1983009808
      %v1115 = vunpack.c.0.s8 %v1114
      %v1116 = vlaneseq
      %v1117 = vshrl.u32 %v1116, 7
      %v1118 = vsub.s32 %v1115, %v1117
      %v1119 = vrot.slane %v1111, %v1118
      %v1121 = vunpack.c.l.s4 1983009808
      %v1122 = vunpack.c.0.s8 %v1121
      %v1123 = vlaneseq
      %v1124 = vshrl.u32 %v1123, 7
      %v1125 = vsub.s32 %v1122, %v1124
      %v1126 = vrot.slane %v1112, %v1125
      %v1127 = vcombine.low %v1119, %v1126
      %v1128 = vcombine.high %v1119, %v1126
      %v1163 = vunpack.c.l.b16 %v1079
      %v1164 = vunpack.c.h.b16 %v1079
      %v1165 = vunpack.c.l.b16 %v1080
      %v1166 = vunpack.c.h.b16 %v1080
      %v1167 = vunpack.c.l.b16 %v1081
      %v1168 = vunpack.c.h.b16 %v1081
      %v1169 = vunpack.c.l.b16 %v1082
      %v1170 = vunpack.c.h.b16 %v1082
      %v1171 = vunpack.c.l.b16 %v1083
      %v1172 = vunpack.c.h.b16 %v1083
      %v1173 = vunpack.c.l.b16 %v1084
      %v1174 = vunpack.c.h.b16 %v1084
      %v1175 = vunpack.c.l.b16 %v1085
      %v1176 = vunpack.c.h.b16 %v1085
      %v1177 = vunpack.c.l.b16 %v1086
      %v1178 = vunpack.c.h.b16 %v1086
      %v1179 = vunpack.c.l.b16 %v1087
      %v1180 = vunpack.c.h.b16 %v1087
      %v1181 = vunpack.c.l.b16 %v1088
      %v1182 = vunpack.c.h.b16 %v1088
      %v1183 = vunpack.c.l.b16 %v1089
      %v1184 = vunpack.c.h.b16 %v1089
      %v1185 = vunpack.c.l.b16 %v1090
      %v1186 = vunpack.c.h.b16 %v1090
      %v1187 = vunpack.c.l.b16 %v1091
      %v1188 = vunpack.c.h.b16 %v1091
      %v1189 = vunpack.c.l.b16 %v1092
      %v1190 = vunpack.c.h.b16 %v1092
      %v1191 = vunpack.c.l.b16 %v1093
      %v1192 = vunpack.c.h.b16 %v1093
      %v1193 = vunpack.c.l.b16 %v1094
      %v1194 = vunpack.c.h.b16 %v1094
      %v1195 = vunpack.c.l.b16 %v1095
      %v1196 = vunpack.c.h.b16 %v1095
      %v1197 = vunpack.c.l.b16 %v1096
      %v1198 = vunpack.c.h.b16 %v1096
      %v1199 = vunpack.c.l.b16 %v1097
      %v1200 = vunpack.c.h.b16 %v1097
      %v1201 = vunpack.c.l.b16 %v1098
      %v1202 = vunpack.c.h.b16 %v1098
      %v1203 = vunpack.c.l.b16 %v1099
      %v1204 = vunpack.c.h.b16 %v1099
      %v1205 = vunpack.c.l.b16 %v1100
      %v1206 = vunpack.c.h.b16 %v1100
      %v1207 = vunpack.c.l.b16 %v1101
      %v1208 = vunpack.c.h.b16 %v1101
      %v1209 = vunpack.c.l.b16 %v1102
      %v1210 = vunpack.c.h.b16 %v1102
      %v1211 = vunpack.c.l.b16 %v1103
      %v1212 = vunpack.c.h.b16 %v1103
      %v1213 = vunpack.c.l.b16 %v1104
      %v1214 = vunpack.c.h.b16 %v1104
      %v1215 = vunpack.c.l.b16 %v1105
      %v1216 = vunpack.c.h.b16 %v1105
      %v1217 = vunpack.c.l.b16 %v1106
      %v1218 = vunpack.c.h.b16 %v1106
      %v1219 = vunpack.c.l.b16 %v1107
      %v1220 = vunpack.c.h.b16 %v1107
      %v1221 = vunpack.c.l.b16 %v1108
      %v1222 = vunpack.c.h.b16 %v1108
      %v1223 = vunpack.c.l.b16 %v1109
      %v1224 = vunpack.c.h.b16 %v1109
      %v1225 = vunpack.c.l.b16 %v1110
      %v1226 = vunpack.c.h.b16 %v1110
      %v1227 = vpack.c.b16 %v1165, %v1163
      %v1228 = vpack.c.b16 %v1166, %v1164
      %v1229 = vpack.c.b16 %v1169, %v1167
      %v1230 = vpack.c.b16 %v1170, %v1168
      %v1231 = vpack.c.b16 %v1173, %v1171
      %v1232 = vpack.c.b16 %v1174, %v1172
      %v1233 = vpack.c.b16 %v1177, %v1175
      %v1234 = vpack.c.b16 %v1178, %v1176
      %v1235 = vpack.c.b16 %v1181, %v1179
      %v1236 = vpack.c.b16 %v1182, %v1180
      %v1237 = vpack.c.b16 %v1185, %v1183
      %v1238 = vpack.c.b16 %v1186, %v1184
      %v1239 = vpack.c.b16 %v1189, %v1187
      %v1240 = vpack.c.b16 %v1190, %v1188
      %v1241 = vpack.c.b16 %v1193, %v1191
      %v1242 = vpack.c.b16 %v1194, %v1192
      %v1243 = vpack.c.b16 %v1197, %v1195
      %v1244 = vpack.c.b16 %v1198, %v1196
      %v1245 = vpack.c.b16 %v1201, %v1199
      %v1246 = vpack.c.b16 %v1202, %v1200
      %v1247 = vpack.c.b16 %v1205, %v1203
      %v1248 = vpack.c.b16 %v1206, %v1204
      %v1249 = vpack.c.b16 %v1209, %v1207
      %v1250 = vpack.c.b16 %v1210, %v1208
      %v1251 = vpack.c.b16 %v1213, %v1211
      %v1252 = vpack.c.b16 %v1214, %v1212
      %v1253 = vpack.c.b16 %v1217, %v1215
      %v1254 = vpack.c.b16 %v1218, %v1216
      %v1255 = vpack.c.b16 %v1221, %v1219
      %v1256 = vpack.c.b16 %v1222, %v1220
      %v1257 = vpack.c.b16 %v1225, %v1223
      %v1258 = vpack.c.b16 %v1226, %v1224
      %1291 = vmatprep.subr.bf16.mxu0 %v1228
      %1292 = vmatpush1.bf16.msra.mxu0 %v1227
      %1293 = vmatprep.subr.bf16.mxu0 %v1230
      %1294 = vmatpush1.bf16.msra.mxu0 %v1229
      %1295 = vmatprep.subr.bf16.mxu0 %v1232
      %1296 = vmatpush1.bf16.msra.mxu0 %v1231
      %1297 = vmatprep.subr.bf16.mxu0 %v1234
      %1298 = vmatpush1.bf16.msra.mxu0 %v1233
      %1299 = vmatprep.subr.bf16.mxu0 %v1236
      %1300 = vmatpush1.bf16.msra.mxu0 %v1235
      %1301 = vmatprep.subr.bf16.mxu0 %v1238
      %1302 = vmatpush1.bf16.msra.mxu0 %v1237
      %1303 = vmatprep.subr.bf16.mxu0 %v1240
      %1304 = vmatpush1.bf16.msra.mxu0 %v1239
      %1305 = vmatprep.subr.bf16.mxu0 %v1242
      %1306 = vmatpush1.bf16.msra.mxu0 %v1241
      %1307 = vmatprep.subr.bf16.mxu0 %v1244
      %1308 = vmatpush1.bf16.msra.mxu0 %v1243
      %1309 = vmatprep.subr.bf16.mxu0 %v1246
      %1310 = vmatpush1.bf16.msra.mxu0 %v1245
      %1311 = vmatprep.subr.bf16.mxu0 %v1248
      %1312 = vmatpush1.bf16.msra.mxu0 %v1247
      %1313 = vmatprep.subr.bf16.mxu0 %v1250
      %1314 = vmatpush1.bf16.msra.mxu0 %v1249
      %1315 = vmatprep.subr.bf16.mxu0 %v1252
      %1316 = vmatpush1.bf16.msra.mxu0 %v1251
      %1317 = vmatprep.subr.bf16.mxu0 %v1254
      %1318 = vmatpush1.bf16.msra.mxu0 %v1253
      %1319 = vmatprep.subr.bf16.mxu0 %v1256
      %1320 = vmatpush1.bf16.msra.mxu0 %v1255
      %1321 = vmatprep.subr.bf16.mxu0 %v1258
      %1322 = vmatpush1.bf16.msra.mxu0 %v1257
      %1323 = vmatprep.mubr.bf16.mxu0 %v1128
      %1324 = vmatmul.mubr.bf16.gmra.mrb[0].mxu0 %v1127
      %v1325 = vpop.f32.mrb[0].mxu0
      %v1326 = vadd.f32 0.0, %v1325
      %v1327 = vpop.f32.mrb[0].mxu0
      %v1328 = vadd.f32 0.0, %v1327
      %v1329 = vpop.f32.mrb[0].mxu0
      %v1330 = vadd.f32 0.0, %v1329
      %v1331 = vpop.f32.mrb[0].mxu0
      %v1332 = vadd.f32 0.0, %v1331
      %1333 = vdwg.mxu0
      %v1334 = vadd.f32 %v1066, %v1326
      %v1335 = vadd.f32 %v1067, %v1328
      %v1336 = vadd.f32 %v1068, %v1330
      %v1337 = vadd.f32 %v1069, %v1332
      %v1338 = vcombine.high %v1077, %v1077
      %v1340 = vshrl.u32 %v1077, 16
      %v1342 = vrot.slane %v1340, 6
      %v1343 = vshll.u32 %v1077, 16
      %v1345 = vrot.slane %v1343, 7
      %v1346 = vor.u32 %v1342, %v1345
      %v1347 = vrot.slane %v1346, 2
      %v1349 = vshll.u32 %v1338, 16
      %v1351 = vrot.slane %v1349, 7
      %v1352 = vsel %vm251, %v1347, %v1351
      %s1353 = scalar_lea.vmem %s1, 1024
      %v1354 = vld [vmem:[%s1353] sm:$0xff]
      %v1355 = vld [vmem:[%s1353 + $0x8] sm:$0xff]
      %v1356 = vld [vmem:[%s1353 + $0x10] sm:$0xff]
      %v1357 = vld [vmem:[%s1353 + $0x18] sm:$0xff]
      %v1358 = vld [vmem:[%s1353 + $0x20] sm:$0xff]
      %v1359 = vld [vmem:[%s1353 + $0x28] sm:$0xff]
      %v1360 = vld [vmem:[%s1353 + $0x30] sm:$0xff]
      %v1361 = vld [vmem:[%s1353 + $0x38] sm:$0xff]
      %v1362 = vld [vmem:[%s1353 + $0x40] sm:$0xff]
      %v1363 = vld [vmem:[%s1353 + $0x48] sm:$0xff]
      %v1364 = vld [vmem:[%s1353 + $0x50] sm:$0xff]
      %v1365 = vld [vmem:[%s1353 + $0x58] sm:$0xff]
      %v1366 = vld [vmem:[%s1353 + $0x60] sm:$0xff]
      %v1367 = vld [vmem:[%s1353 + $0x68] sm:$0xff]
      %v1368 = vld [vmem:[%s1353 + $0x70] sm:$0xff]
      %v1369 = vld [vmem:[%s1353 + $0x78] sm:$0xff]
      %v1370 = vld [vmem:[%s1353 + $0x80] sm:$0xff]
      %v1371 = vld [vmem:[%s1353 + $0x88] sm:$0xff]
      %v1372 = vld [vmem:[%s1353 + $0x90] sm:$0xff]
      %v1373 = vld [vmem:[%s1353 + $0x98] sm:$0xff]
      %v1374 = vld [vmem:[%s1353 + $0xa0] sm:$0xff]
      %v1375 = vld [vmem:[%s1353 + $0xa8] sm:$0xff]
      %v1376 = vld [vmem:[%s1353 + $0xb0] sm:$0xff]
      %v1377 = vld [vmem:[%s1353 + $0xb8] sm:$0xff]
      %v1378 = vld [vmem:[%s1353 + $0xc0] sm:$0xff]
      %v1379 = vld [vmem:[%s1353 + $0xc8] sm:$0xff]
      %v1380 = vld [vmem:[%s1353 + $0xd0] sm:$0xff]
      %v1381 = vld [vmem:[%s1353 + $0xd8] sm:$0xff]
      %v1382 = vld [vmem:[%s1353 + $0xe0] sm:$0xff]
      %v1383 = vld [vmem:[%s1353 + $0xe8] sm:$0xff]
      %v1384 = vld [vmem:[%s1353 + $0xf0] sm:$0xff]
      %v1385 = vld [vmem:[%s1353 + $0xf8] sm:$0xff]
      %v1386 = vcombine.low %v279, %v293
      %v1387 = vcombine.low %v307, %v1352
      %v1389 = vunpack.c.l.s4 1983009808
      %v1390 = vunpack.c.0.s8 %v1389
      %v1391 = vlaneseq
      %v1392 = vshrl.u32 %v1391, 7
      %v1393 = vsub.s32 %v1390, %v1392
      %v1394 = vrot.slane %v1386, %v1393
      %v1396 = vunpack.c.l.s4 1983009808
      %v1397 = vunpack.c.0.s8 %v1396
      %v1398 = vlaneseq
      %v1399 = vshrl.u32 %v1398, 7
      %v1400 = vsub.s32 %v1397, %v1399
      %v1401 = vrot.slane %v1387, %v1400
      %v1402 = vcombine.low %v1394, %v1401
      %v1403 = vcombine.high %v1394, %v1401
      %v1438 = vunpack.c.l.b16 %v1354
      %v1439 = vunpack.c.h.b16 %v1354
      %v1440 = vunpack.c.l.b16 %v1355
      %v1441 = vunpack.c.h.b16 %v1355
      %v1442 = vunpack.c.l.b16 %v1356
      %v1443 = vunpack.c.h.b16 %v1356
      %v1444 = vunpack.c.l.b16 %v1357
      %v1445 = vunpack.c.h.b16 %v1357
      %v1446 = vunpack.c.l.b16 %v1358
      %v1447 = vunpack.c.h.b16 %v1358
      %v1448 = vunpack.c.l.b16 %v1359
      %v1449 = vunpack.c.h.b16 %v1359
      %v1450 = vunpack.c.l.b16 %v1360
      %v1451 = vunpack.c.h.b16 %v1360
      %v1452 = vunpack.c.l.b16 %v1361
      %v1453 = vunpack.c.h.b16 %v1361
      %v1454 = vunpack.c.l.b16 %v1362
      %v1455 = vunpack.c.h.b16 %v1362
      %v1456 = vunpack.c.l.b16 %v1363
      %v1457 = vunpack.c.h.b16 %v1363
      %v1458 = vunpack.c.l.b16 %v1364
      %v1459 = vunpack.c.h.b16 %v1364
      %v1460 = vunpack.c.l.b16 %v1365
      %v1461 = vunpack.c.h.b16 %v1365
      %v1462 = vunpack.c.l.b16 %v1366
      %v1463 = vunpack.c.h.b16 %v1366
      %v1464 = vunpack.c.l.b16 %v1367
      %v1465 = vunpack.c.h.b16 %v1367
      %v1466 = vunpack.c.l.b16 %v1368
      %v1467 = vunpack.c.h.b16 %v1368
      %v1468 = vunpack.c.l.b16 %v1369
      %v1469 = vunpack.c.h.b16 %v1369
      %v1470 = vunpack.c.l.b16 %v1370
      %v1471 = vunpack.c.h.b16 %v1370
      %v1472 = vunpack.c.l.b16 %v1371
      %v1473 = vunpack.c.h.b16 %v1371
      %v1474 = vunpack.c.l.b16 %v1372
      %v1475 = vunpack.c.h.b16 %v1372
      %v1476 = vunpack.c.l.b16 %v1373
      %v1477 = vunpack.c.h.b16 %v1373
      %v1478 = vunpack.c.l.b16 %v1374
      %v1479 = vunpack.c.h.b16 %v1374
      %v1480 = vunpack.c.l.b16 %v1375
      %v1481 = vunpack.c.h.b16 %v1375
      %v1482 = vunpack.c.l.b16 %v1376
      %v1483 = vunpack.c.h.b16 %v1376
      %v1484 = vunpack.c.l.b16 %v1377
      %v1485 = vunpack.c.h.b16 %v1377
      %v1486 = vunpack.c.l.b16 %v1378
      %v1487 = vunpack.c.h.b16 %v1378
      %v1488 = vunpack.c.l.b16 %v1379
      %v1489 = vunpack.c.h.b16 %v1379
      %v1490 = vunpack.c.l.b16 %v1380
      %v1491 = vunpack.c.h.b16 %v1380
      %v1492 = vunpack.c.l.b16 %v1381
      %v1493 = vunpack.c.h.b16 %v1381
      %v1494 = vunpack.c.l.b16 %v1382
      %v1495 = vunpack.c.h.b16 %v1382
      %v1496 = vunpack.c.l.b16 %v1383
      %v1497 = vunpack.c.h.b16 %v1383
      %v1498 = vunpack.c.l.b16 %v1384
      %v1499 = vunpack.c.h.b16 %v1384
      %v1500 = vunpack.c.l.b16 %v1385
      %v1501 = vunpack.c.h.b16 %v1385
      %v1502 = vpack.c.b16 %v1440, %v1438
      %v1503 = vpack.c.b16 %v1441, %v1439
      %v1504 = vpack.c.b16 %v1444, %v1442
      %v1505 = vpack.c.b16 %v1445, %v1443
      %v1506 = vpack.c.b16 %v1448, %v1446
      %v1507 = vpack.c.b16 %v1449, %v1447
      %v1508 = vpack.c.b16 %v1452, %v1450
      %v1509 = vpack.c.b16 %v1453, %v1451
      %v1510 = vpack.c.b16 %v1456, %v1454
      %v1511 = vpack.c.b16 %v1457, %v1455
      %v1512 = vpack.c.b16 %v1460, %v1458
      %v1513 = vpack.c.b16 %v1461, %v1459
      %v1514 = vpack.c.b16 %v1464, %v1462
      %v1515 = vpack.c.b16 %v1465, %v1463
      %v1516 = vpack.c.b16 %v1468, %v1466
      %v1517 = vpack.c.b16 %v1469, %v1467
      %v1518 = vpack.c.b16 %v1472, %v1470
      %v1519 = vpack.c.b16 %v1473, %v1471
      %v1520 = vpack.c.b16 %v1476, %v1474
      %v1521 = vpack.c.b16 %v1477, %v1475
      %v1522 = vpack.c.b16 %v1480, %v1478
      %v1523 = vpack.c.b16 %v1481, %v1479
      %v1524 = vpack.c.b16 %v1484, %v1482
      %v1525 = vpack.c.b16 %v1485, %v1483
      %v1526 = vpack.c.b16 %v1488, %v1486
      %v1527 = vpack.c.b16 %v1489, %v1487
      %v1528 = vpack.c.b16 %v1492, %v1490
      %v1529 = vpack.c.b16 %v1493, %v1491
      %v1530 = vpack.c.b16 %v1496, %v1494
      %v1531 = vpack.c.b16 %v1497, %v1495
      %v1532 = vpack.c.b16 %v1500, %v1498
      %v1533 = vpack.c.b16 %v1501, %v1499
      %1566 = vmatprep.subr.bf16.mxu0 %v1503
      %1567 = vmatpush1.bf16.msra.mxu0 %v1502
      %1568 = vmatprep.subr.bf16.mxu0 %v1505
      %1569 = vmatpush1.bf16.msra.mxu0 %v1504
      %1570 = vmatprep.subr.bf16.mxu0 %v1507
      %1571 = vmatpush1.bf16.msra.mxu0 %v1506
      %1572 = vmatprep.subr.bf16.mxu0 %v1509
      %1573 = vmatpush1.bf16.msra.mxu0 %v1508
      %1574 = vmatprep.subr.bf16.mxu0 %v1511
      %1575 = vmatpush1.bf16.msra.mxu0 %v1510
      %1576 = vmatprep.subr.bf16.mxu0 %v1513
      %1577 = vmatpush1.bf16.msra.mxu0 %v1512
      %1578 = vmatprep.subr.bf16.mxu0 %v1515
      %1579 = vmatpush1.bf16.msra.mxu0 %v1514
      %1580 = vmatprep.subr.bf16.mxu0 %v1517
      %1581 = vmatpush1.bf16.msra.mxu0 %v1516
      %1582 = vmatprep.subr.bf16.mxu0 %v1519
      %1583 = vmatpush1.bf16.msra.mxu0 %v1518
      %1584 = vmatprep.subr.bf16.mxu0 %v1521
      %1585 = vmatpush1.bf16.msra.mxu0 %v1520
      %1586 = vmatprep.subr.bf16.mxu0 %v1523
      %1587 = vmatpush1.bf16.msra.mxu0 %v1522
      %1588 = vmatprep.subr.bf16.mxu0 %v1525
      %1589 = vmatpush1.bf16.msra.mxu0 %v1524
      %1590 = vmatprep.subr.bf16.mxu0 %v1527
      %1591 = vmatpush1.bf16.msra.mxu0 %v1526
      %1592 = vmatprep.subr.bf16.mxu0 %v1529
      %1593 = vmatpush1.bf16.msra.mxu0 %v1528
      %1594 = vmatprep.subr.bf16.mxu0 %v1531
      %1595 = vmatpush1.bf16.msra.mxu0 %v1530
      %1596 = vmatprep.subr.bf16.mxu0 %v1533
      %1597 = vmatpush1.bf16.msra.mxu0 %v1532
      %1598 = vmatprep.mubr.bf16.mxu0 %v1403
      %1599 = vmatmul.mubr.bf16.gmra.mrb[0].mxu0 %v1402
      %v1600 = vpop.f32.mrb[0].mxu0
      %v1601 = vadd.f32 0.0, %v1600
      %v1602 = vpop.f32.mrb[0].mxu0
      %v1603 = vadd.f32 0.0, %v1602
      %v1604 = vpop.f32.mrb[0].mxu0
      %v1605 = vadd.f32 0.0, %v1604
      %v1606 = vpop.f32.mrb[0].mxu0
      %v1607 = vadd.f32 0.0, %v1606
      %1608 = vdwg.mxu0
      %v1609 = vadd.f32 %v1334, %v1601
      %v1610 = vadd.f32 %v1335, %v1603
      %v1611 = vadd.f32 %v1336, %v1605
      %v1612 = vadd.f32 %v1337, %v1607
      %v1613 = vrot.slane %v1077, 7
      %v1614 = vrot.slane %v1613, 2
      %v1615 = vrot.slane %v1338, 7
      %v1616 = vsel %vm793, %v1614, %v1615
      %s1617 = scalar_lea.vmem %s1, 1280
      %v1618 = vld [vmem:[%s1617] sm:$0xff]
      %v1619 = vld [vmem:[%s1617 + $0x8] sm:$0xff]
      %v1620 = vld [vmem:[%s1617 + $0x10] sm:$0xff]
      %v1621 = vld [vmem:[%s1617 + $0x18] sm:$0xff]
      %v1622 = vld [vmem:[%s1617 + $0x20] sm:$0xff]
      %v1623 = vld [vmem:[%s1617 + $0x28] sm:$0xff]
      %v1624 = vld [vmem:[%s1617 + $0x30] sm:$0xff]
      %v1625 = vld [vmem:[%s1617 + $0x38] sm:$0xff]
      %v1626 = vld [vmem:[%s1617 + $0x40] sm:$0xff]
      %v1627 = vld [vmem:[%s1617 + $0x48] sm:$0xff]
      %v1628 = vld [vmem:[%s1617 + $0x50] sm:$0xff]
      %v1629 = vld [vmem:[%s1617 + $0x58] sm:$0xff]
      %v1630 = vld [vmem:[%s1617 + $0x60] sm:$0xff]
      %v1631 = vld [vmem:[%s1617 + $0x68] sm:$0xff]
      %v1632 = vld [vmem:[%s1617 + $0x70] sm:$0xff]
      %v1633 = vld [vmem:[%s1617 + $0x78] sm:$0xff]
      %v1634 = vld [vmem:[%s1617 + $0x80] sm:$0xff]
      %v1635 = vld [vmem:[%s1617 + $0x88] sm:$0xff]
      %v1636 = vld [vmem:[%s1617 + $0x90] sm:$0xff]
      %v1637 = vld [vmem:[%s1617 + $0x98] sm:$0xff]
      %v1638 = vld [vmem:[%s1617 + $0xa0] sm:$0xff]
      %v1639 = vld [vmem:[%s1617 + $0xa8] sm:$0xff]
      %v1640 = vld [vmem:[%s1617 + $0xb0] sm:$0xff]
      %v1641 = vld [vmem:[%s1617 + $0xb8] sm:$0xff]
      %v1642 = vld [vmem:[%s1617 + $0xc0] sm:$0xff]
      %v1643 = vld [vmem:[%s1617 + $0xc8] sm:$0xff]
      %v1644 = vld [vmem:[%s1617 + $0xd0] sm:$0xff]
      %v1645 = vld [vmem:[%s1617 + $0xd8] sm:$0xff]
      %v1646 = vld [vmem:[%s1617 + $0xe0] sm:$0xff]
      %v1647 = vld [vmem:[%s1617 + $0xe8] sm:$0xff]
      %v1648 = vld [vmem:[%s1617 + $0xf0] sm:$0xff]
      %v1649 = vld [vmem:[%s1617 + $0xf8] sm:$0xff]
      %v1650 = vcombine.low %v801, %v805
      %v1651 = vcombine.low %v809, %v1616
      %v1653 = vunpack.c.l.s4 1983009808
      %v1654 = vunpack.c.0.s8 %v1653
      %v1655 = vlaneseq
      %v1656 = vshrl.u32 %v1655, 7
      %v1657 = vsub.s32 %v1654, %v1656
      %v1658 = vrot.slane %v1650, %v1657
      %v1660 = vunpack.c.l.s4 1983009808
      %v1661 = vunpack.c.0.s8 %v1660
      %v1662 = vlaneseq
      %v1663 = vshrl.u32 %v1662, 7
      %v1664 = vsub.s32 %v1661, %v1663
      %v1665 = vrot.slane %v1651, %v1664
      %v1666 = vcombine.low %v1658, %v1665
      %v1667 = vcombine.high %v1658, %v1665
      %v1702 = vunpack.c.l.b16 %v1618
      %v1703 = vunpack.c.h.b16 %v1618
      %v1704 = vunpack.c.l.b16 %v1619
      %v1705 = vunpack.c.h.b16 %v1619
      %v1706 = vunpack.c.l.b16 %v1620
      %v1707 = vunpack.c.h.b16 %v1620
      %v1708 = vunpack.c.l.b16 %v1621
      %v1709 = vunpack.c.h.b16 %v1621
      %v1710 = vunpack.c.l.b16 %v1622
      %v1711 = vunpack.c.h.b16 %v1622
      %v1712 = vunpack.c.l.b16 %v1623
      %v1713 = vunpack.c.h.b16 %v1623
      %v1714 = vunpack.c.l.b16 %v1624
      %v1715 = vunpack.c.h.b16 %v1624
      %v1716 = vunpack.c.l.b16 %v1625
      %v1717 = vunpack.c.h.b16 %v1625
      %v1718 = vunpack.c.l.b16 %v1626
      %v1719 = vunpack.c.h.b16 %v1626
      %v1720 = vunpack.c.l.b16 %v1627
      %v1721 = vunpack.c.h.b16 %v1627
      %v1722 = vunpack.c.l.b16 %v1628
      %v1723 = vunpack.c.h.b16 %v1628
      %v1724 = vunpack.c.l.b16 %v1629
      %v1725 = vunpack.c.h.b16 %v1629
      %v1726 = vunpack.c.l.b16 %v1630
      %v1727 = vunpack.c.h.b16 %v1630
      %v1728 = vunpack.c.l.b16 %v1631
      %v1729 = vunpack.c.h.b16 %v1631
      %v1730 = vunpack.c.l.b16 %v1632
      %v1731 = vunpack.c.h.b16 %v1632
      %v1732 = vunpack.c.l.b16 %v1633
      %v1733 = vunpack.c.h.b16 %v1633
      %v1734 = vunpack.c.l.b16 %v1634
      %v1735 = vunpack.c.h.b16 %v1634
      %v1736 = vunpack.c.l.b16 %v1635
      %v1737 = vunpack.c.h.b16 %v1635
      %v1738 = vunpack.c.l.b16 %v1636
      %v1739 = vunpack.c.h.b16 %v1636
      %v1740 = vunpack.c.l.b16 %v1637
      %v1741 = vunpack.c.h.b16 %v1637
      %v1742 = vunpack.c.l.b16 %v1638
      %v1743 = vunpack.c.h.b16 %v1638
      %v1744 = vunpack.c.l.b16 %v1639
      %v1745 = vunpack.c.h.b16 %v1639
      %v1746 = vunpack.c.l.b16 %v1640
      %v1747 = vunpack.c.h.b16 %v1640
      %v1748 = vunpack.c.l.b16 %v1641
      %v1749 = vunpack.c.h.b16 %v1641
      %v1750 = vunpack.c.l.b16 %v1642
      %v1751 = vunpack.c.h.b16 %v1642
      %v1752 = vunpack.c.l.b16 %v1643
      %v1753 = vunpack.c.h.b16 %v1643
      %v1754 = vunpack.c.l.b16 %v1644
      %v1755 = vunpack.c.h.b16 %v1644
      %v1756 = vunpack.c.l.b16 %v1645
      %v1757 = vunpack.c.h.b16 %v1645
      %v1758 = vunpack.c.l.b16 %v1646
      %v1759 = vunpack.c.h.b16 %v1646
      %v1760 = vunpack.c.l.b16 %v1647
      %v1761 = vunpack.c.h.b16 %v1647
      %v1762 = vunpack.c.l.b16 %v1648
      %v1763 = vunpack.c.h.b16 %v1648
      %v1764 = vunpack.c.l.b16 %v1649
      %v1765 = vunpack.c.h.b16 %v1649
      %v1766 = vpack.c.b16 %v1704, %v1702
      %v1767 = vpack.c.b16 %v1705, %v1703
      %v1768 = vpack.c.b16 %v1708, %v1706
      %v1769 = vpack.c.b16 %v1709, %v1707
      %v1770 = vpack.c.b16 %v1712, %v1710
      %v1771 = vpack.c.b16 %v1713, %v1711
      %v1772 = vpack.c.b16 %v1716, %v1714
      %v1773 = vpack.c.b16 %v1717, %v1715
      %v1774 = vpack.c.b16 %v1720, %v1718
      %v1775 = vpack.c.b16 %v1721, %v1719
      %v1776 = vpack.c.b16 %v1724, %v1722
      %v1777 = vpack.c.b16 %v1725, %v1723
      %v1778 = vpack.c.b16 %v1728, %v1726
      %v1779 = vpack.c.b16 %v1729, %v1727
      %v1780 = vpack.c.b16 %v1732, %v1730
      %v1781 = vpack.c.b16 %v1733, %v1731
      %v1782 = vpack.c.b16 %v1736, %v1734
      %v1783 = vpack.c.b16 %v1737, %v1735
      %v1784 = vpack.c.b16 %v1740, %v1738
      %v1785 = vpack.c.b16 %v1741, %v1739
      %v1786 = vpack.c.b16 %v1744, %v1742
      %v1787 = vpack.c.b16 %v1745, %v1743
      %v1788 = vpack.c.b16 %v1748, %v1746
      %v1789 = vpack.c.b16 %v1749, %v1747
      %v1790 = vpack.c.b16 %v1752, %v1750
      %v1791 = vpack.c.b16 %v1753, %v1751
      %v1792 = vpack.c.b16 %v1756, %v1754
      %v1793 = vpack.c.b16 %v1757, %v1755
      %v1794 = vpack.c.b16 %v1760, %v1758
      %v1795 = vpack.c.b16 %v1761, %v1759
      %v1796 = vpack.c.b16 %v1764, %v1762
      %v1797 = vpack.c.b16 %v1765, %v1763
      %1830 = vmatprep.subr.bf16.mxu0 %v1767
      %1831 = vmatpush1.bf16.msra.mxu0 %v1766
      %1832 = vmatprep.subr.bf16.mxu0 %v1769
      %1833 = vmatpush1.bf16.msra.mxu0 %v1768
      %1834 = vmatprep.subr.bf16.mxu0 %v1771
      %1835 = vmatpush1.bf16.msra.mxu0 %v1770
      %1836 = vmatprep.subr.bf16.mxu0 %v1773
      %1837 = vmatpush1.bf16.msra.mxu0 %v1772
      %1838 = vmatprep.subr.bf16.mxu0 %v1775
      %1839 = vmatpush1.bf16.msra.mxu0 %v1774
      %1840 = vmatprep.subr.bf16.mxu0 %v1777
      %1841 = vmatpush1.bf16.msra.mxu0 %v1776
      %1842 = vmatprep.subr.bf16.mxu0 %v1779
      %1843 = vmatpush1.bf16.msra.mxu0 %v1778
      %1844 = vmatprep.subr.bf16.mxu0 %v1781
      %1845 = vmatpush1.bf16.msra.mxu0 %v1780
      %1846 = vmatprep.subr.bf16.mxu0 %v1783
      %1847 = vmatpush1.bf16.msra.mxu0 %v1782
      %1848 = vmatprep.subr.bf16.mxu0 %v1785
      %1849 = vmatpush1.bf16.msra.mxu0 %v1784
      %1850 = vmatprep.subr.bf16.mxu0 %v1787
      %1851 = vmatpush1.bf16.msra.mxu0 %v1786
      %1852 = vmatprep.subr.bf16.mxu0 %v1789
      %1853 = vmatpush1.bf16.msra.mxu0 %v1788
      %1854 = vmatprep.subr.bf16.mxu0 %v1791
      %1855 = vmatpush1.bf16.msra.mxu0 %v1790
      %1856 = vmatprep.subr.bf16.mxu0 %v1793
      %1857 = vmatpush1.bf16.msra.mxu0 %v1792
      %1858 = vmatprep.subr.bf16.mxu0 %v1795
      %1859 = vmatpush1.bf16.msra.mxu0 %v1794
      %1860 = vmatprep.subr.bf16.mxu0 %v1797
      %1861 = vmatpush1.bf16.msra.mxu0 %v1796
      %1862 = vmatprep.mubr.bf16.mxu0 %v1667
      %1863 = vmatmul.mubr.bf16.gmra.mrb[0].mxu0 %v1666
      %v1864 = vpop.f32.mrb[0].mxu0
      %v1865 = vadd.f32 0.0, %v1864
      %v1866 = vpop.f32.mrb[0].mxu0
      %v1867 = vadd.f32 0.0, %v1866
      %v1868 = vpop.f32.mrb[0].mxu0
      %v1869 = vadd.f32 0.0, %v1868
      %v1870 = vpop.f32.mrb[0].mxu0
      %v1871 = vadd.f32 0.0, %v1870
      %1872 = vdwg.mxu0
      %v1873 = vadd.f32 %v1609, %v1865
      %v1874 = vadd.f32 %v1610, %v1867
      %v1875 = vadd.f32 %v1611, %v1869
      %v1876 = vadd.f32 %v1612, %v1871
      %v1879 = vunpack.c.l.s4 1983009808
      %v1880 = vunpack.c.0.s8 %v1879
      %v1881 = vlaneseq
      %v1882 = vshrl.u32 %v1881, 7
      %v1883 = vsub.s32 %v1880, %v1882
      %v1884 = vrot.slane %v176, %v1883
      %s1885 = scalar_lea.vmem %s1, 1536
      %v1886 = vld [vmem:[%s1885] sm:$0xff]
      %v1887 = vld [vmem:[%s1885 + $0x8] sm:$0xff]
      %v1888 = vld [vmem:[%s1885 + $0x10] sm:$0xff]
      %v1889 = vld [vmem:[%s1885 + $0x18] sm:$0xff]
      %v1890 = vld [vmem:[%s1885 + $0x20] sm:$0xff]
      %v1891 = vld [vmem:[%s1885 + $0x28] sm:$0xff]
      %v1892 = vld [vmem:[%s1885 + $0x30] sm:$0xff]
      %v1893 = vld [vmem:[%s1885 + $0x38] sm:$0xff]
      %v1894 = vld [vmem:[%s1885 + $0x40] sm:$0xff]
      %v1895 = vld [vmem:[%s1885 + $0x48] sm:$0xff]
      %v1896 = vld [vmem:[%s1885 + $0x50] sm:$0xff]
      %v1897 = vld [vmem:[%s1885 + $0x58] sm:$0xff]
      %v1898 = vld [vmem:[%s1885 + $0x60] sm:$0xff]
      %v1899 = vld [vmem:[%s1885 + $0x68] sm:$0xff]
      %v1900 = vld [vmem:[%s1885 + $0x70] sm:$0xff]
      %v1901 = vld [vmem:[%s1885 + $0x78] sm:$0xff]
      %v1902 = vld [vmem:[%s1885 + $0x80] sm:$0xff]
      %v1903 = vld [vmem:[%s1885 + $0x88] sm:$0xff]
      %v1904 = vld [vmem:[%s1885 + $0x90] sm:$0xff]
      %v1905 = vld [vmem:[%s1885 + $0x98] sm:$0xff]
      %v1906 = vld [vmem:[%s1885 + $0xa0] sm:$0xff]
      %v1907 = vld [vmem:[%s1885 + $0xa8] sm:$0xff]
      %v1908 = vld [vmem:[%s1885 + $0xb0] sm:$0xff]
      %v1909 = vld [vmem:[%s1885 + $0xb8] sm:$0xff]
      %v1910 = vld [vmem:[%s1885 + $0xc0] sm:$0xff]
      %v1911 = vld [vmem:[%s1885 + $0xc8] sm:$0xff]
      %v1912 = vld [vmem:[%s1885 + $0xd0] sm:$0xff]
      %v1913 = vld [vmem:[%s1885 + $0xd8] sm:$0xff]
      %v1914 = vld [vmem:[%s1885 + $0xe0] sm:$0xff]
      %v1915 = vld [vmem:[%s1885 + $0xe8] sm:$0xff]
      %v1916 = vld [vmem:[%s1885 + $0xf0] sm:$0xff]
      %v1917 = vld [vmem:[%s1885 + $0xf8] sm:$0xff]
      %v1918 = vcombine.low %v1077, %v1884
      %v1920 = vunpack.c.l.s4 1983009808
      %v1921 = vunpack.c.0.s8 %v1920
      %v1922 = vlaneseq
      %v1923 = vshrl.u32 %v1922, 7
      %v1924 = vsub.s32 %v1921, %v1923
      %v1925 = vrot.slane %v1918, %v1924
      %v1926 = vcombine.low %v579, %v1925
      %v1927 = vcombine.high %v579, %v1925
      %v1962 = vunpack.c.l.b16 %v1886
      %v1963 = vunpack.c.h.b16 %v1886
      %v1964 = vunpack.c.l.b16 %v1887
      %v1965 = vunpack.c.h.b16 %v1887
      %v1966 = vunpack.c.l.b16 %v1888
      %v1967 = vunpack.c.h.b16 %v1888
      %v1968 = vunpack.c.l.b16 %v1889
      %v1969 = vunpack.c.h.b16 %v1889
      %v1970 = vunpack.c.l.b16 %v1890
      %v1971 = vunpack.c.h.b16 %v1890
      %v1972 = vunpack.c.l.b16 %v1891
      %v1973 = vunpack.c.h.b16 %v1891
      %v1974 = vunpack.c.l.b16 %v1892
      %v1975 = vunpack.c.h.b16 %v1892
      %v1976 = vunpack.c.l.b16 %v1893
      %v1977 = vunpack.c.h.b16 %v1893
      %v1978 = vunpack.c.l.b16 %v1894
      %v1979 = vunpack.c.h.b16 %v1894
      %v1980 = vunpack.c.l.b16 %v1895
      %v1981 = vunpack.c.h.b16 %v1895
      %v1982 = vunpack.c.l.b16 %v1896
      %v1983 = vunpack.c.h.b16 %v1896
      %v1984 = vunpack.c.l.b16 %v1897
      %v1985 = vunpack.c.h.b16 %v1897
      %v1986 = vunpack.c.l.b16 %v1898
      %v1987 = vunpack.c.h.b16 %v1898
      %v1988 = vunpack.c.l.b16 %v1899
      %v1989 = vunpack.c.h.b16 %v1899
      %v1990 = vunpack.c.l.b16 %v1900
      %v1991 = vunpack.c.h.b16 %v1900
      %v1992 = vunpack.c.l.b16 %v1901
      %v1993 = vunpack.c.h.b16 %v1901
      %v1994 = vunpack.c.l.b16 %v1902
      %v1995 = vunpack.c.h.b16 %v1902
      %v1996 = vunpack.c.l.b16 %v1903
      %v1997 = vunpack.c.h.b16 %v1903
      %v1998 = vunpack.c.l.b16 %v1904
      %v1999 = vunpack.c.h.b16 %v1904
      %v2000 = vunpack.c.l.b16 %v1905
      %v2001 = vunpack.c.h.b16 %v1905
      %v2002 = vunpack.c.l.b16 %v1906
      %v2003 = vunpack.c.h.b16 %v1906
      %v2004 = vunpack.c.l.b16 %v1907
      %v2005 = vunpack.c.h.b16 %v1907
      %v2006 = vunpack.c.l.b16 %v1908
      %v2007 = vunpack.c.h.b16 %v1908
      %v2008 = vunpack.c.l.b16 %v1909
      %v2009 = vunpack.c.h.b16 %v1909
      %v2010 = vunpack.c.l.b16 %v1910
      %v2011 = vunpack.c.h.b16 %v1910
      %v2012 = vunpack.c.l.b16 %v1911
      %v2013 = vunpack.c.h.b16 %v1911
      %v2014 = vunpack.c.l.b16 %v1912
      %v2015 = vunpack.c.h.b16 %v1912
      %v2016 = vunpack.c.l.b16 %v1913
      %v2017 = vunpack.c.h.b16 %v1913
      %v2018 = vunpack.c.l.b16 %v1914
      %v2019 = vunpack.c.h.b16 %v1914
      %v2020 = vunpack.c.l.b16 %v1915
      %v2021 = vunpack.c.h.b16 %v1915
      %v2022 = vunpack.c.l.b16 %v1916
      %v2023 = vunpack.c.h.b16 %v1916
      %v2024 = vunpack.c.l.b16 %v1917
      %v2025 = vunpack.c.h.b16 %v1917
      %v2026 = vpack.c.b16 %v1964, %v1962
      %v2027 = vpack.c.b16 %v1965, %v1963
      %v2028 = vpack.c.b16 %v1968, %v1966
      %v2029 = vpack.c.b16 %v1969, %v1967
      %v2030 = vpack.c.b16 %v1972, %v1970
      %v2031 = vpack.c.b16 %v1973, %v1971
      %v2032 = vpack.c.b16 %v1976, %v1974
      %v2033 = vpack.c.b16 %v1977, %v1975
      %v2034 = vpack.c.b16 %v1980, %v1978
      %v2035 = vpack.c.b16 %v1981, %v1979
      %v2036 = vpack.c.b16 %v1984, %v1982
      %v2037 = vpack.c.b16 %v1985, %v1983
      %v2038 = vpack.c.b16 %v1988, %v1986
      %v2039 = vpack.c.b16 %v1989, %v1987
      %v2040 = vpack.c.b16 %v1992, %v1990
      %v2041 = vpack.c.b16 %v1993, %v1991
      %v2042 = vpack.c.b16 %v1996, %v1994
      %v2043 = vpack.c.b16 %v1997, %v1995
      %v2044 = vpack.c.b16 %v2000, %v1998
      %v2045 = vpack.c.b16 %v2001, %v1999
      %v2046 = vpack.c.b16 %v2004, %v2002
      %v2047 = vpack.c.b16 %v2005, %v2003
      %v2048 = vpack.c.b16 %v2008, %v2006
      %v2049 = vpack.c.b16 %v2009, %v2007
      %v2050 = vpack.c.b16 %v2012, %v2010
      %v2051 = vpack.c.b16 %v2013, %v2011
      %v2052 = vpack.c.b16 %v2016, %v2014
      %v2053 = vpack.c.b16 %v2017, %v2015
      %v2054 = vpack.c.b16 %v2020, %v2018
      %v2055 = vpack.c.b16 %v2021, %v2019
      %v2056 = vpack.c.b16 %v2024, %v2022
      %v2057 = vpack.c.b16 %v2025, %v2023
      %2090 = vmatprep.subr.bf16.mxu0 %v2027
      %2091 = vmatpush1.bf16.msra.mxu0 %v2026
      %2092 = vmatprep.subr.bf16.mxu0 %v2029
      %2093 = vmatpush1.bf16.msra.mxu0 %v2028
      %2094 = vmatprep.subr.bf16.mxu0 %v2031
      %2095 = vmatpush1.bf16.msra.mxu0 %v2030
      %2096 = vmatprep.subr.bf16.mxu0 %v2033
      %2097 = vmatpush1.bf16.msra.mxu0 %v2032
      %2098 = vmatprep.subr.bf16.mxu0 %v2035
      %2099 = vmatpush1.bf16.msra.mxu0 %v2034
      %2100 = vmatprep.subr.bf16.mxu0 %v2037
      %2101 = vmatpush1.bf16.msra.mxu0 %v2036
      %2102 = vmatprep.subr.bf16.mxu0 %v2039
      %2103 = vmatpush1.bf16.msra.mxu0 %v2038
      %2104 = vmatprep.subr.bf16.mxu0 %v2041
      %2105 = vmatpush1.bf16.msra.mxu0 %v2040
      %2106 = vmatprep.subr.bf16.mxu0 %v2043
      %2107 = vmatpush1.bf16.msra.mxu0 %v2042
      %2108 = vmatprep.subr.bf16.mxu0 %v2045
      %2109 = vmatpush1.bf16.msra.mxu0 %v2044
      %2110 = vmatprep.subr.bf16.mxu0 %v2047
      %2111 = vmatpush1.bf16.msra.mxu0 %v2046
      %2112 = vmatprep.subr.bf16.mxu0 %v2049
      %2113 = vmatpush1.bf16.msra.mxu0 %v2048
      %2114 = vmatprep.subr.bf16.mxu0 %v2051
      %2115 = vmatpush1.bf16.msra.mxu0 %v2050
      %2116 = vmatprep.subr.bf16.mxu0 %v2053
      %2117 = vmatpush1.bf16.msra.mxu0 %v2052
      %2118 = vmatprep.subr.bf16.mxu0 %v2055
      %2119 = vmatpush1.bf16.msra.mxu0 %v2054
      %2120 = vmatprep.subr.bf16.mxu0 %v2057
      %2121 = vmatpush1.bf16.msra.mxu0 %v2056
      %2122 = vmatprep.mubr.bf16.mxu0 %v1927
      %2123 = vmatmul.mubr.bf16.gmra.mrb[0].mxu0 %v1926
      %v2124 = vpop.f32.mrb[0].mxu0
      %v2125 = vadd.f32 0.0, %v2124
      %v2126 = vpop.f32.mrb[0].mxu0
      %v2127 = vadd.f32 0.0, %v2126
      %v2128 = vpop.f32.mrb[0].mxu0
      %v2129 = vadd.f32 0.0, %v2128
      %v2130 = vpop.f32.mrb[0].mxu0
      %v2131 = vadd.f32 0.0, %v2130
      %2132 = vdwg.mxu0
      %v2133 = vadd.f32 %v1873, %v2125
      %v2134 = vadd.f32 %v1874, %v2127
      %v2135 = vadd.f32 %v1875, %v2129
      %v2136 = vadd.f32 %v1876, %v2131
      %v2137 = vcombine.high %v1884, %v1884
      %v2139 = vshrl.u32 %v1884, 16
      %v2141 = vrot.slane %v2139, 6
      %v2142 = vshll.u32 %v1884, 16
      %v2144 = vrot.slane %v2142, 7
      %v2145 = vor.u32 %v2141, %v2144
      %v2146 = vrot.slane %v2145, 2
      %v2148 = vshll.u32 %v2137, 16
      %v2150 = vrot.slane %v2148, 7
      %v2151 = vsel %vm251, %v2146, %v2150
      %s2152 = scalar_lea.vmem %s1, 1792
      %v2153 = vld [vmem:[%s2152] sm:$0xff]
      %v2154 = vld [vmem:[%s2152 + $0x8] sm:$0xff]
      %v2155 = vld [vmem:[%s2152 + $0x10] sm:$0xff]
      %v2156 = vld [vmem:[%s2152 + $0x18] sm:$0xff]
      %v2157 = vld [vmem:[%s2152 + $0x20] sm:$0xff]
      %v2158 = vld [vmem:[%s2152 + $0x28] sm:$0xff]
      %v2159 = vld [vmem:[%s2152 + $0x30] sm:$0xff]
      %v2160 = vld [vmem:[%s2152 + $0x38] sm:$0xff]
      %v2161 = vld [vmem:[%s2152 + $0x40] sm:$0xff]
      %v2162 = vld [vmem:[%s2152 + $0x48] sm:$0xff]
      %v2163 = vld [vmem:[%s2152 + $0x50] sm:$0xff]
      %v2164 = vld [vmem:[%s2152 + $0x58] sm:$0xff]
      %v2165 = vld [vmem:[%s2152 + $0x60] sm:$0xff]
      %v2166 = vld [vmem:[%s2152 + $0x68] sm:$0xff]
      %v2167 = vld [vmem:[%s2152 + $0x70] sm:$0xff]
      %v2168 = vld [vmem:[%s2152 + $0x78] sm:$0xff]
      %v2169 = vld [vmem:[%s2152 + $0x80] sm:$0xff]
      %v2170 = vld [vmem:[%s2152 + $0x88] sm:$0xff]
      %v2171 = vld [vmem:[%s2152 + $0x90] sm:$0xff]
      %v2172 = vld [vmem:[%s2152 + $0x98] sm:$0xff]
      %v2173 = vld [vmem:[%s2152 + $0xa0] sm:$0xff]
      %v2174 = vld [vmem:[%s2152 + $0xa8] sm:$0xff]
      %v2175 = vld [vmem:[%s2152 + $0xb0] sm:$0xff]
      %v2176 = vld [vmem:[%s2152 + $0xb8] sm:$0xff]
      %v2177 = vld [vmem:[%s2152 + $0xc0] sm:$0xff]
      %v2178 = vld [vmem:[%s2152 + $0xc8] sm:$0xff]
      %v2179 = vld [vmem:[%s2152 + $0xd0] sm:$0xff]
      %v2180 = vld [vmem:[%s2152 + $0xd8] sm:$0xff]
      %v2181 = vld [vmem:[%s2152 + $0xe0] sm:$0xff]
      %v2182 = vld [vmem:[%s2152 + $0xe8] sm:$0xff]
      %v2183 = vld [vmem:[%s2152 + $0xf0] sm:$0xff]
      %v2184 = vld [vmem:[%s2152 + $0xf8] sm:$0xff]
      %v2185 = vcombine.low %v1352, %v2151
      %v2187 = vunpack.c.l.s4 1983009808
      %v2188 = vunpack.c.0.s8 %v2187
      %v2189 = vlaneseq
      %v2190 = vshrl.u32 %v2189, 7
      %v2191 = vsub.s32 %v2188, %v2190
      %v2192 = vrot.slane %v2185, %v2191
      %v2193 = vcombine.low %v356, %v2192
      %v2194 = vcombine.high %v356, %v2192
      %v2229 = vunpack.c.l.b16 %v2153
      %v2230 = vunpack.c.h.b16 %v2153
      %v2231 = vunpack.c.l.b16 %v2154
      %v2232 = vunpack.c.h.b16 %v2154
      %v2233 = vunpack.c.l.b16 %v2155
      %v2234 = vunpack.c.h.b16 %v2155
      %v2235 = vunpack.c.l.b16 %v2156
      %v2236 = vunpack.c.h.b16 %v2156
      %v2237 = vunpack.c.l.b16 %v2157
      %v2238 = vunpack.c.h.b16 %v2157
      %v2239 = vunpack.c.l.b16 %v2158
      %v2240 = vunpack.c.h.b16 %v2158
      %v2241 = vunpack.c.l.b16 %v2159
      %v2242 = vunpack.c.h.b16 %v2159
      %v2243 = vunpack.c.l.b16 %v2160
      %v2244 = vunpack.c.h.b16 %v2160
      %v2245 = vunpack.c.l.b16 %v2161
      %v2246 = vunpack.c.h.b16 %v2161
      %v2247 = vunpack.c.l.b16 %v2162
      %v2248 = vunpack.c.h.b16 %v2162
      %v2249 = vunpack.c.l.b16 %v2163
      %v2250 = vunpack.c.h.b16 %v2163
      %v2251 = vunpack.c.l.b16 %v2164
      %v2252 = vunpack.c.h.b16 %v2164
      %v2253 = vunpack.c.l.b16 %v2165
      %v2254 = vunpack.c.h.b16 %v2165
      %v2255 = vunpack.c.l.b16 %v2166
      %v2256 = vunpack.c.h.b16 %v2166
      %v2257 = vunpack.c.l.b16 %v2167
      %v2258 = vunpack.c.h.b16 %v2167
      %v2259 = vunpack.c.l.b16 %v2168
      %v2260 = vunpack.c.h.b16 %v2168
      %v2261 = vunpack.c.l.b16 %v2169
      %v2262 = vunpack.c.h.b16 %v2169
      %v2263 = vunpack.c.l.b16 %v2170
      %v2264 = vunpack.c.h.b16 %v2170
      %v2265 = vunpack.c.l.b16 %v2171
      %v2266 = vunpack.c.h.b16 %v2171
      %v2267 = vunpack.c.l.b16 %v2172
      %v2268 = vunpack.c.h.b16 %v2172
      %v2269 = vunpack.c.l.b16 %v2173
      %v2270 = vunpack.c.h.b16 %v2173
      %v2271 = vunpack.c.l.b16 %v2174
      %v2272 = vunpack.c.h.b16 %v2174
      %v2273 = vunpack.c.l.b16 %v2175
      %v2274 = vunpack.c.h.b16 %v2175
      %v2275 = vunpack.c.l.b16 %v2176
      %v2276 = vunpack.c.h.b16 %v2176
      %v2277 = vunpack.c.l.b16 %v2177
      %v2278 = vunpack.c.h.b16 %v2177
      %v2279 = vunpack.c.l.b16 %v2178
      %v2280 = vunpack.c.h.b16 %v2178
      %v2281 = vunpack.c.l.b16 %v2179
      %v2282 = vunpack.c.h.b16 %v2179
      %v2283 = vunpack.c.l.b16 %v2180
      %v2284 = vunpack.c.h.b16 %v2180
      %v2285 = vunpack.c.l.b16 %v2181
      %v2286 = vunpack.c.h.b16 %v2181
      %v2287 = vunpack.c.l.b16 %v2182
      %v2288 = vunpack.c.h.b16 %v2182
      %v2289 = vunpack.c.l.b16 %v2183
      %v2290 = vunpack.c.h.b16 %v2183
      %v2291 = vunpack.c.l.b16 %v2184
      %v2292 = vunpack.c.h.b16 %v2184
      %v2293 = vpack.c.b16 %v2231, %v2229
      %v2294 = vpack.c.b16 %v2232, %v2230
      %v2295 = vpack.c.b16 %v2235, %v2233
      %v2296 = vpack.c.b16 %v2236, %v2234
      %v2297 = vpack.c.b16 %v2239, %v2237
      %v2298 = vpack.c.b16 %v2240, %v2238
      %v2299 = vpack.c.b16 %v2243, %v2241
      %v2300 = vpack.c.b16 %v2244, %v2242
      %v2301 = vpack.c.b16 %v2247, %v2245
      %v2302 = vpack.c.b16 %v2248, %v2246
      %v2303 = vpack.c.b16 %v2251, %v2249
      %v2304 = vpack.c.b16 %v2252, %v2250
      %v2305 = vpack.c.b16 %v2255, %v2253
      %v2306 = vpack.c.b16 %v2256, %v2254
      %v2307 = vpack.c.b16 %v2259, %v2257
      %v2308 = vpack.c.b16 %v2260, %v2258
      %v2309 = vpack.c.b16 %v2263, %v2261
      %v2310 = vpack.c.b16 %v2264, %v2262
      %v2311 = vpack.c.b16 %v2267, %v2265
      %v2312 = vpack.c.b16 %v2268, %v2266
      %v2313 = vpack.c.b16 %v2271, %v2269
      %v2314 = vpack.c.b16 %v2272, %v2270
      %v2315 = vpack.c.b16 %v2275, %v2273
      %v2316 = vpack.c.b16 %v2276, %v2274
      %v2317 = vpack.c.b16 %v2279, %v2277
      %v2318 = vpack.c.b16 %v2280, %v2278
      %v2319 = vpack.c.b16 %v2283, %v2281
      %v2320 = vpack.c.b16 %v2284, %v2282
      %v2321 = vpack.c.b16 %v2287, %v2285
      %v2322 = vpack.c.b16 %v2288, %v2286
      %v2323 = vpack.c.b16 %v2291, %v2289
      %v2324 = vpack.c.b16 %v2292, %v2290
      %2357 = vmatprep.subr.bf16.mxu0 %v2294
      %2358 = vmatpush1.bf16.msra.mxu0 %v2293
      %2359 = vmatprep.subr.bf16.mxu0 %v2296
      %2360 = vmatpush1.bf16.msra.mxu0 %v2295
      %2361 = vmatprep.subr.bf16.mxu0 %v2298
      %2362 = vmatpush1.bf16.msra.mxu0 %v2297
      %2363 = vmatprep.subr.bf16.mxu0 %v2300
      %2364 = vmatpush1.bf16.msra.mxu0 %v2299
      %2365 = vmatprep.subr.bf16.mxu0 %v2302
      %2366 = vmatpush1.bf16.msra.mxu0 %v2301
      %2367 = vmatprep.subr.bf16.mxu0 %v2304
      %2368 = vmatpush1.bf16.msra.mxu0 %v2303
      %2369 = vmatprep.subr.bf16.mxu0 %v2306
      %2370 = vmatpush1.bf16.msra.mxu0 %v2305
      %2371 = vmatprep.subr.bf16.mxu0 %v2308
      %2372 = vmatpush1.bf16.msra.mxu0 %v2307
      %2373 = vmatprep.subr.bf16.mxu0 %v2310
      %2374 = vmatpush1.bf16.msra.mxu0 %v2309
      %2375 = vmatprep.subr.bf16.mxu0 %v2312
      %2376 = vmatpush1.bf16.msra.mxu0 %v2311
      %2377 = vmatprep.subr.bf16.mxu0 %v2314
      %2378 = vmatpush1.bf16.msra.mxu0 %v2313
      %2379 = vmatprep.subr.bf16.mxu0 %v2316
      %2380 = vmatpush1.bf16.msra.mxu0 %v2315
      %2381 = vmatprep.subr.bf16.mxu0 %v2318
      %2382 = vmatpush1.bf16.msra.mxu0 %v2317
      %2383 = vmatprep.subr.bf16.mxu0 %v2320
      %2384 = vmatpush1.bf16.msra.mxu0 %v2319
      %2385 = vmatprep.subr.bf16.mxu0 %v2322
      %2386 = vmatpush1.bf16.msra.mxu0 %v2321
      %2387 = vmatprep.subr.bf16.mxu0 %v2324
      %2388 = vmatpush1.bf16.msra.mxu0 %v2323
      %2389 = vmatprep.mubr.bf16.mxu0 %v2194
      %2390 = vmatmul.mubr.bf16.gmra.mrb[0].mxu0 %v2193
      %v2391 = vpop.f32.mrb[0].mxu0
      %v2392 = vadd.f32 0.0, %v2391
      %v2393 = vpop.f32.mrb[0].mxu0
      %v2394 = vadd.f32 0.0, %v2393
      %v2395 = vpop.f32.mrb[0].mxu0
      %v2396 = vadd.f32 0.0, %v2395
      %v2397 = vpop.f32.mrb[0].mxu0
      %v2398 = vadd.f32 0.0, %v2397
      %2399 = vdwg.mxu0
      %v2400 = vadd.f32 %v2133, %v2392
      %v2401 = vadd.f32 %v2134, %v2394
      %v2402 = vadd.f32 %v2135, %v2396
      %v2403 = vadd.f32 %v2136, %v2398
      %v2404 = vrot.slane %v1884, 7
      %v2405 = vrot.slane %v2404, 2
      %v2406 = vrot.slane %v2137, 7
      %v2407 = vsel %vm793, %v2405, %v2406
      %s2408 = scalar_lea.vmem %s1, 2048
      %v2409 = vld [vmem:[%s2408] sm:$0xff]
      %v2410 = vld [vmem:[%s2408 + $0x8] sm:$0xff]
      %v2411 = vld [vmem:[%s2408 + $0x10] sm:$0xff]
      %v2412 = vld [vmem:[%s2408 + $0x18] sm:$0xff]
      %v2413 = vld [vmem:[%s2408 + $0x20] sm:$0xff]
      %v2414 = vld [vmem:[%s2408 + $0x28] sm:$0xff]
      %v2415 = vld [vmem:[%s2408 + $0x30] sm:$0xff]
      %v2416 = vld [vmem:[%s2408 + $0x38] sm:$0xff]
      %v2417 = vld [vmem:[%s2408 + $0x40] sm:$0xff]
      %v2418 = vld [vmem:[%s2408 + $0x48] sm:$0xff]
      %v2419 = vld [vmem:[%s2408 + $0x50] sm:$0xff]
      %v2420 = vld [vmem:[%s2408 + $0x58] sm:$0xff]
      %v2421 = vld [vmem:[%s2408 + $0x60] sm:$0xff]
      %v2422 = vld [vmem:[%s2408 + $0x68] sm:$0xff]
      %v2423 = vld [vmem:[%s2408 + $0x70] sm:$0xff]
      %v2424 = vld [vmem:[%s2408 + $0x78] sm:$0xff]
      %v2425 = vld [vmem:[%s2408 + $0x80] sm:$0xff]
      %v2426 = vld [vmem:[%s2408 + $0x88] sm:$0xff]
      %v2427 = vld [vmem:[%s2408 + $0x90] sm:$0xff]
      %v2428 = vld [vmem:[%s2408 + $0x98] sm:$0xff]
      %v2429 = vld [vmem:[%s2408 + $0xa0] sm:$0xff]
      %v2430 = vld [vmem:[%s2408 + $0xa8] sm:$0xff]
      %v2431 = vld [vmem:[%s2408 + $0xb0] sm:$0xff]
      %v2432 = vld [vmem:[%s2408 + $0xb8] sm:$0xff]
      %v2433 = vld [vmem:[%s2408 + $0xc0] sm:$0xff]
      %v2434 = vld [vmem:[%s2408 + $0xc8] sm:$0xff]
      %v2435 = vld [vmem:[%s2408 + $0xd0] sm:$0xff]
      %v2436 = vld [vmem:[%s2408 + $0xd8] sm:$0xff]
      %v2437 = vld [vmem:[%s2408 + $0xe0] sm:$0xff]
      %v2438 = vld [vmem:[%s2408 + $0xe8] sm:$0xff]
      %v2439 = vld [vmem:[%s2408 + $0xf0] sm:$0xff]
      %v2440 = vld [vmem:[%s2408 + $0xf8] sm:$0xff]
      %v2441 = vcombine.low %v1616, %v2407
      %v2443 = vunpack.c.l.s4 1983009808
      %v2444 = vunpack.c.0.s8 %v2443
      %v2445 = vlaneseq
      %v2446 = vshrl.u32 %v2445, 7
      %v2447 = vsub.s32 %v2444, %v2446
      %v2448 = vrot.slane %v2441, %v2447
      %v2449 = vcombine.low %v858, %v2448
      %v2450 = vcombine.high %v858, %v2448
      %v2485 = vunpack.c.l.b16 %v2409
      %v2486 = vunpack.c.h.b16 %v2409
      %v2487 = vunpack.c.l.b16 %v2410
      %v2488 = vunpack.c.h.b16 %v2410
      %v2489 = vunpack.c.l.b16 %v2411
      %v2490 = vunpack.c.h.b16 %v2411
      %v2491 = vunpack.c.l.b16 %v2412
      %v2492 = vunpack.c.h.b16 %v2412
      %v2493 = vunpack.c.l.b16 %v2413
      %v2494 = vunpack.c.h.b16 %v2413
      %v2495 = vunpack.c.l.b16 %v2414
      %v2496 = vunpack.c.h.b16 %v2414
      %v2497 = vunpack.c.l.b16 %v2415
      %v2498 = vunpack.c.h.b16 %v2415
      %v2499 = vunpack.c.l.b16 %v2416
      %v2500 = vunpack.c.h.b16 %v2416
      %v2501 = vunpack.c.l.b16 %v2417
      %v2502 = vunpack.c.h.b16 %v2417
      %v2503 = vunpack.c.l.b16 %v2418
      %v2504 = vunpack.c.h.b16 %v2418
      %v2505 = vunpack.c.l.b16 %v2419
      %v2506 = vunpack.c.h.b16 %v2419
      %v2507 = vunpack.c.l.b16 %v2420
      %v2508 = vunpack.c.h.b16 %v2420
      %v2509 = vunpack.c.l.b16 %v2421
      %v2510 = vunpack.c.h.b16 %v2421
      %v2511 = vunpack.c.l.b16 %v2422
      %v2512 = vunpack.c.h.b16 %v2422
      %v2513 = vunpack.c.l.b16 %v2423
      %v2514 = vunpack.c.h.b16 %v2423
      %v2515 = vunpack.c.l.b16 %v2424
      %v2516 = vunpack.c.h.b16 %v2424
      %v2517 = vunpack.c.l.b16 %v2425
      %v2518 = vunpack.c.h.b16 %v2425
      %v2519 = vunpack.c.l.b16 %v2426
      %v2520 = vunpack.c.h.b16 %v2426
      %v2521 = vunpack.c.l.b16 %v2427
      %v2522 = vunpack.c.h.b16 %v2427
      %v2523 = vunpack.c.l.b16 %v2428
      %v2524 = vunpack.c.h.b16 %v2428
      %v2525 = vunpack.c.l.b16 %v2429
      %v2526 = vunpack.c.h.b16 %v2429
      %v2527 = vunpack.c.l.b16 %v2430
      %v2528 = vunpack.c.h.b16 %v2430
      %v2529 = vunpack.c.l.b16 %v2431
      %v2530 = vunpack.c.h.b16 %v2431
      %v2531 = vunpack.c.l.b16 %v2432
      %v2532 = vunpack.c.h.b16 %v2432
      %v2533 = vunpack.c.l.b16 %v2433
      %v2534 = vunpack.c.h.b16 %v2433
      %v2535 = vunpack.c.l.b16 %v2434
      %v2536 = vunpack.c.h.b16 %v2434
      %v2537 = vunpack.c.l.b16 %v2435
      %v2538 = vunpack.c.h.b16 %v2435
      %v2539 = vunpack.c.l.b16 %v2436
      %v2540 = vunpack.c.h.b16 %v2436
      %v2541 = vunpack.c.l.b16 %v2437
      %v2542 = vunpack.c.h.b16 %v2437
      %v2543 = vunpack.c.l.b16 %v2438
      %v2544 = vunpack.c.h.b16 %v2438
      %v2545 = vunpack.c.l.b16 %v2439
      %v2546 = vunpack.c.h.b16 %v2439
      %v2547 = vunpack.c.l.b16 %v2440
      %v2548 = vunpack.c.h.b16 %v2440
      %v2549 = vpack.c.b16 %v2487, %v2485
      %v2550 = vpack.c.b16 %v2488, %v2486
      %v2551 = vpack.c.b16 %v2491, %v2489
      %v2552 = vpack.c.b16 %v2492, %v2490
      %v2553 = vpack.c.b16 %v2495, %v2493
      %v2554 = vpack.c.b16 %v2496, %v2494
      %v2555 = vpack.c.b16 %v2499, %v2497
      %v2556 = vpack.c.b16 %v2500, %v2498
      %v2557 = vpack.c.b16 %v2503, %v2501
      %v2558 = vpack.c.b16 %v2504, %v2502
      %v2559 = vpack.c.b16 %v2507, %v2505
      %v2560 = vpack.c.b16 %v2508, %v2506
      %v2561 = vpack.c.b16 %v2511, %v2509
      %v2562 = vpack.c.b16 %v2512, %v2510
      %v2563 = vpack.c.b16 %v2515, %v2513
      %v2564 = vpack.c.b16 %v2516, %v2514
      %v2565 = vpack.c.b16 %v2519, %v2517
      %v2566 = vpack.c.b16 %v2520, %v2518
      %v2567 = vpack.c.b16 %v2523, %v2521
      %v2568 = vpack.c.b16 %v2524, %v2522
      %v2569 = vpack.c.b16 %v2527, %v2525
      %v2570 = vpack.c.b16 %v2528, %v2526
      %v2571 = vpack.c.b16 %v2531, %v2529
      %v2572 = vpack.c.b16 %v2532, %v2530
      %v2573 = vpack.c.b16 %v2535, %v2533
      %v2574 = vpack.c.b16 %v2536, %v2534
      %v2575 = vpack.c.b16 %v2539, %v2537
      %v2576 = vpack.c.b16 %v2540, %v2538
      %v2577 = vpack.c.b16 %v2543, %v2541
      %v2578 = vpack.c.b16 %v2544, %v2542
      %v2579 = vpack.c.b16 %v2547, %v2545
      %v2580 = vpack.c.b16 %v2548, %v2546
      %2613 = vmatprep.subr.bf16.mxu0 %v2550
      %2614 = vmatpush1.bf16.msra.mxu0 %v2549
      %2615 = vmatprep.subr.bf16.mxu0 %v2552
      %2616 = vmatpush1.bf16.msra.mxu0 %v2551
      %2617 = vmatprep.subr.bf16.mxu0 %v2554
      %2618 = vmatpush1.bf16.msra.mxu0 %v2553
      %2619 = vmatprep.subr.bf16.mxu0 %v2556
      %2620 = vmatpush1.bf16.msra.mxu0 %v2555
      %2621 = vmatprep.subr.bf16.mxu0 %v2558
      %2622 = vmatpush1.bf16.msra.mxu0 %v2557
      %2623 = vmatprep.subr.bf16.mxu0 %v2560
      %2624 = vmatpush1.bf16.msra.mxu0 %v2559
      %2625 = vmatprep.subr.bf16.mxu0 %v2562
      %2626 = vmatpush1.bf16.msra.mxu0 %v2561
      %2627 = vmatprep.subr.bf16.mxu0 %v2564
      %2628 = vmatpush1.bf16.msra.mxu0 %v2563
      %2629 = vmatprep.subr.bf16.mxu0 %v2566
      %2630 = vmatpush1.bf16.msra.mxu0 %v2565
      %2631 = vmatprep.subr.bf16.mxu0 %v2568
      %2632 = vmatpush1.bf16.msra.mxu0 %v2567
      %2633 = vmatprep.subr.bf16.mxu0 %v2570
      %2634 = vmatpush1.bf16.msra.mxu0 %v2569
      %2635 = vmatprep.subr.bf16.mxu0 %v2572
      %2636 = vmatpush1.bf16.msra.mxu0 %v2571
      %2637 = vmatprep.subr.bf16.mxu0 %v2574
      %2638 = vmatpush1.bf16.msra.mxu0 %v2573
      %2639 = vmatprep.subr.bf16.mxu0 %v2576
      %2640 = vmatpush1.bf16.msra.mxu0 %v2575
      %2641 = vmatprep.subr.bf16.mxu0 %v2578
      %2642 = vmatpush1.bf16.msra.mxu0 %v2577
      %2643 = vmatprep.subr.bf16.mxu0 %v2580
      %2644 = vmatpush1.bf16.msra.mxu0 %v2579
      %2645 = vmatprep.mubr.bf16.mxu0 %v2450
      %2646 = vmatmul.mubr.bf16.gmra.mrb[0].mxu0 %v2449
      %v2647 = vpop.f32.mrb[0].mxu0
      %v2648 = vadd.f32 0.0, %v2647
      %v2649 = vpop.f32.mrb[0].mxu0
      %v2650 = vadd.f32 0.0, %v2649
      %v2651 = vpop.f32.mrb[0].mxu0
      %v2652 = vadd.f32 0.0, %v2651
      %v2653 = vpop.f32.mrb[0].mxu0
      %v2654 = vadd.f32 0.0, %v2653
      %2655 = vdwg.mxu0
      %v2656 = vadd.f32 %v2400, %v2648
      %v2657 = vadd.f32 %v2401, %v2650
      %v2658 = vadd.f32 %v2402, %v2652
      %v2659 = vadd.f32 %v2403, %v2654
      %v2660 = vld [vmem:[%s2] sm:$0x3]
      %v2662 = vlaneseq
      %v2663 = vshrl.u32 %v2662, 7
      %v2664 = vsub.s32 0, %v2663
      %v2665 = vrot.slane %v2660, %v2664
      %v2666 = vlaneseq
      %v2667 = vshrl.u32 %v2666, 7
      %v2668 = vsub.s32 1, %v2667
      %v2669 = vrot.slane %v2660, %v2668
      %v2672 = vadd.f32 %v2656, %v2665
      %v2673 = vadd.f32 %v2657, %v2669
      %v2674 = vadd.f32 %v2658, %v2665
      %v2675 = vadd.f32 %v2659, %v2669
      %v2676 = vmax.f32 %v2672, 0.0
      %v2677 = vmax.f32 %v2673, 0.0
      %v2678 = vmax.f32 %v2674, 0.0
      %v2679 = vmax.f32 %v2675, 0.0
      %v2684 = vcombine.low %v2676, %v2677
      %v2685 = vcombine.high %v2676, %v2677
      %v2686 = vcombine.low %v2678, %v2679
      %v2687 = vcombine.high %v2678, %v2679
      %v2692 = vcombine.high %v2684, %v2684
      %v2693 = vcombine.high %v2685, %v2685
      %v2694 = vcombine.high %v2686, %v2686
      %v2695 = vcombine.high %v2687, %v2687
      %v2700 = vpack.c.bf16 %v2684, %v2684
      %v2701 = vpack.c.bf16 %v2692, %v2692
      %v2702 = vpack.c.bf16 %v2685, %v2685
      %v2703 = vpack.c.bf16 %v2693, %v2693
      %v2704 = vpack.c.bf16 %v2686, %v2686
      %v2705 = vpack.c.bf16 %v2694, %v2694
      %v2706 = vpack.c.bf16 %v2687, %v2687
      %v2707 = vpack.c.bf16 %v2695, %v2695
      %v2716 = vcombine.low %v2700, %v2701
      %v2718 = vunpack.c.l.s4 1983009808
      %v2719 = vunpack.c.0.s8 %v2718
      %v2720 = vlaneseq
      %v2721 = vshrl.u32 %v2720, 7
      %v2722 = vsub.s32 %v2719, %v2721
      %v2723 = vrot.slane %v2716, %v2722
      %v2724 = vcombine.low %v2702, %v2703
      %v2726 = vunpack.c.l.s4 1983009808
      %v2727 = vunpack.c.0.s8 %v2726
      %v2728 = vlaneseq
      %v2729 = vshrl.u32 %v2728, 7
      %v2730 = vsub.s32 %v2727, %v2729
      %v2731 = vrot.slane %v2724, %v2730
      %v2732 = vcombine.low %v2704, %v2705
      %v2734 = vunpack.c.l.s4 1983009808
      %v2735 = vunpack.c.0.s8 %v2734
      %v2736 = vlaneseq
      %v2737 = vshrl.u32 %v2736, 7
      %v2738 = vsub.s32 %v2735, %v2737
      %v2739 = vrot.slane %v2732, %v2738
      %v2740 = vcombine.low %v2706, %v2707
      %v2742 = vunpack.c.l.s4 1983009808
      %v2743 = vunpack.c.0.s8 %v2742
      %v2744 = vlaneseq
      %v2745 = vshrl.u32 %v2744, 7
      %v2746 = vsub.s32 %v2743, %v2745
      %v2747 = vrot.slane %v2740, %v2746
      %2752 = vst [vmem:[%s170] sm:$0xf] %v2723
      %2753 = vst [vmem:[%s170 + $0x4] sm:$0xf] %v2731
      %2754 = vst [vmem:[%s170 + $0x8] sm:$0xf] %v2739
      %2755 = vst [vmem:[%s170 + $0xc] sm:$0xf] %v2747
      %p2756 = scmp.lt.s32.totalorder %s14, 3
      %s2757 = scalar_select %p2756, %s14, 3
      %s2758 = smul.addr %s2757, 8
      %s2759 = smul.addr %s2758, 2
      %s2760 = scalar_lea.vmem %s3, %s2759
      // Predicated region
      $region33: #{_lambda_.15} parent=31 // pred_check
        %p2761 = pneg %p100
      $region34: #{_lambda_.15} parent=31 // pred_check_branch
        %2763 = sbr.rel (%p2761) target = $region36
      $region35: #{_lambda_.15} parent=31 // pred_region
        _
      $region36: #{_lambda_.15} parent=31 // pred_fallthru
        _
    $region32: #{_lambda_.15} parent=5 // pred_fallthru
      _
    %p2764 = scmp.le.s32.totalorder 2, %s9
    // Predicated region
    $region37: #{_lambda_.15} parent=5 // pred_check
      %p2765 = pneg %p2764
    $region38: #{_lambda_.15} parent=5 // pred_check_branch
      %2767 = sbr.rel (%p2765) target = $region40
    $region39: #{_lambda_.15} parent=5 // pred_region
      %s2768 = ssub.s32 %s9, 2
      // Predicated region
      $region41: #{_lambda_.15} parent=39 // pred_check
        %p2769 = pneg %p106
      $region42: #{_lambda_.15} parent=39 // pred_check_branch
        %2771 = sbr.rel (%p2769) target = $region44
      $region43: #{_lambda_.15} parent=39 // pred_region
        %p2772 = scmp.lt.s32.totalorder %s15, 3
        %s2773 = scalar_select %p2772, %s15, 3
        %s2774 = smul.addr %s2773, 8
        %s2775 = smul.addr %s2774, 2
        %s2776 = scalar_lea.vmem %s3, %s2775
      $region44: #{_lambda_.15} parent=39 // pred_fallthru
        _
    $region40: #{_lambda_.15} parent=5 // pred_fallthru
      _
  $region6: #{_lambda_.15} parent=0 // loop_footer
    %s13 = sadd.s32 1, %s9
  $region7: #{_lambda_.15} parent=0 // loop_footer_branch
    %8 = sbr.rel target = $region3
  $region8: #{_lambda_.15} parent=0 // loop_exit
    _

// kernel: _lambda_.9
$region0: #{_lambda_.9}
  #allocation0 [shape = 'u32[]', space=smem, size = 0x4, offset = 0x4, fixed_abs, tag = 'smem constant byte address 0x4 - core index']
  #allocation1 [shape = 'u32[144,128]{1,0:T(1,128)}', space=vmem, size = 0x12000, scoped, tag = 'internal scratch']
  %s0 = inlined_call_operand.vmem [shape: f32[1,16,128], index: 0, kind: input, shape index: {}]
  %s1 = inlined_call_operand.vmem [shape: f32[1,16,128], index: 1, kind: input, shape index: {}]
  %s2 = inlined_call_operand.vmem [shape: f32[16,16], index: 2, kind: input, shape index: {}]
  %s3 = inlined_call_operand.vmem [shape: f32[128,128], index: 3, kind: input, shape index: {}]
  %s4 = inlined_call_operand.vmem [shape: f32[1,1,128], index: 4, kind: input, shape index: {}]
  %s5 = inlined_call_operand.vmem [shape: f32[1,1,128], index: 5, kind: output, shape index: {0}]
  %s6 = inlined_call_operand.vmem [shape: f32[1,1,128], index: 6, kind: output, shape index: {1}]
  %7 = xla_tuple %s5, %s6
  %s8 = sld [smem:[#allocation0]]
  $region38: #{_lambda_.9} parent=0
    _
  %s10 = ssub.s32 1, %s8
  %s11 = scalar_select 0, %s10, %s8
  // Predicated region
  $region2: #{_lambda_.9} parent=0 // pred_check
    _
  $region3: #{_lambda_.9} parent=0 // pred_check_branch
    %13 = sbr.rel (0) target = $region5
  $region4: #{_lambda_.9} parent=0 // pred_region
    _
  $region5: #{_lambda_.9} parent=0 // pred_fallthru
    _
  // Predicated region
  $region6: #{_lambda_.9} parent=0 // pred_check
    _
  $region7: #{_lambda_.9} parent=0 // pred_check_branch
    %15 = sbr.rel (0) target = $region9
  $region8: #{_lambda_.9} parent=0 // pred_region
    _
  $region9: #{_lambda_.9} parent=0 // pred_fallthru
    _
  // Predicated region
  $region10: #{_lambda_.9} parent=0 // pred_check
    _
  $region11: #{_lambda_.9} parent=0 // pred_check_branch
    %17 = sbr.rel (0) target = $region13
  $region12: #{_lambda_.9} parent=0 // pred_region
    _
  $region13: #{_lambda_.9} parent=0 // pred_fallthru
    _
  // Predicated region
  $region14: #{_lambda_.9} parent=0 // pred_check
    _
  $region15: #{_lambda_.9} parent=0 // pred_check_branch
    %19 = sbr.rel (0) target = $region17
  $region16: #{_lambda_.9} parent=0 // pred_region
    _
  $region17: #{_lambda_.9} parent=0 // pred_fallthru
    _
  // Predicated region
  $region18: #{_lambda_.9} parent=0 // pred_check
    _
  $region19: #{_lambda_.9} parent=0 // pred_check_branch
    %21 = sbr.rel (0) target = $region21
  $region20: #{_lambda_.9} parent=0 // pred_region
    _
  $region21: #{_lambda_.9} parent=0 // pred_fallthru
    _
  %v22 = vld [vmem:[%s0] sm:$0xff]
  %v23 = vld [vmem:[%s0 + $0x8] sm:$0xff]
  %v24 = vld [vmem:[%s1] sm:$0xff]
  %v25 = vld [vmem:[%s1 + $0x8] sm:$0xff]
  %v26 = vld [vmem:[%s2] sm:$0xff]
  %v27 = vld [vmem:[%s2 + $0x8] sm:$0xff]
  %v28 = vld [vmem:[%s3] sm:$0xff]
  %v29 = vld [vmem:[%s3 + $0x8] sm:$0xff]
  %v30 = vld [vmem:[%s3 + $0x10] sm:$0xff]
  %v31 = vld [vmem:[%s3 + $0x18] sm:$0xff]
  %v32 = vld [vmem:[%s3 + $0x20] sm:$0xff]
  %v33 = vld [vmem:[%s3 + $0x28] sm:$0xff]
  %v34 = vld [vmem:[%s3 + $0x30] sm:$0xff]
  %v35 = vld [vmem:[%s3 + $0x38] sm:$0xff]
  %v36 = vld [vmem:[%s3 + $0x40] sm:$0xff]
  %v37 = vld [vmem:[%s3 + $0x48] sm:$0xff]
  %v38 = vld [vmem:[%s3 + $0x50] sm:$0xff]
  %v39 = vld [vmem:[%s3 + $0x58] sm:$0xff]
  %v40 = vld [vmem:[%s3 + $0x60] sm:$0xff]
  %v41 = vld [vmem:[%s3 + $0x68] sm:$0xff]
  %v42 = vld [vmem:[%s3 + $0x70] sm:$0xff]
  %v43 = vld [vmem:[%s3 + $0x78] sm:$0xff]
  %v44 = vld [vmem:[%s4] sm:$0x1]
  %vm45 = vcmask 130048
  %v47 = vsel %vm45, %v26, 0
  %v50 = vsel %vm45, %v27, 0
  %52 = vmatprep.subr.mxu0 0.0
  %53 = vmatpush1.msra.mxu0 %v22
  %54 = vmatprep.subr.mxu0 0.0
  %55 = vmatpush1.msra.mxu0 %v23
  %56 = vmatprep.subr.mxu0 0.0
  %57 = vmatpush1.msra.mxu0 0.0
  %58 = vmatprep.subr.mxu0 0.0
  %59 = vmatpush1.msra.mxu0 0.0
  %60 = vmatprep.subr.mxu0 0.0
  %61 = vmatpush1.msra.mxu0 0.0
  %62 = vmatprep.subr.mxu0 0.0
  %63 = vmatpush1.msra.mxu0 0.0
  %64 = vmatprep.subr.mxu0 0.0
  %65 = vmatpush1.msra.mxu0 0.0
  %66 = vmatprep.subr.mxu0 0.0
  %67 = vmatpush1.msra.mxu0 0.0
  %68 = vmatprep.subr.mxu0 0.0
  %69 = vmatpush1.msra.mxu0 0.0
  %70 = vmatprep.subr.mxu0 0.0
  %71 = vmatpush1.msra.mxu0 0.0
  %72 = vmatprep.subr.mxu0 0.0
  %73 = vmatpush1.msra.mxu0 0.0
  %74 = vmatprep.subr.mxu0 0.0
  %75 = vmatpush1.msra.mxu0 0.0
  %76 = vmatprep.subr.mxu0 0.0
  %77 = vmatpush1.msra.mxu0 0.0
  %78 = vmatprep.subr.mxu0 0.0
  %79 = vmatpush1.msra.mxu0 0.0
  %80 = vmatprep.subr.mxu0 0.0
  %81 = vmatpush1.msra.mxu0 0.0
  %82 = vmatprep.subr.mxu0 0.0
  %83 = vmatpush1.msra.mxu0 0.0
  %84 = vmatprep.subr.mxu0 0.0
  %85 = vmatpush1.msra.mxu0 0.0
  %86 = vmatprep.subr.mxu0 0.0
  %87 = vmatpush1.msra.mxu0 0.0
  %88 = vmatprep.subr.mxu0 0.0
  %89 = vmatpush1.msra.mxu0 0.0
  %90 = vmatprep.subr.mxu0 0.0
  %91 = vmatpush1.msra.mxu0 0.0
  %92 = vmatprep.subr.mxu0 0.0
  %93 = vmatpush1.msra.mxu0 0.0
  %94 = vmatprep.subr.mxu0 0.0
  %95 = vmatpush1.msra.mxu0 0.0
  %96 = vmatprep.subr.mxu0 0.0
  %97 = vmatpush1.msra.mxu0 0.0
  %98 = vmatprep.subr.mxu0 0.0
  %99 = vmatpush1.msra.mxu0 0.0
  %100 = vmatprep.subr.mxu0 0.0
  %101 = vmatpush1.msra.mxu0 0.0
  %102 = vmatprep.subr.mxu0 0.0
  %103 = vmatpush1.msra.mxu0 0.0
  %104 = vmatprep.subr.mxu0 0.0
  %105 = vmatpush1.msra.mxu0 0.0
  %106 = vmatprep.subr.mxu0 0.0
  %107 = vmatpush1.msra.mxu0 0.0
  %108 = vmatprep.subr.mxu0 0.0
  %109 = vmatpush1.msra.mxu0 0.0
  %110 = vmatprep.subr.mxu0 0.0
  %111 = vmatpush1.msra.mxu0 0.0
  %112 = vmatprep.subr.mxu0 0.0
  %113 = vmatpush1.msra.mxu0 0.0
  %114 = vmatprep.subr.mxu0 0.0
  %115 = vmatpush1.msra.mxu0 0.0
  %116 = vmatprep.mubr.f32.mxu0 0.0
  %117 = vmatmul.mubr.f32.gmra.mrb[0].mxu0 %v47
  %v118 = vpop.f32.mrb[0].mxu0
  %v119 = vadd.f32 0.0, %v118
  %v120 = vpop.f32.mrb[0].mxu0
  %121 = vmatprep.mubr.f32.mxu0 0.0
  %122 = vmatmul.mubr.f32.gmra.mrb[0].mxu0 %v50
  %v123 = vpop.f32.mrb[0].mxu0
  %v124 = vadd.f32 0.0, %v123
  %v125 = vpop.f32.mrb[0].mxu0
  %126 = vdwg.mxu0
  %127 = vmatprep.subr.mxu0 0.0
  %128 = vmatpush1.msra.mxu0 %v28
  %129 = vmatprep.subr.mxu0 0.0
  %130 = vmatpush1.msra.mxu0 %v29
  %131 = vmatprep.subr.mxu0 0.0
  %132 = vmatpush1.msra.mxu0 %v30
  %133 = vmatprep.subr.mxu0 0.0
  %134 = vmatpush1.msra.mxu0 %v31
  %135 = vmatprep.subr.mxu0 0.0
  %136 = vmatpush1.msra.mxu0 %v32
  %137 = vmatprep.subr.mxu0 0.0
  %138 = vmatpush1.msra.mxu0 %v33
  %139 = vmatprep.subr.mxu0 0.0
  %140 = vmatpush1.msra.mxu0 %v34
  %141 = vmatprep.subr.mxu0 0.0
  %142 = vmatpush1.msra.mxu0 %v35
  %143 = vmatprep.subr.mxu0 0.0
  %144 = vmatpush1.msra.mxu0 %v36
  %145 = vmatprep.subr.mxu0 0.0
  %146 = vmatpush1.msra.mxu0 %v37
  %147 = vmatprep.subr.mxu0 0.0
  %148 = vmatpush1.msra.mxu0 %v38
  %149 = vmatprep.subr.mxu0 0.0
  %150 = vmatpush1.msra.mxu0 %v39
  %151 = vmatprep.subr.mxu0 0.0
  %152 = vmatpush1.msra.mxu0 %v40
  %153 = vmatprep.subr.mxu0 0.0
  %154 = vmatpush1.msra.mxu0 %v41
  %155 = vmatprep.subr.mxu0 0.0
  %156 = vmatpush1.msra.mxu0 %v42
  %157 = vmatprep.subr.mxu0 0.0
  %158 = vmatpush1.msra.mxu0 %v43
  %159 = vmatprep.subr.mxu0 0.0
  %160 = vmatpush1.msra.mxu0 0.0
  %161 = vmatprep.subr.mxu0 0.0
  %162 = vmatpush1.msra.mxu0 0.0
  %163 = vmatprep.subr.mxu0 0.0
  %164 = vmatpush1.msra.mxu0 0.0
  %165 = vmatprep.subr.mxu0 0.0
  %166 = vmatpush1.msra.mxu0 0.0
  %167 = vmatprep.subr.mxu0 0.0
  %168 = vmatpush1.msra.mxu0 0.0
  %169 = vmatprep.subr.mxu0 0.0
  %170 = vmatpush1.msra.mxu0 0.0
  %171 = vmatprep.subr.mxu0 0.0
  %172 = vmatpush1.msra.mxu0 0.0
  %173 = vmatprep.subr.mxu0 0.0
  %174 = vmatpush1.msra.mxu0 0.0
  %175 = vmatprep.subr.mxu0 0.0
  %176 = vmatpush1.msra.mxu0 0.0
  %177 = vmatprep.subr.mxu0 0.0
  %178 = vmatpush1.msra.mxu0 0.0
  %179 = vmatprep.subr.mxu0 0.0
  %180 = vmatpush1.msra.mxu0 0.0
  %181 = vmatprep.subr.mxu0 0.0
  %182 = vmatpush1.msra.mxu0 0.0
  %183 = vmatprep.subr.mxu0 0.0
  %184 = vmatpush1.msra.mxu0 0.0
  %185 = vmatprep.subr.mxu0 0.0
  %186 = vmatpush1.msra.mxu0 0.0
  %187 = vmatprep.subr.mxu0 0.0
  %188 = vmatpush1.msra.mxu0 0.0
  %189 = vmatprep.subr.mxu0 0.0
  %190 = vmatpush1.msra.mxu0 0.0
  %191 = vmatprep.mubr.f32.mxu0 0.0
  %192 = vmatmul.mubr.f32.gmra.mrb[0].mxu0 %v119
  %v193 = vpop.f32.mrb[0].mxu0
  %v194 = vadd.f32 0.0, %v193
  %v195 = vpop.f32.mrb[0].mxu0
  %196 = vmatprep.mubr.f32.mxu0 0.0
  %197 = vmatmul.mubr.f32.gmra.mrb[0].mxu0 %v124
  %v198 = vpop.f32.mrb[0].mxu0
  %v199 = vadd.f32 0.0, %v198
  %v200 = vpop.f32.mrb[0].mxu0
  %201 = vdwg.mxu0
  %202 = vmatprep.subr.mxu0 0.0
  %203 = vmatpush1.msra.mxu0 %v24
  %204 = vmatprep.subr.mxu0 0.0
  %205 = vmatpush1.msra.mxu0 %v25
  %206 = vmatprep.subr.mxu0 0.0
  %207 = vmatpush1.msra.mxu0 0.0
  %208 = vmatprep.subr.mxu0 0.0
  %209 = vmatpush1.msra.mxu0 0.0
  %210 = vmatprep.subr.mxu0 0.0
  %211 = vmatpush1.msra.mxu0 0.0
  %212 = vmatprep.subr.mxu0 0.0
  %213 = vmatpush1.msra.mxu0 0.0
  %214 = vmatprep.subr.mxu0 0.0
  %215 = vmatpush1.msra.mxu0 0.0
  %216 = vmatprep.subr.mxu0 0.0
  %217 = vmatpush1.msra.mxu0 0.0
  %218 = vmatprep.subr.mxu0 0.0
  %219 = vmatpush1.msra.mxu0 0.0
  %220 = vmatprep.subr.mxu0 0.0
  %221 = vmatpush1.msra.mxu0 0.0
  %222 = vmatprep.subr.mxu0 0.0
  %223 = vmatpush1.msra.mxu0 0.0
  %224 = vmatprep.subr.mxu0 0.0
  %225 = vmatpush1.msra.mxu0 0.0
  %226 = vmatprep.subr.mxu0 0.0
  %227 = vmatpush1.msra.mxu0 0.0
  %228 = vmatprep.subr.mxu0 0.0
  %229 = vmatpush1.msra.mxu0 0.0
  %230 = vmatprep.subr.mxu0 0.0
  %231 = vmatpush1.msra.mxu0 0.0
  %232 = vmatprep.subr.mxu0 0.0
  %233 = vmatpush1.msra.mxu0 0.0
  %234 = vmatprep.subr.mxu0 0.0
  %235 = vmatpush1.msra.mxu0 0.0
  %236 = vmatprep.subr.mxu0 0.0
  %237 = vmatpush1.msra.mxu0 0.0
  %238 = vmatprep.subr.mxu0 0.0
  %239 = vmatpush1.msra.mxu0 0.0
  %240 = vmatprep.subr.mxu0 0.0
  %241 = vmatpush1.msra.mxu0 0.0
  %242 = vmatprep.subr.mxu0 0.0
  %243 = vmatpush1.msra.mxu0 0.0
  %244 = vmatprep.subr.mxu0 0.0
  %245 = vmatpush1.msra.mxu0 0.0
  %246 = vmatprep.subr.mxu0 0.0
  %247 = vmatpush1.msra.mxu0 0.0
  %248 = vmatprep.subr.mxu0 0.0
  %249 = vmatpush1.msra.mxu0 0.0
  %250 = vmatprep.subr.mxu0 0.0
  %251 = vmatpush1.msra.mxu0 0.0
  %252 = vmatprep.subr.mxu0 0.0
  %253 = vmatpush1.msra.mxu0 0.0
  %254 = vmatprep.subr.mxu0 0.0
  %255 = vmatpush1.msra.mxu0 0.0
  %256 = vmatprep.subr.mxu0 0.0
  %257 = vmatpush1.msra.mxu0 0.0
  %258 = vmatprep.subr.mxu0 0.0
  %259 = vmatpush1.msra.mxu0 0.0
  %260 = vmatprep.subr.mxu0 0.0
  %261 = vmatpush1.msra.mxu0 0.0
  %262 = vmatprep.subr.mxu0 0.0
  %263 = vmatpush1.msra.mxu0 0.0
  %264 = vmatprep.subr.mxu0 0.0
  %265 = vmatpush1.msra.mxu0 0.0
  %266 = vmatprep.mubr.f32.mxu0 0.0
  %267 = vmatmul.mubr.f32.gmra.mrb[0].mxu0 %v47
  %v268 = vpop.f32.mrb[0].mxu0
  %v269 = vadd.f32 0.0, %v268
  %v270 = vpop.f32.mrb[0].mxu0
  %271 = vmatprep.mubr.f32.mxu0 0.0
  %272 = vmatmul.mubr.f32.gmra.mrb[0].mxu0 %v50
  %v273 = vpop.f32.mrb[0].mxu0
  %v274 = vadd.f32 0.0, %v273
  %v275 = vpop.f32.mrb[0].mxu0
  %276 = vdwg.mxu0
  %277 = vmatprep.subr.mxu0 0.0
  %278 = vmatpush1.msra.mxu0 %v28
  %279 = vmatprep.subr.mxu0 0.0
  %280 = vmatpush1.msra.mxu0 %v29
  %281 = vmatprep.subr.mxu0 0.0
  %282 = vmatpush1.msra.mxu0 %v30
  %283 = vmatprep.subr.mxu0 0.0
  %284 = vmatpush1.msra.mxu0 %v31
  %285 = vmatprep.subr.mxu0 0.0
  %286 = vmatpush1.msra.mxu0 %v32
  %287 = vmatprep.subr.mxu0 0.0
  %288 = vmatpush1.msra.mxu0 %v33
  %289 = vmatprep.subr.mxu0 0.0
  %290 = vmatpush1.msra.mxu0 %v34
  %291 = vmatprep.subr.mxu0 0.0
  %292 = vmatpush1.msra.mxu0 %v35
  %293 = vmatprep.subr.mxu0 0.0
  %294 = vmatpush1.msra.mxu0 %v36
  %295 = vmatprep.subr.mxu0 0.0
  %296 = vmatpush1.msra.mxu0 %v37
  %297 = vmatprep.subr.mxu0 0.0
  %298 = vmatpush1.msra.mxu0 %v38
  %299 = vmatprep.subr.mxu0 0.0
  %300 = vmatpush1.msra.mxu0 %v39
  %301 = vmatprep.subr.mxu0 0.0
  %302 = vmatpush1.msra.mxu0 %v40
  %303 = vmatprep.subr.mxu0 0.0
  %304 = vmatpush1.msra.mxu0 %v41
  %305 = vmatprep.subr.mxu0 0.0
  %306 = vmatpush1.msra.mxu0 %v42
  %307 = vmatprep.subr.mxu0 0.0
  %308 = vmatpush1.msra.mxu0 %v43
  %309 = vmatprep.subr.mxu0 0.0
  %310 = vmatpush1.msra.mxu0 0.0
  %311 = vmatprep.subr.mxu0 0.0
  %312 = vmatpush1.msra.mxu0 0.0
  %313 = vmatprep.subr.mxu0 0.0
  %314 = vmatpush1.msra.mxu0 0.0
  %315 = vmatprep.subr.mxu0 0.0
  %316 = vmatpush1.msra.mxu0 0.0
  %317 = vmatprep.subr.mxu0 0.0
  %318 = vmatpush1.msra.mxu0 0.0
  %319 = vmatprep.subr.mxu0 0.0
  %320 = vmatpush1.msra.mxu0 0.0
  %321 = vmatprep.subr.mxu0 0.0
  %322 = vmatpush1.msra.mxu0 0.0
  %323 = vmatprep.subr.mxu0 0.0
  %324 = vmatpush1.msra.mxu0 0.0
  %325 = vmatprep.subr.mxu0 0.0
  %326 = vmatpush1.msra.mxu0 0.0
  %327 = vmatprep.subr.mxu0 0.0
  %328 = vmatpush1.msra.mxu0 0.0
  %329 = vmatprep.subr.mxu0 0.0
  %330 = vmatpush1.msra.mxu0 0.0
  %331 = vmatprep.subr.mxu0 0.0
  %332 = vmatpush1.msra.mxu0 0.0
  %333 = vmatprep.subr.mxu0 0.0
  %334 = vmatpush1.msra.mxu0 0.0
  %335 = vmatprep.subr.mxu0 0.0
  %336 = vmatpush1.msra.mxu0 0.0
  %337 = vmatprep.subr.mxu0 0.0
  %338 = vmatpush1.msra.mxu0 0.0
  %339 = vmatprep.subr.mxu0 0.0
  %340 = vmatpush1.msra.mxu0 0.0
  %341 = vmatprep.mubr.f32.mxu0 0.0
  %342 = vmatmul.mubr.f32.gmra.mrb[0].mxu0 %v269
  %v343 = vpop.f32.mrb[0].mxu0
  %v344 = vadd.f32 0.0, %v343
  %v345 = vpop.f32.mrb[0].mxu0
  %346 = vmatprep.mubr.f32.mxu0 0.0
  %347 = vmatmul.mubr.f32.gmra.mrb[0].mxu0 %v274
  %v348 = vpop.f32.mrb[0].mxu0
  %v349 = vadd.f32 0.0, %v348
  %v350 = vpop.f32.mrb[0].mxu0
  %351 = vdwg.mxu0
  %v352 = vmul.f32 %v22, %v22
  %v353 = vmul.f32 %v23, %v23
  %354 = vmatprep.subr.mxu0 0.0
  %355 = vmatpush1.msra.mxu0 %v352
  %356 = vmatprep.subr.mxu0 0.0
  %357 = vmatpush1.msra.mxu0 %v353
  %358 = vmatprep.subr.mxu0 0.0
  %359 = vmatpush1.msra.mxu0 0.0
  %360 = vmatprep.subr.mxu0 0.0
  %361 = vmatpush1.msra.mxu0 0.0
  %362 = vmatprep.subr.mxu0 0.0
  %363 = vmatpush1.msra.mxu0 0.0
  %364 = vmatprep.subr.mxu0 0.0
  %365 = vmatpush1.msra.mxu0 0.0
  %366 = vmatprep.subr.mxu0 0.0
  %367 = vmatpush1.msra.mxu0 0.0
  %368 = vmatprep.subr.mxu0 0.0
  %369 = vmatpush1.msra.mxu0 0.0
  %370 = vmatprep.subr.mxu0 0.0
  %371 = vmatpush1.msra.mxu0 0.0
  %372 = vmatprep.subr.mxu0 0.0
  %373 = vmatpush1.msra.mxu0 0.0
  %374 = vmatprep.subr.mxu0 0.0
  %375 = vmatpush1.msra.mxu0 0.0
  %376 = vmatprep.subr.mxu0 0.0
  %377 = vmatpush1.msra.mxu0 0.0
  %378 = vmatprep.subr.mxu0 0.0
  %379 = vmatpush1.msra.mxu0 0.0
  %380 = vmatprep.subr.mxu0 0.0
  %381 = vmatpush1.msra.mxu0 0.0
  %382 = vmatprep.subr.mxu0 0.0
  %383 = vmatpush1.msra.mxu0 0.0
  %384 = vmatprep.subr.mxu0 0.0
  %385 = vmatpush1.msra.mxu0 0.0
  %386 = vmatprep.subr.mxu0 0.0
  %387 = vmatpush1.msra.mxu0 0.0
  %388 = vmatprep.subr.mxu0 0.0
  %389 = vmatpush1.msra.mxu0 0.0
  %390 = vmatprep.subr.mxu0 0.0
  %391 = vmatpush1.msra.mxu0 0.0
  %392 = vmatprep.subr.mxu0 0.0
  %393 = vmatpush1.msra.mxu0 0.0
  %394 = vmatprep.subr.mxu0 0.0
  %395 = vmatpush1.msra.mxu0 0.0
  %396 = vmatprep.subr.mxu0 0.0
  %397 = vmatpush1.msra.mxu0 0.0
  %398 = vmatprep.subr.mxu0 0.0
  %399 = vmatpush1.msra.mxu0 0.0
  %400 = vmatprep.subr.mxu0 0.0
  %401 = vmatpush1.msra.mxu0 0.0
  %402 = vmatprep.subr.mxu0 0.0
  %403 = vmatpush1.msra.mxu0 0.0
  %404 = vmatprep.subr.mxu0 0.0
  %405 = vmatpush1.msra.mxu0 0.0
  %406 = vmatprep.subr.mxu0 0.0
  %407 = vmatpush1.msra.mxu0 0.0
  %408 = vmatprep.subr.mxu0 0.0
  %409 = vmatpush1.msra.mxu0 0.0
  %410 = vmatprep.subr.mxu0 0.0
  %411 = vmatpush1.msra.mxu0 0.0
  %412 = vmatprep.subr.mxu0 0.0
  %413 = vmatpush1.msra.mxu0 0.0
  %414 = vmatprep.subr.mxu0 0.0
  %415 = vmatpush1.msra.mxu0 0.0
  %416 = vmatprep.subr.mxu0 0.0
  %417 = vmatpush1.msra.mxu0 0.0
  %418 = vmatprep.mubr.f32.mxu0 0.0
  %419 = vmatmul.mubr.f32.gmra.mrb[0].mxu0 %v47
  %v420 = vpop.f32.mrb[0].mxu0
  %v421 = vadd.f32 0.0, %v420
  %v422 = vpop.f32.mrb[0].mxu0
  %423 = vmatprep.mubr.f32.mxu0 0.0
  %424 = vmatmul.mubr.f32.gmra.mrb[0].mxu0 %v50
  %v425 = vpop.f32.mrb[0].mxu0
  %v426 = vadd.f32 0.0, %v425
  %v427 = vpop.f32.mrb[0].mxu0
  %428 = vdwg.mxu0
  %429 = vmatprep.subr.mxu0 0.0
  %430 = vmatpush1.msra.mxu0 %v28
  %431 = vmatprep.subr.mxu0 0.0
  %432 = vmatpush1.msra.mxu0 %v29
  %433 = vmatprep.subr.mxu0 0.0
  %434 = vmatpush1.msra.mxu0 %v30
  %435 = vmatprep.subr.mxu0 0.0
  %436 = vmatpush1.msra.mxu0 %v31
  %437 = vmatprep.subr.mxu0 0.0
  %438 = vmatpush1.msra.mxu0 %v32
  %439 = vmatprep.subr.mxu0 0.0
  %440 = vmatpush1.msra.mxu0 %v33
  %441 = vmatprep.subr.mxu0 0.0
  %442 = vmatpush1.msra.mxu0 %v34
  %443 = vmatprep.subr.mxu0 0.0
  %444 = vmatpush1.msra.mxu0 %v35
  %445 = vmatprep.subr.mxu0 0.0
  %446 = vmatpush1.msra.mxu0 %v36
  %447 = vmatprep.subr.mxu0 0.0
  %448 = vmatpush1.msra.mxu0 %v37
  %449 = vmatprep.subr.mxu0 0.0
  %450 = vmatpush1.msra.mxu0 %v38
  %451 = vmatprep.subr.mxu0 0.0
  %452 = vmatpush1.msra.mxu0 %v39
  %453 = vmatprep.subr.mxu0 0.0
  %454 = vmatpush1.msra.mxu0 %v40
  %455 = vmatprep.subr.mxu0 0.0
  %456 = vmatpush1.msra.mxu0 %v41
  %457 = vmatprep.subr.mxu0 0.0
  %458 = vmatpush1.msra.mxu0 %v42
  %459 = vmatprep.subr.mxu0 0.0
  %460 = vmatpush1.msra.mxu0 %v43
  %461 = vmatprep.subr.mxu0 0.0
  %462 = vmatpush1.msra.mxu0 0.0
  %463 = vmatprep.subr.mxu0 0.0
  %464 = vmatpush1.msra.mxu0 0.0
  %465 = vmatprep.subr.mxu0 0.0
  %466 = vmatpush1.msra.mxu0 0.0
  %467 = vmatprep.subr.mxu0 0.0
  %468 = vmatpush1.msra.mxu0 0.0
  %469 = vmatprep.subr.mxu0 0.0
  %470 = vmatpush1.msra.mxu0 0.0
  %471 = vmatprep.subr.mxu0 0.0
  %472 = vmatpush1.msra.mxu0 0.0
  %473 = vmatprep.subr.mxu0 0.0
  %474 = vmatpush1.msra.mxu0 0.0
  %475 = vmatprep.subr.mxu0 0.0
  %476 = vmatpush1.msra.mxu0 0.0
  %477 = vmatprep.subr.mxu0 0.0
  %478 = vmatpush1.msra.mxu0 0.0
  %479 = vmatprep.subr.mxu0 0.0
  %480 = vmatpush1.msra.mxu0 0.0
  %481 = vmatprep.subr.mxu0 0.0
  %482 = vmatpush1.msra.mxu0 0.0
  %483 = vmatprep.subr.mxu0 0.0
  %484 = vmatpush1.msra.mxu0 0.0
  %485 = vmatprep.subr.mxu0 0.0
  %486 = vmatpush1.msra.mxu0 0.0
  %487 = vmatprep.subr.mxu0 0.0
  %488 = vmatpush1.msra.mxu0 0.0
  %489 = vmatprep.subr.mxu0 0.0
  %490 = vmatpush1.msra.mxu0 0.0
  %491 = vmatprep.subr.mxu0 0.0
  %492 = vmatpush1.msra.mxu0 0.0
  %493 = vmatprep.mubr.f32.mxu0 0.0
  %494 = vmatmul.mubr.f32.gmra.mrb[0].mxu0 %v421
  %v495 = vpop.f32.mrb[0].mxu0
  %v496 = vadd.f32 0.0, %v495
  %v497 = vpop.f32.mrb[0].mxu0
  %498 = vmatprep.mubr.f32.mxu0 0.0
  %499 = vmatmul.mubr.f32.gmra.mrb[0].mxu0 %v426
  %v500 = vpop.f32.mrb[0].mxu0
  %v501 = vadd.f32 0.0, %v500
  %v502 = vpop.f32.mrb[0].mxu0
  %503 = vdwg.mxu0
  %v504 = vmul.f32 %v24, %v24
  %v505 = vmul.f32 %v25, %v25
  %506 = vmatprep.subr.mxu0 0.0
  %507 = vmatpush1.msra.mxu0 %v504
  %508 = vmatprep.subr.mxu0 0.0
  %509 = vmatpush1.msra.mxu0 %v505
  %510 = vmatprep.subr.mxu0 0.0
  %511 = vmatpush1.msra.mxu0 0.0
  %512 = vmatprep.subr.mxu0 0.0
  %513 = vmatpush1.msra.mxu0 0.0
  %514 = vmatprep.subr.mxu0 0.0
  %515 = vmatpush1.msra.mxu0 0.0
  %516 = vmatprep.subr.mxu0 0.0
  %517 = vmatpush1.msra.mxu0 0.0
  %518 = vmatprep.subr.mxu0 0.0
  %519 = vmatpush1.msra.mxu0 0.0
  %520 = vmatprep.subr.mxu0 0.0
  %521 = vmatpush1.msra.mxu0 0.0
  %522 = vmatprep.subr.mxu0 0.0
  %523 = vmatpush1.msra.mxu0 0.0
  %524 = vmatprep.subr.mxu0 0.0
  %525 = vmatpush1.msra.mxu0 0.0
  %526 = vmatprep.subr.mxu0 0.0
  %527 = vmatpush1.msra.mxu0 0.0
  %528 = vmatprep.subr.mxu0 0.0
  %529 = vmatpush1.msra.mxu0 0.0
  %530 = vmatprep.subr.mxu0 0.0
  %531 = vmatpush1.msra.mxu0 0.0
  %532 = vmatprep.subr.mxu0 0.0
  %533 = vmatpush1.msra.mxu0 0.0
  %534 = vmatprep.subr.mxu0 0.0
  %535 = vmatpush1.msra.mxu0 0.0
  %536 = vmatprep.subr.mxu0 0.0
  %537 = vmatpush1.msra.mxu0 0.0
  %538 = vmatprep.subr.mxu0 0.0
  %539 = vmatpush1.msra.mxu0 0.0
  %540 = vmatprep.subr.mxu0 0.0
  %541 = vmatpush1.msra.mxu0 0.0
  %542 = vmatprep.subr.mxu0 0.0
  %543 = vmatpush1.msra.mxu0 0.0
  %544 = vmatprep.subr.mxu0 0.0
  %545 = vmatpush1.msra.mxu0 0.0
  %546 = vmatprep.subr.mxu0 0.0
  %547 = vmatpush1.msra.mxu0 0.0
  %548 = vmatprep.subr.mxu0 0.0
  %549 = vmatpush1.msra.mxu0 0.0
  %550 = vmatprep.subr.mxu0 0.0
  %551 = vmatpush1.msra.mxu0 0.0
  %552 = vmatprep.subr.mxu0 0.0
  %553 = vmatpush1.msra.mxu0 0.0
  %554 = vmatprep.subr.mxu0 0.0
  %555 = vmatpush1.msra.mxu0 0.0
  %556 = vmatprep.subr.mxu0 0.0
  %557 = vmatpush1.msra.mxu0 0.0
  %558 = vmatprep.subr.mxu0 0.0
  %559 = vmatpush1.msra.mxu0 0.0
  %560 = vmatprep.subr.mxu0 0.0
  %561 = vmatpush1.msra.mxu0 0.0
  %562 = vmatprep.subr.mxu0 0.0
  %563 = vmatpush1.msra.mxu0 0.0
  %564 = vmatprep.subr.mxu0 0.0
  %565 = vmatpush1.msra.mxu0 0.0
  %566 = vmatprep.subr.mxu0 0.0
  %567 = vmatpush1.msra.mxu0 0.0
  %568 = vmatprep.subr.mxu0 0.0
  %569 = vmatpush1.msra.mxu0 0.0
  %570 = vmatprep.mubr.f32.mxu0 0.0
  %571 = vmatmul.mubr.f32.gmra.mrb[0].mxu0 %v47
  %v572 = vpop.f32.mrb[0].mxu0
  %v573 = vadd.f32 0.0, %v572
  %v574 = vpop.f32.mrb[0].mxu0
  %575 = vmatprep.mubr.f32.mxu0 0.0
  %576 = vmatmul.mubr.f32.gmra.mrb[0].mxu0 %v50
  %v577 = vpop.f32.mrb[0].mxu0
  %v578 = vadd.f32 0.0, %v577
  %v579 = vpop.f32.mrb[0].mxu0
  %580 = vdwg.mxu0
  %581 = vmatprep.subr.mxu0 0.0
  %582 = vmatpush1.msra.mxu0 %v28
  %583 = vmatprep.subr.mxu0 0.0
  %584 = vmatpush1.msra.mxu0 %v29
  %585 = vmatprep.subr.mxu0 0.0
  %586 = vmatpush1.msra.mxu0 %v30
  %587 = vmatprep.subr.mxu0 0.0
  %588 = vmatpush1.msra.mxu0 %v31
  %589 = vmatprep.subr.mxu0 0.0
  %590 = vmatpush1.msra.mxu0 %v32
  %591 = vmatprep.subr.mxu0 0.0
  %592 = vmatpush1.msra.mxu0 %v33
  %593 = vmatprep.subr.mxu0 0.0
  %594 = vmatpush1.msra.mxu0 %v34
  %595 = vmatprep.subr.mxu0 0.0
  %596 = vmatpush1.msra.mxu0 %v35
  %597 = vmatprep.subr.mxu0 0.0
  %598 = vmatpush1.msra.mxu0 %v36
  %599 = vmatprep.subr.mxu0 0.0
  %600 = vmatpush1.msra.mxu0 %v37
  %601 = vmatprep.subr.mxu0 0.0
  %602 = vmatpush1.msra.mxu0 %v38
  %603 = vmatprep.subr.mxu0 0.0
  %604 = vmatpush1.msra.mxu0 %v39
  %605 = vmatprep.subr.mxu0 0.0
  %606 = vmatpush1.msra.mxu0 %v40
  %607 = vmatprep.subr.mxu0 0.0
  %608 = vmatpush1.msra.mxu0 %v41
  %609 = vmatprep.subr.mxu0 0.0
  %610 = vmatpush1.msra.mxu0 %v42
  %611 = vmatprep.subr.mxu0 0.0
  %612 = vmatpush1.msra.mxu0 %v43
  %613 = vmatprep.subr.mxu0 0.0
  %614 = vmatpush1.msra.mxu0 0.0
  %615 = vmatprep.subr.mxu0 0.0
  %616 = vmatpush1.msra.mxu0 0.0
  %617 = vmatprep.subr.mxu0 0.0
  %618 = vmatpush1.msra.mxu0 0.0
  %619 = vmatprep.subr.mxu0 0.0
  %620 = vmatpush1.msra.mxu0 0.0
  %621 = vmatprep.subr.mxu0 0.0
  %622 = vmatpush1.msra.mxu0 0.0
  %623 = vmatprep.subr.mxu0 0.0
  %624 = vmatpush1.msra.mxu0 0.0
  %625 = vmatprep.subr.mxu0 0.0
  %626 = vmatpush1.msra.mxu0 0.0
  %627 = vmatprep.subr.mxu0 0.0
  %628 = vmatpush1.msra.mxu0 0.0
  %629 = vmatprep.subr.mxu0 0.0
  %630 = vmatpush1.msra.mxu0 0.0
  %631 = vmatprep.subr.mxu0 0.0
  %632 = vmatpush1.msra.mxu0 0.0
  %633 = vmatprep.subr.mxu0 0.0
  %634 = vmatpush1.msra.mxu0 0.0
  %635 = vmatprep.subr.mxu0 0.0
  %636 = vmatpush1.msra.mxu0 0.0
  %637 = vmatprep.subr.mxu0 0.0
  %638 = vmatpush1.msra.mxu0 0.0
  %639 = vmatprep.subr.mxu0 0.0
  %640 = vmatpush1.msra.mxu0 0.0
  %641 = vmatprep.subr.mxu0 0.0
  %642 = vmatpush1.msra.mxu0 0.0
  %643 = vmatprep.subr.mxu0 0.0
  %644 = vmatpush1.msra.mxu0 0.0
  %645 = vmatprep.mubr.f32.mxu0 0.0
  %646 = vmatmul.mubr.f32.gmra.mrb[0].mxu0 %v573
  %v647 = vpop.f32.mrb[0].mxu0
  %v648 = vadd.f32 0.0, %v647
  %v649 = vpop.f32.mrb[0].mxu0
  %650 = vmatprep.mubr.f32.mxu0 0.0
  %651 = vmatmul.mubr.f32.gmra.mrb[0].mxu0 %v578
  %v652 = vpop.f32.mrb[0].mxu0
  %v653 = vadd.f32 0.0, %v652
  %v654 = vpop.f32.mrb[0].mxu0
  %655 = vdwg.mxu0
  %v656 = vmul.f32 %v22, %v24
  %v657 = vmul.f32 %v23, %v25
  %658 = vmatprep.subr.mxu0 0.0
  %659 = vmatpush1.msra.mxu0 %v656
  %660 = vmatprep.subr.mxu0 0.0
  %661 = vmatpush1.msra.mxu0 %v657
  %662 = vmatprep.subr.mxu0 0.0
  %663 = vmatpush1.msra.mxu0 0.0
  %664 = vmatprep.subr.mxu0 0.0
  %665 = vmatpush1.msra.mxu0 0.0
  %666 = vmatprep.subr.mxu0 0.0
  %667 = vmatpush1.msra.mxu0 0.0
  %668 = vmatprep.subr.mxu0 0.0
  %669 = vmatpush1.msra.mxu0 0.0
  %670 = vmatprep.subr.mxu0 0.0
  %671 = vmatpush1.msra.mxu0 0.0
  %672 = vmatprep.subr.mxu0 0.0
  %673 = vmatpush1.msra.mxu0 0.0
  %674 = vmatprep.subr.mxu0 0.0
  %675 = vmatpush1.msra.mxu0 0.0
  %676 = vmatprep.subr.mxu0 0.0
  %677 = vmatpush1.msra.mxu0 0.0
  %678 = vmatprep.subr.mxu0 0.0
  %679 = vmatpush1.msra.mxu0 0.0
  %680 = vmatprep.subr.mxu0 0.0
  %681 = vmatpush1.msra.mxu0 0.0
  %682 = vmatprep.subr.mxu0 0.0
  %683 = vmatpush1.msra.mxu0 0.0
  %684 = vmatprep.subr.mxu0 0.0
  %685 = vmatpush1.msra.mxu0 0.0
  %686 = vmatprep.subr.mxu0 0.0
  %687 = vmatpush1.msra.mxu0 0.0
  %688 = vmatprep.subr.mxu0 0.0
  %689 = vmatpush1.msra.mxu0 0.0
  %690 = vmatprep.subr.mxu0 0.0
  %691 = vmatpush1.msra.mxu0 0.0
  %692 = vmatprep.subr.mxu0 0.0
  %693 = vmatpush1.msra.mxu0 0.0
  %694 = vmatprep.subr.mxu0 0.0
  %695 = vmatpush1.msra.mxu0 0.0
  %696 = vmatprep.subr.mxu0 0.0
  %697 = vmatpush1.msra.mxu0 0.0
  %698 = vmatprep.subr.mxu0 0.0
  %699 = vmatpush1.msra.mxu0 0.0
  %700 = vmatprep.subr.mxu0 0.0
  %701 = vmatpush1.msra.mxu0 0.0
  %702 = vmatprep.subr.mxu0 0.0
  %703 = vmatpush1.msra.mxu0 0.0
  %704 = vmatprep.subr.mxu0 0.0
  %705 = vmatpush1.msra.mxu0 0.0
  %706 = vmatprep.subr.mxu0 0.0
  %707 = vmatpush1.msra.mxu0 0.0
  %708 = vmatprep.subr.mxu0 0.0
  %709 = vmatpush1.msra.mxu0 0.0
  %710 = vmatprep.subr.mxu0 0.0
  %711 = vmatpush1.msra.mxu0 0.0
  %712 = vmatprep.subr.mxu0 0.0
  %713 = vmatpush1.msra.mxu0 0.0
  %714 = vmatprep.subr.mxu0 0.0
  %715 = vmatpush1.msra.mxu0 0.0
  %716 = vmatprep.subr.mxu0 0.0
  %717 = vmatpush1.msra.mxu0 0.0
  %718 = vmatprep.subr.mxu0 0.0
  %719 = vmatpush1.msra.mxu0 0.0
  %720 = vmatprep.subr.mxu0 0.0
  %721 = vmatpush1.msra.mxu0 0.0
  %722 = vmatprep.mubr.f32.mxu0 0.0
  %723 = vmatmul.mubr.f32.gmra.mrb[0].mxu0 %v47
  %v724 = vpop.f32.mrb[0].mxu0
  %v725 = vadd.f32 0.0, %v724
  %v726 = vpop.f32.mrb[0].mxu0
  %727 = vmatprep.mubr.f32.mxu0 0.0
  %728 = vmatmul.mubr.f32.gmra.mrb[0].mxu0 %v50
  %v729 = vpop.f32.mrb[0].mxu0
  %v730 = vadd.f32 0.0, %v729
  %v731 = vpop.f32.mrb[0].mxu0
  %732 = vdwg.mxu0
  %733 = vmatprep.subr.mxu0 0.0
  %734 = vmatpush1.msra.mxu0 %v28
  %735 = vmatprep.subr.mxu0 0.0
  %736 = vmatpush1.msra.mxu0 %v29
  %737 = vmatprep.subr.mxu0 0.0
  %738 = vmatpush1.msra.mxu0 %v30
  %739 = vmatprep.subr.mxu0 0.0
  %740 = vmatpush1.msra.mxu0 %v31
  %741 = vmatprep.subr.mxu0 0.0
  %742 = vmatpush1.msra.mxu0 %v32
  %743 = vmatprep.subr.mxu0 0.0
  %744 = vmatpush1.msra.mxu0 %v33
  %745 = vmatprep.subr.mxu0 0.0
  %746 = vmatpush1.msra.mxu0 %v34
  %747 = vmatprep.subr.mxu0 0.0
  %748 = vmatpush1.msra.mxu0 %v35
  %749 = vmatprep.subr.mxu0 0.0
  %750 = vmatpush1.msra.mxu0 %v36
  %751 = vmatprep.subr.mxu0 0.0
  %752 = vmatpush1.msra.mxu0 %v37
  %753 = vmatprep.subr.mxu0 0.0
  %754 = vmatpush1.msra.mxu0 %v38
  %755 = vmatprep.subr.mxu0 0.0
  %756 = vmatpush1.msra.mxu0 %v39
  %757 = vmatprep.subr.mxu0 0.0
  %758 = vmatpush1.msra.mxu0 %v40
  %759 = vmatprep.subr.mxu0 0.0
  %760 = vmatpush1.msra.mxu0 %v41
  %761 = vmatprep.subr.mxu0 0.0
  %762 = vmatpush1.msra.mxu0 %v42
  %763 = vmatprep.subr.mxu0 0.0
  %764 = vmatpush1.msra.mxu0 %v43
  %765 = vmatprep.subr.mxu0 0.0
  %766 = vmatpush1.msra.mxu0 0.0
  %767 = vmatprep.subr.mxu0 0.0
  %768 = vmatpush1.msra.mxu0 0.0
  %769 = vmatprep.subr.mxu0 0.0
  %770 = vmatpush1.msra.mxu0 0.0
  %771 = vmatprep.subr.mxu0 0.0
  %772 = vmatpush1.msra.mxu0 0.0
  %773 = vmatprep.subr.mxu0 0.0
  %774 = vmatpush1.msra.mxu0 0.0
  %775 = vmatprep.subr.mxu0 0.0
  %776 = vmatpush1.msra.mxu0 0.0
  %777 = vmatprep.subr.mxu0 0.0
  %778 = vmatpush1.msra.mxu0 0.0
  %779 = vmatprep.subr.mxu0 0.0
  %780 = vmatpush1.msra.mxu0 0.0
  %781 = vmatprep.subr.mxu0 0.0
  %782 = vmatpush1.msra.mxu0 0.0
  %783 = vmatprep.subr.mxu0 0.0
  %784 = vmatpush1.msra.mxu0 0.0
  %785 = vmatprep.subr.mxu0 0.0
  %786 = vmatpush1.msra.mxu0 0.0
  %787 = vmatprep.subr.mxu0 0.0
  %788 = vmatpush1.msra.mxu0 0.0
  %789 = vmatprep.subr.mxu0 0.0
  %790 = vmatpush1.msra.mxu0 0.0
  %791 = vmatprep.subr.mxu0 0.0
  %792 = vmatpush1.msra.mxu0 0.0
  %793 = vmatprep.subr.mxu0 0.0
  %794 = vmatpush1.msra.mxu0 0.0
  %795 = vmatprep.subr.mxu0 0.0
  %796 = vmatpush1.msra.mxu0 0.0
  %797 = vmatprep.mubr.f32.mxu0 0.0
  %798 = vmatmul.mubr.f32.gmra.mrb[0].mxu0 %v725
  %v799 = vpop.f32.mrb[0].mxu0
  %v800 = vadd.f32 0.0, %v799
  %v801 = vpop.f32.mrb[0].mxu0
  %802 = vmatprep.mubr.f32.mxu0 0.0
  %803 = vmatmul.mubr.f32.gmra.mrb[0].mxu0 %v730
  %v804 = vpop.f32.mrb[0].mxu0
  %v805 = vadd.f32 0.0, %v804
  %v806 = vpop.f32.mrb[0].mxu0
  %807 = vdwg.mxu0
  %v808 = vmul.f32 %v194, %v194
  %v809 = vmul.f32 %v199, %v199
  %v810 = vmul.f32 %v344, %v344
  %v811 = vmul.f32 %v349, %v349
  %v812 = vmul.f32 %v194, %v344
  %v813 = vmul.f32 %v199, %v349
  %v814 = vsub.f32 %v496, %v808
  %v815 = vsub.f32 %v501, %v809
  %v816 = vsub.f32 %v648, %v810
  %v817 = vsub.f32 %v653, %v811
  %v818 = vsub.f32 %v800, %v812
  %v819 = vsub.f32 %v805, %v813
  %v820 = vmul.f32 %v812, 2.0
  %v821 = vmul.f32 %v813, 2.0
  %v822 = vadd.f32 %v820, 0.0001
  %v823 = vadd.f32 %v821, 0.0001
  %v824 = vmul.f32 %v818, 2.0
  %v825 = vmul.f32 %v819, 2.0
  %v826 = vadd.f32 %v824, 0.0009
  %v827 = vadd.f32 %v825, 0.0009
  %v828 = vmul.f32 %v822, %v826
  %v829 = vmul.f32 %v823, %v827
  %v830 = vadd.f32 %v808, %v810
  %v831 = vadd.f32 %v809, %v811
  %v832 = vadd.f32 %v830, 0.0001
  %v833 = vadd.f32 %v831, 0.0001
  %v834 = vadd.f32 %v814, %v816
  %v835 = vadd.f32 %v815, %v817
  %v836 = vadd.f32 %v834, 0.0009
  %v837 = vadd.f32 %v835, 0.0009
  %v838 = vmul.f32 %v832, %v836
  %v839 = vmul.f32 %v833, %v837
  %v840 = vrcp.pop %v838
  %v841 = vmul.f32 %v828, %v840
  %v842 = vrcp.pop %v839
  %v843 = vmul.f32 %v829, %v842
  %v844 = vadd.f32 %v841, %v843
  %v845 = vrot.slane %v844, 4
  %v846 = vadd.f32 %v844, %v845
  %v847 = vrot.slane %v846, 2
  %v848 = vadd.f32 %v846, %v847
  %v849 = vrot.slane %v848, 1
  %v850 = vadd.f32 %v848, %v849
  %v851 = vmul.f32 %v850, %v44
  %v852 = vsub.f32 %v22, %v24
  %v853 = vsub.f32 %v23, %v25
  %v854 = vand.u32 2147483647, %v852
  %v855 = vand.u32 2147483647, %v853
  %v856 = vadd.f32 %v854, %v855
  %v857 = vrot.slane %v856, 4
  %v858 = vadd.f32 %v856, %v857
  %v859 = vrot.slane %v858, 2
  %v860 = vadd.f32 %v858, %v859
  %v861 = vrot.slane %v860, 1
  %v862 = vadd.f32 %v860, %v861
  %863 = vst [vmem:[%s5] sm:$0x1] %v851
  %864 = vst [vmem:[%s6] sm:$0x1] %v862
  // Predicated region
  $region22: #{_lambda_.9} parent=0 // pred_check
    _
  $region23: #{_lambda_.9} parent=0 // pred_check_branch
    %866 = sbr.rel (0) target = $region25
  $region24: #{_lambda_.9} parent=0 // pred_region
    _
  $region25: #{_lambda_.9} parent=0 // pred_fallthru
    _
  // Predicated region
  $region26: #{_lambda_.9} parent=0 // pred_check
    _
  $region27: #{_lambda_.9} parent=0 // pred_check_branch
    %868 = sbr.rel (0) target = $region29
  $region28: #{_lambda_.9} parent=0 // pred_region
    _
  $region29: #{_lambda_.9} parent=0 // pred_fallthru
    _
  // Predicated region
  $region30: #{_lambda_.9} parent=0 // pred_check
    _
  $region31: #{_lambda_.9} parent=0 // pred_check_branch
    %870 = sbr.rel (0) target = $region33
  $region32: #{_lambda_.9} parent=0 // pred_region
    _
  $region33: #{_lambda_.9} parent=0 // pred_fallthru
    _
  // Predicated region
  $region34: #{_lambda_.9} parent=0 // pred_check
    _
  $region35: #{_lambda_.9} parent=0 // pred_check_branch
    %872 = sbr.rel (0) target = $region37
  $region36: #{_lambda_.9} parent=0 // pred_region
    _
  $region37: #{_lambda_.9} parent=0 // pred_fallthru
    _

</llo_original>
